<compile_context>
chip_gen: v5e
topology: v5e:2x2
jax: 0.10.0
libtpu: 0.0.40
codegen_flags: <defaults>
</compile_context>

<pallas_src>
import functools

import jax
import jax.numpy as jnp
from jax.experimental import pallas as pl
from jax.experimental.pallas import tpu as pltpu

IN_CHANNELS_LIST = [4, 8, 16, 32]
OUT_CHANNELS = 16


def _round_up(x, m):
    return (x + m - 1) // m * m


# ----------------------------------------------------------------------------
# Pallas kernels
# ----------------------------------------------------------------------------
def _conv_tap_kernel(kh, kw, relu, x_ref, w_ref, b_ref, o_ref):
    """Valid (no-pad) stride-1 conv, one batch element per grid step.

    x_ref: (1, Hi, Wi, Cin)   activations, f32
    w_ref: (kh*kw*Cin, Cout)  weights, bf16, tap-major rows
    b_ref: (1, Cout)          bias, f32
    o_ref: (1, Ho, Wo, Cout)  Ho = Hi - kh + 1, Wo = Wi - kw + 1

    The kh*kw taps are accumulated in f32 from unit-stride slices of x_ref
    (in-kernel im2col), so no patch tensor is ever materialized in HBM.
    """
    cin = x_ref.shape[3]
    _, ho, wo, cout = o_ref.shape
    acc = jnp.zeros((ho * wo, cout), jnp.float32)
    for di in range(kh):
        for dj in range(kw):
            tap = x_ref[0, di:di + ho, dj:dj + wo, :]
            tap = tap.reshape(ho * wo, cin).astype(jnp.bfloat16)
            t = di * kw + dj
            wt = w_ref[t * cin:(t + 1) * cin, :]
            acc = acc + jnp.dot(tap, wt, preferred_element_type=jnp.float32)
    acc = acc + b_ref[...]
    if relu:
        acc = jnp.maximum(acc, 0.0)
    o_ref[...] = acc.reshape(1, ho, wo, cout).astype(o_ref.dtype)


def _fpn_level_kernel(transpose_out, lat_ref, td_ref, wi_ref, bi_ref,
                      wl_ref, bl_ref, inner_ref, res_ref, pad_ref):
    """One fused FPN level: 1x1 inner conv + top-down add + 3x3 layer conv.

    lat_ref:   (1, H, W, Cl)   body feature (lateral), f32, Cl padded to 8
    td_ref:    (1, H, W, C)    upsampled top-down (zeros for the top level)
    wi_ref:    (Cl, C) bf16    / bi_ref: (1, C) f32
    wl_ref:    (9*C, C) bf16   / bl_ref: (1, C) f32
    inner_ref: (1, H, W, C)    last_inner output (feeds the next level)
    res_ref:   (1, C, H*W) if transpose_out (lane-dense store) else (1,H,W,C)
    pad_ref:   VMEM scratch (H+2, W+2, C) f32 for the pad-1 3x3 conv
    """
    _, h, w, cl = lat_ref.shape
    C = bi_ref.shape[1]
    hw = h * w

    # 1x1 lateral conv + bias + top-down add (fused, no separate add kernel).
    lat = lat_ref[...].reshape(hw, cl).astype(jnp.bfloat16)
    inner = jnp.dot(lat, wi_ref[...], preferred_element_type=jnp.float32)
    inner = inner + bi_ref[...] + td_ref[...].reshape(hw, C)
    inner_ref[...] = inner.reshape(1, h, w, C)

    # Zero-padded copy of last_inner for the 3x3 / pad-1 layer conv.
    pad_ref[...] = jnp.zeros(pad_ref.shape, pad_ref.dtype)
    pad_ref[1:h + 1, 1:w + 1, :] = inner.reshape(h, w, C)

    acc = jnp.zeros((hw, C), jnp.float32)
    for di in range(3):
        for dj in range(3):
            tap = pad_ref[di:di + h, dj:dj + w, :]
            tap = tap.reshape(hw, C).astype(jnp.bfloat16)
            t = di * 3 + dj
            wt = wl_ref[t * C:(t + 1) * C, :]
            acc = acc + jnp.dot(tap, wt, preferred_element_type=jnp.float32)
    acc = acc + bl_ref[...]

    if transpose_out:
        # Lane-dense (C, H*W) store; wrapper reshape to NCHW is free.
        res_ref[...] = jnp.transpose(acc).reshape(1, C, hw)
    else:
        res_ref[...] = acc.reshape(1, h, w, C)


# ----------------------------------------------------------------------------
# Wrappers
# ----------------------------------------------------------------------------
def body_conv(x, w_packed, b_packed):
    """3x3 / stride-2 / pad-1 conv + ReLU.

    Implemented as a stride-1 2x2 conv over a space-to-depth(2) copy of the
    padded input (pure-layout XLA reshape/transpose, ~1x traffic), so the
    Pallas kernel only needs unit-stride tap slices.
    """
    n, h, w, c = x.shape
    cout = w_packed.shape[1]
    cin4 = w_packed.shape[0] // 4           # padded 4*c
    ho, wo = h // 2, w // 2
    hb, wb = ho + 1, wo + 1
    xp = jnp.pad(x, ((0, 0), (1, 1), (1, 1), (0, 0)))
    xs = xp.reshape(n, hb, 2, wb, 2, c)
    xs = xs.transpose(0, 1, 3, 2, 4, 5).reshape(n, hb, wb, 4 * c)
    if 4 * c != cin4:                       # K padded to a multiple of 8
        xs = jnp.pad(xs, ((0, 0), (0, 0), (0, 0), (0, cin4 - 4 * c)))
    return pl.pallas_call(
        functools.partial(_conv_tap_kernel, 2, 2, True),
        out_shape=jax.ShapeDtypeStruct((n, ho, wo, cout), jnp.float32),
        grid=(n,),
        in_specs=[
            pl.BlockSpec((1, hb, wb, cin4), lambda b: (b, 0, 0, 0)),
            pl.BlockSpec((4 * cin4, cout), lambda b: (0, 0)),
            pl.BlockSpec((1, cout), lambda b: (0, 0)),
        ],
        out_specs=pl.BlockSpec((1, ho, wo, cout), lambda b: (b, 0, 0, 0)),
        compiler_params=pltpu.CompilerParams(
            dimension_semantics=("parallel",)),
    )(xs, w_packed, b_packed)


def fpn_level(lat, td, wi, bi, wl, bl):
    """One fused FPN level (1x1 conv + add + 3x3 conv) as a single pallas_call."""
    n, h, w, cl = lat.shape
    C = bi.shape[1]
    hw = h * w
    transpose_out = (hw % 8 == 0) and (hw > C)
    if transpose_out:
        res_shape = jax.ShapeDtypeStruct((n, C, hw), jnp.float32)
        res_spec = pl.BlockSpec((1, C, hw), lambda b: (b, 0, 0))
    else:
        res_shape = jax.ShapeDtypeStruct((n, h, w, C), jnp.float32)
        res_spec = pl.BlockSpec((1, h, w, C), lambda b: (b, 0, 0, 0))
    inner, res = pl.pallas_call(
        functools.partial(_fpn_level_kernel, transpose_out),
        out_shape=(jax.ShapeDtypeStruct((n, h, w, C), jnp.float32), res_shape),
        grid=(n,),
        in_specs=[
            pl.BlockSpec((1, h, w, cl), lambda b: (b, 0, 0, 0)),
            pl.BlockSpec((1, h, w, C), lambda b: (b, 0, 0, 0)),
            pl.BlockSpec((cl, C), lambda b: (0, 0)),
            pl.BlockSpec((1, C), lambda b: (0, 0)),
            pl.BlockSpec((9 * C, C), lambda b: (0, 0)),
            pl.BlockSpec((1, C), lambda b: (0, 0)),
        ],
        out_specs=(pl.BlockSpec((1, h, w, C), lambda b: (b, 0, 0, 0)),
                   res_spec),
        scratch_shapes=[pltpu.VMEM((h + 2, w + 2, C), jnp.float32)],
        compiler_params=pltpu.CompilerParams(
            dimension_semantics=("parallel",)),
    )(lat, td, wi, bi, wl, bl)
    return inner, res, transpose_out


def upsample2x(x):
    """Exact 2x nearest upsample via broadcast/reshape (no gathers)."""
    n, h, w, c = x.shape
    x = jnp.broadcast_to(x[:, :, None, :, None, :], (n, h, 2, w, 2, c))
    return x.reshape(n, 2 * h, 2 * w, c)


def _pad_channels(x, c_target):
    c = x.shape[-1]
    if c == c_target:
        return x
    return jnp.pad(x, ((0, 0), (0, 0), (0, 0), (0, c_target - c)))


# ----------------------------------------------------------------------------
# Parameters (deterministic, synthetic) + one-time packing for the kernels
# ----------------------------------------------------------------------------
def init_params(key):
    params = {}
    cin = 3
    for idx, cout in enumerate(IN_CHANNELS_LIST):
        key, k1, k2 = jax.random.split(key, 3)
        params[f"body_w{idx}"] = 0.1 * jax.random.normal(
            k1, (3, 3, cin, cout), jnp.float32)
        params[f"body_b{idx}"] = 0.01 * jax.random.normal(
            k2, (cout,), jnp.float32)
        cin = cout
    for idx, c in enumerate(IN_CHANNELS_LIST):
        key, k1, k2, k3, k4 = jax.random.split(key, 5)
        params[f"fpn_inner_w{idx}"] = 0.1 * jax.random.normal(
            k1, (1, 1, c, OUT_CHANNELS), jnp.float32)
        params[f"fpn_inner_b{idx}"] = 0.01 * jax.random.normal(
            k2, (OUT_CHANNELS,), jnp.float32)
        params[f"fpn_layer_w{idx}"] = 0.1 * jax.random.normal(
            k3, (3, 3, OUT_CHANNELS, OUT_CHANNELS), jnp.float32)
        params[f"fpn_layer_b{idx}"] = 0.01 * jax.random.normal(
            k4, (OUT_CHANNELS,), jnp.float32)
    return params


def pack_params(params):
    """Weight preprocessing (done once): body 3x3/s2 -> equivalent 2x2/s1
    weights over the s2d input, K padded to multiples of 8, tap-major rows,
    bf16 for the MXU; biases kept f32 as (1, Cout)."""
    packed = {}
    C = OUT_CHANNELS
    for idx in range(len(IN_CHANNELS_LIST)):
        w3 = params[f"body_w{idx}"]
        _, _, cin, cout = w3.shape
        # [block_i, block_j, parity_i, parity_j, cin, cout]
        w2 = jnp.zeros((2, 2, 2, 2, cin, cout), w3.dtype)
        for i in range(3):
            for j in range(3):
                w2 = w2.at[i // 2, j // 2, i % 2, j % 2].set(w3[i, j])
        w2 = w2.reshape(2, 2, 4 * cin, cout)
        cin4 = _round_up(4 * cin, 8)
        if cin4 != 4 * cin:
            w2 = jnp.pad(w2, ((0, 0), (0, 0), (0, cin4 - 4 * cin), (0, 0)))
        packed[f"body_w{idx}"] = w2.reshape(4 * cin4, cout).astype(jnp.bfloat16)
        packed[f"body_b{idx}"] = params[f"body_b{idx}"].reshape(1, cout)
    for idx, c in enumerate(IN_CHANNELS_LIST):
        wi = params[f"fpn_inner_w{idx}"].reshape(c, C)
        cp = _round_up(c, 8)
        if cp != c:
            wi = jnp.pad(wi, ((0, cp - c), (0, 0)))
        packed[f"fpn_inner_w{idx}"] = wi.astype(jnp.bfloat16)
        packed[f"fpn_inner_b{idx}"] = params[f"fpn_inner_b{idx}"].reshape(1, C)
        packed[f"fpn_layer_w{idx}"] = params[f"fpn_layer_w{idx}"].reshape(
            9 * C, C).astype(jnp.bfloat16)
        packed[f"fpn_layer_b{idx}"] = params[f"fpn_layer_b{idx}"].reshape(1, C)
    return packed


# ----------------------------------------------------------------------------
# Forward pass: body (IntermediateLayerGetter) -> FPN -> MaxpoolOnP5
# ----------------------------------------------------------------------------
def backbone_with_fpn_forward(packed, x_nchw):
    x = jnp.transpose(x_nchw, (0, 2, 3, 1))            # NCHW -> NHWC
    num = len(IN_CHANNELS_LIST)
    C = OUT_CHANNELS

    # ---- body: 4x [conv3x3 stride2 pad1 + ReLU], keep every stage ----------
    feats = []
    h = x
    for idx in range(num):
        h = body_conv(h, packed[f"body_w{idx}"], packed[f"body_b{idx}"])
        feats.append(h)

    # ---- FeaturePyramidNetwork (one fused kernel per level) ----------------
    results = [None] * num
    trans = [None] * num
    last_inner = None
    for idx in range(num - 1, -1, -1):
        lat = _pad_channels(feats[idx], packed[f"fpn_inner_w{idx}"].shape[0])
        n, fh, fw, _ = feats[idx].shape
        if last_inner is None:                     # coarsest level: no top-down
            td = jnp.zeros((n, fh, fw, C), jnp.float32)
        else:
            td = upsample2x(last_inner)
        last_inner, res, tr = fpn_level(
            lat, td,
            packed[f"fpn_inner_w{idx}"], packed[f"fpn_inner_b{idx}"],
            packed[f"fpn_layer_w{idx}"], packed[f"fpn_layer_b{idx}"])
        results[idx] = res
        trans[idx] = tr

    # ---- to NCHW + extra block MaxpoolOnP5 (max_pool2d kernel=1 stride=2) ---
    outs = {}
    for idx in range(num):
        n, fh, fw, _ = feats[idx].shape
        r = results[idx]
        if trans[idx]:
            outs[str(idx)] = r.reshape(n, C, fh, fw)          # free reshape
        else:
            outs[str(idx)] = jnp.transpose(r, (0, 3, 1, 2))
    outs["pool"] = outs[str(num - 1)][:, :, ::2, ::2]
    return outs


# ----------------------------------------------------------------------------
if __name__ == "__main__":
    key = jax.random.PRNGKey(0)
    key, pkey, xkey = jax.random.split(key, 3)
    params = init_params(pkey)
    packed = pack_params(params)

    # small NCHW input consistent with a conv backbone (4 stride-2 stages)
    x = jax.random.normal(xkey, (2, 3, 32, 32), jnp.float32)

    fwd = jax.jit(backbone_with_fpn_forward)
    out = fwd(packed, x)
    jax.block_until_ready(out)

    expected = {
        "0": (2, OUT_CHANNELS, 16, 16),
        "1": (2, OUT_CHANNELS, 8, 8),
        "2": (2, OUT_CHANNELS, 4, 4),
        "3": (2, OUT_CHANNELS, 2, 2),
        "pool": (2, OUT_CHANNELS, 1, 1),
    }
    for k, shp in expected.items():
        assert out[k].shape == shp, (k, out[k].shape, shp)
        assert bool(jnp.isfinite(out[k]).all()), k

    print("KERNEL_OK")
</pallas_src>

<mosaic_0001>
module attributes {stable_mosaic.version = 11 : i64} {
  func.func @_conv_tap_kernel(%arg0: i32, %arg1: memref<1x17x17x16xf32, #tpu.memory_space<vmem>>, %arg2: memref<64x4xbf16, #tpu.memory_space<vmem>>, %arg3: memref<1x4xf32, #tpu.memory_space<vmem>>, %arg4: memref<1x16x16x4xf32, #tpu.memory_space<vmem>>) attributes {dimension_semantics = [#tpu.dimension_semantics<parallel>], iteration_bounds = array<i64: 2>, scalar_prefetch = 0 : i64, scratch_operands = 0 : i64, tpu.core_type = #tpu.core_type<tc>, window_params = [{transform_indices = @transform_0, window_bounds = array<i64: 1, 17, 17, 16>}, {pipeline_mode = #tpu.pipeline_mode<synchronous>, transform_indices = @transform_1, window_bounds = array<i64: 64, 4>}, {pipeline_mode = #tpu.pipeline_mode<synchronous>, transform_indices = @transform_2, window_bounds = array<i64: 1, 4>}, {transform_indices = @transform_3, window_bounds = array<i64: 1, 16, 16, 4>}]} {
    %cst = arith.constant 0.000000e+00 : f32
    %0 = vector.broadcast %cst : f32 to vector<256x4xf32>
    %c0 = arith.constant 0 : index
    %c0_0 = arith.constant 0 : index
    %c0_1 = arith.constant 0 : index
    %c0_2 = arith.constant 0 : index
    %1 = vector.load %arg1[%c0, %c0_0, %c0_1, %c0_2] : memref<1x17x17x16xf32, #tpu.memory_space<vmem>>, vector<1x16x16x16xf32>
    %2 = vector.shape_cast %1 : vector<1x16x16x16xf32> to vector<16x16x16xf32>
    %3 = vector.shape_cast %2 : vector<16x16x16xf32> to vector<256x16xf32>
    %4 = arith.truncf %3 : vector<256x16xf32> to vector<256x16xbf16>
    %c0_3 = arith.constant 0 : index
    %c0_4 = arith.constant 0 : index
    %5 = vector.load %arg2[%c0_3, %c0_4] : memref<64x4xbf16, #tpu.memory_space<vmem>>, vector<16x4xbf16>
    %cst_5 = arith.constant dense<0.000000e+00> : vector<256x4xf32>
    %6 = tpu.matmul %4, %5, %cst_5 {dimension_numbers = #tpu.dot_dimension_numbers<[1], [0], [0], [1], [0, 0, 1, 1], [], []>} : vector<256x16xbf16>, vector<16x4xbf16>, vector<256x4xf32> -> vector<256x4xf32>
    %7 = arith.addf %0, %6 : vector<256x4xf32>
    %c0_6 = arith.constant 0 : index
    %c0_7 = arith.constant 0 : index
    %c1 = arith.constant 1 : index
    %c0_8 = arith.constant 0 : index
    %8 = vector.load %arg1[%c0_6, %c0_7, %c1, %c0_8] : memref<1x17x17x16xf32, #tpu.memory_space<vmem>>, vector<1x16x16x16xf32>
    %9 = vector.shape_cast %8 : vector<1x16x16x16xf32> to vector<16x16x16xf32>
    %10 = vector.shape_cast %9 : vector<16x16x16xf32> to vector<256x16xf32>
    %11 = arith.truncf %10 : vector<256x16xf32> to vector<256x16xbf16>
    %c16 = arith.constant 16 : index
    %c0_9 = arith.constant 0 : index
    %12 = vector.load %arg2[%c16, %c0_9] : memref<64x4xbf16, #tpu.memory_space<vmem>>, vector<16x4xbf16>
    %cst_10 = arith.constant dense<0.000000e+00> : vector<256x4xf32>
    %13 = tpu.matmul %11, %12, %cst_10 {dimension_numbers = #tpu.dot_dimension_numbers<[1], [0], [0], [1], [0, 0, 1, 1], [], []>} : vector<256x16xbf16>, vector<16x4xbf16>, vector<256x4xf32> -> vector<256x4xf32>
    %14 = arith.addf %7, %13 : vector<256x4xf32>
    %c0_11 = arith.constant 0 : index
    %c1_12 = arith.constant 1 : index
    %c0_13 = arith.constant 0 : index
    %c0_14 = arith.constant 0 : index
    %15 = vector.load %arg1[%c0_11, %c1_12, %c0_13, %c0_14] : memref<1x17x17x16xf32, #tpu.memory_space<vmem>>, vector<1x16x16x16xf32>
    %16 = vector.shape_cast %15 : vector<1x16x16x16xf32> to vector<16x16x16xf32>
    %17 = vector.shape_cast %16 : vector<16x16x16xf32> to vector<256x16xf32>
    %18 = arith.truncf %17 : vector<256x16xf32> to vector<256x16xbf16>
    %c32 = arith.constant 32 : index
    %c0_15 = arith.constant 0 : index
    %19 = vector.load %arg2[%c32, %c0_15] : memref<64x4xbf16, #tpu.memory_space<vmem>>, vector<16x4xbf16>
    %cst_16 = arith.constant dense<0.000000e+00> : vector<256x4xf32>
    %20 = tpu.matmul %18, %19, %cst_16 {dimension_numbers = #tpu.dot_dimension_numbers<[1], [0], [0], [1], [0, 0, 1, 1], [], []>} : vector<256x16xbf16>, vector<16x4xbf16>, vector<256x4xf32> -> vector<256x4xf32>
    %21 = arith.addf %14, %20 : vector<256x4xf32>
    %c0_17 = arith.constant 0 : index
    %c1_18 = arith.constant 1 : index
    %c1_19 = arith.constant 1 : index
    %c0_20 = arith.constant 0 : index
    %22 = vector.load %arg1[%c0_17, %c1_18, %c1_19, %c0_20] : memref<1x17x17x16xf32, #tpu.memory_space<vmem>>, vector<1x16x16x16xf32>
    %23 = vector.shape_cast %22 : vector<1x16x16x16xf32> to vector<16x16x16xf32>
    %24 = vector.shape_cast %23 : vector<16x16x16xf32> to vector<256x16xf32>
    %25 = arith.truncf %24 : vector<256x16xf32> to vector<256x16xbf16>
    %c48 = arith.constant 48 : index
    %c0_21 = arith.constant 0 : index
    %26 = vector.load %arg2[%c48, %c0_21] : memref<64x4xbf16, #tpu.memory_space<vmem>>, vector<16x4xbf16>
    %cst_22 = arith.constant dense<0.000000e+00> : vector<256x4xf32>
    %27 = tpu.matmul %25, %26, %cst_22 {dimension_numbers = #tpu.dot_dimension_numbers<[1], [0], [0], [1], [0, 0, 1, 1], [], []>} : vector<256x16xbf16>, vector<16x4xbf16>, vector<256x4xf32> -> vector<256x4xf32>
    %28 = arith.addf %21, %27 : vector<256x4xf32>
    %c0_23 = arith.constant 0 : index
    %c0_24 = arith.constant 0 : index
    %29 = vector.load %arg3[%c0_23, %c0_24] : memref<1x4xf32, #tpu.memory_space<vmem>>, vector<1x4xf32>
    %30 = vector.broadcast %29 : vector<1x4xf32> to vector<256x4xf32>
    %31 = arith.addf %28, %30 : vector<256x4xf32>
    %cst_25 = arith.constant 0.000000e+00 : f32
    %32 = vector.broadcast %cst_25 : f32 to vector<256x4xf32>
    %33 = arith.maximumf %31, %32 : vector<256x4xf32>
    %34 = vector.shape_cast %33 : vector<256x4xf32> to vector<1x16x16x4xf32>
    %c0_26 = arith.constant 0 : index
    %c0_27 = arith.constant 0 : index
    %c0_28 = arith.constant 0 : index
    %c0_29 = arith.constant 0 : index
    %35 = vector.load %arg4[%c0_26, %c0_27, %c0_28, %c0_29] : memref<1x16x16x4xf32, #tpu.memory_space<vmem>>, vector<1x16x16x4xf32>
    tpu.vector_store %arg4[%c0_26, %c0_27, %c0_28, %c0_29], %34 {strides = array<i32>} : memref<1x16x16x4xf32, #tpu.memory_space<vmem>>, vector<1x16x16x4xf32>,
    return
  }
  func.func @transform_0(%arg0: i32) -> (i32, i32, i32, i32) {
    %c0_i32 = arith.constant 0 : i32
    %c0_i32_0 = arith.constant 0 : i32
    %c0_i32_1 = arith.constant 0 : i32
    %c0_i32_2 = arith.constant 0 : i32
    return %arg0, %c0_i32, %c0_i32_0, %c0_i32_1 : i32, i32, i32, i32
  }
  func.func @transform_1(%arg0: i32) -> (i32, i32) {
    %c0_i32 = arith.constant 0 : i32
    %c0_i32_0 = arith.constant 0 : i32
    %c0_i32_1 = arith.constant 0 : i32
    return %c0_i32, %c0_i32_0 : i32, i32
  }
  func.func @transform_2(%arg0: i32) -> (i32, i32) {
    %c0_i32 = arith.constant 0 : i32
    %c0_i32_0 = arith.constant 0 : i32
    %c0_i32_1 = arith.constant 0 : i32
    return %c0_i32, %c0_i32_0 : i32, i32
  }
  func.func @transform_3(%arg0: i32) -> (i32, i32, i32, i32) {
    %c0_i32 = arith.constant 0 : i32
    %c0_i32_0 = arith.constant 0 : i32
    %c0_i32_1 = arith.constant 0 : i32
    %c0_i32_2 = arith.constant 0 : i32
    return %arg0, %c0_i32, %c0_i32_0, %c0_i32_1 : i32, i32, i32, i32
  }
}

module attributes {stable_mosaic.version = 11 : i64} {
  func.func @_conv_tap_kernel(%arg0: i32, %arg1: memref<1x9x9x16xf32, #tpu.memory_space<vmem>>, %arg2: memref<64x8xbf16, #tpu.memory_space<vmem>>, %arg3: memref<1x8xf32, #tpu.memory_space<vmem>>, %arg4: memref<1x8x8x8xf32, #tpu.memory_space<vmem>>) attributes {dimension_semantics = [#tpu.dimension_semantics<parallel>], iteration_bounds = array<i64: 2>, scalar_prefetch = 0 : i64, scratch_operands = 0 : i64, tpu.core_type = #tpu.core_type<tc>, window_params = [{transform_indices = @transform_0, window_bounds = array<i64: 1, 9, 9, 16>}, {pipeline_mode = #tpu.pipeline_mode<synchronous>, transform_indices = @transform_1, window_bounds = array<i64: 64, 8>}, {pipeline_mode = #tpu.pipeline_mode<synchronous>, transform_indices = @transform_2, window_bounds = array<i64: 1, 8>}, {transform_indices = @transform_3, window_bounds = array<i64: 1, 8, 8, 8>}]} {
    %cst = arith.constant 0.000000e+00 : f32
    %0 = vector.broadcast %cst : f32 to vector<64x8xf32>
    %c0 = arith.constant 0 : index
    %c0_0 = arith.constant 0 : index
    %c0_1 = arith.constant 0 : index
    %c0_2 = arith.constant 0 : index
    %1 = vector.load %arg1[%c0, %c0_0, %c0_1, %c0_2] : memref<1x9x9x16xf32, #tpu.memory_space<vmem>>, vector<1x8x8x16xf32>
    %2 = vector.shape_cast %1 : vector<1x8x8x16xf32> to vector<8x8x16xf32>
    %3 = vector.shape_cast %2 : vector<8x8x16xf32> to vector<64x16xf32>
    %4 = arith.truncf %3 : vector<64x16xf32> to vector<64x16xbf16>
    %c0_3 = arith.constant 0 : index
    %c0_4 = arith.constant 0 : index
    %5 = vector.load %arg2[%c0_3, %c0_4] : memref<64x8xbf16, #tpu.memory_space<vmem>>, vector<16x8xbf16>
    %cst_5 = arith.constant dense<0.000000e+00> : vector<64x8xf32>
    %6 = tpu.matmul %4, %5, %cst_5 {dimension_numbers = #tpu.dot_dimension_numbers<[1], [0], [0], [1], [0, 0, 1, 1], [], []>} : vector<64x16xbf16>, vector<16x8xbf16>, vector<64x8xf32> -> vector<64x8xf32>
    %7 = arith.addf %0, %6 : vector<64x8xf32>
    %c0_6 = arith.constant 0 : index
    %c0_7 = arith.constant 0 : index
    %c1 = arith.constant 1 : index
    %c0_8 = arith.constant 0 : index
    %8 = vector.load %arg1[%c0_6, %c0_7, %c1, %c0_8] : memref<1x9x9x16xf32, #tpu.memory_space<vmem>>, vector<1x8x8x16xf32>
    %9 = vector.shape_cast %8 : vector<1x8x8x16xf32> to vector<8x8x16xf32>
    %10 = vector.shape_cast %9 : vector<8x8x16xf32> to vector<64x16xf32>
    %11 = arith.truncf %10 : vector<64x16xf32> to vector<64x16xbf16>
    %c16 = arith.constant 16 : index
    %c0_9 = arith.constant 0 : index
    %12 = vector.load %arg2[%c16, %c0_9] : memref<64x8xbf16, #tpu.memory_space<vmem>>, vector<16x8xbf16>
    %cst_10 = arith.constant dense<0.000000e+00> : vector<64x8xf32>
    %13 = tpu.matmul %11, %12, %cst_10 {dimension_numbers = #tpu.dot_dimension_numbers<[1], [0], [0], [1], [0, 0, 1, 1], [], []>} : vector<64x16xbf16>, vector<16x8xbf16>, vector<64x8xf32> -> vector<64x8xf32>
    %14 = arith.addf %7, %13 : vector<64x8xf32>
    %c0_11 = arith.constant 0 : index
    %c1_12 = arith.constant 1 : index
    %c0_13 = arith.constant 0 : index
    %c0_14 = arith.constant 0 : index
    %15 = vector.load %arg1[%c0_11, %c1_12, %c0_13, %c0_14] : memref<1x9x9x16xf32, #tpu.memory_space<vmem>>, vector<1x8x8x16xf32>
    %16 = vector.shape_cast %15 : vector<1x8x8x16xf32> to vector<8x8x16xf32>
    %17 = vector.shape_cast %16 : vector<8x8x16xf32> to vector<64x16xf32>
    %18 = arith.truncf %17 : vector<64x16xf32> to vector<64x16xbf16>
    %c32 = arith.constant 32 : index
    %c0_15 = arith.constant 0 : index
    %19 = vector.load %arg2[%c32, %c0_15] : memref<64x8xbf16, #tpu.memory_space<vmem>>, vector<16x8xbf16>
    %cst_16 = arith.constant dense<0.000000e+00> : vector<64x8xf32>
    %20 = tpu.matmul %18, %19, %cst_16 {dimension_numbers = #tpu.dot_dimension_numbers<[1], [0], [0], [1], [0, 0, 1, 1], [], []>} : vector<64x16xbf16>, vector<16x8xbf16>, vector<64x8xf32> -> vector<64x8xf32>
    %21 = arith.addf %14, %20 : vector<64x8xf32>
    %c0_17 = arith.constant 0 : index
    %c1_18 = arith.constant 1 : index
    %c1_19 = arith.constant 1 : index
    %c0_20 = arith.constant 0 : index
    %22 = vector.load %arg1[%c0_17, %c1_18, %c1_19, %c0_20] : memref<1x9x9x16xf32, #tpu.memory_space<vmem>>, vector<1x8x8x16xf32>
    %23 = vector.shape_cast %22 : vector<1x8x8x16xf32> to vector<8x8x16xf32>
    %24 = vector.shape_cast %23 : vector<8x8x16xf32> to vector<64x16xf32>
    %25 = arith.truncf %24 : vector<64x16xf32> to vector<64x16xbf16>
    %c48 = arith.constant 48 : index
    %c0_21 = arith.constant 0 : index
    %26 = vector.load %arg2[%c48, %c0_21] : memref<64x8xbf16, #tpu.memory_space<vmem>>, vector<16x8xbf16>
    %cst_22 = arith.constant dense<0.000000e+00> : vector<64x8xf32>
    %27 = tpu.matmul %25, %26, %cst_22 {dimension_numbers = #tpu.dot_dimension_numbers<[1], [0], [0], [1], [0, 0, 1, 1], [], []>} : vector<64x16xbf16>, vector<16x8xbf16>, vector<64x8xf32> -> vector<64x8xf32>
    %28 = arith.addf %21, %27 : vector<64x8xf32>
    %c0_23 = arith.constant 0 : index
    %c0_24 = arith.constant 0 : index
    %29 = vector.load %arg3[%c0_23, %c0_24] : memref<1x8xf32, #tpu.memory_space<vmem>>, vector<1x8xf32>
    %30 = vector.broadcast %29 : vector<1x8xf32> to vector<64x8xf32>
    %31 = arith.addf %28, %30 : vector<64x8xf32>
    %cst_25 = arith.constant 0.000000e+00 : f32
    %32 = vector.broadcast %cst_25 : f32 to vector<64x8xf32>
    %33 = arith.maximumf %31, %32 : vector<64x8xf32>
    %34 = vector.shape_cast %33 : vector<64x8xf32> to vector<1x8x8x8xf32>
    %c0_26 = arith.constant 0 : index
    %c0_27 = arith.constant 0 : index
    %c0_28 = arith.constant 0 : index
    %c0_29 = arith.constant 0 : index
    %35 = vector.load %arg4[%c0_26, %c0_27, %c0_28, %c0_29] : memref<1x8x8x8xf32, #tpu.memory_space<vmem>>, vector<1x8x8x8xf32>
    tpu.vector_store %arg4[%c0_26, %c0_27, %c0_28, %c0_29], %34 {strides = array<i32>} : memref<1x8x8x8xf32, #tpu.memory_space<vmem>>, vector<1x8x8x8xf32>,
    return
  }
  func.func @transform_0(%arg0: i32) -> (i32, i32, i32, i32) {
    %c0_i32 = arith.constant 0 : i32
    %c0_i32_0 = arith.constant 0 : i32
    %c0_i32_1 = arith.constant 0 : i32
    %c0_i32_2 = arith.constant 0 : i32
    return %arg0, %c0_i32, %c0_i32_0, %c0_i32_1 : i32, i32, i32, i32
  }
  func.func @transform_1(%arg0: i32) -> (i32, i32) {
    %c0_i32 = arith.constant 0 : i32
    %c0_i32_0 = arith.constant 0 : i32
    %c0_i32_1 = arith.constant 0 : i32
    return %c0_i32, %c0_i32_0 : i32, i32
  }
  func.func @transform_2(%arg0: i32) -> (i32, i32) {
    %c0_i32 = arith.constant 0 : i32
    %c0_i32_0 = arith.constant 0 : i32
    %c0_i32_1 = arith.constant 0 : i32
    return %c0_i32, %c0_i32_0 : i32, i32
  }
  func.func @transform_3(%arg0: i32) -> (i32, i32, i32, i32) {
    %c0_i32 = arith.constant 0 : i32
    %c0_i32_0 = arith.constant 0 : i32
    %c0_i32_1 = arith.constant 0 : i32
    %c0_i32_2 = arith.constant 0 : i32
    return %arg0, %c0_i32, %c0_i32_0, %c0_i32_1 : i32, i32, i32, i32
  }
}

module attributes {stable_mosaic.version = 11 : i64} {
  func.func @_conv_tap_kernel(%arg0: i32, %arg1: memref<1x5x5x32xf32, #tpu.memory_space<vmem>>, %arg2: memref<128x16xbf16, #tpu.memory_space<vmem>>, %arg3: memref<1x16xf32, #tpu.memory_space<vmem>>, %arg4: memref<1x4x4x16xf32, #tpu.memory_space<vmem>>) attributes {dimension_semantics = [#tpu.dimension_semantics<parallel>], iteration_bounds = array<i64: 2>, scalar_prefetch = 0 : i64, scratch_operands = 0 : i64, tpu.core_type = #tpu.core_type<tc>, window_params = [{transform_indices = @transform_0, window_bounds = array<i64: 1, 5, 5, 32>}, {pipeline_mode = #tpu.pipeline_mode<synchronous>, transform_indices = @transform_1, window_bounds = array<i64: 128, 16>}, {pipeline_mode = #tpu.pipeline_mode<synchronous>, transform_indices = @transform_2, window_bounds = array<i64: 1, 16>}, {transform_indices = @transform_3, window_bounds = array<i64: 1, 4, 4, 16>}]} {
    %cst = arith.constant 0.000000e+00 : f32
    %0 = vector.broadcast %cst : f32 to vector<16x16xf32>
    %c0 = arith.constant 0 : index
    %c0_0 = arith.constant 0 : index
    %c0_1 = arith.constant 0 : index
    %c0_2 = arith.constant 0 : index
    %1 = vector.load %arg1[%c0, %c0_0, %c0_1, %c0_2] : memref<1x5x5x32xf32, #tpu.memory_space<vmem>>, vector<1x4x4x32xf32>
    %2 = vector.shape_cast %1 : vector<1x4x4x32xf32> to vector<4x4x32xf32>
    %3 = vector.shape_cast %2 : vector<4x4x32xf32> to vector<16x32xf32>
    %4 = arith.truncf %3 : vector<16x32xf32> to vector<16x32xbf16>
    %c0_3 = arith.constant 0 : index
    %c0_4 = arith.constant 0 : index
    %5 = vector.load %arg2[%c0_3, %c0_4] : memref<128x16xbf16, #tpu.memory_space<vmem>>, vector<32x16xbf16>
    %cst_5 = arith.constant dense<0.000000e+00> : vector<16x16xf32>
    %6 = tpu.matmul %4, %5, %cst_5 {dimension_numbers = #tpu.dot_dimension_numbers<[1], [0], [0], [1], [0, 0, 1, 1], [], []>} : vector<16x32xbf16>, vector<32x16xbf16>, vector<16x16xf32> -> vector<16x16xf32>
    %7 = arith.addf %0, %6 : vector<16x16xf32>
    %c0_6 = arith.constant 0 : index
    %c0_7 = arith.constant 0 : index
    %c1 = arith.constant 1 : index
    %c0_8 = arith.constant 0 : index
    %8 = vector.load %arg1[%c0_6, %c0_7, %c1, %c0_8] : memref<1x5x5x32xf32, #tpu.memory_space<vmem>>, vector<1x4x4x32xf32>
    %9 = vector.shape_cast %8 : vector<1x4x4x32xf32> to vector<4x4x32xf32>
    %10 = vector.shape_cast %9 : vector<4x4x32xf32> to vector<16x32xf32>
    %11 = arith.truncf %10 : vector<16x32xf32> to vector<16x32xbf16>
    %c32 = arith.constant 32 : index
    %c0_9 = arith.constant 0 : index
    %12 = vector.load %arg2[%c32, %c0_9] : memref<128x16xbf16, #tpu.memory_space<vmem>>, vector<32x16xbf16>
    %cst_10 = arith.constant dense<0.000000e+00> : vector<16x16xf32>
    %13 = tpu.matmul %11, %12, %cst_10 {dimension_numbers = #tpu.dot_dimension_numbers<[1], [0], [0], [1], [0, 0, 1, 1], [], []>} : vector<16x32xbf16>, vector<32x16xbf16>, vector<16x16xf32> -> vector<16x16xf32>
    %14 = arith.addf %7, %13 : vector<16x16xf32>
    %c0_11 = arith.constant 0 : index
    %c1_12 = arith.constant 1 : index
    %c0_13 = arith.constant 0 : index
    %c0_14 = arith.constant 0 : index
    %15 = vector.load %arg1[%c0_11, %c1_12, %c0_13, %c0_14] : memref<1x5x5x32xf32, #tpu.memory_space<vmem>>, vector<1x4x4x32xf32>
    %16 = vector.shape_cast %15 : vector<1x4x4x32xf32> to vector<4x4x32xf32>
    %17 = vector.shape_cast %16 : vector<4x4x32xf32> to vector<16x32xf32>
    %18 = arith.truncf %17 : vector<16x32xf32> to vector<16x32xbf16>
    %c64 = arith.constant 64 : index
    %c0_15 = arith.constant 0 : index
    %19 = vector.load %arg2[%c64, %c0_15] : memref<128x16xbf16, #tpu.memory_space<vmem>>, vector<32x16xbf16>
    %cst_16 = arith.constant dense<0.000000e+00> : vector<16x16xf32>
    %20 = tpu.matmul %18, %19, %cst_16 {dimension_numbers = #tpu.dot_dimension_numbers<[1], [0], [0], [1], [0, 0, 1, 1], [], []>} : vector<16x32xbf16>, vector<32x16xbf16>, vector<16x16xf32> -> vector<16x16xf32>
    %21 = arith.addf %14, %20 : vector<16x16xf32>
    %c0_17 = arith.constant 0 : index
    %c1_18 = arith.constant 1 : index
    %c1_19 = arith.constant 1 : index
    %c0_20 = arith.constant 0 : index
    %22 = vector.load %arg1[%c0_17, %c1_18, %c1_19, %c0_20] : memref<1x5x5x32xf32, #tpu.memory_space<vmem>>, vector<1x4x4x32xf32>
    %23 = vector.shape_cast %22 : vector<1x4x4x32xf32> to vector<4x4x32xf32>
    %24 = vector.shape_cast %23 : vector<4x4x32xf32> to vector<16x32xf32>
    %25 = arith.truncf %24 : vector<16x32xf32> to vector<16x32xbf16>
    %c96 = arith.constant 96 : index
    %c0_21 = arith.constant 0 : index
    %26 = vector.load %arg2[%c96, %c0_21] : memref<128x16xbf16, #tpu.memory_space<vmem>>, vector<32x16xbf16>
    %cst_22 = arith.constant dense<0.000000e+00> : vector<16x16xf32>
    %27 = tpu.matmul %25, %26, %cst_22 {dimension_numbers = #tpu.dot_dimension_numbers<[1], [0], [0], [1], [0, 0, 1, 1], [], []>} : vector<16x32xbf16>, vector<32x16xbf16>, vector<16x16xf32> -> vector<16x16xf32>
    %28 = arith.addf %21, %27 : vector<16x16xf32>
    %c0_23 = arith.constant 0 : index
    %c0_24 = arith.constant 0 : index
    %29 = vector.load %arg3[%c0_23, %c0_24] : memref<1x16xf32, #tpu.memory_space<vmem>>, vector<1x16xf32>
    %30 = vector.broadcast %29 : vector<1x16xf32> to vector<16x16xf32>
    %31 = arith.addf %28, %30 : vector<16x16xf32>
    %cst_25 = arith.constant 0.000000e+00 : f32
    %32 = vector.broadcast %cst_25 : f32 to vector<16x16xf32>
    %33 = arith.maximumf %31, %32 : vector<16x16xf32>
    %34 = vector.shape_cast %33 : vector<16x16xf32> to vector<1x4x4x16xf32>
    %c0_26 = arith.constant 0 : index
    %c0_27 = arith.constant 0 : index
    %c0_28 = arith.constant 0 : index
    %c0_29 = arith.constant 0 : index
    %35 = vector.load %arg4[%c0_26, %c0_27, %c0_28, %c0_29] : memref<1x4x4x16xf32, #tpu.memory_space<vmem>>, vector<1x4x4x16xf32>
    tpu.vector_store %arg4[%c0_26, %c0_27, %c0_28, %c0_29], %34 {strides = array<i32>} : memref<1x4x4x16xf32, #tpu.memory_space<vmem>>, vector<1x4x4x16xf32>,
    return
  }
  func.func @transform_0(%arg0: i32) -> (i32, i32, i32, i32) {
    %c0_i32 = arith.constant 0 : i32
    %c0_i32_0 = arith.constant 0 : i32
    %c0_i32_1 = arith.constant 0 : i32
    %c0_i32_2 = arith.constant 0 : i32
    return %arg0, %c0_i32, %c0_i32_0, %c0_i32_1 : i32, i32, i32, i32
  }
  func.func @transform_1(%arg0: i32) -> (i32, i32) {
    %c0_i32 = arith.constant 0 : i32
    %c0_i32_0 = arith.constant 0 : i32
    %c0_i32_1 = arith.constant 0 : i32
    return %c0_i32, %c0_i32_0 : i32, i32
  }
  func.func @transform_2(%arg0: i32) -> (i32, i32) {
    %c0_i32 = arith.constant 0 : i32
    %c0_i32_0 = arith.constant 0 : i32
    %c0_i32_1 = arith.constant 0 : i32
    return %c0_i32, %c0_i32_0 : i32, i32
  }
  func.func @transform_3(%arg0: i32) -> (i32, i32, i32, i32) {
    %c0_i32 = arith.constant 0 : i32
    %c0_i32_0 = arith.constant 0 : i32
    %c0_i32_1 = arith.constant 0 : i32
    %c0_i32_2 = arith.constant 0 : i32
    return %arg0, %c0_i32, %c0_i32_0, %c0_i32_1 : i32, i32, i32, i32
  }
}

module attributes {stable_mosaic.version = 11 : i64} {
  func.func @_conv_tap_kernel(%arg0: i32, %arg1: memref<1x3x3x64xf32, #tpu.memory_space<vmem>>, %arg2: memref<256x32xbf16, #tpu.memory_space<vmem>>, %arg3: memref<1x32xf32, #tpu.memory_space<vmem>>, %arg4: memref<1x2x2x32xf32, #tpu.memory_space<vmem>>) attributes {dimension_semantics = [#tpu.dimension_semantics<parallel>], iteration_bounds = array<i64: 2>, scalar_prefetch = 0 : i64, scratch_operands = 0 : i64, tpu.core_type = #tpu.core_type<tc>, window_params = [{transform_indices = @transform_0, window_bounds = array<i64: 1, 3, 3, 64>}, {pipeline_mode = #tpu.pipeline_mode<synchronous>, transform_indices = @transform_1, window_bounds = array<i64: 256, 32>}, {pipeline_mode = #tpu.pipeline_mode<synchronous>, transform_indices = @transform_2, window_bounds = array<i64: 1, 32>}, {transform_indices = @transform_3, window_bounds = array<i64: 1, 2, 2, 32>}]} {
    %cst = arith.constant 0.000000e+00 : f32
    %0 = vector.broadcast %cst : f32 to vector<4x32xf32>
    %c0 = arith.constant 0 : index
    %c0_0 = arith.constant 0 : index
    %c0_1 = arith.constant 0 : index
    %c0_2 = arith.constant 0 : index
    %1 = vector.load %arg1[%c0, %c0_0, %c0_1, %c0_2] : memref<1x3x3x64xf32, #tpu.memory_space<vmem>>, vector<1x2x2x64xf32>
    %2 = vector.shape_cast %1 : vector<1x2x2x64xf32> to vector<2x2x64xf32>
    %3 = vector.shape_cast %2 : vector<2x2x64xf32> to vector<4x64xf32>
    %4 = arith.truncf %3 : vector<4x64xf32> to vector<4x64xbf16>
    %c0_3 = arith.constant 0 : index
    %c0_4 = arith.constant 0 : index
    %5 = vector.load %arg2[%c0_3, %c0_4] : memref<256x32xbf16, #tpu.memory_space<vmem>>, vector<64x32xbf16>
    %cst_5 = arith.constant dense<0.000000e+00> : vector<4x32xf32>
    %6 = tpu.matmul %4, %5, %cst_5 {dimension_numbers = #tpu.dot_dimension_numbers<[1], [0], [0], [1], [0, 0, 1, 1], [], []>} : vector<4x64xbf16>, vector<64x32xbf16>, vector<4x32xf32> -> vector<4x32xf32>
    %7 = arith.addf %0, %6 : vector<4x32xf32>
    %c0_6 = arith.constant 0 : index
    %c0_7 = arith.constant 0 : index
    %c1 = arith.constant 1 : index
    %c0_8 = arith.constant 0 : index
    %8 = vector.load %arg1[%c0_6, %c0_7, %c1, %c0_8] : memref<1x3x3x64xf32, #tpu.memory_space<vmem>>, vector<1x2x2x64xf32>
    %9 = vector.shape_cast %8 : vector<1x2x2x64xf32> to vector<2x2x64xf32>
    %10 = vector.shape_cast %9 : vector<2x2x64xf32> to vector<4x64xf32>
    %11 = arith.truncf %10 : vector<4x64xf32> to vector<4x64xbf16>
    %c64 = arith.constant 64 : index
    %c0_9 = arith.constant 0 : index
    %12 = vector.load %arg2[%c64, %c0_9] : memref<256x32xbf16, #tpu.memory_space<vmem>>, vector<64x32xbf16>
    %cst_10 = arith.constant dense<0.000000e+00> : vector<4x32xf32>
    %13 = tpu.matmul %11, %12, %cst_10 {dimension_numbers = #tpu.dot_dimension_numbers<[1], [0], [0], [1], [0, 0, 1, 1], [], []>} : vector<4x64xbf16>, vector<64x32xbf16>, vector<4x32xf32> -> vector<4x32xf32>
    %14 = arith.addf %7, %13 : vector<4x32xf32>
    %c0_11 = arith.constant 0 : index
    %c1_12 = arith.constant 1 : index
    %c0_13 = arith.constant 0 : index
    %c0_14 = arith.constant 0 : index
    %15 = vector.load %arg1[%c0_11, %c1_12, %c0_13, %c0_14] : memref<1x3x3x64xf32, #tpu.memory_space<vmem>>, vector<1x2x2x64xf32>
    %16 = vector.shape_cast %15 : vector<1x2x2x64xf32> to vector<2x2x64xf32>
    %17 = vector.shape_cast %16 : vector<2x2x64xf32> to vector<4x64xf32>
    %18 = arith.truncf %17 : vector<4x64xf32> to vector<4x64xbf16>
    %c128 = arith.constant 128 : index
    %c0_15 = arith.constant 0 : index
    %19 = vector.load %arg2[%c128, %c0_15] : memref<256x32xbf16, #tpu.memory_space<vmem>>, vector<64x32xbf16>
    %cst_16 = arith.constant dense<0.000000e+00> : vector<4x32xf32>
    %20 = tpu.matmul %18, %19, %cst_16 {dimension_numbers = #tpu.dot_dimension_numbers<[1], [0], [0], [1], [0, 0, 1, 1], [], []>} : vector<4x64xbf16>, vector<64x32xbf16>, vector<4x32xf32> -> vector<4x32xf32>
    %21 = arith.addf %14, %20 : vector<4x32xf32>
    %c0_17 = arith.constant 0 : index
    %c1_18 = arith.constant 1 : index
    %c1_19 = arith.constant 1 : index
    %c0_20 = arith.constant 0 : index
    %22 = vector.load %arg1[%c0_17, %c1_18, %c1_19, %c0_20] : memref<1x3x3x64xf32, #tpu.memory_space<vmem>>, vector<1x2x2x64xf32>
    %23 = vector.shape_cast %22 : vector<1x2x2x64xf32> to vector<2x2x64xf32>
    %24 = vector.shape_cast %23 : vector<2x2x64xf32> to vector<4x64xf32>
    %25 = arith.truncf %24 : vector<4x64xf32> to vector<4x64xbf16>
    %c192 = arith.constant 192 : index
    %c0_21 = arith.constant 0 : index
    %26 = vector.load %arg2[%c192, %c0_21] : memref<256x32xbf16, #tpu.memory_space<vmem>>, vector<64x32xbf16>
    %cst_22 = arith.constant dense<0.000000e+00> : vector<4x32xf32>
    %27 = tpu.matmul %25, %26, %cst_22 {dimension_numbers = #tpu.dot_dimension_numbers<[1], [0], [0], [1], [0, 0, 1, 1], [], []>} : vector<4x64xbf16>, vector<64x32xbf16>, vector<4x32xf32> -> vector<4x32xf32>
    %28 = arith.addf %21, %27 : vector<4x32xf32>
    %c0_23 = arith.constant 0 : index
    %c0_24 = arith.constant 0 : index
    %29 = vector.load %arg3[%c0_23, %c0_24] : memref<1x32xf32, #tpu.memory_space<vmem>>, vector<1x32xf32>
    %30 = vector.broadcast %29 : vector<1x32xf32> to vector<4x32xf32>
    %31 = arith.addf %28, %30 : vector<4x32xf32>
    %cst_25 = arith.constant 0.000000e+00 : f32
    %32 = vector.broadcast %cst_25 : f32 to vector<4x32xf32>
    %33 = arith.maximumf %31, %32 : vector<4x32xf32>
    %34 = vector.shape_cast %33 : vector<4x32xf32> to vector<1x2x2x32xf32>
    %c0_26 = arith.constant 0 : index
    %c0_27 = arith.constant 0 : index
    %c0_28 = arith.constant 0 : index
    %c0_29 = arith.constant 0 : index
    %35 = vector.load %arg4[%c0_26, %c0_27, %c0_28, %c0_29] : memref<1x2x2x32xf32, #tpu.memory_space<vmem>>, vector<1x2x2x32xf32>
    tpu.vector_store %arg4[%c0_26, %c0_27, %c0_28, %c0_29], %34 {strides = array<i32>} : memref<1x2x2x32xf32, #tpu.memory_space<vmem>>, vector<1x2x2x32xf32>,
    return
  }
  func.func @transform_0(%arg0: i32) -> (i32, i32, i32, i32) {
    %c0_i32 = arith.constant 0 : i32
    %c0_i32_0 = arith.constant 0 : i32
    %c0_i32_1 = arith.constant 0 : i32
    %c0_i32_2 = arith.constant 0 : i32
    return %arg0, %c0_i32, %c0_i32_0, %c0_i32_1 : i32, i32, i32, i32
  }
  func.func @transform_1(%arg0: i32) -> (i32, i32) {
    %c0_i32 = arith.constant 0 : i32
    %c0_i32_0 = arith.constant 0 : i32
    %c0_i32_1 = arith.constant 0 : i32
    return %c0_i32, %c0_i32_0 : i32, i32
  }
  func.func @transform_2(%arg0: i32) -> (i32, i32) {
    %c0_i32 = arith.constant 0 : i32
    %c0_i32_0 = arith.constant 0 : i32
    %c0_i32_1 = arith.constant 0 : i32
    return %c0_i32, %c0_i32_0 : i32, i32
  }
  func.func @transform_3(%arg0: i32) -> (i32, i32, i32, i32) {
    %c0_i32 = arith.constant 0 : i32
    %c0_i32_0 = arith.constant 0 : i32
    %c0_i32_1 = arith.constant 0 : i32
    %c0_i32_2 = arith.constant 0 : i32
    return %arg0, %c0_i32, %c0_i32_0, %c0_i32_1 : i32, i32, i32, i32
  }
}

module attributes {stable_mosaic.version = 11 : i64} {
  func.func @_fpn_level_kernel(%arg0: i32, %arg1: memref<1x2x2x32xf32, #tpu.memory_space<vmem>>, %arg2: memref<1x2x2x16xf32, #tpu.memory_space<vmem>>, %arg3: memref<32x16xbf16, #tpu.memory_space<vmem>>, %arg4: memref<1x16xf32, #tpu.memory_space<vmem>>, %arg5: memref<144x16xbf16, #tpu.memory_space<vmem>>, %arg6: memref<1x16xf32, #tpu.memory_space<vmem>>, %arg7: memref<1x2x2x16xf32, #tpu.memory_space<vmem>>, %arg8: memref<1x2x2x16xf32, #tpu.memory_space<vmem>>, %arg9: memref<4x4x16xf32, #tpu.memory_space<vmem>>) attributes {dimension_semantics = [#tpu.dimension_semantics<parallel>], iteration_bounds = array<i64: 2>, scalar_prefetch = 0 : i64, scratch_operands = 1 : i64, tpu.core_type = #tpu.core_type<tc>, window_params = [{transform_indices = @transform_0, window_bounds = array<i64: 1, 2, 2, 32>}, {transform_indices = @transform_1, window_bounds = array<i64: 1, 2, 2, 16>}, {pipeline_mode = #tpu.pipeline_mode<synchronous>, transform_indices = @transform_2, window_bounds = array<i64: 32, 16>}, {pipeline_mode = #tpu.pipeline_mode<synchronous>, transform_indices = @transform_3, window_bounds = array<i64: 1, 16>}, {pipeline_mode = #tpu.pipeline_mode<synchronous>, transform_indices = @transform_4, window_bounds = array<i64: 144, 16>}, {pipeline_mode = #tpu.pipeline_mode<synchronous>, transform_indices = @transform_5, window_bounds = array<i64: 1, 16>}, {transform_indices = @transform_6, window_bounds = array<i64: 1, 2, 2, 16>}, {transform_indices = @transform_7, window_bounds = array<i64: 1, 2, 2, 16>}]} {
    %c0 = arith.constant 0 : index
    %c0_0 = arith.constant 0 : index
    %c0_1 = arith.constant 0 : index
    %c0_2 = arith.constant 0 : index
    %0 = vector.load %arg1[%c0, %c0_0, %c0_1, %c0_2] : memref<1x2x2x32xf32, #tpu.memory_space<vmem>>, vector<1x2x2x32xf32>
    %1 = vector.shape_cast %0 : vector<1x2x2x32xf32> to vector<4x32xf32>
    %2 = arith.truncf %1 : vector<4x32xf32> to vector<4x32xbf16>
    %c0_3 = arith.constant 0 : index
    %c0_4 = arith.constant 0 : index
    %3 = vector.load %arg3[%c0_3, %c0_4] : memref<32x16xbf16, #tpu.memory_space<vmem>>, vector<32x16xbf16>
    %cst = arith.constant dense<0.000000e+00> : vector<4x16xf32>
    %4 = tpu.matmul %2, %3, %cst {dimension_numbers = #tpu.dot_dimension_numbers<[1], [0], [0], [1], [0, 0, 1, 1], [], []>} : vector<4x32xbf16>, vector<32x16xbf16>, vector<4x16xf32> -> vector<4x16xf32>
    %c0_5 = arith.constant 0 : index
    %c0_6 = arith.constant 0 : index
    %5 = vector.load %arg4[%c0_5, %c0_6] : memref<1x16xf32, #tpu.memory_space<vmem>>, vector<1x16xf32>
    %6 = vector.broadcast %5 : vector<1x16xf32> to vector<4x16xf32>
    %7 = arith.addf %4, %6 : vector<4x16xf32>
    %c0_7 = arith.constant 0 : index
    %c0_8 = arith.constant 0 : index
    %c0_9 = arith.constant 0 : index
    %c0_10 = arith.constant 0 : index
    %8 = vector.load %arg2[%c0_7, %c0_8, %c0_9, %c0_10] : memref<1x2x2x16xf32, #tpu.memory_space<vmem>>, vector<1x2x2x16xf32>
    %9 = vector.shape_cast %8 : vector<1x2x2x16xf32> to vector<4x16xf32>
    %10 = arith.addf %7, %9 : vector<4x16xf32>
    %11 = vector.shape_cast %10 : vector<4x16xf32> to vector<1x2x2x16xf32>
    %c0_11 = arith.constant 0 : index
    %c0_12 = arith.constant 0 : index
    %c0_13 = arith.constant 0 : index
    %c0_14 = arith.constant 0 : index
    %12 = vector.load %arg7[%c0_11, %c0_12, %c0_13, %c0_14] : memref<1x2x2x16xf32, #tpu.memory_space<vmem>>, vector<1x2x2x16xf32>
    tpu.vector_store %arg7[%c0_11, %c0_12, %c0_13, %c0_14], %11 {strides = array<i32>} : memref<1x2x2x16xf32, #tpu.memory_space<vmem>>, vector<1x2x2x16xf32>,
    %cst_15 = arith.constant 0.000000e+00 : f32
    %13 = vector.broadcast %cst_15 : f32 to vector<4x4x16xf32>
    %c0_16 = arith.constant 0 : index
    %c0_17 = arith.constant 0 : index
    %c0_18 = arith.constant 0 : index
    %14 = vector.load %arg9[%c0_16, %c0_17, %c0_18] : memref<4x4x16xf32, #tpu.memory_space<vmem>>, vector<4x4x16xf32>
    tpu.vector_store %arg9[%c0_16, %c0_17, %c0_18], %13 {strides = array<i32>} : memref<4x4x16xf32, #tpu.memory_space<vmem>>, vector<4x4x16xf32>,
    %15 = vector.shape_cast %10 : vector<4x16xf32> to vector<2x2x16xf32>
    %c1 = arith.constant 1 : index
    %c1_19 = arith.constant 1 : index
    %c0_20 = arith.constant 0 : index
    %16 = vector.load %arg9[%c1, %c1_19, %c0_20] : memref<4x4x16xf32, #tpu.memory_space<vmem>>, vector<2x2x16xf32>
    tpu.vector_store %arg9[%c1, %c1_19, %c0_20], %15 {strides = array<i32>} : memref<4x4x16xf32, #tpu.memory_space<vmem>>, vector<2x2x16xf32>,
    %cst_21 = arith.constant 0.000000e+00 : f32
    %17 = vector.broadcast %cst_21 : f32 to vector<4x16xf32>
    %c0_22 = arith.constant 0 : index
    %c0_23 = arith.constant 0 : index
    %c0_24 = arith.constant 0 : index
    %18 = vector.load %arg9[%c0_22, %c0_23, %c0_24] : memref<4x4x16xf32, #tpu.memory_space<vmem>>, vector<2x2x16xf32>
    %19 = vector.shape_cast %18 : vector<2x2x16xf32> to vector<4x16xf32>
    %20 = arith.truncf %19 : vector<4x16xf32> to vector<4x16xbf16>
    %c0_25 = arith.constant 0 : index
    %c0_26 = arith.constant 0 : index
    %21 = vector.load %arg5[%c0_25, %c0_26] : memref<144x16xbf16, #tpu.memory_space<vmem>>, vector<16x16xbf16>
    %cst_27 = arith.constant dense<0.000000e+00> : vector<4x16xf32>
    %22 = tpu.matmul %20, %21, %cst_27 {dimension_numbers = #tpu.dot_dimension_numbers<[1], [0], [0], [1], [0, 0, 1, 1], [], []>} : vector<4x16xbf16>, vector<16x16xbf16>, vector<4x16xf32> -> vector<4x16xf32>
    %23 = arith.addf %17, %22 : vector<4x16xf32>
    %c0_28 = arith.constant 0 : index
    %c1_29 = arith.constant 1 : index
    %c0_30 = arith.constant 0 : index
    %24 = vector.load %arg9[%c0_28, %c1_29, %c0_30] : memref<4x4x16xf32, #tpu.memory_space<vmem>>, vector<2x2x16xf32>
    %25 = vector.shape_cast %24 : vector<2x2x16xf32> to vector<4x16xf32>
    %26 = arith.truncf %25 : vector<4x16xf32> to vector<4x16xbf16>
    %c16 = arith.constant 16 : index
    %c0_31 = arith.constant 0 : index
    %27 = vector.load %arg5[%c16, %c0_31] : memref<144x16xbf16, #tpu.memory_space<vmem>>, vector<16x16xbf16>
    %cst_32 = arith.constant dense<0.000000e+00> : vector<4x16xf32>
    %28 = tpu.matmul %26, %27, %cst_32 {dimension_numbers = #tpu.dot_dimension_numbers<[1], [0], [0], [1], [0, 0, 1, 1], [], []>} : vector<4x16xbf16>, vector<16x16xbf16>, vector<4x16xf32> -> vector<4x16xf32>
    %29 = arith.addf %23, %28 : vector<4x16xf32>
    %c0_33 = arith.constant 0 : index
    %c2 = arith.constant 2 : index
    %c0_34 = arith.constant 0 : index
    %30 = vector.load %arg9[%c0_33, %c2, %c0_34] : memref<4x4x16xf32, #tpu.memory_space<vmem>>, vector<2x2x16xf32>
    %31 = vector.shape_cast %30 : vector<2x2x16xf32> to vector<4x16xf32>
    %32 = arith.truncf %31 : vector<4x16xf32> to vector<4x16xbf16>
    %c32 = arith.constant 32 : index
    %c0_35 = arith.constant 0 : index
    %33 = vector.load %arg5[%c32, %c0_35] : memref<144x16xbf16, #tpu.memory_space<vmem>>, vector<16x16xbf16>
    %cst_36 = arith.constant dense<0.000000e+00> : vector<4x16xf32>
    %34 = tpu.matmul %32, %33, %cst_36 {dimension_numbers = #tpu.dot_dimension_numbers<[1], [0], [0], [1], [0, 0, 1, 1], [], []>} : vector<4x16xbf16>, vector<16x16xbf16>, vector<4x16xf32> -> vector<4x16xf32>
    %35 = arith.addf %29, %34 : vector<4x16xf32>
    %c1_37 = arith.constant 1 : index
    %c0_38 = arith.constant 0 : index
    %c0_39 = arith.constant 0 : index
    %36 = vector.load %arg9[%c1_37, %c0_38, %c0_39] : memref<4x4x16xf32, #tpu.memory_space<vmem>>, vector<2x2x16xf32>
    %37 = vector.shape_cast %36 : vector<2x2x16xf32> to vector<4x16xf32>
    %38 = arith.truncf %37 : vector<4x16xf32> to vector<4x16xbf16>
    %c48 = arith.constant 48 : index
    %c0_40 = arith.constant 0 : index
    %39 = vector.load %arg5[%c48, %c0_40] : memref<144x16xbf16, #tpu.memory_space<vmem>>, vector<16x16xbf16>
    %cst_41 = arith.constant dense<0.000000e+00> : vector<4x16xf32>
    %40 = tpu.matmul %38, %39, %cst_41 {dimension_numbers = #tpu.dot_dimension_numbers<[1], [0], [0], [1], [0, 0, 1, 1], [], []>} : vector<4x16xbf16>, vector<16x16xbf16>, vector<4x16xf32> -> vector<4x16xf32>
    %41 = arith.addf %35, %40 : vector<4x16xf32>
    %c1_42 = arith.constant 1 : index
    %c1_43 = arith.constant 1 : index
    %c0_44 = arith.constant 0 : index
    %42 = vector.load %arg9[%c1_42, %c1_43, %c0_44] : memref<4x4x16xf32, #tpu.memory_space<vmem>>, vector<2x2x16xf32>
    %43 = vector.shape_cast %42 : vector<2x2x16xf32> to vector<4x16xf32>
    %44 = arith.truncf %43 : vector<4x16xf32> to vector<4x16xbf16>
    %c64 = arith.constant 64 : index
    %c0_45 = arith.constant 0 : index
    %45 = vector.load %arg5[%c64, %c0_45] : memref<144x16xbf16, #tpu.memory_space<vmem>>, vector<16x16xbf16>
    %cst_46 = arith.constant dense<0.000000e+00> : vector<4x16xf32>
    %46 = tpu.matmul %44, %45, %cst_46 {dimension_numbers = #tpu.dot_dimension_numbers<[1], [0], [0], [1], [0, 0, 1, 1], [], []>} : vector<4x16xbf16>, vector<16x16xbf16>, vector<4x16xf32> -> vector<4x16xf32>
    %47 = arith.addf %41, %46 : vector<4x16xf32>
    %c1_47 = arith.constant 1 : index
    %c2_48 = arith.constant 2 : index
    %c0_49 = arith.constant 0 : index
    %48 = vector.load %arg9[%c1_47, %c2_48, %c0_49] : memref<4x4x16xf32, #tpu.memory_space<vmem>>, vector<2x2x16xf32>
    %49 = vector.shape_cast %48 : vector<2x2x16xf32> to vector<4x16xf32>
    %50 = arith.truncf %49 : vector<4x16xf32> to vector<4x16xbf16>
    %c80 = arith.constant 80 : index
    %c0_50 = arith.constant 0 : index
    %51 = vector.load %arg5[%c80, %c0_50] : memref<144x16xbf16, #tpu.memory_space<vmem>>, vector<16x16xbf16>
    %cst_51 = arith.constant dense<0.000000e+00> : vector<4x16xf32>
    %52 = tpu.matmul %50, %51, %cst_51 {dimension_numbers = #tpu.dot_dimension_numbers<[1], [0], [0], [1], [0, 0, 1, 1], [], []>} : vector<4x16xbf16>, vector<16x16xbf16>, vector<4x16xf32> -> vector<4x16xf32>
    %53 = arith.addf %47, %52 : vector<4x16xf32>
    %c2_52 = arith.constant 2 : index
    %c0_53 = arith.constant 0 : index
    %c0_54 = arith.constant 0 : index
    %54 = vector.load %arg9[%c2_52, %c0_53, %c0_54] : memref<4x4x16xf32, #tpu.memory_space<vmem>>, vector<2x2x16xf32>
    %55 = vector.shape_cast %54 : vector<2x2x16xf32> to vector<4x16xf32>
    %56 = arith.truncf %55 : vector<4x16xf32> to vector<4x16xbf16>
    %c96 = arith.constant 96 : index
    %c0_55 = arith.constant 0 : index
    %57 = vector.load %arg5[%c96, %c0_55] : memref<144x16xbf16, #tpu.memory_space<vmem>>, vector<16x16xbf16>
    %cst_56 = arith.constant dense<0.000000e+00> : vector<4x16xf32>
    %58 = tpu.matmul %56, %57, %cst_56 {dimension_numbers = #tpu.dot_dimension_numbers<[1], [0], [0], [1], [0, 0, 1, 1], [], []>} : vector<4x16xbf16>, vector<16x16xbf16>, vector<4x16xf32> -> vector<4x16xf32>
    %59 = arith.addf %53, %58 : vector<4x16xf32>
    %c2_57 = arith.constant 2 : index
    %c1_58 = arith.constant 1 : index
    %c0_59 = arith.constant 0 : index
    %60 = vector.load %arg9[%c2_57, %c1_58, %c0_59] : memref<4x4x16xf32, #tpu.memory_space<vmem>>, vector<2x2x16xf32>
    %61 = vector.shape_cast %60 : vector<2x2x16xf32> to vector<4x16xf32>
    %62 = arith.truncf %61 : vector<4x16xf32> to vector<4x16xbf16>
    %c112 = arith.constant 112 : index
    %c0_60 = arith.constant 0 : index
    %63 = vector.load %arg5[%c112, %c0_60] : memref<144x16xbf16, #tpu.memory_space<vmem>>, vector<16x16xbf16>
    %cst_61 = arith.constant dense<0.000000e+00> : vector<4x16xf32>
    %64 = tpu.matmul %62, %63, %cst_61 {dimension_numbers = #tpu.dot_dimension_numbers<[1], [0], [0], [1], [0, 0, 1, 1], [], []>} : vector<4x16xbf16>, vector<16x16xbf16>, vector<4x16xf32> -> vector<4x16xf32>
    %65 = arith.addf %59, %64 : vector<4x16xf32>
    %c2_62 = arith.constant 2 : index
    %c2_63 = arith.constant 2 : index
    %c0_64 = arith.constant 0 : index
    %66 = vector.load %arg9[%c2_62, %c2_63, %c0_64] : memref<4x4x16xf32, #tpu.memory_space<vmem>>, vector<2x2x16xf32>
    %67 = vector.shape_cast %66 : vector<2x2x16xf32> to vector<4x16xf32>
    %68 = arith.truncf %67 : vector<4x16xf32> to vector<4x16xbf16>
    %c128 = arith.constant 128 : index
    %c0_65 = arith.constant 0 : index
    %69 = vector.load %arg5[%c128, %c0_65] : memref<144x16xbf16, #tpu.memory_space<vmem>>, vector<16x16xbf16>
    %cst_66 = arith.constant dense<0.000000e+00> : vector<4x16xf32>
    %70 = tpu.matmul %68, %69, %cst_66 {dimension_numbers = #tpu.dot_dimension_numbers<[1], [0], [0], [1], [0, 0, 1, 1], [], []>} : vector<4x16xbf16>, vector<16x16xbf16>, vector<4x16xf32> -> vector<4x16xf32>
    %71 = arith.addf %65, %70 : vector<4x16xf32>
    %c0_67 = arith.constant 0 : index
    %c0_68 = arith.constant 0 : index
    %72 = vector.load %arg6[%c0_67, %c0_68] : memref<1x16xf32, #tpu.memory_space<vmem>>, vector<1x16xf32>
    %73 = vector.broadcast %72 : vector<1x16xf32> to vector<4x16xf32>
    %74 = arith.addf %71, %73 : vector<4x16xf32>
    %75 = vector.shape_cast %74 : vector<4x16xf32> to vector<1x2x2x16xf32>
    %c0_69 = arith.constant 0 : index
    %c0_70 = arith.constant 0 : index
    %c0_71 = arith.constant 0 : index
    %c0_72 = arith.constant 0 : index
    %76 = vector.load %arg8[%c0_69, %c0_70, %c0_71, %c0_72] : memref<1x2x2x16xf32, #tpu.memory_space<vmem>>, vector<1x2x2x16xf32>
    tpu.vector_store %arg8[%c0_69, %c0_70, %c0_71, %c0_72], %75 {strides = array<i32>} : memref<1x2x2x16xf32, #tpu.memory_space<vmem>>, vector<1x2x2x16xf32>,
    return
  }
  func.func @transform_0(%arg0: i32) -> (i32, i32, i32, i32) {
    %c0_i32 = arith.constant 0 : i32
    %c0_i32_0 = arith.constant 0 : i32
    %c0_i32_1 = arith.constant 0 : i32
    %c0_i32_2 = arith.constant 0 : i32
    return %arg0, %c0_i32, %c0_i32_0, %c0_i32_1 : i32, i32, i32, i32
  }
  func.func @transform_1(%arg0: i32) -> (i32, i32, i32, i32) {
    %c0_i32 = arith.constant 0 : i32
    %c0_i32_0 = arith.constant 0 : i32
    %c0_i32_1 = arith.constant 0 : i32
    %c0_i32_2 = arith.constant 0 : i32
    return %arg0, %c0_i32, %c0_i32_0, %c0_i32_1 : i32, i32, i32, i32
  }
  func.func @transform_2(%arg0: i32) -> (i32, i32) {
    %c0_i32 = arith.constant 0 : i32
    %c0_i32_0 = arith.constant 0 : i32
    %c0_i32_1 = arith.constant 0 : i32
    return %c0_i32, %c0_i32_0 : i32, i32
  }
  func.func @transform_3(%arg0: i32) -> (i32, i32) {
    %c0_i32 = arith.constant 0 : i32
    %c0_i32_0 = arith.constant 0 : i32
    %c0_i32_1 = arith.constant 0 : i32
    return %c0_i32, %c0_i32_0 : i32, i32
  }
  func.func @transform_4(%arg0: i32) -> (i32, i32) {
    %c0_i32 = arith.constant 0 : i32
    %c0_i32_0 = arith.constant 0 : i32
    %c0_i32_1 = arith.constant 0 : i32
    return %c0_i32, %c0_i32_0 : i32, i32
  }
  func.func @transform_5(%arg0: i32) -> (i32, i32) {
    %c0_i32 = arith.constant 0 : i32
    %c0_i32_0 = arith.constant 0 : i32
    %c0_i32_1 = arith.constant 0 : i32
    return %c0_i32, %c0_i32_0 : i32, i32
  }
  func.func @transform_6(%arg0: i32) -> (i32, i32, i32, i32) {
    %c0_i32 = arith.constant 0 : i32
    %c0_i32_0 = arith.constant 0 : i32
    %c0_i32_1 = arith.constant 0 : i32
    %c0_i32_2 = arith.constant 0 : i32
    return %arg0, %c0_i32, %c0_i32_0, %c0_i32_1 : i32, i32, i32, i32
  }
  func.func @transform_7(%arg0: i32) -> (i32, i32, i32, i32) {
    %c0_i32 = arith.constant 0 : i32
    %c0_i32_0 = arith.constant 0 : i32
    %c0_i32_1 = arith.constant 0 : i32
    %c0_i32_2 = arith.constant 0 : i32
    return %arg0, %c0_i32, %c0_i32_0, %c0_i32_1 : i32, i32, i32, i32
  }
}

module attributes {stable_mosaic.version = 11 : i64} {
  func.func @_fpn_level_kernel(%arg0: i32, %arg1: memref<1x4x4x16xf32, #tpu.memory_space<vmem>>, %arg2: memref<1x4x4x16xf32, #tpu.memory_space<vmem>>, %arg3: memref<16x16xbf16, #tpu.memory_space<vmem>>, %arg4: memref<1x16xf32, #tpu.memory_space<vmem>>, %arg5: memref<144x16xbf16, #tpu.memory_space<vmem>>, %arg6: memref<1x16xf32, #tpu.memory_space<vmem>>, %arg7: memref<1x4x4x16xf32, #tpu.memory_space<vmem>>, %arg8: memref<1x4x4x16xf32, #tpu.memory_space<vmem>>, %arg9: memref<6x6x16xf32, #tpu.memory_space<vmem>>) attributes {dimension_semantics = [#tpu.dimension_semantics<parallel>], iteration_bounds = array<i64: 2>, scalar_prefetch = 0 : i64, scratch_operands = 1 : i64, tpu.core_type = #tpu.core_type<tc>, window_params = [{transform_indices = @transform_0, window_bounds = array<i64: 1, 4, 4, 16>}, {transform_indices = @transform_1, window_bounds = array<i64: 1, 4, 4, 16>}, {pipeline_mode = #tpu.pipeline_mode<synchronous>, transform_indices = @transform_2, window_bounds = array<i64: 16, 16>}, {pipeline_mode = #tpu.pipeline_mode<synchronous>, transform_indices = @transform_3, window_bounds = array<i64: 1, 16>}, {pipeline_mode = #tpu.pipeline_mode<synchronous>, transform_indices = @transform_4, window_bounds = array<i64: 144, 16>}, {pipeline_mode = #tpu.pipeline_mode<synchronous>, transform_indices = @transform_5, window_bounds = array<i64: 1, 16>}, {transform_indices = @transform_6, window_bounds = array<i64: 1, 4, 4, 16>}, {transform_indices = @transform_7, window_bounds = array<i64: 1, 4, 4, 16>}]} {
    %c0 = arith.constant 0 : index
    %c0_0 = arith.constant 0 : index
    %c0_1 = arith.constant 0 : index
    %c0_2 = arith.constant 0 : index
    %0 = vector.load %arg1[%c0, %c0_0, %c0_1, %c0_2] : memref<1x4x4x16xf32, #tpu.memory_space<vmem>>, vector<1x4x4x16xf32>
    %1 = vector.shape_cast %0 : vector<1x4x4x16xf32> to vector<16x16xf32>
    %2 = arith.truncf %1 : vector<16x16xf32> to vector<16x16xbf16>
    %c0_3 = arith.constant 0 : index
    %c0_4 = arith.constant 0 : index
    %3 = vector.load %arg3[%c0_3, %c0_4] : memref<16x16xbf16, #tpu.memory_space<vmem>>, vector<16x16xbf16>
    %cst = arith.constant dense<0.000000e+00> : vector<16x16xf32>
    %4 = tpu.matmul %2, %3, %cst {dimension_numbers = #tpu.dot_dimension_numbers<[1], [0], [0], [1], [0, 0, 1, 1], [], []>} : vector<16x16xbf16>, vector<16x16xbf16>, vector<16x16xf32> -> vector<16x16xf32>
    %c0_5 = arith.constant 0 : index
    %c0_6 = arith.constant 0 : index
    %5 = vector.load %arg4[%c0_5, %c0_6] : memref<1x16xf32, #tpu.memory_space<vmem>>, vector<1x16xf32>
    %6 = vector.broadcast %5 : vector<1x16xf32> to vector<16x16xf32>
    %7 = arith.addf %4, %6 : vector<16x16xf32>
    %c0_7 = arith.constant 0 : index
    %c0_8 = arith.constant 0 : index
    %c0_9 = arith.constant 0 : index
    %c0_10 = arith.constant 0 : index
    %8 = vector.load %arg2[%c0_7, %c0_8, %c0_9, %c0_10] : memref<1x4x4x16xf32, #tpu.memory_space<vmem>>, vector<1x4x4x16xf32>
    %9 = vector.shape_cast %8 : vector<1x4x4x16xf32> to vector<16x16xf32>
    %10 = arith.addf %7, %9 : vector<16x16xf32>
    %11 = vector.shape_cast %10 : vector<16x16xf32> to vector<1x4x4x16xf32>
    %c0_11 = arith.constant 0 : index
    %c0_12 = arith.constant 0 : index
    %c0_13 = arith.constant 0 : index
    %c0_14 = arith.constant 0 : index
    %12 = vector.load %arg7[%c0_11, %c0_12, %c0_13, %c0_14] : memref<1x4x4x16xf32, #tpu.memory_space<vmem>>, vector<1x4x4x16xf32>
    tpu.vector_store %arg7[%c0_11, %c0_12, %c0_13, %c0_14], %11 {strides = array<i32>} : memref<1x4x4x16xf32, #tpu.memory_space<vmem>>, vector<1x4x4x16xf32>,
    %cst_15 = arith.constant 0.000000e+00 : f32
    %13 = vector.broadcast %cst_15 : f32 to vector<6x6x16xf32>
    %c0_16 = arith.constant 0 : index
    %c0_17 = arith.constant 0 : index
    %c0_18 = arith.constant 0 : index
    %14 = vector.load %arg9[%c0_16, %c0_17, %c0_18] : memref<6x6x16xf32, #tpu.memory_space<vmem>>, vector<6x6x16xf32>
    tpu.vector_store %arg9[%c0_16, %c0_17, %c0_18], %13 {strides = array<i32>} : memref<6x6x16xf32, #tpu.memory_space<vmem>>, vector<6x6x16xf32>,
    %15 = vector.shape_cast %10 : vector<16x16xf32> to vector<4x4x16xf32>
    %c1 = arith.constant 1 : index
    %c1_19 = arith.constant 1 : index
    %c0_20 = arith.constant 0 : index
    %16 = vector.load %arg9[%c1, %c1_19, %c0_20] : memref<6x6x16xf32, #tpu.memory_space<vmem>>, vector<4x4x16xf32>
    tpu.vector_store %arg9[%c1, %c1_19, %c0_20], %15 {strides = array<i32>} : memref<6x6x16xf32, #tpu.memory_space<vmem>>, vector<4x4x16xf32>,
    %cst_21 = arith.constant 0.000000e+00 : f32
    %17 = vector.broadcast %cst_21 : f32 to vector<16x16xf32>
    %c0_22 = arith.constant 0 : index
    %c0_23 = arith.constant 0 : index
    %c0_24 = arith.constant 0 : index
    %18 = vector.load %arg9[%c0_22, %c0_23, %c0_24] : memref<6x6x16xf32, #tpu.memory_space<vmem>>, vector<4x4x16xf32>
    %19 = vector.shape_cast %18 : vector<4x4x16xf32> to vector<16x16xf32>
    %20 = arith.truncf %19 : vector<16x16xf32> to vector<16x16xbf16>
    %c0_25 = arith.constant 0 : index
    %c0_26 = arith.constant 0 : index
    %21 = vector.load %arg5[%c0_25, %c0_26] : memref<144x16xbf16, #tpu.memory_space<vmem>>, vector<16x16xbf16>
    %cst_27 = arith.constant dense<0.000000e+00> : vector<16x16xf32>
    %22 = tpu.matmul %20, %21, %cst_27 {dimension_numbers = #tpu.dot_dimension_numbers<[1], [0], [0], [1], [0, 0, 1, 1], [], []>} : vector<16x16xbf16>, vector<16x16xbf16>, vector<16x16xf32> -> vector<16x16xf32>
    %23 = arith.addf %17, %22 : vector<16x16xf32>
    %c0_28 = arith.constant 0 : index
    %c1_29 = arith.constant 1 : index
    %c0_30 = arith.constant 0 : index
    %24 = vector.load %arg9[%c0_28, %c1_29, %c0_30] : memref<6x6x16xf32, #tpu.memory_space<vmem>>, vector<4x4x16xf32>
    %25 = vector.shape_cast %24 : vector<4x4x16xf32> to vector<16x16xf32>
    %26 = arith.truncf %25 : vector<16x16xf32> to vector<16x16xbf16>
    %c16 = arith.constant 16 : index
    %c0_31 = arith.constant 0 : index
    %27 = vector.load %arg5[%c16, %c0_31] : memref<144x16xbf16, #tpu.memory_space<vmem>>, vector<16x16xbf16>
    %cst_32 = arith.constant dense<0.000000e+00> : vector<16x16xf32>
    %28 = tpu.matmul %26, %27, %cst_32 {dimension_numbers = #tpu.dot_dimension_numbers<[1], [0], [0], [1], [0, 0, 1, 1], [], []>} : vector<16x16xbf16>, vector<16x16xbf16>, vector<16x16xf32> -> vector<16x16xf32>
    %29 = arith.addf %23, %28 : vector<16x16xf32>
    %c0_33 = arith.constant 0 : index
    %c2 = arith.constant 2 : index
    %c0_34 = arith.constant 0 : index
    %30 = vector.load %arg9[%c0_33, %c2, %c0_34] : memref<6x6x16xf32, #tpu.memory_space<vmem>>, vector<4x4x16xf32>
    %31 = vector.shape_cast %30 : vector<4x4x16xf32> to vector<16x16xf32>
    %32 = arith.truncf %31 : vector<16x16xf32> to vector<16x16xbf16>
    %c32 = arith.constant 32 : index
    %c0_35 = arith.constant 0 : index
    %33 = vector.load %arg5[%c32, %c0_35] : memref<144x16xbf16, #tpu.memory_space<vmem>>, vector<16x16xbf16>
    %cst_36 = arith.constant dense<0.000000e+00> : vector<16x16xf32>
    %34 = tpu.matmul %32, %33, %cst_36 {dimension_numbers = #tpu.dot_dimension_numbers<[1], [0], [0], [1], [0, 0, 1, 1], [], []>} : vector<16x16xbf16>, vector<16x16xbf16>, vector<16x16xf32> -> vector<16x16xf32>
    %35 = arith.addf %29, %34 : vector<16x16xf32>
    %c1_37 = arith.constant 1 : index
    %c0_38 = arith.constant 0 : index
    %c0_39 = arith.constant 0 : index
    %36 = vector.load %arg9[%c1_37, %c0_38, %c0_39] : memref<6x6x16xf32, #tpu.memory_space<vmem>>, vector<4x4x16xf32>
    %37 = vector.shape_cast %36 : vector<4x4x16xf32> to vector<16x16xf32>
    %38 = arith.truncf %37 : vector<16x16xf32> to vector<16x16xbf16>
    %c48 = arith.constant 48 : index
    %c0_40 = arith.constant 0 : index
    %39 = vector.load %arg5[%c48, %c0_40] : memref<144x16xbf16, #tpu.memory_space<vmem>>, vector<16x16xbf16>
    %cst_41 = arith.constant dense<0.000000e+00> : vector<16x16xf32>
    %40 = tpu.matmul %38, %39, %cst_41 {dimension_numbers = #tpu.dot_dimension_numbers<[1], [0], [0], [1], [0, 0, 1, 1], [], []>} : vector<16x16xbf16>, vector<16x16xbf16>, vector<16x16xf32> -> vector<16x16xf32>
    %41 = arith.addf %35, %40 : vector<16x16xf32>
    %c1_42 = arith.constant 1 : index
    %c1_43 = arith.constant 1 : index
    %c0_44 = arith.constant 0 : index
    %42 = vector.load %arg9[%c1_42, %c1_43, %c0_44] : memref<6x6x16xf32, #tpu.memory_space<vmem>>, vector<4x4x16xf32>
    %43 = vector.shape_cast %42 : vector<4x4x16xf32> to vector<16x16xf32>
    %44 = arith.truncf %43 : vector<16x16xf32> to vector<16x16xbf16>
    %c64 = arith.constant 64 : index
    %c0_45 = arith.constant 0 : index
    %45 = vector.load %arg5[%c64, %c0_45] : memref<144x16xbf16, #tpu.memory_space<vmem>>, vector<16x16xbf16>
    %cst_46 = arith.constant dense<0.000000e+00> : vector<16x16xf32>
    %46 = tpu.matmul %44, %45, %cst_46 {dimension_numbers = #tpu.dot_dimension_numbers<[1], [0], [0], [1], [0, 0, 1, 1], [], []>} : vector<16x16xbf16>, vector<16x16xbf16>, vector<16x16xf32> -> vector<16x16xf32>
    %47 = arith.addf %41, %46 : vector<16x16xf32>
    %c1_47 = arith.constant 1 : index
    %c2_48 = arith.constant 2 : index
    %c0_49 = arith.constant 0 : index
    %48 = vector.load %arg9[%c1_47, %c2_48, %c0_49] : memref<6x6x16xf32, #tpu.memory_space<vmem>>, vector<4x4x16xf32>
    %49 = vector.shape_cast %48 : vector<4x4x16xf32> to vector<16x16xf32>
    %50 = arith.truncf %49 : vector<16x16xf32> to vector<16x16xbf16>
    %c80 = arith.constant 80 : index
    %c0_50 = arith.constant 0 : index
    %51 = vector.load %arg5[%c80, %c0_50] : memref<144x16xbf16, #tpu.memory_space<vmem>>, vector<16x16xbf16>
    %cst_51 = arith.constant dense<0.000000e+00> : vector<16x16xf32>
    %52 = tpu.matmul %50, %51, %cst_51 {dimension_numbers = #tpu.dot_dimension_numbers<[1], [0], [0], [1], [0, 0, 1, 1], [], []>} : vector<16x16xbf16>, vector<16x16xbf16>, vector<16x16xf32> -> vector<16x16xf32>
    %53 = arith.addf %47, %52 : vector<16x16xf32>
    %c2_52 = arith.constant 2 : index
    %c0_53 = arith.constant 0 : index
    %c0_54 = arith.constant 0 : index
    %54 = vector.load %arg9[%c2_52, %c0_53, %c0_54] : memref<6x6x16xf32, #tpu.memory_space<vmem>>, vector<4x4x16xf32>
    %55 = vector.shape_cast %54 : vector<4x4x16xf32> to vector<16x16xf32>
    %56 = arith.truncf %55 : vector<16x16xf32> to vector<16x16xbf16>
    %c96 = arith.constant 96 : index
    %c0_55 = arith.constant 0 : index
    %57 = vector.load %arg5[%c96, %c0_55] : memref<144x16xbf16, #tpu.memory_space<vmem>>, vector<16x16xbf16>
    %cst_56 = arith.constant dense<0.000000e+00> : vector<16x16xf32>
    %58 = tpu.matmul %56, %57, %cst_56 {dimension_numbers = #tpu.dot_dimension_numbers<[1], [0], [0], [1], [0, 0, 1, 1], [], []>} : vector<16x16xbf16>, vector<16x16xbf16>, vector<16x16xf32> -> vector<16x16xf32>
    %59 = arith.addf %53, %58 : vector<16x16xf32>
    %c2_57 = arith.constant 2 : index
    %c1_58 = arith.constant 1 : index
    %c0_59 = arith.constant 0 : index
    %60 = vector.load %arg9[%c2_57, %c1_58, %c0_59] : memref<6x6x16xf32, #tpu.memory_space<vmem>>, vector<4x4x16xf32>
    %61 = vector.shape_cast %60 : vector<4x4x16xf32> to vector<16x16xf32>
    %62 = arith.truncf %61 : vector<16x16xf32> to vector<16x16xbf16>
    %c112 = arith.constant 112 : index
    %c0_60 = arith.constant 0 : index
    %63 = vector.load %arg5[%c112, %c0_60] : memref<144x16xbf16, #tpu.memory_space<vmem>>, vector<16x16xbf16>
    %cst_61 = arith.constant dense<0.000000e+00> : vector<16x16xf32>
    %64 = tpu.matmul %62, %63, %cst_61 {dimension_numbers = #tpu.dot_dimension_numbers<[1], [0], [0], [1], [0, 0, 1, 1], [], []>} : vector<16x16xbf16>, vector<16x16xbf16>, vector<16x16xf32> -> vector<16x16xf32>
    %65 = arith.addf %59, %64 : vector<16x16xf32>
    %c2_62 = arith.constant 2 : index
    %c2_63 = arith.constant 2 : index
    %c0_64 = arith.constant 0 : index
    %66 = vector.load %arg9[%c2_62, %c2_63, %c0_64] : memref<6x6x16xf32, #tpu.memory_space<vmem>>, vector<4x4x16xf32>
    %67 = vector.shape_cast %66 : vector<4x4x16xf32> to vector<16x16xf32>
    %68 = arith.truncf %67 : vector<16x16xf32> to vector<16x16xbf16>
    %c128 = arith.constant 128 : index
    %c0_65 = arith.constant 0 : index
    %69 = vector.load %arg5[%c128, %c0_65] : memref<144x16xbf16, #tpu.memory_space<vmem>>, vector<16x16xbf16>
    %cst_66 = arith.constant dense<0.000000e+00> : vector<16x16xf32>
    %70 = tpu.matmul %68, %69, %cst_66 {dimension_numbers = #tpu.dot_dimension_numbers<[1], [0], [0], [1], [0, 0, 1, 1], [], []>} : vector<16x16xbf16>, vector<16x16xbf16>, vector<16x16xf32> -> vector<16x16xf32>
    %71 = arith.addf %65, %70 : vector<16x16xf32>
    %c0_67 = arith.constant 0 : index
    %c0_68 = arith.constant 0 : index
    %72 = vector.load %arg6[%c0_67, %c0_68] : memref<1x16xf32, #tpu.memory_space<vmem>>, vector<1x16xf32>
    %73 = vector.broadcast %72 : vector<1x16xf32> to vector<16x16xf32>
    %74 = arith.addf %71, %73 : vector<16x16xf32>
    %75 = vector.shape_cast %74 : vector<16x16xf32> to vector<1x4x4x16xf32>
    %c0_69 = arith.constant 0 : index
    %c0_70 = arith.constant 0 : index
    %c0_71 = arith.constant 0 : index
    %c0_72 = arith.constant 0 : index
    %76 = vector.load %arg8[%c0_69, %c0_70, %c0_71, %c0_72] : memref<1x4x4x16xf32, #tpu.memory_space<vmem>>, vector<1x4x4x16xf32>
    tpu.vector_store %arg8[%c0_69, %c0_70, %c0_71, %c0_72], %75 {strides = array<i32>} : memref<1x4x4x16xf32, #tpu.memory_space<vmem>>, vector<1x4x4x16xf32>,
    return
  }
  func.func @transform_0(%arg0: i32) -> (i32, i32, i32, i32) {
    %c0_i32 = arith.constant 0 : i32
    %c0_i32_0 = arith.constant 0 : i32
    %c0_i32_1 = arith.constant 0 : i32
    %c0_i32_2 = arith.constant 0 : i32
    return %arg0, %c0_i32, %c0_i32_0, %c0_i32_1 : i32, i32, i32, i32
  }
  func.func @transform_1(%arg0: i32) -> (i32, i32, i32, i32) {
    %c0_i32 = arith.constant 0 : i32
    %c0_i32_0 = arith.constant 0 : i32
    %c0_i32_1 = arith.constant 0 : i32
    %c0_i32_2 = arith.constant 0 : i32
    return %arg0, %c0_i32, %c0_i32_0, %c0_i32_1 : i32, i32, i32, i32
  }
  func.func @transform_2(%arg0: i32) -> (i32, i32) {
    %c0_i32 = arith.constant 0 : i32
    %c0_i32_0 = arith.constant 0 : i32
    %c0_i32_1 = arith.constant 0 : i32
    return %c0_i32, %c0_i32_0 : i32, i32
  }
  func.func @transform_3(%arg0: i32) -> (i32, i32) {
    %c0_i32 = arith.constant 0 : i32
    %c0_i32_0 = arith.constant 0 : i32
    %c0_i32_1 = arith.constant 0 : i32
    return %c0_i32, %c0_i32_0 : i32, i32
  }
  func.func @transform_4(%arg0: i32) -> (i32, i32) {
    %c0_i32 = arith.constant 0 : i32
    %c0_i32_0 = arith.constant 0 : i32
    %c0_i32_1 = arith.constant 0 : i32
    return %c0_i32, %c0_i32_0 : i32, i32
  }
  func.func @transform_5(%arg0: i32) -> (i32, i32) {
    %c0_i32 = arith.constant 0 : i32
    %c0_i32_0 = arith.constant 0 : i32
    %c0_i32_1 = arith.constant 0 : i32
    return %c0_i32, %c0_i32_0 : i32, i32
  }
  func.func @transform_6(%arg0: i32) -> (i32, i32, i32, i32) {
    %c0_i32 = arith.constant 0 : i32
    %c0_i32_0 = arith.constant 0 : i32
    %c0_i32_1 = arith.constant 0 : i32
    %c0_i32_2 = arith.constant 0 : i32
    return %arg0, %c0_i32, %c0_i32_0, %c0_i32_1 : i32, i32, i32, i32
  }
  func.func @transform_7(%arg0: i32) -> (i32, i32, i32, i32) {
    %c0_i32 = arith.constant 0 : i32
    %c0_i32_0 = arith.constant 0 : i32
    %c0_i32_1 = arith.constant 0 : i32
    %c0_i32_2 = arith.constant 0 : i32
    return %arg0, %c0_i32, %c0_i32_0, %c0_i32_1 : i32, i32, i32, i32
  }
}

module attributes {stable_mosaic.version = 11 : i64} {
  func.func @_fpn_level_kernel(%arg0: i32, %arg1: memref<1x8x8x8xf32, #tpu.memory_space<vmem>>, %arg2: memref<1x8x8x16xf32, #tpu.memory_space<vmem>>, %arg3: memref<8x16xbf16, #tpu.memory_space<vmem>>, %arg4: memref<1x16xf32, #tpu.memory_space<vmem>>, %arg5: memref<144x16xbf16, #tpu.memory_space<vmem>>, %arg6: memref<1x16xf32, #tpu.memory_space<vmem>>, %arg7: memref<1x8x8x16xf32, #tpu.memory_space<vmem>>, %arg8: memref<1x16x64xf32, #tpu.memory_space<vmem>>, %arg9: memref<10x10x16xf32, #tpu.memory_space<vmem>>) attributes {dimension_semantics = [#tpu.dimension_semantics<parallel>], iteration_bounds = array<i64: 2>, scalar_prefetch = 0 : i64, scratch_operands = 1 : i64, tpu.core_type = #tpu.core_type<tc>, window_params = [{transform_indices = @transform_0, window_bounds = array<i64: 1, 8, 8, 8>}, {transform_indices = @transform_1, window_bounds = array<i64: 1, 8, 8, 16>}, {pipeline_mode = #tpu.pipeline_mode<synchronous>, transform_indices = @transform_2, window_bounds = array<i64: 8, 16>}, {pipeline_mode = #tpu.pipeline_mode<synchronous>, transform_indices = @transform_3, window_bounds = array<i64: 1, 16>}, {pipeline_mode = #tpu.pipeline_mode<synchronous>, transform_indices = @transform_4, window_bounds = array<i64: 144, 16>}, {pipeline_mode = #tpu.pipeline_mode<synchronous>, transform_indices = @transform_5, window_bounds = array<i64: 1, 16>}, {transform_indices = @transform_6, window_bounds = array<i64: 1, 8, 8, 16>}, {transform_indices = @transform_7, window_bounds = array<i64: 1, 16, 64>}]} {
    %c0 = arith.constant 0 : index
    %c0_0 = arith.constant 0 : index
    %c0_1 = arith.constant 0 : index
    %c0_2 = arith.constant 0 : index
    %0 = vector.load %arg1[%c0, %c0_0, %c0_1, %c0_2] : memref<1x8x8x8xf32, #tpu.memory_space<vmem>>, vector<1x8x8x8xf32>
    %1 = vector.shape_cast %0 : vector<1x8x8x8xf32> to vector<64x8xf32>
    %2 = arith.truncf %1 : vector<64x8xf32> to vector<64x8xbf16>
    %c0_3 = arith.constant 0 : index
    %c0_4 = arith.constant 0 : index
    %3 = vector.load %arg3[%c0_3, %c0_4] : memref<8x16xbf16, #tpu.memory_space<vmem>>, vector<8x16xbf16>
    %cst = arith.constant dense<0.000000e+00> : vector<64x16xf32>
    %4 = tpu.matmul %2, %3, %cst {dimension_numbers = #tpu.dot_dimension_numbers<[1], [0], [0], [1], [0, 0, 1, 1], [], []>} : vector<64x8xbf16>, vector<8x16xbf16>, vector<64x16xf32> -> vector<64x16xf32>
    %c0_5 = arith.constant 0 : index
    %c0_6 = arith.constant 0 : index
    %5 = vector.load %arg4[%c0_5, %c0_6] : memref<1x16xf32, #tpu.memory_space<vmem>>, vector<1x16xf32>
    %6 = vector.broadcast %5 : vector<1x16xf32> to vector<64x16xf32>
    %7 = arith.addf %4, %6 : vector<64x16xf32>
    %c0_7 = arith.constant 0 : index
    %c0_8 = arith.constant 0 : index
    %c0_9 = arith.constant 0 : index
    %c0_10 = arith.constant 0 : index
    %8 = vector.load %arg2[%c0_7, %c0_8, %c0_9, %c0_10] : memref<1x8x8x16xf32, #tpu.memory_space<vmem>>, vector<1x8x8x16xf32>
    %9 = vector.shape_cast %8 : vector<1x8x8x16xf32> to vector<64x16xf32>
    %10 = arith.addf %7, %9 : vector<64x16xf32>
    %11 = vector.shape_cast %10 : vector<64x16xf32> to vector<1x8x8x16xf32>
    %c0_11 = arith.constant 0 : index
    %c0_12 = arith.constant 0 : index
    %c0_13 = arith.constant 0 : index
    %c0_14 = arith.constant 0 : index
    %12 = vector.load %arg7[%c0_11, %c0_12, %c0_13, %c0_14] : memref<1x8x8x16xf32, #tpu.memory_space<vmem>>, vector<1x8x8x16xf32>
    tpu.vector_store %arg7[%c0_11, %c0_12, %c0_13, %c0_14], %11 {strides = array<i32>} : memref<1x8x8x16xf32, #tpu.memory_space<vmem>>, vector<1x8x8x16xf32>,
    %cst_15 = arith.constant 0.000000e+00 : f32
    %13 = vector.broadcast %cst_15 : f32 to vector<10x10x16xf32>
    %c0_16 = arith.constant 0 : index
    %c0_17 = arith.constant 0 : index
    %c0_18 = arith.constant 0 : index
    %14 = vector.load %arg9[%c0_16, %c0_17, %c0_18] : memref<10x10x16xf32, #tpu.memory_space<vmem>>, vector<10x10x16xf32>
    tpu.vector_store %arg9[%c0_16, %c0_17, %c0_18], %13 {strides = array<i32>} : memref<10x10x16xf32, #tpu.memory_space<vmem>>, vector<10x10x16xf32>,
    %15 = vector.shape_cast %10 : vector<64x16xf32> to vector<8x8x16xf32>
    %c1 = arith.constant 1 : index
    %c1_19 = arith.constant 1 : index
    %c0_20 = arith.constant 0 : index
    %16 = vector.load %arg9[%c1, %c1_19, %c0_20] : memref<10x10x16xf32, #tpu.memory_space<vmem>>, vector<8x8x16xf32>
    tpu.vector_store %arg9[%c1, %c1_19, %c0_20], %15 {strides = array<i32>} : memref<10x10x16xf32, #tpu.memory_space<vmem>>, vector<8x8x16xf32>,
    %cst_21 = arith.constant 0.000000e+00 : f32
    %17 = vector.broadcast %cst_21 : f32 to vector<64x16xf32>
    %c0_22 = arith.constant 0 : index
    %c0_23 = arith.constant 0 : index
    %c0_24 = arith.constant 0 : index
    %18 = vector.load %arg9[%c0_22, %c0_23, %c0_24] : memref<10x10x16xf32, #tpu.memory_space<vmem>>, vector<8x8x16xf32>
    %19 = vector.shape_cast %18 : vector<8x8x16xf32> to vector<64x16xf32>
    %20 = arith.truncf %19 : vector<64x16xf32> to vector<64x16xbf16>
    %c0_25 = arith.constant 0 : index
    %c0_26 = arith.constant 0 : index
    %21 = vector.load %arg5[%c0_25, %c0_26] : memref<144x16xbf16, #tpu.memory_space<vmem>>, vector<16x16xbf16>
    %cst_27 = arith.constant dense<0.000000e+00> : vector<64x16xf32>
    %22 = tpu.matmul %20, %21, %cst_27 {dimension_numbers = #tpu.dot_dimension_numbers<[1], [0], [0], [1], [0, 0, 1, 1], [], []>} : vector<64x16xbf16>, vector<16x16xbf16>, vector<64x16xf32> -> vector<64x16xf32>
    %23 = arith.addf %17, %22 : vector<64x16xf32>
    %c0_28 = arith.constant 0 : index
    %c1_29 = arith.constant 1 : index
    %c0_30 = arith.constant 0 : index
    %24 = vector.load %arg9[%c0_28, %c1_29, %c0_30] : memref<10x10x16xf32, #tpu.memory_space<vmem>>, vector<8x8x16xf32>
    %25 = vector.shape_cast %24 : vector<8x8x16xf32> to vector<64x16xf32>
    %26 = arith.truncf %25 : vector<64x16xf32> to vector<64x16xbf16>
    %c16 = arith.constant 16 : index
    %c0_31 = arith.constant 0 : index
    %27 = vector.load %arg5[%c16, %c0_31] : memref<144x16xbf16, #tpu.memory_space<vmem>>, vector<16x16xbf16>
    %cst_32 = arith.constant dense<0.000000e+00> : vector<64x16xf32>
    %28 = tpu.matmul %26, %27, %cst_32 {dimension_numbers = #tpu.dot_dimension_numbers<[1], [0], [0], [1], [0, 0, 1, 1], [], []>} : vector<64x16xbf16>, vector<16x16xbf16>, vector<64x16xf32> -> vector<64x16xf32>
    %29 = arith.addf %23, %28 : vector<64x16xf32>
    %c0_33 = arith.constant 0 : index
    %c2 = arith.constant 2 : index
    %c0_34 = arith.constant 0 : index
    %30 = vector.load %arg9[%c0_33, %c2, %c0_34] : memref<10x10x16xf32, #tpu.memory_space<vmem>>, vector<8x8x16xf32>
    %31 = vector.shape_cast %30 : vector<8x8x16xf32> to vector<64x16xf32>
    %32 = arith.truncf %31 : vector<64x16xf32> to vector<64x16xbf16>
    %c32 = arith.constant 32 : index
    %c0_35 = arith.constant 0 : index
    %33 = vector.load %arg5[%c32, %c0_35] : memref<144x16xbf16, #tpu.memory_space<vmem>>, vector<16x16xbf16>
    %cst_36 = arith.constant dense<0.000000e+00> : vector<64x16xf32>
    %34 = tpu.matmul %32, %33, %cst_36 {dimension_numbers = #tpu.dot_dimension_numbers<[1], [0], [0], [1], [0, 0, 1, 1], [], []>} : vector<64x16xbf16>, vector<16x16xbf16>, vector<64x16xf32> -> vector<64x16xf32>
    %35 = arith.addf %29, %34 : vector<64x16xf32>
    %c1_37 = arith.constant 1 : index
    %c0_38 = arith.constant 0 : index
    %c0_39 = arith.constant 0 : index
    %36 = vector.load %arg9[%c1_37, %c0_38, %c0_39] : memref<10x10x16xf32, #tpu.memory_space<vmem>>, vector<8x8x16xf32>
    %37 = vector.shape_cast %36 : vector<8x8x16xf32> to vector<64x16xf32>
    %38 = arith.truncf %37 : vector<64x16xf32> to vector<64x16xbf16>
    %c48 = arith.constant 48 : index
    %c0_40 = arith.constant 0 : index
    %39 = vector.load %arg5[%c48, %c0_40] : memref<144x16xbf16, #tpu.memory_space<vmem>>, vector<16x16xbf16>
    %cst_41 = arith.constant dense<0.000000e+00> : vector<64x16xf32>
    %40 = tpu.matmul %38, %39, %cst_41 {dimension_numbers = #tpu.dot_dimension_numbers<[1], [0], [0], [1], [0, 0, 1, 1], [], []>} : vector<64x16xbf16>, vector<16x16xbf16>, vector<64x16xf32> -> vector<64x16xf32>
    %41 = arith.addf %35, %40 : vector<64x16xf32>
    %c1_42 = arith.constant 1 : index
    %c1_43 = arith.constant 1 : index
    %c0_44 = arith.constant 0 : index
    %42 = vector.load %arg9[%c1_42, %c1_43, %c0_44] : memref<10x10x16xf32, #tpu.memory_space<vmem>>, vector<8x8x16xf32>
    %43 = vector.shape_cast %42 : vector<8x8x16xf32> to vector<64x16xf32>
    %44 = arith.truncf %43 : vector<64x16xf32> to vector<64x16xbf16>
    %c64 = arith.constant 64 : index
    %c0_45 = arith.constant 0 : index
    %45 = vector.load %arg5[%c64, %c0_45] : memref<144x16xbf16, #tpu.memory_space<vmem>>, vector<16x16xbf16>
    %cst_46 = arith.constant dense<0.000000e+00> : vector<64x16xf32>
    %46 = tpu.matmul %44, %45, %cst_46 {dimension_numbers = #tpu.dot_dimension_numbers<[1], [0], [0], [1], [0, 0, 1, 1], [], []>} : vector<64x16xbf16>, vector<16x16xbf16>, vector<64x16xf32> -> vector<64x16xf32>
    %47 = arith.addf %41, %46 : vector<64x16xf32>
    %c1_47 = arith.constant 1 : index
    %c2_48 = arith.constant 2 : index
    %c0_49 = arith.constant 0 : index
    %48 = vector.load %arg9[%c1_47, %c2_48, %c0_49] : memref<10x10x16xf32, #tpu.memory_space<vmem>>, vector<8x8x16xf32>
    %49 = vector.shape_cast %48 : vector<8x8x16xf32> to vector<64x16xf32>
    %50 = arith.truncf %49 : vector<64x16xf32> to vector<64x16xbf16>
    %c80 = arith.constant 80 : index
    %c0_50 = arith.constant 0 : index
    %51 = vector.load %arg5[%c80, %c0_50] : memref<144x16xbf16, #tpu.memory_space<vmem>>, vector<16x16xbf16>
    %cst_51 = arith.constant dense<0.000000e+00> : vector<64x16xf32>
    %52 = tpu.matmul %50, %51, %cst_51 {dimension_numbers = #tpu.dot_dimension_numbers<[1], [0], [0], [1], [0, 0, 1, 1], [], []>} : vector<64x16xbf16>, vector<16x16xbf16>, vector<64x16xf32> -> vector<64x16xf32>
    %53 = arith.addf %47, %52 : vector<64x16xf32>
    %c2_52 = arith.constant 2 : index
    %c0_53 = arith.constant 0 : index
    %c0_54 = arith.constant 0 : index
    %54 = vector.load %arg9[%c2_52, %c0_53, %c0_54] : memref<10x10x16xf32, #tpu.memory_space<vmem>>, vector<8x8x16xf32>
    %55 = vector.shape_cast %54 : vector<8x8x16xf32> to vector<64x16xf32>
    %56 = arith.truncf %55 : vector<64x16xf32> to vector<64x16xbf16>
    %c96 = arith.constant 96 : index
    %c0_55 = arith.constant 0 : index
    %57 = vector.load %arg5[%c96, %c0_55] : memref<144x16xbf16, #tpu.memory_space<vmem>>, vector<16x16xbf16>
    %cst_56 = arith.constant dense<0.000000e+00> : vector<64x16xf32>
    %58 = tpu.matmul %56, %57, %cst_56 {dimension_numbers = #tpu.dot_dimension_numbers<[1], [0], [0], [1], [0, 0, 1, 1], [], []>} : vector<64x16xbf16>, vector<16x16xbf16>, vector<64x16xf32> -> vector<64x16xf32>
    %59 = arith.addf %53, %58 : vector<64x16xf32>
    %c2_57 = arith.constant 2 : index
    %c1_58 = arith.constant 1 : index
    %c0_59 = arith.constant 0 : index
    %60 = vector.load %arg9[%c2_57, %c1_58, %c0_59] : memref<10x10x16xf32, #tpu.memory_space<vmem>>, vector<8x8x16xf32>
    %61 = vector.shape_cast %60 : vector<8x8x16xf32> to vector<64x16xf32>
    %62 = arith.truncf %61 : vector<64x16xf32> to vector<64x16xbf16>
    %c112 = arith.constant 112 : index
    %c0_60 = arith.constant 0 : index
    %63 = vector.load %arg5[%c112, %c0_60] : memref<144x16xbf16, #tpu.memory_space<vmem>>, vector<16x16xbf16>
    %cst_61 = arith.constant dense<0.000000e+00> : vector<64x16xf32>
    %64 = tpu.matmul %62, %63, %cst_61 {dimension_numbers = #tpu.dot_dimension_numbers<[1], [0], [0], [1], [0, 0, 1, 1], [], []>} : vector<64x16xbf16>, vector<16x16xbf16>, vector<64x16xf32> -> vector<64x16xf32>
    %65 = arith.addf %59, %64 : vector<64x16xf32>
    %c2_62 = arith.constant 2 : index
    %c2_63 = arith.constant 2 : index
    %c0_64 = arith.constant 0 : index
    %66 = vector.load %arg9[%c2_62, %c2_63, %c0_64] : memref<10x10x16xf32, #tpu.memory_space<vmem>>, vector<8x8x16xf32>
    %67 = vector.shape_cast %66 : vector<8x8x16xf32> to vector<64x16xf32>
    %68 = arith.truncf %67 : vector<64x16xf32> to vector<64x16xbf16>
    %c128 = arith.constant 128 : index
    %c0_65 = arith.constant 0 : index
    %69 = vector.load %arg5[%c128, %c0_65] : memref<144x16xbf16, #tpu.memory_space<vmem>>, vector<16x16xbf16>
    %cst_66 = arith.constant dense<0.000000e+00> : vector<64x16xf32>
    %70 = tpu.matmul %68, %69, %cst_66 {dimension_numbers = #tpu.dot_dimension_numbers<[1], [0], [0], [1], [0, 0, 1, 1], [], []>} : vector<64x16xbf16>, vector<16x16xbf16>, vector<64x16xf32> -> vector<64x16xf32>
    %71 = arith.addf %65, %70 : vector<64x16xf32>
    %c0_67 = arith.constant 0 : index
    %c0_68 = arith.constant 0 : index
    %72 = vector.load %arg6[%c0_67, %c0_68] : memref<1x16xf32, #tpu.memory_space<vmem>>, vector<1x16xf32>
    %73 = vector.broadcast %72 : vector<1x16xf32> to vector<64x16xf32>
    %74 = arith.addf %71, %73 : vector<64x16xf32>
    %75 = tpu.transpose %74, [1, 0] : vector<64x16xf32> -> vector<16x64xf32>
    %76 = vector.shape_cast %75 : vector<16x64xf32> to vector<1x16x64xf32>
    %c0_69 = arith.constant 0 : index
    %c0_70 = arith.constant 0 : index
    %c0_71 = arith.constant 0 : index
    %77 = vector.load %arg8[%c0_69, %c0_70, %c0_71] : memref<1x16x64xf32, #tpu.memory_space<vmem>>, vector<1x16x64xf32>
    tpu.vector_store %arg8[%c0_69, %c0_70, %c0_71], %76 {strides = array<i32>} : memref<1x16x64xf32, #tpu.memory_space<vmem>>, vector<1x16x64xf32>,
    return
  }
  func.func @transform_0(%arg0: i32) -> (i32, i32, i32, i32) {
    %c0_i32 = arith.constant 0 : i32
    %c0_i32_0 = arith.constant 0 : i32
    %c0_i32_1 = arith.constant 0 : i32
    %c0_i32_2 = arith.constant 0 : i32
    return %arg0, %c0_i32, %c0_i32_0, %c0_i32_1 : i32, i32, i32, i32
  }
  func.func @transform_1(%arg0: i32) -> (i32, i32, i32, i32) {
    %c0_i32 = arith.constant 0 : i32
    %c0_i32_0 = arith.constant 0 : i32
    %c0_i32_1 = arith.constant 0 : i32
    %c0_i32_2 = arith.constant 0 : i32
    return %arg0, %c0_i32, %c0_i32_0, %c0_i32_1 : i32, i32, i32, i32
  }
  func.func @transform_2(%arg0: i32) -> (i32, i32) {
    %c0_i32 = arith.constant 0 : i32
    %c0_i32_0 = arith.constant 0 : i32
    %c0_i32_1 = arith.constant 0 : i32
    return %c0_i32, %c0_i32_0 : i32, i32
  }
  func.func @transform_3(%arg0: i32) -> (i32, i32) {
    %c0_i32 = arith.constant 0 : i32
    %c0_i32_0 = arith.constant 0 : i32
    %c0_i32_1 = arith.constant 0 : i32
    return %c0_i32, %c0_i32_0 : i32, i32
  }
  func.func @transform_4(%arg0: i32) -> (i32, i32) {
    %c0_i32 = arith.constant 0 : i32
    %c0_i32_0 = arith.constant 0 : i32
    %c0_i32_1 = arith.constant 0 : i32
    return %c0_i32, %c0_i32_0 : i32, i32
  }
  func.func @transform_5(%arg0: i32) -> (i32, i32) {
    %c0_i32 = arith.constant 0 : i32
    %c0_i32_0 = arith.constant 0 : i32
    %c0_i32_1 = arith.constant 0 : i32
    return %c0_i32, %c0_i32_0 : i32, i32
  }
  func.func @transform_6(%arg0: i32) -> (i32, i32, i32, i32) {
    %c0_i32 = arith.constant 0 : i32
    %c0_i32_0 = arith.constant 0 : i32
    %c0_i32_1 = arith.constant 0 : i32
    %c0_i32_2 = arith.constant 0 : i32
    return %arg0, %c0_i32, %c0_i32_0, %c0_i32_1 : i32, i32, i32, i32
  }
  func.func @transform_7(%arg0: i32) -> (i32, i32, i32) {
    %c0_i32 = arith.constant 0 : i32
    %c0_i32_0 = arith.constant 0 : i32
    %c0_i32_1 = arith.constant 0 : i32
    return %arg0, %c0_i32, %c0_i32_0 : i32, i32, i32
  }
}

module attributes {stable_mosaic.version = 11 : i64} {
  func.func @_fpn_level_kernel(%arg0: i32, %arg1: memref<1x16x16x8xf32, #tpu.memory_space<vmem>>, %arg2: memref<1x16x16x16xf32, #tpu.memory_space<vmem>>, %arg3: memref<8x16xbf16, #tpu.memory_space<vmem>>, %arg4: memref<1x16xf32, #tpu.memory_space<vmem>>, %arg5: memref<144x16xbf16, #tpu.memory_space<vmem>>, %arg6: memref<1x16xf32, #tpu.memory_space<vmem>>, %arg7: memref<1x16x16x16xf32, #tpu.memory_space<vmem>>, %arg8: memref<1x16x256xf32, #tpu.memory_space<vmem>>, %arg9: memref<18x18x16xf32, #tpu.memory_space<vmem>>) attributes {dimension_semantics = [#tpu.dimension_semantics<parallel>], iteration_bounds = array<i64: 2>, scalar_prefetch = 0 : i64, scratch_operands = 1 : i64, tpu.core_type = #tpu.core_type<tc>, window_params = [{transform_indices = @transform_0, window_bounds = array<i64: 1, 16, 16, 8>}, {transform_indices = @transform_1, window_bounds = array<i64: 1, 16, 16, 16>}, {pipeline_mode = #tpu.pipeline_mode<synchronous>, transform_indices = @transform_2, window_bounds = array<i64: 8, 16>}, {pipeline_mode = #tpu.pipeline_mode<synchronous>, transform_indices = @transform_3, window_bounds = array<i64: 1, 16>}, {pipeline_mode = #tpu.pipeline_mode<synchronous>, transform_indices = @transform_4, window_bounds = array<i64: 144, 16>}, {pipeline_mode = #tpu.pipeline_mode<synchronous>, transform_indices = @transform_5, window_bounds = array<i64: 1, 16>}, {transform_indices = @transform_6, window_bounds = array<i64: 1, 16, 16, 16>}, {transform_indices = @transform_7, window_bounds = array<i64: 1, 16, 256>}]} {
    %c0 = arith.constant 0 : index
    %c0_0 = arith.constant 0 : index
    %c0_1 = arith.constant 0 : index
    %c0_2 = arith.constant 0 : index
    %0 = vector.load %arg1[%c0, %c0_0, %c0_1, %c0_2] : memref<1x16x16x8xf32, #tpu.memory_space<vmem>>, vector<1x16x16x8xf32>
    %1 = vector.shape_cast %0 : vector<1x16x16x8xf32> to vector<256x8xf32>
    %2 = arith.truncf %1 : vector<256x8xf32> to vector<256x8xbf16>
    %c0_3 = arith.constant 0 : index
    %c0_4 = arith.constant 0 : index
    %3 = vector.load %arg3[%c0_3, %c0_4] : memref<8x16xbf16, #tpu.memory_space<vmem>>, vector<8x16xbf16>
    %cst = arith.constant dense<0.000000e+00> : vector<256x16xf32>
    %4 = tpu.matmul %2, %3, %cst {dimension_numbers = #tpu.dot_dimension_numbers<[1], [0], [0], [1], [0, 0, 1, 1], [], []>} : vector<256x8xbf16>, vector<8x16xbf16>, vector<256x16xf32> -> vector<256x16xf32>
    %c0_5 = arith.constant 0 : index
    %c0_6 = arith.constant 0 : index
    %5 = vector.load %arg4[%c0_5, %c0_6] : memref<1x16xf32, #tpu.memory_space<vmem>>, vector<1x16xf32>
    %6 = vector.broadcast %5 : vector<1x16xf32> to vector<256x16xf32>
    %7 = arith.addf %4, %6 : vector<256x16xf32>
    %c0_7 = arith.constant 0 : index
    %c0_8 = arith.constant 0 : index
    %c0_9 = arith.constant 0 : index
    %c0_10 = arith.constant 0 : index
    %8 = vector.load %arg2[%c0_7, %c0_8, %c0_9, %c0_10] : memref<1x16x16x16xf32, #tpu.memory_space<vmem>>, vector<1x16x16x16xf32>
    %9 = vector.shape_cast %8 : vector<1x16x16x16xf32> to vector<256x16xf32>
    %10 = arith.addf %7, %9 : vector<256x16xf32>
    %11 = vector.shape_cast %10 : vector<256x16xf32> to vector<1x16x16x16xf32>
    %c0_11 = arith.constant 0 : index
    %c0_12 = arith.constant 0 : index
    %c0_13 = arith.constant 0 : index
    %c0_14 = arith.constant 0 : index
    %12 = vector.load %arg7[%c0_11, %c0_12, %c0_13, %c0_14] : memref<1x16x16x16xf32, #tpu.memory_space<vmem>>, vector<1x16x16x16xf32>
    tpu.vector_store %arg7[%c0_11, %c0_12, %c0_13, %c0_14], %11 {strides = array<i32>} : memref<1x16x16x16xf32, #tpu.memory_space<vmem>>, vector<1x16x16x16xf32>,
    %cst_15 = arith.constant 0.000000e+00 : f32
    %13 = vector.broadcast %cst_15 : f32 to vector<18x18x16xf32>
    %c0_16 = arith.constant 0 : index
    %c0_17 = arith.constant 0 : index
    %c0_18 = arith.constant 0 : index
    %14 = vector.load %arg9[%c0_16, %c0_17, %c0_18] : memref<18x18x16xf32, #tpu.memory_space<vmem>>, vector<18x18x16xf32>
    tpu.vector_store %arg9[%c0_16, %c0_17, %c0_18], %13 {strides = array<i32>} : memref<18x18x16xf32, #tpu.memory_space<vmem>>, vector<18x18x16xf32>,
    %15 = vector.shape_cast %10 : vector<256x16xf32> to vector<16x16x16xf32>
    %c1 = arith.constant 1 : index
    %c1_19 = arith.constant 1 : index
    %c0_20 = arith.constant 0 : index
    %16 = vector.load %arg9[%c1, %c1_19, %c0_20] : memref<18x18x16xf32, #tpu.memory_space<vmem>>, vector<16x16x16xf32>
    tpu.vector_store %arg9[%c1, %c1_19, %c0_20], %15 {strides = array<i32>} : memref<18x18x16xf32, #tpu.memory_space<vmem>>, vector<16x16x16xf32>,
    %cst_21 = arith.constant 0.000000e+00 : f32
    %17 = vector.broadcast %cst_21 : f32 to vector<256x16xf32>
    %c0_22 = arith.constant 0 : index
    %c0_23 = arith.constant 0 : index
    %c0_24 = arith.constant 0 : index
    %18 = vector.load %arg9[%c0_22, %c0_23, %c0_24] : memref<18x18x16xf32, #tpu.memory_space<vmem>>, vector<16x16x16xf32>
    %19 = vector.shape_cast %18 : vector<16x16x16xf32> to vector<256x16xf32>
    %20 = arith.truncf %19 : vector<256x16xf32> to vector<256x16xbf16>
    %c0_25 = arith.constant 0 : index
    %c0_26 = arith.constant 0 : index
    %21 = vector.load %arg5[%c0_25, %c0_26] : memref<144x16xbf16, #tpu.memory_space<vmem>>, vector<16x16xbf16>
    %cst_27 = arith.constant dense<0.000000e+00> : vector<256x16xf32>
    %22 = tpu.matmul %20, %21, %cst_27 {dimension_numbers = #tpu.dot_dimension_numbers<[1], [0], [0], [1], [0, 0, 1, 1], [], []>} : vector<256x16xbf16>, vector<16x16xbf16>, vector<256x16xf32> -> vector<256x16xf32>
    %23 = arith.addf %17, %22 : vector<256x16xf32>
    %c0_28 = arith.constant 0 : index
    %c1_29 = arith.constant 1 : index
    %c0_30 = arith.constant 0 : index
    %24 = vector.load %arg9[%c0_28, %c1_29, %c0_30] : memref<18x18x16xf32, #tpu.memory_space<vmem>>, vector<16x16x16xf32>
    %25 = vector.shape_cast %24 : vector<16x16x16xf32> to vector<256x16xf32>
    %26 = arith.truncf %25 : vector<256x16xf32> to vector<256x16xbf16>
    %c16 = arith.constant 16 : index
    %c0_31 = arith.constant 0 : index
    %27 = vector.load %arg5[%c16, %c0_31] : memref<144x16xbf16, #tpu.memory_space<vmem>>, vector<16x16xbf16>
    %cst_32 = arith.constant dense<0.000000e+00> : vector<256x16xf32>
    %28 = tpu.matmul %26, %27, %cst_32 {dimension_numbers = #tpu.dot_dimension_numbers<[1], [0], [0], [1], [0, 0, 1, 1], [], []>} : vector<256x16xbf16>, vector<16x16xbf16>, vector<256x16xf32> -> vector<256x16xf32>
    %29 = arith.addf %23, %28 : vector<256x16xf32>
    %c0_33 = arith.constant 0 : index
    %c2 = arith.constant 2 : index
    %c0_34 = arith.constant 0 : index
    %30 = vector.load %arg9[%c0_33, %c2, %c0_34] : memref<18x18x16xf32, #tpu.memory_space<vmem>>, vector<16x16x16xf32>
    %31 = vector.shape_cast %30 : vector<16x16x16xf32> to vector<256x16xf32>
    %32 = arith.truncf %31 : vector<256x16xf32> to vector<256x16xbf16>
    %c32 = arith.constant 32 : index
    %c0_35 = arith.constant 0 : index
    %33 = vector.load %arg5[%c32, %c0_35] : memref<144x16xbf16, #tpu.memory_space<vmem>>, vector<16x16xbf16>
    %cst_36 = arith.constant dense<0.000000e+00> : vector<256x16xf32>
    %34 = tpu.matmul %32, %33, %cst_36 {dimension_numbers = #tpu.dot_dimension_numbers<[1], [0], [0], [1], [0, 0, 1, 1], [], []>} : vector<256x16xbf16>, vector<16x16xbf16>, vector<256x16xf32> -> vector<256x16xf32>
    %35 = arith.addf %29, %34 : vector<256x16xf32>
    %c1_37 = arith.constant 1 : index
    %c0_38 = arith.constant 0 : index
    %c0_39 = arith.constant 0 : index
    %36 = vector.load %arg9[%c1_37, %c0_38, %c0_39] : memref<18x18x16xf32, #tpu.memory_space<vmem>>, vector<16x16x16xf32>
    %37 = vector.shape_cast %36 : vector<16x16x16xf32> to vector<256x16xf32>
    %38 = arith.truncf %37 : vector<256x16xf32> to vector<256x16xbf16>
    %c48 = arith.constant 48 : index
    %c0_40 = arith.constant 0 : index
    %39 = vector.load %arg5[%c48, %c0_40] : memref<144x16xbf16, #tpu.memory_space<vmem>>, vector<16x16xbf16>
    %cst_41 = arith.constant dense<0.000000e+00> : vector<256x16xf32>
    %40 = tpu.matmul %38, %39, %cst_41 {dimension_numbers = #tpu.dot_dimension_numbers<[1], [0], [0], [1], [0, 0, 1, 1], [], []>} : vector<256x16xbf16>, vector<16x16xbf16>, vector<256x16xf32> -> vector<256x16xf32>
    %41 = arith.addf %35, %40 : vector<256x16xf32>
    %c1_42 = arith.constant 1 : index
    %c1_43 = arith.constant 1 : index
    %c0_44 = arith.constant 0 : index
    %42 = vector.load %arg9[%c1_42, %c1_43, %c0_44] : memref<18x18x16xf32, #tpu.memory_space<vmem>>, vector<16x16x16xf32>
    %43 = vector.shape_cast %42 : vector<16x16x16xf32> to vector<256x16xf32>
    %44 = arith.truncf %43 : vector<256x16xf32> to vector<256x16xbf16>
    %c64 = arith.constant 64 : index
    %c0_45 = arith.constant 0 : index
    %45 = vector.load %arg5[%c64, %c0_45] : memref<144x16xbf16, #tpu.memory_space<vmem>>, vector<16x16xbf16>
    %cst_46 = arith.constant dense<0.000000e+00> : vector<256x16xf32>
    %46 = tpu.matmul %44, %45, %cst_46 {dimension_numbers = #tpu.dot_dimension_numbers<[1], [0], [0], [1], [0, 0, 1, 1], [], []>} : vector<256x16xbf16>, vector<16x16xbf16>, vector<256x16xf32> -> vector<256x16xf32>
    %47 = arith.addf %41, %46 : vector<256x16xf32>
    %c1_47 = arith.constant 1 : index
    %c2_48 = arith.constant 2 : index
    %c0_49 = arith.constant 0 : index
    %48 = vector.load %arg9[%c1_47, %c2_48, %c0_49] : memref<18x18x16xf32, #tpu.memory_space<vmem>>, vector<16x16x16xf32>
    %49 = vector.shape_cast %48 : vector<16x16x16xf32> to vector<256x16xf32>
    %50 = arith.truncf %49 : vector<256x16xf32> to vector<256x16xbf16>
    %c80 = arith.constant 80 : index
    %c0_50 = arith.constant 0 : index
    %51 = vector.load %arg5[%c80, %c0_50] : memref<144x16xbf16, #tpu.memory_space<vmem>>, vector<16x16xbf16>
    %cst_51 = arith.constant dense<0.000000e+00> : vector<256x16xf32>
    %52 = tpu.matmul %50, %51, %cst_51 {dimension_numbers = #tpu.dot_dimension_numbers<[1], [0], [0], [1], [0, 0, 1, 1], [], []>} : vector<256x16xbf16>, vector<16x16xbf16>, vector<256x16xf32> -> vector<256x16xf32>
    %53 = arith.addf %47, %52 : vector<256x16xf32>
    %c2_52 = arith.constant 2 : index
    %c0_53 = arith.constant 0 : index
    %c0_54 = arith.constant 0 : index
    %54 = vector.load %arg9[%c2_52, %c0_53, %c0_54] : memref<18x18x16xf32, #tpu.memory_space<vmem>>, vector<16x16x16xf32>
    %55 = vector.shape_cast %54 : vector<16x16x16xf32> to vector<256x16xf32>
    %56 = arith.truncf %55 : vector<256x16xf32> to vector<256x16xbf16>
    %c96 = arith.constant 96 : index
    %c0_55 = arith.constant 0 : index
    %57 = vector.load %arg5[%c96, %c0_55] : memref<144x16xbf16, #tpu.memory_space<vmem>>, vector<16x16xbf16>
    %cst_56 = arith.constant dense<0.000000e+00> : vector<256x16xf32>
    %58 = tpu.matmul %56, %57, %cst_56 {dimension_numbers = #tpu.dot_dimension_numbers<[1], [0], [0], [1], [0, 0, 1, 1], [], []>} : vector<256x16xbf16>, vector<16x16xbf16>, vector<256x16xf32> -> vector<256x16xf32>
    %59 = arith.addf %53, %58 : vector<256x16xf32>
    %c2_57 = arith.constant 2 : index
    %c1_58 = arith.constant 1 : index
    %c0_59 = arith.constant 0 : index
    %60 = vector.load %arg9[%c2_57, %c1_58, %c0_59] : memref<18x18x16xf32, #tpu.memory_space<vmem>>, vector<16x16x16xf32>
    %61 = vector.shape_cast %60 : vector<16x16x16xf32> to vector<256x16xf32>
    %62 = arith.truncf %61 : vector<256x16xf32> to vector<256x16xbf16>
    %c112 = arith.constant 112 : index
    %c0_60 = arith.constant 0 : index
    %63 = vector.load %arg5[%c112, %c0_60] : memref<144x16xbf16, #tpu.memory_space<vmem>>, vector<16x16xbf16>
    %cst_61 = arith.constant dense<0.000000e+00> : vector<256x16xf32>
    %64 = tpu.matmul %62, %63, %cst_61 {dimension_numbers = #tpu.dot_dimension_numbers<[1], [0], [0], [1], [0, 0, 1, 1], [], []>} : vector<256x16xbf16>, vector<16x16xbf16>, vector<256x16xf32> -> vector<256x16xf32>
    %65 = arith.addf %59, %64 : vector<256x16xf32>
    %c2_62 = arith.constant 2 : index
    %c2_63 = arith.constant 2 : index
    %c0_64 = arith.constant 0 : index
    %66 = vector.load %arg9[%c2_62, %c2_63, %c0_64] : memref<18x18x16xf32, #tpu.memory_space<vmem>>, vector<16x16x16xf32>
    %67 = vector.shape_cast %66 : vector<16x16x16xf32> to vector<256x16xf32>
    %68 = arith.truncf %67 : vector<256x16xf32> to vector<256x16xbf16>
    %c128 = arith.constant 128 : index
    %c0_65 = arith.constant 0 : index
    %69 = vector.load %arg5[%c128, %c0_65] : memref<144x16xbf16, #tpu.memory_space<vmem>>, vector<16x16xbf16>
    %cst_66 = arith.constant dense<0.000000e+00> : vector<256x16xf32>
    %70 = tpu.matmul %68, %69, %cst_66 {dimension_numbers = #tpu.dot_dimension_numbers<[1], [0], [0], [1], [0, 0, 1, 1], [], []>} : vector<256x16xbf16>, vector<16x16xbf16>, vector<256x16xf32> -> vector<256x16xf32>
    %71 = arith.addf %65, %70 : vector<256x16xf32>
    %c0_67 = arith.constant 0 : index
    %c0_68 = arith.constant 0 : index
    %72 = vector.load %arg6[%c0_67, %c0_68] : memref<1x16xf32, #tpu.memory_space<vmem>>, vector<1x16xf32>
    %73 = vector.broadcast %72 : vector<1x16xf32> to vector<256x16xf32>
    %74 = arith.addf %71, %73 : vector<256x16xf32>
    %75 = tpu.transpose %74, [1, 0] : vector<256x16xf32> -> vector<16x256xf32>
    %76 = vector.shape_cast %75 : vector<16x256xf32> to vector<1x16x256xf32>
    %c0_69 = arith.constant 0 : index
    %c0_70 = arith.constant 0 : index
    %c0_71 = arith.constant 0 : index
    %77 = vector.load %arg8[%c0_69, %c0_70, %c0_71] : memref<1x16x256xf32, #tpu.memory_space<vmem>>, vector<1x16x256xf32>
    tpu.vector_store %arg8[%c0_69, %c0_70, %c0_71], %76 {strides = array<i32>} : memref<1x16x256xf32, #tpu.memory_space<vmem>>, vector<1x16x256xf32>,
    return
  }
  func.func @transform_0(%arg0: i32) -> (i32, i32, i32, i32) {
    %c0_i32 = arith.constant 0 : i32
    %c0_i32_0 = arith.constant 0 : i32
    %c0_i32_1 = arith.constant 0 : i32
    %c0_i32_2 = arith.constant 0 : i32
    return %arg0, %c0_i32, %c0_i32_0, %c0_i32_1 : i32, i32, i32, i32
  }
  func.func @transform_1(%arg0: i32) -> (i32, i32, i32, i32) {
    %c0_i32 = arith.constant 0 : i32
    %c0_i32_0 = arith.constant 0 : i32
    %c0_i32_1 = arith.constant 0 : i32
    %c0_i32_2 = arith.constant 0 : i32
    return %arg0, %c0_i32, %c0_i32_0, %c0_i32_1 : i32, i32, i32, i32
  }
  func.func @transform_2(%arg0: i32) -> (i32, i32) {
    %c0_i32 = arith.constant 0 : i32
    %c0_i32_0 = arith.constant 0 : i32
    %c0_i32_1 = arith.constant 0 : i32
    return %c0_i32, %c0_i32_0 : i32, i32
  }
  func.func @transform_3(%arg0: i32) -> (i32, i32) {
    %c0_i32 = arith.constant 0 : i32
    %c0_i32_0 = arith.constant 0 : i32
    %c0_i32_1 = arith.constant 0 : i32
    return %c0_i32, %c0_i32_0 : i32, i32
  }
  func.func @transform_4(%arg0: i32) -> (i32, i32) {
    %c0_i32 = arith.constant 0 : i32
    %c0_i32_0 = arith.constant 0 : i32
    %c0_i32_1 = arith.constant 0 : i32
    return %c0_i32, %c0_i32_0 : i32, i32
  }
  func.func @transform_5(%arg0: i32) -> (i32, i32) {
    %c0_i32 = arith.constant 0 : i32
    %c0_i32_0 = arith.constant 0 : i32
    %c0_i32_1 = arith.constant 0 : i32
    return %c0_i32, %c0_i32_0 : i32, i32
  }
  func.func @transform_6(%arg0: i32) -> (i32, i32, i32, i32) {
    %c0_i32 = arith.constant 0 : i32
    %c0_i32_0 = arith.constant 0 : i32
    %c0_i32_1 = arith.constant 0 : i32
    %c0_i32_2 = arith.constant 0 : i32
    return %arg0, %c0_i32, %c0_i32_0, %c0_i32_1 : i32, i32, i32, i32
  }
  func.func @transform_7(%arg0: i32) -> (i32, i32, i32) {
    %c0_i32 = arith.constant 0 : i32
    %c0_i32_0 = arith.constant 0 : i32
    %c0_i32_1 = arith.constant 0 : i32
    return %arg0, %c0_i32, %c0_i32_0 : i32, i32, i32
  }
}

</mosaic_0001>

<llo_original>
// kernel: backbone_with_fpn_forward.8
$region0: #{backbone_with_fpn_forward.8}
  #allocation0 [shape = 'u32[]', space=smem, size = 0x4, offset = 0x4, fixed_abs, tag = 'smem constant byte address 0x4 - core index']
  #allocation1 [shape = 'u32[72,128]{1,0:T(1,128)}', space=vmem, size = 0x9000, scoped, tag = 'internal scratch']
  %s0 = inlined_call_operand.vmem [shape: f32[2,17,17,16], index: 0, kind: input, shape index: {}]
  %s1 = inlined_call_operand.vmem [shape: bf16[64,4], index: 1, kind: input, shape index: {}]
  %s2 = inlined_call_operand.vmem [shape: f32[1,4], index: 2, kind: input, shape index: {}]
  %s3 = inlined_call_operand.vmem [shape: f32[2,16,16,4], index: 3, kind: output, shape index: {}]
  %s4 = sld [smem:[#allocation0]]
  $region45: #{backbone_with_fpn_forward.8} parent=0
    _
  %s6 = ssub.s32 1, %s4
  %s7 = scalar_select 0, %s6, %s4
  loop: start=0, step=1, limit=4
  $region2: #{backbone_with_fpn_forward.8} parent=0 // loop_pre_header
    _
  $region3: #{backbone_with_fpn_forward.8} parent=0 // loop_header
    %s9 = sphi 0, %s13
    %p10 = scmp.ge.s32.totalorder %s9, 4
    %s19 = sphi 0, %s21
    %s22 = sphi 0, %s19
    %s23 = sphi 0, %s22
    %s39 = sphi 0, %s23
    %s43 = sphi 0, %s43
    %s45 = sphi 0, %s43
    %s46 = sphi 0, %s45
    %s60 = sphi 0, %s46
    %s64 = sphi 0, %s64
    %s66 = sphi 0, %s64
    %s67 = sphi 0, %s66
    %s81 = sphi 0, %s67
    %s87 = sphi 0, %s89
    %s90 = sphi 0, %s87
    %s91 = sphi 0, %s90
    %s107 = sphi 0, %s91
  $region4: #{backbone_with_fpn_forward.8} parent=0 // loop_header_branch
    %12 = sbr.rel (%p10) target = $region8
  $region5: #{backbone_with_fpn_forward.8} parent=0 // loop_body
    %s14 = ssub.s32 %s9, 1
    %s15 = ssub.s32 %s9, 2
    %s16 = sadd.s32 %s9, 1
    %s17 = ssub.s32 %s9, %s16
    %p18 = scmp.eq.s32.totalorder %s17, 0
    %s20 = sadd.s32 %s19, 1
    %s21 = scalar_select %p18, %s19, %s20
    %p24 = pneg %p18
    %p25 = scmp.eq.s32.totalorder %s9, 1
    %p26 = por %p24, %p25
    %p27 = scmp.ne.s32.totalorder %s19, %s22
    %p28 = scmp.eq.s32.totalorder %s9, 0
    %p29 = por %p27, %p28
    %p30 = scmp.ne.s32.totalorder %s19, %s22
    %p31 = scmp.eq.s32.totalorder %s14, 1
    %p32 = por %p30, %p31
    %p33 = scmp.ne.s32.totalorder %s22, %s23
    %p34 = scmp.eq.s32.totalorder %s14, 0
    %p35 = por %p33, %p34
    %p36 = scmp.ne.s32.totalorder %s22, %s23
    %p37 = scmp.eq.s32.totalorder %s15, 1
    %p38 = por %p36, %p37
    %p40 = scmp.ne.s32.totalorder %s23, %s39
    %p41 = scmp.eq.s32.totalorder %s15, 0
    %p42 = por %p40, %p41
    %s44 = sadd.s32 %s43, 1
    %p47 = scmp.eq.s32.totalorder %s9, 1
    %p48 = scmp.ne.s32.totalorder %s43, %s45
    %p49 = scmp.eq.s32.totalorder %s9, 0
    %p50 = por %p48, %p49
    %p51 = scmp.ne.s32.totalorder %s43, %s45
    %p52 = scmp.eq.s32.totalorder %s14, 1
    %p53 = por %p51, %p52
    %p54 = scmp.ne.s32.totalorder %s45, %s46
    %p55 = scmp.eq.s32.totalorder %s14, 0
    %p56 = por %p54, %p55
    %p57 = scmp.ne.s32.totalorder %s45, %s46
    %p58 = scmp.eq.s32.totalorder %s15, 1
    %p59 = por %p57, %p58
    %p61 = scmp.ne.s32.totalorder %s46, %s60
    %p62 = scmp.eq.s32.totalorder %s15, 0
    %p63 = por %p61, %p62
    %s65 = sadd.s32 %s64, 1
    %p68 = scmp.eq.s32.totalorder %s9, 1
    %p69 = scmp.ne.s32.totalorder %s64, %s66
    %p70 = scmp.eq.s32.totalorder %s9, 0
    %p71 = por %p69, %p70
    %p72 = scmp.ne.s32.totalorder %s64, %s66
    %p73 = scmp.eq.s32.totalorder %s14, 1
    %p74 = por %p72, %p73
    %p75 = scmp.ne.s32.totalorder %s66, %s67
    %p76 = scmp.eq.s32.totalorder %s14, 0
    %p77 = por %p75, %p76
    %p78 = scmp.ne.s32.totalorder %s66, %s67
    %p79 = scmp.eq.s32.totalorder %s15, 1
    %p80 = por %p78, %p79
    %p82 = scmp.ne.s32.totalorder %s67, %s81
    %p83 = scmp.eq.s32.totalorder %s15, 0
    %p84 = por %p82, %p83
    %s85 = ssub.s32 %s9, %s16
    %p86 = scmp.eq.s32.totalorder %s85, 0
    %s88 = sadd.s32 %s87, 1
    %s89 = scalar_select %p86, %s87, %s88
    %p92 = pneg %p86
    %p93 = scmp.eq.s32.totalorder %s9, 1
    %p94 = por %p92, %p93
    %p95 = scmp.ne.s32.totalorder %s87, %s90
    %p96 = scmp.eq.s32.totalorder %s9, 0
    %p97 = por %p95, %p96
    %p98 = scmp.ne.s32.totalorder %s87, %s90
    %p99 = scmp.eq.s32.totalorder %s14, 1
    %p100 = por %p98, %p99
    %p101 = scmp.ne.s32.totalorder %s90, %s91
    %p102 = scmp.eq.s32.totalorder %s14, 0
    %p103 = por %p101, %p102
    %p104 = scmp.ne.s32.totalorder %s90, %s91
    %p105 = scmp.eq.s32.totalorder %s15, 1
    %p106 = por %p104, %p105
    %p108 = scmp.ne.s32.totalorder %s91, %s107
    %p109 = scmp.eq.s32.totalorder %s15, 0
    %p110 = por %p108, %p109
    %p111 = scmp.le.s32.totalorder 1, %s9
    %p112 = scmp.lt.s32.totalorder %s9, 3
    %p113 = pnand %p111, %p112
    %p114 = pneg %p113
    // Predicated region
    $region9: #{backbone_with_fpn_forward.8} parent=5 // pred_check
      _
    $region10: #{backbone_with_fpn_forward.8} parent=5 // pred_check_branch
      %116 = sbr.rel (%p113) target = $region12
    $region11: #{backbone_with_fpn_forward.8} parent=5 // pred_region
      %s117 = ssub.s32 %s9, 1
      // Predicated region
      $region13: #{backbone_with_fpn_forward.8} parent=11 // pred_check
        %p118 = pneg %p56
      $region14: #{backbone_with_fpn_forward.8} parent=11 // pred_check_branch
        %120 = sbr.rel (%p118) target = $region16
      $region15: #{backbone_with_fpn_forward.8} parent=11 // pred_region
        _
      $region16: #{backbone_with_fpn_forward.8} parent=11 // pred_fallthru
        _
      // Predicated region
      $region17: #{backbone_with_fpn_forward.8} parent=11 // pred_check
        %p121 = pneg %p77
      $region18: #{backbone_with_fpn_forward.8} parent=11 // pred_check_branch
        %123 = sbr.rel (%p121) target = $region20
      $region19: #{backbone_with_fpn_forward.8} parent=11 // pred_region
        _
      $region20: #{backbone_with_fpn_forward.8} parent=11 // pred_fallthru
        _
    $region12: #{backbone_with_fpn_forward.8} parent=5 // pred_fallthru
      _
    %p124 = scmp.lt.s32.totalorder %s9, 2
    // Predicated region
    $region21: #{backbone_with_fpn_forward.8} parent=5 // pred_check
      %p125 = pneg %p124
    $region22: #{backbone_with_fpn_forward.8} parent=5 // pred_check_branch
      %127 = sbr.rel (%p125) target = $region24
    $region23: #{backbone_with_fpn_forward.8} parent=5 // pred_region
      // Predicated region
      $region25: #{backbone_with_fpn_forward.8} parent=23 // pred_check
        %p128 = pneg %p29
      $region26: #{backbone_with_fpn_forward.8} parent=23 // pred_check_branch
        %130 = sbr.rel (%p128) target = $region28
      $region27: #{backbone_with_fpn_forward.8} parent=23 // pred_region
        %p131 = scmp.lt.s32.totalorder %s9, 1
        %s132 = scalar_select %p131, %s9, 1
        %s133 = smul.addr %s132, 51
        %s134 = smul.addr %s133, 8
        %s135 = scalar_lea.vmem %s0, %s134
      $region28: #{backbone_with_fpn_forward.8} parent=23 // pred_fallthru
        _
    $region24: #{backbone_with_fpn_forward.8} parent=5 // pred_fallthru
      _
    %p136 = scmp.le.s32.totalorder 1, %s9
    %p137 = scmp.lt.s32.totalorder %s9, 3
    %p138 = pnand %p136, %p137
    %p139 = pneg %p138
    // Predicated region
    $region29: #{backbone_with_fpn_forward.8} parent=5 // pred_check
      _
    $region30: #{backbone_with_fpn_forward.8} parent=5 // pred_check_branch
      %141 = sbr.rel (%p138) target = $region32
    $region31: #{backbone_with_fpn_forward.8} parent=5 // pred_region
      %s142 = ssub.s32 %s9, 1
      %p143 = scmp.lt.s32.totalorder %s14, 1
      %s144 = scalar_select %p143, %s14, 1
      %s145 = smul.addr %s144, 51
      %s146 = smul.addr %s145, 8
      %s147 = scalar_lea.vmem %s0, %s146
      %p148 = pneg %p35
      %p149 = pneg %p32
      %p150 = pneg %p56
      %p151 = pneg %p53
      %p152 = pneg %p77
      %p153 = pneg %p74
      %p154 = pneg %p103
      %p155 = pneg %p100
      %p156 = scmp.lt.s32.totalorder %s14, 1
      %s157 = scalar_select %p156, %s14, 1
      %s158 = smul.addr %s157, 32
      %s159 = smul.addr %s158, 8
      %s160 = scalar_lea.vmem %s3, %s159
      %p161 = scmp.lt.s32.totalorder %s14, 1
      %s162 = scalar_select %p161, %s14, 1
      %s163 = smul.addr %s162, 51
      %s164 = smul.addr %s163, 8
      %s165 = scalar_lea.vmem %s0, %s164
      %p166 = scmp.lt.s32.totalorder %s14, 1
      %s167 = scalar_select %p166, %s14, 1
      %s168 = smul.addr %s167, 32
      %s169 = smul.addr %s168, 8
      %s170 = scalar_lea.vmem %s3, %s169
      %v172 = vld [vmem:[%s165] sm:$0xff]
      %v173 = vld [vmem:[%s165 + $0x8] sm:$0xff]
      %v174 = vld [vmem:[%s165 + $0x18] sm:$0xff]
      %v175 = vld [vmem:[%s165 + $0x20] sm:$0xff]
      %v176 = vld [vmem:[%s165 + $0x30] sm:$0xff]
      %v177 = vld [vmem:[%s165 + $0x38] sm:$0xff]
      %v178 = vld [vmem:[%s165 + $0x48] sm:$0xff]
      %v179 = vld [vmem:[%s165 + $0x50] sm:$0xff]
      %v180 = vld [vmem:[%s165 + $0x60] sm:$0xff]
      %v181 = vld [vmem:[%s165 + $0x68] sm:$0xff]
      %v182 = vld [vmem:[%s165 + $0x78] sm:$0xff]
      %v183 = vld [vmem:[%s165 + $0x80] sm:$0xff]
      %v184 = vld [vmem:[%s165 + $0x90] sm:$0xff]
      %v185 = vld [vmem:[%s165 + $0x98] sm:$0xff]
      %v186 = vld [vmem:[%s165 + $0xa8] sm:$0xff]
      %v187 = vld [vmem:[%s165 + $0xb0] sm:$0xff]
      %v188 = vld [vmem:[%s165 + $0xc0] sm:$0xff]
      %v189 = vld [vmem:[%s165 + $0xc8] sm:$0xff]
      %v190 = vld [vmem:[%s165 + $0xd8] sm:$0xff]
      %v191 = vld [vmem:[%s165 + $0xe0] sm:$0xff]
      %v192 = vld [vmem:[%s165 + $0xf0] sm:$0xff]
      %v193 = vld [vmem:[%s165 + $0xf8] sm:$0xff]
      %v194 = vld [vmem:[%s165 + $0x108] sm:$0xff]
      %v195 = vld [vmem:[%s165 + $0x110] sm:$0xff]
      %v196 = vld [vmem:[%s165 + $0x120] sm:$0xff]
      %v197 = vld [vmem:[%s165 + $0x128] sm:$0xff]
      %v198 = vld [vmem:[%s165 + $0x138] sm:$0xff]
      %v199 = vld [vmem:[%s165 + $0x140] sm:$0xff]
      %v200 = vld [vmem:[%s165 + $0x150] sm:$0xff]
      %v201 = vld [vmem:[%s165 + $0x158] sm:$0xff]
      %v202 = vld [vmem:[%s165 + $0x168] sm:$0xff]
      %v203 = vld [vmem:[%s165 + $0x170] sm:$0xff]
      %v204 = vpack.c.bf16 %v173, %v172
      %v205 = vpack.c.bf16 %v175, %v174
      %v206 = vpack.c.bf16 %v177, %v176
      %v207 = vpack.c.bf16 %v179, %v178
      %v208 = vpack.c.bf16 %v181, %v180
      %v209 = vpack.c.bf16 %v183, %v182
      %v210 = vpack.c.bf16 %v185, %v184
      %v211 = vpack.c.bf16 %v187, %v186
      %v212 = vpack.c.bf16 %v189, %v188
      %v213 = vpack.c.bf16 %v191, %v190
      %v214 = vpack.c.bf16 %v193, %v192
      %v215 = vpack.c.bf16 %v195, %v194
      %v216 = vpack.c.bf16 %v197, %v196
      %v217 = vpack.c.bf16 %v199, %v198
      %v218 = vpack.c.bf16 %v201, %v200
      %v219 = vpack.c.bf16 %v203, %v202
      %v220 = vld [vmem:[%s1] sm:$0xf]
      %v221 = vld [vmem:[%s1 + $0x4] sm:$0xf]
      %v222 = vld [vmem:[%s165 + $0x1] sm:$0xff]
      %v223 = vld [vmem:[%s165 + $0x9] sm:$0xff]
      %v224 = vld [vmem:[%s165 + $0x19] sm:$0xff]
      %v225 = vld [vmem:[%s165 + $0x21] sm:$0xff]
      %v226 = vld [vmem:[%s165 + $0x31] sm:$0xff]
      %v227 = vld [vmem:[%s165 + $0x39] sm:$0xff]
      %v228 = vld [vmem:[%s165 + $0x49] sm:$0xff]
      %v229 = vld [vmem:[%s165 + $0x51] sm:$0xff]
      %v230 = vld [vmem:[%s165 + $0x61] sm:$0xff]
      %v231 = vld [vmem:[%s165 + $0x69] sm:$0xff]
      %v232 = vld [vmem:[%s165 + $0x79] sm:$0xff]
      %v233 = vld [vmem:[%s165 + $0x81] sm:$0xff]
      %v234 = vld [vmem:[%s165 + $0x91] sm:$0xff]
      %v235 = vld [vmem:[%s165 + $0x99] sm:$0xff]
      %v236 = vld [vmem:[%s165 + $0xa9] sm:$0xff]
      %v237 = vld [vmem:[%s165 + $0xb1] sm:$0xff]
      %v238 = vld [vmem:[%s165 + $0xc1] sm:$0xff]
      %v239 = vld [vmem:[%s165 + $0xc9] sm:$0xff]
      %v240 = vld [vmem:[%s165 + $0xd9] sm:$0xff]
      %v241 = vld [vmem:[%s165 + $0xe1] sm:$0xff]
      %v242 = vld [vmem:[%s165 + $0xf1] sm:$0xff]
      %v243 = vld [vmem:[%s165 + $0xf9] sm:$0xff]
      %v244 = vld [vmem:[%s165 + $0x109] sm:$0xff]
      %v245 = vld [vmem:[%s165 + $0x111] sm:$0xff]
      %v246 = vld [vmem:[%s165 + $0x121] sm:$0xff]
      %v247 = vld [vmem:[%s165 + $0x129] sm:$0xff]
      %v248 = vld [vmem:[%s165 + $0x139] sm:$0xff]
      %v249 = vld [vmem:[%s165 + $0x141] sm:$0xff]
      %v250 = vld [vmem:[%s165 + $0x151] sm:$0xff]
      %v251 = vld [vmem:[%s165 + $0x159] sm:$0xff]
      %v252 = vld [vmem:[%s165 + $0x169] sm:$0xff]
      %v253 = vld [vmem:[%s165 + $0x171] sm:$0xff]
      %v254 = vpack.c.bf16 %v223, %v222
      %v255 = vpack.c.bf16 %v225, %v224
      %v256 = vpack.c.bf16 %v227, %v226
      %v257 = vpack.c.bf16 %v229, %v228
      %v258 = vpack.c.bf16 %v231, %v230
      %v259 = vpack.c.bf16 %v233, %v232
      %v260 = vpack.c.bf16 %v235, %v234
      %v261 = vpack.c.bf16 %v237, %v236
      %v262 = vpack.c.bf16 %v239, %v238
      %v263 = vpack.c.bf16 %v241, %v240
      %v264 = vpack.c.bf16 %v243, %v242
      %v265 = vpack.c.bf16 %v245, %v244
      %v266 = vpack.c.bf16 %v247, %v246
      %v267 = vpack.c.bf16 %v249, %v248
      %v268 = vpack.c.bf16 %v251, %v250
      %v269 = vpack.c.bf16 %v253, %v252
      %v270 = vld [vmem:[%s1 + $0x8] sm:$0xf]
      %v271 = vld [vmem:[%s1 + $0xc] sm:$0xf]
      %v274 = vunpack.c.l.b16 %v270
      %v275 = vunpack.c.l.b16 %v271
      %v276 = vpack.c.b16 %v275, %v274
      %vm278 = vcmask 130048
      %v280 = vsel %vm278, %v254, 0
      %v283 = vsel %vm278, %v255, 0
      %v286 = vsel %vm278, %v256, 0
      %v289 = vsel %vm278, %v257, 0
      %v292 = vsel %vm278, %v258, 0
      %v295 = vsel %vm278, %v259, 0
      %v298 = vsel %vm278, %v260, 0
      %v301 = vsel %vm278, %v261, 0
      %v304 = vsel %vm278, %v262, 0
      %v307 = vsel %vm278, %v263, 0
      %v310 = vsel %vm278, %v264, 0
      %v313 = vsel %vm278, %v265, 0
      %v316 = vsel %vm278, %v266, 0
      %v319 = vsel %vm278, %v267, 0
      %v322 = vsel %vm278, %v268, 0
      %v325 = vsel %vm278, %v269, 0
      %327 = vmatpush.bf16.msra.mxu0 0
      %328 = vmatpush.bf16.msra.mxu0 0
      %329 = vmatpush.bf16.msra.mxu0 0
      %330 = vmatpush.bf16.msra.mxu0 0
      %331 = vmatpush.bf16.msra.mxu0 0
      %332 = vmatpush.bf16.msra.mxu0 0
      %333 = vmatpush.bf16.msra.mxu0 0
      %334 = vmatpush.bf16.msra.mxu0 %v276
      %335 = vmatmul.bf16.gmra.mxu0 %v280
      %v336 = vpop.f32.mrf.mxu0
      %v337 = vadd.f32 0.0, %v336
      %v338 = vpop.f32.mrf.mxu0
      %v339 = vadd.f32 0.0, %v338
      %340 = vmatmul.bf16.gmra.mxu0 %v283
      %v341 = vpop.f32.mrf.mxu0
      %v342 = vadd.f32 0.0, %v341
      %v343 = vpop.f32.mrf.mxu0
      %v344 = vadd.f32 0.0, %v343
      %345 = vmatmul.bf16.gmra.mxu0 %v286
      %v346 = vpop.f32.mrf.mxu0
      %v347 = vadd.f32 0.0, %v346
      %v348 = vpop.f32.mrf.mxu0
      %v349 = vadd.f32 0.0, %v348
      %350 = vmatmul.bf16.gmra.mxu0 %v289
      %v351 = vpop.f32.mrf.mxu0
      %v352 = vadd.f32 0.0, %v351
      %v353 = vpop.f32.mrf.mxu0
      %v354 = vadd.f32 0.0, %v353
      %355 = vmatmul.bf16.gmra.mxu0 %v292
      %v356 = vpop.f32.mrf.mxu0
      %v357 = vadd.f32 0.0, %v356
      %v358 = vpop.f32.mrf.mxu0
      %v359 = vadd.f32 0.0, %v358
      %360 = vmatmul.bf16.gmra.mxu0 %v295
      %v361 = vpop.f32.mrf.mxu0
      %v362 = vadd.f32 0.0, %v361
      %v363 = vpop.f32.mrf.mxu0
      %v364 = vadd.f32 0.0, %v363
      %365 = vmatmul.bf16.gmra.mxu0 %v298
      %v366 = vpop.f32.mrf.mxu0
      %v367 = vadd.f32 0.0, %v366
      %v368 = vpop.f32.mrf.mxu0
      %v369 = vadd.f32 0.0, %v368
      %370 = vmatmul.bf16.gmra.mxu0 %v301
      %v371 = vpop.f32.mrf.mxu0
      %v372 = vadd.f32 0.0, %v371
      %v373 = vpop.f32.mrf.mxu0
      %v374 = vadd.f32 0.0, %v373
      %375 = vmatmul.bf16.gmra.mxu0 %v304
      %v376 = vpop.f32.mrf.mxu0
      %v377 = vadd.f32 0.0, %v376
      %v378 = vpop.f32.mrf.mxu0
      %v379 = vadd.f32 0.0, %v378
      %380 = vmatmul.bf16.gmra.mxu0 %v307
      %v381 = vpop.f32.mrf.mxu0
      %v382 = vadd.f32 0.0, %v381
      %v383 = vpop.f32.mrf.mxu0
      %v384 = vadd.f32 0.0, %v383
      %385 = vmatmul.bf16.gmra.mxu0 %v310
      %v386 = vpop.f32.mrf.mxu0
      %v387 = vadd.f32 0.0, %v386
      %v388 = vpop.f32.mrf.mxu0
      %v389 = vadd.f32 0.0, %v388
      %390 = vmatmul.bf16.gmra.mxu0 %v313
      %v391 = vpop.f32.mrf.mxu0
      %v392 = vadd.f32 0.0, %v391
      %v393 = vpop.f32.mrf.mxu0
      %v394 = vadd.f32 0.0, %v393
      %395 = vmatmul.bf16.gmra.mxu0 %v316
      %v396 = vpop.f32.mrf.mxu0
      %v397 = vadd.f32 0.0, %v396
      %v398 = vpop.f32.mrf.mxu0
      %v399 = vadd.f32 0.0, %v398
      %400 = vmatmul.bf16.gmra.mxu0 %v319
      %v401 = vpop.f32.mrf.mxu0
      %v402 = vadd.f32 0.0, %v401
      %v403 = vpop.f32.mrf.mxu0
      %v404 = vadd.f32 0.0, %v403
      %405 = vmatmul.bf16.gmra.mxu0 %v322
      %v406 = vpop.f32.mrf.mxu0
      %v407 = vadd.f32 0.0, %v406
      %v408 = vpop.f32.mrf.mxu0
      %v409 = vadd.f32 0.0, %v408
      %410 = vmatmul.bf16.gmra.mxu0 %v325
      %v411 = vpop.f32.mrf.mxu0
      %v412 = vadd.f32 0.0, %v411
      %v413 = vpop.f32.mrf.mxu0
      %v414 = vadd.f32 0.0, %v413
      %415 = vdwg.mxu0
      %v418 = vunpack.c.l.b16 %v220
      %v419 = vunpack.c.l.b16 %v221
      %v420 = vpack.c.b16 %v419, %v418
      %v423 = vsel %vm278, %v204, 0
      %v426 = vsel %vm278, %v205, 0
      %v429 = vsel %vm278, %v206, 0
      %v432 = vsel %vm278, %v207, 0
      %v435 = vsel %vm278, %v208, 0
      %v438 = vsel %vm278, %v209, 0
      %v441 = vsel %vm278, %v210, 0
      %v444 = vsel %vm278, %v211, 0
      %v447 = vsel %vm278, %v212, 0
      %v450 = vsel %vm278, %v213, 0
      %v453 = vsel %vm278, %v214, 0
      %v456 = vsel %vm278, %v215, 0
      %v459 = vsel %vm278, %v216, 0
      %v462 = vsel %vm278, %v217, 0
      %v465 = vsel %vm278, %v218, 0
      %v468 = vsel %vm278, %v219, 0
      %470 = vmatpush.bf16.msra.mxu0 0
      %471 = vmatpush.bf16.msra.mxu0 0
      %472 = vmatpush.bf16.msra.mxu0 0
      %473 = vmatpush.bf16.msra.mxu0 0
      %474 = vmatpush.bf16.msra.mxu0 0
      %475 = vmatpush.bf16.msra.mxu0 0
      %476 = vmatpush.bf16.msra.mxu0 0
      %477 = vmatpush.bf16.msra.mxu0 %v420
      %478 = vmatmul.bf16.gmra.mxu0 %v423
      %v479 = vpop.f32.mrf.mxu0
      %v480 = vadd.f32 %v337, %v479
      %v481 = vpop.f32.mrf.mxu0
      %v482 = vadd.f32 %v339, %v481
      %483 = vmatmul.bf16.gmra.mxu0 %v426
      %v484 = vpop.f32.mrf.mxu0
      %v485 = vadd.f32 %v342, %v484
      %v486 = vpop.f32.mrf.mxu0
      %v487 = vadd.f32 %v344, %v486
      %488 = vmatmul.bf16.gmra.mxu0 %v429
      %v489 = vpop.f32.mrf.mxu0
      %v490 = vadd.f32 %v347, %v489
      %v491 = vpop.f32.mrf.mxu0
      %v492 = vadd.f32 %v349, %v491
      %493 = vmatmul.bf16.gmra.mxu0 %v432
      %v494 = vpop.f32.mrf.mxu0
      %v495 = vadd.f32 %v352, %v494
      %v496 = vpop.f32.mrf.mxu0
      %v497 = vadd.f32 %v354, %v496
      %498 = vmatmul.bf16.gmra.mxu0 %v435
      %v499 = vpop.f32.mrf.mxu0
      %v500 = vadd.f32 %v357, %v499
      %v501 = vpop.f32.mrf.mxu0
      %v502 = vadd.f32 %v359, %v501
      %503 = vmatmul.bf16.gmra.mxu0 %v438
      %v504 = vpop.f32.mrf.mxu0
      %v505 = vadd.f32 %v362, %v504
      %v506 = vpop.f32.mrf.mxu0
      %v507 = vadd.f32 %v364, %v506
      %508 = vmatmul.bf16.gmra.mxu0 %v441
      %v509 = vpop.f32.mrf.mxu0
      %v510 = vadd.f32 %v367, %v509
      %v511 = vpop.f32.mrf.mxu0
      %v512 = vadd.f32 %v369, %v511
      %513 = vmatmul.bf16.gmra.mxu0 %v444
      %v514 = vpop.f32.mrf.mxu0
      %v515 = vadd.f32 %v372, %v514
      %v516 = vpop.f32.mrf.mxu0
      %v517 = vadd.f32 %v374, %v516
      %518 = vmatmul.bf16.gmra.mxu0 %v447
      %v519 = vpop.f32.mrf.mxu0
      %v520 = vadd.f32 %v377, %v519
      %v521 = vpop.f32.mrf.mxu0
      %v522 = vadd.f32 %v379, %v521
      %523 = vmatmul.bf16.gmra.mxu0 %v450
      %v524 = vpop.f32.mrf.mxu0
      %v525 = vadd.f32 %v382, %v524
      %v526 = vpop.f32.mrf.mxu0
      %v527 = vadd.f32 %v384, %v526
      %528 = vmatmul.bf16.gmra.mxu0 %v453
      %v529 = vpop.f32.mrf.mxu0
      %v530 = vadd.f32 %v387, %v529
      %v531 = vpop.f32.mrf.mxu0
      %v532 = vadd.f32 %v389, %v531
      %533 = vmatmul.bf16.gmra.mxu0 %v456
      %v534 = vpop.f32.mrf.mxu0
      %v535 = vadd.f32 %v392, %v534
      %v536 = vpop.f32.mrf.mxu0
      %v537 = vadd.f32 %v394, %v536
      %538 = vmatmul.bf16.gmra.mxu0 %v459
      %v539 = vpop.f32.mrf.mxu0
      %v540 = vadd.f32 %v397, %v539
      %v541 = vpop.f32.mrf.mxu0
      %v542 = vadd.f32 %v399, %v541
      %543 = vmatmul.bf16.gmra.mxu0 %v462
      %v544 = vpop.f32.mrf.mxu0
      %v545 = vadd.f32 %v402, %v544
      %v546 = vpop.f32.mrf.mxu0
      %v547 = vadd.f32 %v404, %v546
      %548 = vmatmul.bf16.gmra.mxu0 %v465
      %v549 = vpop.f32.mrf.mxu0
      %v550 = vadd.f32 %v407, %v549
      %v551 = vpop.f32.mrf.mxu0
      %v552 = vadd.f32 %v409, %v551
      %553 = vmatmul.bf16.gmra.mxu0 %v468
      %v554 = vpop.f32.mrf.mxu0
      %v555 = vadd.f32 %v412, %v554
      %v556 = vpop.f32.mrf.mxu0
      %v557 = vadd.f32 %v414, %v556
      %558 = vdwg.mxu0
      %s559 = scalar_lea.vmem %s165, 24
      %v560 = vld [vmem:[%s559] sm:$0xff]
      %v561 = vld [vmem:[%s559 + $0x8] sm:$0xff]
      %v562 = vld [vmem:[%s559 + $0x18] sm:$0xff]
      %v563 = vld [vmem:[%s559 + $0x20] sm:$0xff]
      %v564 = vld [vmem:[%s559 + $0x30] sm:$0xff]
      %v565 = vld [vmem:[%s559 + $0x38] sm:$0xff]
      %v566 = vld [vmem:[%s559 + $0x48] sm:$0xff]
      %v567 = vld [vmem:[%s559 + $0x50] sm:$0xff]
      %v568 = vld [vmem:[%s559 + $0x60] sm:$0xff]
      %v569 = vld [vmem:[%s559 + $0x68] sm:$0xff]
      %v570 = vld [vmem:[%s559 + $0x78] sm:$0xff]
      %v571 = vld [vmem:[%s559 + $0x80] sm:$0xff]
      %v572 = vld [vmem:[%s559 + $0x90] sm:$0xff]
      %v573 = vld [vmem:[%s559 + $0x98] sm:$0xff]
      %v574 = vld [vmem:[%s559 + $0xa8] sm:$0xff]
      %v575 = vld [vmem:[%s559 + $0xb0] sm:$0xff]
      %v576 = vld [vmem:[%s559 + $0xc0] sm:$0xff]
      %v577 = vld [vmem:[%s559 + $0xc8] sm:$0xff]
      %v578 = vld [vmem:[%s559 + $0xd8] sm:$0xff]
      %v579 = vld [vmem:[%s559 + $0xe0] sm:$0xff]
      %v580 = vld [vmem:[%s559 + $0xf0] sm:$0xff]
      %v581 = vld [vmem:[%s559 + $0xf8] sm:$0xff]
      %v582 = vld [vmem:[%s559 + $0x108] sm:$0xff]
      %v583 = vld [vmem:[%s559 + $0x110] sm:$0xff]
      %v584 = vld [vmem:[%s559 + $0x120] sm:$0xff]
      %v585 = vld [vmem:[%s559 + $0x128] sm:$0xff]
      %v586 = vld [vmem:[%s559 + $0x138] sm:$0xff]
      %v587 = vld [vmem:[%s559 + $0x140] sm:$0xff]
      %v588 = vld [vmem:[%s559 + $0x150] sm:$0xff]
      %v589 = vld [vmem:[%s559 + $0x158] sm:$0xff]
      %v590 = vld [vmem:[%s559 + $0x168] sm:$0xff]
      %v591 = vld [vmem:[%s559 + $0x170] sm:$0xff]
      %v592 = vpack.c.bf16 %v561, %v560
      %v593 = vpack.c.bf16 %v563, %v562
      %v594 = vpack.c.bf16 %v565, %v564
      %v595 = vpack.c.bf16 %v567, %v566
      %v596 = vpack.c.bf16 %v569, %v568
      %v597 = vpack.c.bf16 %v571, %v570
      %v598 = vpack.c.bf16 %v573, %v572
      %v599 = vpack.c.bf16 %v575, %v574
      %v600 = vpack.c.bf16 %v577, %v576
      %v601 = vpack.c.bf16 %v579, %v578
      %v602 = vpack.c.bf16 %v581, %v580
      %v603 = vpack.c.bf16 %v583, %v582
      %v604 = vpack.c.bf16 %v585, %v584
      %v605 = vpack.c.bf16 %v587, %v586
      %v606 = vpack.c.bf16 %v589, %v588
      %v607 = vpack.c.bf16 %v591, %v590
      %v608 = vld [vmem:[%s1 + $0x10] sm:$0xf]
      %v609 = vld [vmem:[%s1 + $0x14] sm:$0xf]
      %v612 = vunpack.c.l.b16 %v608
      %v613 = vunpack.c.l.b16 %v609
      %v614 = vpack.c.b16 %v613, %v612
      %v617 = vsel %vm278, %v592, 0
      %v620 = vsel %vm278, %v593, 0
      %v623 = vsel %vm278, %v594, 0
      %v626 = vsel %vm278, %v595, 0
      %v629 = vsel %vm278, %v596, 0
      %v632 = vsel %vm278, %v597, 0
      %v635 = vsel %vm278, %v598, 0
      %v638 = vsel %vm278, %v599, 0
      %v641 = vsel %vm278, %v600, 0
      %v644 = vsel %vm278, %v601, 0
      %v647 = vsel %vm278, %v602, 0
      %v650 = vsel %vm278, %v603, 0
      %v653 = vsel %vm278, %v604, 0
      %v656 = vsel %vm278, %v605, 0
      %v659 = vsel %vm278, %v606, 0
      %v662 = vsel %vm278, %v607, 0
      %664 = vmatpush.bf16.msra.mxu0 0
      %665 = vmatpush.bf16.msra.mxu0 0
      %666 = vmatpush.bf16.msra.mxu0 0
      %667 = vmatpush.bf16.msra.mxu0 0
      %668 = vmatpush.bf16.msra.mxu0 0
      %669 = vmatpush.bf16.msra.mxu0 0
      %670 = vmatpush.bf16.msra.mxu0 0
      %671 = vmatpush.bf16.msra.mxu0 %v614
      %672 = vmatmul.bf16.gmra.mxu0 %v617
      %v673 = vpop.f32.mrf.mxu0
      %v674 = vadd.f32 0.0, %v673
      %v675 = vpop.f32.mrf.mxu0
      %v676 = vadd.f32 0.0, %v675
      %677 = vmatmul.bf16.gmra.mxu0 %v620
      %v678 = vpop.f32.mrf.mxu0
      %v679 = vadd.f32 0.0, %v678
      %v680 = vpop.f32.mrf.mxu0
      %v681 = vadd.f32 0.0, %v680
      %682 = vmatmul.bf16.gmra.mxu0 %v623
      %v683 = vpop.f32.mrf.mxu0
      %v684 = vadd.f32 0.0, %v683
      %v685 = vpop.f32.mrf.mxu0
      %v686 = vadd.f32 0.0, %v685
      %687 = vmatmul.bf16.gmra.mxu0 %v626
      %v688 = vpop.f32.mrf.mxu0
      %v689 = vadd.f32 0.0, %v688
      %v690 = vpop.f32.mrf.mxu0
      %v691 = vadd.f32 0.0, %v690
      %692 = vmatmul.bf16.gmra.mxu0 %v629
      %v693 = vpop.f32.mrf.mxu0
      %v694 = vadd.f32 0.0, %v693
      %v695 = vpop.f32.mrf.mxu0
      %v696 = vadd.f32 0.0, %v695
      %697 = vmatmul.bf16.gmra.mxu0 %v632
      %v698 = vpop.f32.mrf.mxu0
      %v699 = vadd.f32 0.0, %v698
      %v700 = vpop.f32.mrf.mxu0
      %v701 = vadd.f32 0.0, %v700
      %702 = vmatmul.bf16.gmra.mxu0 %v635
      %v703 = vpop.f32.mrf.mxu0
      %v704 = vadd.f32 0.0, %v703
      %v705 = vpop.f32.mrf.mxu0
      %v706 = vadd.f32 0.0, %v705
      %707 = vmatmul.bf16.gmra.mxu0 %v638
      %v708 = vpop.f32.mrf.mxu0
      %v709 = vadd.f32 0.0, %v708
      %v710 = vpop.f32.mrf.mxu0
      %v711 = vadd.f32 0.0, %v710
      %712 = vmatmul.bf16.gmra.mxu0 %v641
      %v713 = vpop.f32.mrf.mxu0
      %v714 = vadd.f32 0.0, %v713
      %v715 = vpop.f32.mrf.mxu0
      %v716 = vadd.f32 0.0, %v715
      %717 = vmatmul.bf16.gmra.mxu0 %v644
      %v718 = vpop.f32.mrf.mxu0
      %v719 = vadd.f32 0.0, %v718
      %v720 = vpop.f32.mrf.mxu0
      %v721 = vadd.f32 0.0, %v720
      %722 = vmatmul.bf16.gmra.mxu0 %v647
      %v723 = vpop.f32.mrf.mxu0
      %v724 = vadd.f32 0.0, %v723
      %v725 = vpop.f32.mrf.mxu0
      %v726 = vadd.f32 0.0, %v725
      %727 = vmatmul.bf16.gmra.mxu0 %v650
      %v728 = vpop.f32.mrf.mxu0
      %v729 = vadd.f32 0.0, %v728
      %v730 = vpop.f32.mrf.mxu0
      %v731 = vadd.f32 0.0, %v730
      %732 = vmatmul.bf16.gmra.mxu0 %v653
      %v733 = vpop.f32.mrf.mxu0
      %v734 = vadd.f32 0.0, %v733
      %v735 = vpop.f32.mrf.mxu0
      %v736 = vadd.f32 0.0, %v735
      %737 = vmatmul.bf16.gmra.mxu0 %v656
      %v738 = vpop.f32.mrf.mxu0
      %v739 = vadd.f32 0.0, %v738
      %v740 = vpop.f32.mrf.mxu0
      %v741 = vadd.f32 0.0, %v740
      %742 = vmatmul.bf16.gmra.mxu0 %v659
      %v743 = vpop.f32.mrf.mxu0
      %v744 = vadd.f32 0.0, %v743
      %v745 = vpop.f32.mrf.mxu0
      %v746 = vadd.f32 0.0, %v745
      %747 = vmatmul.bf16.gmra.mxu0 %v662
      %v748 = vpop.f32.mrf.mxu0
      %v749 = vadd.f32 0.0, %v748
      %v750 = vpop.f32.mrf.mxu0
      %v751 = vadd.f32 0.0, %v750
      %752 = vdwg.mxu0
      %v753 = vadd.f32 %v480, %v674
      %v754 = vadd.f32 %v482, %v676
      %v755 = vadd.f32 %v485, %v679
      %v756 = vadd.f32 %v487, %v681
      %v757 = vadd.f32 %v490, %v684
      %v758 = vadd.f32 %v492, %v686
      %v759 = vadd.f32 %v495, %v689
      %v760 = vadd.f32 %v497, %v691
      %v761 = vadd.f32 %v500, %v694
      %v762 = vadd.f32 %v502, %v696
      %v763 = vadd.f32 %v505, %v699
      %v764 = vadd.f32 %v507, %v701
      %v765 = vadd.f32 %v510, %v704
      %v766 = vadd.f32 %v512, %v706
      %v767 = vadd.f32 %v515, %v709
      %v768 = vadd.f32 %v517, %v711
      %v769 = vadd.f32 %v520, %v714
      %v770 = vadd.f32 %v522, %v716
      %v771 = vadd.f32 %v525, %v719
      %v772 = vadd.f32 %v527, %v721
      %v773 = vadd.f32 %v530, %v724
      %v774 = vadd.f32 %v532, %v726
      %v775 = vadd.f32 %v535, %v729
      %v776 = vadd.f32 %v537, %v731
      %v777 = vadd.f32 %v540, %v734
      %v778 = vadd.f32 %v542, %v736
      %v779 = vadd.f32 %v545, %v739
      %v780 = vadd.f32 %v547, %v741
      %v781 = vadd.f32 %v550, %v744
      %v782 = vadd.f32 %v552, %v746
      %v783 = vadd.f32 %v555, %v749
      %v784 = vadd.f32 %v557, %v751
      %v785 = vld [vmem:[%s559 + $0x1] sm:$0xff]
      %v786 = vld [vmem:[%s559 + $0x9] sm:$0xff]
      %v787 = vld [vmem:[%s559 + $0x19] sm:$0xff]
      %v788 = vld [vmem:[%s559 + $0x21] sm:$0xff]
      %v789 = vld [vmem:[%s559 + $0x31] sm:$0xff]
      %v790 = vld [vmem:[%s559 + $0x39] sm:$0xff]
      %v791 = vld [vmem:[%s559 + $0x49] sm:$0xff]
      %v792 = vld [vmem:[%s559 + $0x51] sm:$0xff]
      %v793 = vld [vmem:[%s559 + $0x61] sm:$0xff]
      %v794 = vld [vmem:[%s559 + $0x69] sm:$0xff]
      %v795 = vld [vmem:[%s559 + $0x79] sm:$0xff]
      %v796 = vld [vmem:[%s559 + $0x81] sm:$0xff]
      %v797 = vld [vmem:[%s559 + $0x91] sm:$0xff]
      %v798 = vld [vmem:[%s559 + $0x99] sm:$0xff]
      %v799 = vld [vmem:[%s559 + $0xa9] sm:$0xff]
      %v800 = vld [vmem:[%s559 + $0xb1] sm:$0xff]
      %v801 = vld [vmem:[%s559 + $0xc1] sm:$0xff]
      %v802 = vld [vmem:[%s559 + $0xc9] sm:$0xff]
      %v803 = vld [vmem:[%s559 + $0xd9] sm:$0xff]
      %v804 = vld [vmem:[%s559 + $0xe1] sm:$0xff]
      %v805 = vld [vmem:[%s559 + $0xf1] sm:$0xff]
      %v806 = vld [vmem:[%s559 + $0xf9] sm:$0xff]
      %v807 = vld [vmem:[%s559 + $0x109] sm:$0xff]
      %v808 = vld [vmem:[%s559 + $0x111] sm:$0xff]
      %v809 = vld [vmem:[%s559 + $0x121] sm:$0xff]
      %v810 = vld [vmem:[%s559 + $0x129] sm:$0xff]
      %v811 = vld [vmem:[%s559 + $0x139] sm:$0xff]
      %v812 = vld [vmem:[%s559 + $0x141] sm:$0xff]
      %v813 = vld [vmem:[%s559 + $0x151] sm:$0xff]
      %v814 = vld [vmem:[%s559 + $0x159] sm:$0xff]
      %v815 = vld [vmem:[%s559 + $0x169] sm:$0xff]
      %v816 = vld [vmem:[%s559 + $0x171] sm:$0xff]
      %v817 = vpack.c.bf16 %v786, %v785
      %v818 = vpack.c.bf16 %v788, %v787
      %v819 = vpack.c.bf16 %v790, %v789
      %v820 = vpack.c.bf16 %v792, %v791
      %v821 = vpack.c.bf16 %v794, %v793
      %v822 = vpack.c.bf16 %v796, %v795
      %v823 = vpack.c.bf16 %v798, %v797
      %v824 = vpack.c.bf16 %v800, %v799
      %v825 = vpack.c.bf16 %v802, %v801
      %v826 = vpack.c.bf16 %v804, %v803
      %v827 = vpack.c.bf16 %v806, %v805
      %v828 = vpack.c.bf16 %v808, %v807
      %v829 = vpack.c.bf16 %v810, %v809
      %v830 = vpack.c.bf16 %v812, %v811
      %v831 = vpack.c.bf16 %v814, %v813
      %v832 = vpack.c.bf16 %v816, %v815
      %v833 = vld [vmem:[%s1 + $0x18] sm:$0xf]
      %v834 = vld [vmem:[%s1 + $0x1c] sm:$0xf]
      %v837 = vunpack.c.l.b16 %v833
      %v838 = vunpack.c.l.b16 %v834
      %v839 = vpack.c.b16 %v838, %v837
      %v842 = vsel %vm278, %v817, 0
      %v845 = vsel %vm278, %v818, 0
      %v848 = vsel %vm278, %v819, 0
      %v851 = vsel %vm278, %v820, 0
      %v854 = vsel %vm278, %v821, 0
      %v857 = vsel %vm278, %v822, 0
      %v860 = vsel %vm278, %v823, 0
      %v863 = vsel %vm278, %v824, 0
      %v866 = vsel %vm278, %v825, 0
      %v869 = vsel %vm278, %v826, 0
      %v872 = vsel %vm278, %v827, 0
      %v875 = vsel %vm278, %v828, 0
      %v878 = vsel %vm278, %v829, 0
      %v881 = vsel %vm278, %v830, 0
      %v884 = vsel %vm278, %v831, 0
      %v887 = vsel %vm278, %v832, 0
      %889 = vmatpush.bf16.msra.mxu0 0
      %890 = vmatpush.bf16.msra.mxu0 0
      %891 = vmatpush.bf16.msra.mxu0 0
      %892 = vmatpush.bf16.msra.mxu0 0
      %893 = vmatpush.bf16.msra.mxu0 0
      %894 = vmatpush.bf16.msra.mxu0 0
      %895 = vmatpush.bf16.msra.mxu0 0
      %896 = vmatpush.bf16.msra.mxu0 %v839
      %897 = vmatmul.bf16.gmra.mxu0 %v842
      %v898 = vpop.f32.mrf.mxu0
      %v899 = vadd.f32 0.0, %v898
      %v900 = vpop.f32.mrf.mxu0
      %v901 = vadd.f32 0.0, %v900
      %902 = vmatmul.bf16.gmra.mxu0 %v845
      %v903 = vpop.f32.mrf.mxu0
      %v904 = vadd.f32 0.0, %v903
      %v905 = vpop.f32.mrf.mxu0
      %v906 = vadd.f32 0.0, %v905
      %907 = vmatmul.bf16.gmra.mxu0 %v848
      %v908 = vpop.f32.mrf.mxu0
      %v909 = vadd.f32 0.0, %v908
      %v910 = vpop.f32.mrf.mxu0
      %v911 = vadd.f32 0.0, %v910
      %912 = vmatmul.bf16.gmra.mxu0 %v851
      %v913 = vpop.f32.mrf.mxu0
      %v914 = vadd.f32 0.0, %v913
      %v915 = vpop.f32.mrf.mxu0
      %v916 = vadd.f32 0.0, %v915
      %917 = vmatmul.bf16.gmra.mxu0 %v854
      %v918 = vpop.f32.mrf.mxu0
      %v919 = vadd.f32 0.0, %v918
      %v920 = vpop.f32.mrf.mxu0
      %v921 = vadd.f32 0.0, %v920
      %922 = vmatmul.bf16.gmra.mxu0 %v857
      %v923 = vpop.f32.mrf.mxu0
      %v924 = vadd.f32 0.0, %v923
      %v925 = vpop.f32.mrf.mxu0
      %v926 = vadd.f32 0.0, %v925
      %927 = vmatmul.bf16.gmra.mxu0 %v860
      %v928 = vpop.f32.mrf.mxu0
      %v929 = vadd.f32 0.0, %v928
      %v930 = vpop.f32.mrf.mxu0
      %v931 = vadd.f32 0.0, %v930
      %932 = vmatmul.bf16.gmra.mxu0 %v863
      %v933 = vpop.f32.mrf.mxu0
      %v934 = vadd.f32 0.0, %v933
      %v935 = vpop.f32.mrf.mxu0
      %v936 = vadd.f32 0.0, %v935
      %937 = vmatmul.bf16.gmra.mxu0 %v866
      %v938 = vpop.f32.mrf.mxu0
      %v939 = vadd.f32 0.0, %v938
      %v940 = vpop.f32.mrf.mxu0
      %v941 = vadd.f32 0.0, %v940
      %942 = vmatmul.bf16.gmra.mxu0 %v869
      %v943 = vpop.f32.mrf.mxu0
      %v944 = vadd.f32 0.0, %v943
      %v945 = vpop.f32.mrf.mxu0
      %v946 = vadd.f32 0.0, %v945
      %947 = vmatmul.bf16.gmra.mxu0 %v872
      %v948 = vpop.f32.mrf.mxu0
      %v949 = vadd.f32 0.0, %v948
      %v950 = vpop.f32.mrf.mxu0
      %v951 = vadd.f32 0.0, %v950
      %952 = vmatmul.bf16.gmra.mxu0 %v875
      %v953 = vpop.f32.mrf.mxu0
      %v954 = vadd.f32 0.0, %v953
      %v955 = vpop.f32.mrf.mxu0
      %v956 = vadd.f32 0.0, %v955
      %957 = vmatmul.bf16.gmra.mxu0 %v878
      %v958 = vpop.f32.mrf.mxu0
      %v959 = vadd.f32 0.0, %v958
      %v960 = vpop.f32.mrf.mxu0
      %v961 = vadd.f32 0.0, %v960
      %962 = vmatmul.bf16.gmra.mxu0 %v881
      %v963 = vpop.f32.mrf.mxu0
      %v964 = vadd.f32 0.0, %v963
      %v965 = vpop.f32.mrf.mxu0
      %v966 = vadd.f32 0.0, %v965
      %967 = vmatmul.bf16.gmra.mxu0 %v884
      %v968 = vpop.f32.mrf.mxu0
      %v969 = vadd.f32 0.0, %v968
      %v970 = vpop.f32.mrf.mxu0
      %v971 = vadd.f32 0.0, %v970
      %972 = vmatmul.bf16.gmra.mxu0 %v887
      %v973 = vpop.f32.mrf.mxu0
      %v974 = vadd.f32 0.0, %v973
      %v975 = vpop.f32.mrf.mxu0
      %v976 = vadd.f32 0.0, %v975
      %977 = vdwg.mxu0
      %v978 = vadd.f32 %v753, %v899
      %v979 = vadd.f32 %v754, %v901
      %v980 = vadd.f32 %v755, %v904
      %v981 = vadd.f32 %v756, %v906
      %v982 = vadd.f32 %v757, %v909
      %v983 = vadd.f32 %v758, %v911
      %v984 = vadd.f32 %v759, %v914
      %v985 = vadd.f32 %v760, %v916
      %v986 = vadd.f32 %v761, %v919
      %v987 = vadd.f32 %v762, %v921
      %v988 = vadd.f32 %v763, %v924
      %v989 = vadd.f32 %v764, %v926
      %v990 = vadd.f32 %v765, %v929
      %v991 = vadd.f32 %v766, %v931
      %v992 = vadd.f32 %v767, %v934
      %v993 = vadd.f32 %v768, %v936
      %v994 = vadd.f32 %v769, %v939
      %v995 = vadd.f32 %v770, %v941
      %v996 = vadd.f32 %v771, %v944
      %v997 = vadd.f32 %v772, %v946
      %v998 = vadd.f32 %v773, %v949
      %v999 = vadd.f32 %v774, %v951
      %v1000 = vadd.f32 %v775, %v954
      %v1001 = vadd.f32 %v776, %v956
      %v1002 = vadd.f32 %v777, %v959
      %v1003 = vadd.f32 %v778, %v961
      %v1004 = vadd.f32 %v779, %v964
      %v1005 = vadd.f32 %v780, %v966
      %v1006 = vadd.f32 %v781, %v969
      %v1007 = vadd.f32 %v782, %v971
      %v1008 = vadd.f32 %v783, %v974
      %v1009 = vadd.f32 %v784, %v976
      %v1010 = vld [vmem:[%s2] sm:$0x1]
      %v1012 = vperm.slane %v1010, 0
      %v1014 = vadd.f32 %v978, %v1012
      %v1015 = vadd.f32 %v979, %v1012
      %v1016 = vadd.f32 %v980, %v1012
      %v1017 = vadd.f32 %v981, %v1012
      %v1018 = vadd.f32 %v982, %v1012
      %v1019 = vadd.f32 %v983, %v1012
      %v1020 = vadd.f32 %v984, %v1012
      %v1021 = vadd.f32 %v985, %v1012
      %v1022 = vadd.f32 %v986, %v1012
      %v1023 = vadd.f32 %v987, %v1012
      %v1024 = vadd.f32 %v988, %v1012
      %v1025 = vadd.f32 %v989, %v1012
      %v1026 = vadd.f32 %v990, %v1012
      %v1027 = vadd.f32 %v991, %v1012
      %v1028 = vadd.f32 %v992, %v1012
      %v1029 = vadd.f32 %v993, %v1012
      %v1030 = vadd.f32 %v994, %v1012
      %v1031 = vadd.f32 %v995, %v1012
      %v1032 = vadd.f32 %v996, %v1012
      %v1033 = vadd.f32 %v997, %v1012
      %v1034 = vadd.f32 %v998, %v1012
      %v1035 = vadd.f32 %v999, %v1012
      %v1036 = vadd.f32 %v1000, %v1012
      %v1037 = vadd.f32 %v1001, %v1012
      %v1038 = vadd.f32 %v1002, %v1012
      %v1039 = vadd.f32 %v1003, %v1012
      %v1040 = vadd.f32 %v1004, %v1012
      %v1041 = vadd.f32 %v1005, %v1012
      %v1042 = vadd.f32 %v1006, %v1012
      %v1043 = vadd.f32 %v1007, %v1012
      %v1044 = vadd.f32 %v1008, %v1012
      %v1045 = vadd.f32 %v1009, %v1012
      %v1046 = vmax.f32 %v1014, 0.0
      %v1047 = vmax.f32 %v1015, 0.0
      %v1048 = vmax.f32 %v1016, 0.0
      %v1049 = vmax.f32 %v1017, 0.0
      %v1050 = vmax.f32 %v1018, 0.0
      %v1051 = vmax.f32 %v1019, 0.0
      %v1052 = vmax.f32 %v1020, 0.0
      %v1053 = vmax.f32 %v1021, 0.0
      %v1054 = vmax.f32 %v1022, 0.0
      %v1055 = vmax.f32 %v1023, 0.0
      %v1056 = vmax.f32 %v1024, 0.0
      %v1057 = vmax.f32 %v1025, 0.0
      %v1058 = vmax.f32 %v1026, 0.0
      %v1059 = vmax.f32 %v1027, 0.0
      %v1060 = vmax.f32 %v1028, 0.0
      %v1061 = vmax.f32 %v1029, 0.0
      %v1062 = vmax.f32 %v1030, 0.0
      %v1063 = vmax.f32 %v1031, 0.0
      %v1064 = vmax.f32 %v1032, 0.0
      %v1065 = vmax.f32 %v1033, 0.0
      %v1066 = vmax.f32 %v1034, 0.0
      %v1067 = vmax.f32 %v1035, 0.0
      %v1068 = vmax.f32 %v1036, 0.0
      %v1069 = vmax.f32 %v1037, 0.0
      %v1070 = vmax.f32 %v1038, 0.0
      %v1071 = vmax.f32 %v1039, 0.0
      %v1072 = vmax.f32 %v1040, 0.0
      %v1073 = vmax.f32 %v1041, 0.0
      %v1074 = vmax.f32 %v1042, 0.0
      %v1075 = vmax.f32 %v1043, 0.0
      %v1076 = vmax.f32 %v1044, 0.0
      %v1077 = vmax.f32 %v1045, 0.0
      %vm1078 = vcmask 31744
      %1079 = vst.msk [vmem:[%s170] sm:$0xff] %vm1078, %v1046
      %1080 = vst.msk [vmem:[%s170 + $0x8] sm:$0xff] %vm1078, %v1047
      %1081 = vst.msk [vmem:[%s170 + $0x10] sm:$0xff] %vm1078, %v1048
      %1082 = vst.msk [vmem:[%s170 + $0x18] sm:$0xff] %vm1078, %v1049
      %1083 = vst.msk [vmem:[%s170 + $0x20] sm:$0xff] %vm1078, %v1050
      %1084 = vst.msk [vmem:[%s170 + $0x28] sm:$0xff] %vm1078, %v1051
      %1085 = vst.msk [vmem:[%s170 + $0x30] sm:$0xff] %vm1078, %v1052
      %1086 = vst.msk [vmem:[%s170 + $0x38] sm:$0xff] %vm1078, %v1053
      %1087 = vst.msk [vmem:[%s170 + $0x40] sm:$0xff] %vm1078, %v1054
      %1088 = vst.msk [vmem:[%s170 + $0x48] sm:$0xff] %vm1078, %v1055
      %1089 = vst.msk [vmem:[%s170 + $0x50] sm:$0xff] %vm1078, %v1056
      %1090 = vst.msk [vmem:[%s170 + $0x58] sm:$0xff] %vm1078, %v1057
      %1091 = vst.msk [vmem:[%s170 + $0x60] sm:$0xff] %vm1078, %v1058
      %1092 = vst.msk [vmem:[%s170 + $0x68] sm:$0xff] %vm1078, %v1059
      %1093 = vst.msk [vmem:[%s170 + $0x70] sm:$0xff] %vm1078, %v1060
      %1094 = vst.msk [vmem:[%s170 + $0x78] sm:$0xff] %vm1078, %v1061
      %1095 = vst.msk [vmem:[%s170 + $0x80] sm:$0xff] %vm1078, %v1062
      %1096 = vst.msk [vmem:[%s170 + $0x88] sm:$0xff] %vm1078, %v1063
      %1097 = vst.msk [vmem:[%s170 + $0x90] sm:$0xff] %vm1078, %v1064
      %1098 = vst.msk [vmem:[%s170 + $0x98] sm:$0xff] %vm1078, %v1065
      %1099 = vst.msk [vmem:[%s170 + $0xa0] sm:$0xff] %vm1078, %v1066
      %1100 = vst.msk [vmem:[%s170 + $0xa8] sm:$0xff] %vm1078, %v1067
      %1101 = vst.msk [vmem:[%s170 + $0xb0] sm:$0xff] %vm1078, %v1068
      %1102 = vst.msk [vmem:[%s170 + $0xb8] sm:$0xff] %vm1078, %v1069
      %1103 = vst.msk [vmem:[%s170 + $0xc0] sm:$0xff] %vm1078, %v1070
      %1104 = vst.msk [vmem:[%s170 + $0xc8] sm:$0xff] %vm1078, %v1071
      %1105 = vst.msk [vmem:[%s170 + $0xd0] sm:$0xff] %vm1078, %v1072
      %1106 = vst.msk [vmem:[%s170 + $0xd8] sm:$0xff] %vm1078, %v1073
      %1107 = vst.msk [vmem:[%s170 + $0xe0] sm:$0xff] %vm1078, %v1074
      %1108 = vst.msk [vmem:[%s170 + $0xe8] sm:$0xff] %vm1078, %v1075
      %1109 = vst.msk [vmem:[%s170 + $0xf0] sm:$0xff] %vm1078, %v1076
      %1110 = vst.msk [vmem:[%s170 + $0xf8] sm:$0xff] %vm1078, %v1077
      %p1111 = scmp.lt.s32.totalorder %s14, 1
      %s1112 = scalar_select %p1111, %s14, 1
      %s1113 = smul.addr %s1112, 32
      %s1114 = smul.addr %s1113, 8
      %s1115 = scalar_lea.vmem %s3, %s1114
      // Predicated region
      $region33: #{backbone_with_fpn_forward.8} parent=31 // pred_check
        %p1116 = pneg %p100
      $region34: #{backbone_with_fpn_forward.8} parent=31 // pred_check_branch
        %1118 = sbr.rel (%p1116) target = $region36
      $region35: #{backbone_with_fpn_forward.8} parent=31 // pred_region
        _
      $region36: #{backbone_with_fpn_forward.8} parent=31 // pred_fallthru
        _
    $region32: #{backbone_with_fpn_forward.8} parent=5 // pred_fallthru
      _
    %p1119 = scmp.le.s32.totalorder 2, %s9
    // Predicated region
    $region37: #{backbone_with_fpn_forward.8} parent=5 // pred_check
      %p1120 = pneg %p1119
    $region38: #{backbone_with_fpn_forward.8} parent=5 // pred_check_branch
      %1122 = sbr.rel (%p1120) target = $region40
    $region39: #{backbone_with_fpn_forward.8} parent=5 // pred_region
      %s1123 = ssub.s32 %s9, 2
      // Predicated region
      $region41: #{backbone_with_fpn_forward.8} parent=39 // pred_check
        %p1124 = pneg %p106
      $region42: #{backbone_with_fpn_forward.8} parent=39 // pred_check_branch
        %1126 = sbr.rel (%p1124) target = $region44
      $region43: #{backbone_with_fpn_forward.8} parent=39 // pred_region
        %p1127 = scmp.lt.s32.totalorder %s15, 1
        %s1128 = scalar_select %p1127, %s15, 1
        %s1129 = smul.addr %s1128, 32
        %s1130 = smul.addr %s1129, 8
        %s1131 = scalar_lea.vmem %s3, %s1130
      $region44: #{backbone_with_fpn_forward.8} parent=39 // pred_fallthru
        _
    $region40: #{backbone_with_fpn_forward.8} parent=5 // pred_fallthru
      _
  $region6: #{backbone_with_fpn_forward.8} parent=0 // loop_footer
    %s13 = sadd.s32 1, %s9
  $region7: #{backbone_with_fpn_forward.8} parent=0 // loop_footer_branch
    %8 = sbr.rel target = $region3
  $region8: #{backbone_with_fpn_forward.8} parent=0 // loop_exit
    _

// kernel: backbone_with_fpn_forward.9
$region0: #{backbone_with_fpn_forward.9}
  #allocation0 [shape = 'u32[]', space=smem, size = 0x4, offset = 0x4, fixed_abs, tag = 'smem constant byte address 0x4 - core index']
  #allocation1 [shape = 'u32[72,128]{1,0:T(1,128)}', space=vmem, size = 0x9000, scoped, tag = 'internal scratch']
  %s0 = inlined_call_operand.vmem [shape: f32[2,9,9,16], index: 0, kind: input, shape index: {}]
  %s1 = inlined_call_operand.vmem [shape: bf16[64,8], index: 1, kind: input, shape index: {}]
  %s2 = inlined_call_operand.vmem [shape: f32[1,8], index: 2, kind: input, shape index: {}]
  %s3 = inlined_call_operand.vmem [shape: f32[2,8,8,8], index: 3, kind: output, shape index: {}]
  %s4 = sld [smem:[#allocation0]]
  $region45: #{backbone_with_fpn_forward.9} parent=0
    _
  %s6 = ssub.s32 1, %s4
  %s7 = scalar_select 0, %s6, %s4
  loop: start=0, step=1, limit=4
  $region2: #{backbone_with_fpn_forward.9} parent=0 // loop_pre_header
    _
  $region3: #{backbone_with_fpn_forward.9} parent=0 // loop_header
    %s9 = sphi 0, %s13
    %p10 = scmp.ge.s32.totalorder %s9, 4
    %s19 = sphi 0, %s21
    %s22 = sphi 0, %s19
    %s23 = sphi 0, %s22
    %s39 = sphi 0, %s23
    %s43 = sphi 0, %s43
    %s45 = sphi 0, %s43
    %s46 = sphi 0, %s45
    %s60 = sphi 0, %s46
    %s64 = sphi 0, %s64
    %s66 = sphi 0, %s64
    %s67 = sphi 0, %s66
    %s81 = sphi 0, %s67
    %s87 = sphi 0, %s89
    %s90 = sphi 0, %s87
    %s91 = sphi 0, %s90
    %s107 = sphi 0, %s91
  $region4: #{backbone_with_fpn_forward.9} parent=0 // loop_header_branch
    %12 = sbr.rel (%p10) target = $region8
  $region5: #{backbone_with_fpn_forward.9} parent=0 // loop_body
    %s14 = ssub.s32 %s9, 1
    %s15 = ssub.s32 %s9, 2
    %s16 = sadd.s32 %s9, 1
    %s17 = ssub.s32 %s9, %s16
    %p18 = scmp.eq.s32.totalorder %s17, 0
    %s20 = sadd.s32 %s19, 1
    %s21 = scalar_select %p18, %s19, %s20
    %p24 = pneg %p18
    %p25 = scmp.eq.s32.totalorder %s9, 1
    %p26 = por %p24, %p25
    %p27 = scmp.ne.s32.totalorder %s19, %s22
    %p28 = scmp.eq.s32.totalorder %s9, 0
    %p29 = por %p27, %p28
    %p30 = scmp.ne.s32.totalorder %s19, %s22
    %p31 = scmp.eq.s32.totalorder %s14, 1
    %p32 = por %p30, %p31
    %p33 = scmp.ne.s32.totalorder %s22, %s23
    %p34 = scmp.eq.s32.totalorder %s14, 0
    %p35 = por %p33, %p34
    %p36 = scmp.ne.s32.totalorder %s22, %s23
    %p37 = scmp.eq.s32.totalorder %s15, 1
    %p38 = por %p36, %p37
    %p40 = scmp.ne.s32.totalorder %s23, %s39
    %p41 = scmp.eq.s32.totalorder %s15, 0
    %p42 = por %p40, %p41
    %s44 = sadd.s32 %s43, 1
    %p47 = scmp.eq.s32.totalorder %s9, 1
    %p48 = scmp.ne.s32.totalorder %s43, %s45
    %p49 = scmp.eq.s32.totalorder %s9, 0
    %p50 = por %p48, %p49
    %p51 = scmp.ne.s32.totalorder %s43, %s45
    %p52 = scmp.eq.s32.totalorder %s14, 1
    %p53 = por %p51, %p52
    %p54 = scmp.ne.s32.totalorder %s45, %s46
    %p55 = scmp.eq.s32.totalorder %s14, 0
    %p56 = por %p54, %p55
    %p57 = scmp.ne.s32.totalorder %s45, %s46
    %p58 = scmp.eq.s32.totalorder %s15, 1
    %p59 = por %p57, %p58
    %p61 = scmp.ne.s32.totalorder %s46, %s60
    %p62 = scmp.eq.s32.totalorder %s15, 0
    %p63 = por %p61, %p62
    %s65 = sadd.s32 %s64, 1
    %p68 = scmp.eq.s32.totalorder %s9, 1
    %p69 = scmp.ne.s32.totalorder %s64, %s66
    %p70 = scmp.eq.s32.totalorder %s9, 0
    %p71 = por %p69, %p70
    %p72 = scmp.ne.s32.totalorder %s64, %s66
    %p73 = scmp.eq.s32.totalorder %s14, 1
    %p74 = por %p72, %p73
    %p75 = scmp.ne.s32.totalorder %s66, %s67
    %p76 = scmp.eq.s32.totalorder %s14, 0
    %p77 = por %p75, %p76
    %p78 = scmp.ne.s32.totalorder %s66, %s67
    %p79 = scmp.eq.s32.totalorder %s15, 1
    %p80 = por %p78, %p79
    %p82 = scmp.ne.s32.totalorder %s67, %s81
    %p83 = scmp.eq.s32.totalorder %s15, 0
    %p84 = por %p82, %p83
    %s85 = ssub.s32 %s9, %s16
    %p86 = scmp.eq.s32.totalorder %s85, 0
    %s88 = sadd.s32 %s87, 1
    %s89 = scalar_select %p86, %s87, %s88
    %p92 = pneg %p86
    %p93 = scmp.eq.s32.totalorder %s9, 1
    %p94 = por %p92, %p93
    %p95 = scmp.ne.s32.totalorder %s87, %s90
    %p96 = scmp.eq.s32.totalorder %s9, 0
    %p97 = por %p95, %p96
    %p98 = scmp.ne.s32.totalorder %s87, %s90
    %p99 = scmp.eq.s32.totalorder %s14, 1
    %p100 = por %p98, %p99
    %p101 = scmp.ne.s32.totalorder %s90, %s91
    %p102 = scmp.eq.s32.totalorder %s14, 0
    %p103 = por %p101, %p102
    %p104 = scmp.ne.s32.totalorder %s90, %s91
    %p105 = scmp.eq.s32.totalorder %s15, 1
    %p106 = por %p104, %p105
    %p108 = scmp.ne.s32.totalorder %s91, %s107
    %p109 = scmp.eq.s32.totalorder %s15, 0
    %p110 = por %p108, %p109
    %p111 = scmp.le.s32.totalorder 1, %s9
    %p112 = scmp.lt.s32.totalorder %s9, 3
    %p113 = pnand %p111, %p112
    %p114 = pneg %p113
    // Predicated region
    $region9: #{backbone_with_fpn_forward.9} parent=5 // pred_check
      _
    $region10: #{backbone_with_fpn_forward.9} parent=5 // pred_check_branch
      %116 = sbr.rel (%p113) target = $region12
    $region11: #{backbone_with_fpn_forward.9} parent=5 // pred_region
      %s117 = ssub.s32 %s9, 1
      // Predicated region
      $region13: #{backbone_with_fpn_forward.9} parent=11 // pred_check
        %p118 = pneg %p56
      $region14: #{backbone_with_fpn_forward.9} parent=11 // pred_check_branch
        %120 = sbr.rel (%p118) target = $region16
      $region15: #{backbone_with_fpn_forward.9} parent=11 // pred_region
        _
      $region16: #{backbone_with_fpn_forward.9} parent=11 // pred_fallthru
        _
      // Predicated region
      $region17: #{backbone_with_fpn_forward.9} parent=11 // pred_check
        %p121 = pneg %p77
      $region18: #{backbone_with_fpn_forward.9} parent=11 // pred_check_branch
        %123 = sbr.rel (%p121) target = $region20
      $region19: #{backbone_with_fpn_forward.9} parent=11 // pred_region
        _
      $region20: #{backbone_with_fpn_forward.9} parent=11 // pred_fallthru
        _
    $region12: #{backbone_with_fpn_forward.9} parent=5 // pred_fallthru
      _
    %p124 = scmp.lt.s32.totalorder %s9, 2
    // Predicated region
    $region21: #{backbone_with_fpn_forward.9} parent=5 // pred_check
      %p125 = pneg %p124
    $region22: #{backbone_with_fpn_forward.9} parent=5 // pred_check_branch
      %127 = sbr.rel (%p125) target = $region24
    $region23: #{backbone_with_fpn_forward.9} parent=5 // pred_region
      // Predicated region
      $region25: #{backbone_with_fpn_forward.9} parent=23 // pred_check
        %p128 = pneg %p29
      $region26: #{backbone_with_fpn_forward.9} parent=23 // pred_check_branch
        %130 = sbr.rel (%p128) target = $region28
      $region27: #{backbone_with_fpn_forward.9} parent=23 // pred_region
        %p131 = scmp.lt.s32.totalorder %s9, 1
        %s132 = scalar_select %p131, %s9, 1
        %s133 = smul.addr %s132, 18
        %s134 = smul.addr %s133, 8
        %s135 = scalar_lea.vmem %s0, %s134
      $region28: #{backbone_with_fpn_forward.9} parent=23 // pred_fallthru
        _
    $region24: #{backbone_with_fpn_forward.9} parent=5 // pred_fallthru
      _
    %p136 = scmp.le.s32.totalorder 1, %s9
    %p137 = scmp.lt.s32.totalorder %s9, 3
    %p138 = pnand %p136, %p137
    %p139 = pneg %p138
    // Predicated region
    $region29: #{backbone_with_fpn_forward.9} parent=5 // pred_check
      _
    $region30: #{backbone_with_fpn_forward.9} parent=5 // pred_check_branch
      %141 = sbr.rel (%p138) target = $region32
    $region31: #{backbone_with_fpn_forward.9} parent=5 // pred_region
      %s142 = ssub.s32 %s9, 1
      %p143 = scmp.lt.s32.totalorder %s14, 1
      %s144 = scalar_select %p143, %s14, 1
      %s145 = smul.addr %s144, 18
      %s146 = smul.addr %s145, 8
      %s147 = scalar_lea.vmem %s0, %s146
      %p148 = pneg %p35
      %p149 = pneg %p32
      %p150 = pneg %p56
      %p151 = pneg %p53
      %p152 = pneg %p77
      %p153 = pneg %p74
      %p154 = pneg %p103
      %p155 = pneg %p100
      %p156 = scmp.lt.s32.totalorder %s14, 1
      %s157 = scalar_select %p156, %s14, 1
      %s158 = smul.addr %s157, 8
      %s159 = smul.addr %s158, 8
      %s160 = scalar_lea.vmem %s3, %s159
      %p161 = scmp.lt.s32.totalorder %s14, 1
      %s162 = scalar_select %p161, %s14, 1
      %s163 = smul.addr %s162, 18
      %s164 = smul.addr %s163, 8
      %s165 = scalar_lea.vmem %s0, %s164
      %p166 = scmp.lt.s32.totalorder %s14, 1
      %s167 = scalar_select %p166, %s14, 1
      %s168 = smul.addr %s167, 8
      %s169 = smul.addr %s168, 8
      %s170 = scalar_lea.vmem %s3, %s169
      %v172 = vld [vmem:[%s165] sm:$0xff]
      %v173 = vld [vmem:[%s165 + $0x10] sm:$0xff]
      %v174 = vld [vmem:[%s165 + $0x20] sm:$0xff]
      %v175 = vld [vmem:[%s165 + $0x30] sm:$0xff]
      %v176 = vld [vmem:[%s165 + $0x40] sm:$0xff]
      %v177 = vld [vmem:[%s165 + $0x50] sm:$0xff]
      %v178 = vld [vmem:[%s165 + $0x60] sm:$0xff]
      %v179 = vld [vmem:[%s165 + $0x70] sm:$0xff]
      %v180 = vpack.c.bf16 %v173, %v172
      %v181 = vpack.c.bf16 %v175, %v174
      %v182 = vpack.c.bf16 %v177, %v176
      %v183 = vpack.c.bf16 %v179, %v178
      %v184 = vld [vmem:[%s1] sm:$0xf]
      %v185 = vld [vmem:[%s1 + $0x4] sm:$0xf]
      %v186 = vld [vmem:[%s165 + $0x1] sm:$0xff]
      %v187 = vld [vmem:[%s165 + $0x11] sm:$0xff]
      %v188 = vld [vmem:[%s165 + $0x21] sm:$0xff]
      %v189 = vld [vmem:[%s165 + $0x31] sm:$0xff]
      %v190 = vld [vmem:[%s165 + $0x41] sm:$0xff]
      %v191 = vld [vmem:[%s165 + $0x51] sm:$0xff]
      %v192 = vld [vmem:[%s165 + $0x61] sm:$0xff]
      %v193 = vld [vmem:[%s165 + $0x71] sm:$0xff]
      %v194 = vpack.c.bf16 %v187, %v186
      %v195 = vpack.c.bf16 %v189, %v188
      %v196 = vpack.c.bf16 %v191, %v190
      %v197 = vpack.c.bf16 %v193, %v192
      %v198 = vld [vmem:[%s1 + $0x8] sm:$0xf]
      %v199 = vld [vmem:[%s1 + $0xc] sm:$0xf]
      %v202 = vunpack.c.l.b16 %v198
      %v203 = vunpack.c.l.b16 %v199
      %v204 = vpack.c.b16 %v203, %v202
      %vm206 = vcmask 130048
      %v208 = vsel %vm206, %v194, 0
      %v211 = vsel %vm206, %v195, 0
      %v214 = vsel %vm206, %v196, 0
      %v217 = vsel %vm206, %v197, 0
      %219 = vmatpush.bf16.msra.mxu0 0
      %220 = vmatpush.bf16.msra.mxu0 0
      %221 = vmatpush.bf16.msra.mxu0 0
      %222 = vmatpush.bf16.msra.mxu0 0
      %223 = vmatpush.bf16.msra.mxu0 0
      %224 = vmatpush.bf16.msra.mxu0 0
      %225 = vmatpush.bf16.msra.mxu0 0
      %226 = vmatpush.bf16.msra.mxu0 %v204
      %227 = vmatmul.bf16.gmra.mxu0 %v208
      %v228 = vpop.f32.mrf.mxu0
      %v229 = vadd.f32 0.0, %v228
      %v230 = vpop.f32.mrf.mxu0
      %v231 = vadd.f32 0.0, %v230
      %232 = vmatmul.bf16.gmra.mxu0 %v211
      %v233 = vpop.f32.mrf.mxu0
      %v234 = vadd.f32 0.0, %v233
      %v235 = vpop.f32.mrf.mxu0
      %v236 = vadd.f32 0.0, %v235
      %237 = vmatmul.bf16.gmra.mxu0 %v214
      %v238 = vpop.f32.mrf.mxu0
      %v239 = vadd.f32 0.0, %v238
      %v240 = vpop.f32.mrf.mxu0
      %v241 = vadd.f32 0.0, %v240
      %242 = vmatmul.bf16.gmra.mxu0 %v217
      %v243 = vpop.f32.mrf.mxu0
      %v244 = vadd.f32 0.0, %v243
      %v245 = vpop.f32.mrf.mxu0
      %v246 = vadd.f32 0.0, %v245
      %247 = vdwg.mxu0
      %v250 = vunpack.c.l.b16 %v184
      %v251 = vunpack.c.l.b16 %v185
      %v252 = vpack.c.b16 %v251, %v250
      %v255 = vsel %vm206, %v180, 0
      %v258 = vsel %vm206, %v181, 0
      %v261 = vsel %vm206, %v182, 0
      %v264 = vsel %vm206, %v183, 0
      %266 = vmatpush.bf16.msra.mxu0 0
      %267 = vmatpush.bf16.msra.mxu0 0
      %268 = vmatpush.bf16.msra.mxu0 0
      %269 = vmatpush.bf16.msra.mxu0 0
      %270 = vmatpush.bf16.msra.mxu0 0
      %271 = vmatpush.bf16.msra.mxu0 0
      %272 = vmatpush.bf16.msra.mxu0 0
      %273 = vmatpush.bf16.msra.mxu0 %v252
      %274 = vmatmul.bf16.gmra.mxu0 %v255
      %v275 = vpop.f32.mrf.mxu0
      %v276 = vadd.f32 %v229, %v275
      %v277 = vpop.f32.mrf.mxu0
      %v278 = vadd.f32 %v231, %v277
      %279 = vmatmul.bf16.gmra.mxu0 %v258
      %v280 = vpop.f32.mrf.mxu0
      %v281 = vadd.f32 %v234, %v280
      %v282 = vpop.f32.mrf.mxu0
      %v283 = vadd.f32 %v236, %v282
      %284 = vmatmul.bf16.gmra.mxu0 %v261
      %v285 = vpop.f32.mrf.mxu0
      %v286 = vadd.f32 %v239, %v285
      %v287 = vpop.f32.mrf.mxu0
      %v288 = vadd.f32 %v241, %v287
      %289 = vmatmul.bf16.gmra.mxu0 %v264
      %v290 = vpop.f32.mrf.mxu0
      %v291 = vadd.f32 %v244, %v290
      %v292 = vpop.f32.mrf.mxu0
      %v293 = vadd.f32 %v246, %v292
      %294 = vdwg.mxu0
      %s295 = scalar_lea.vmem %s165, 16
      %v296 = vld [vmem:[%s295] sm:$0xff]
      %v297 = vld [vmem:[%s295 + $0x10] sm:$0xff]
      %v298 = vld [vmem:[%s295 + $0x20] sm:$0xff]
      %v299 = vld [vmem:[%s295 + $0x30] sm:$0xff]
      %v300 = vld [vmem:[%s295 + $0x40] sm:$0xff]
      %v301 = vld [vmem:[%s295 + $0x50] sm:$0xff]
      %v302 = vld [vmem:[%s295 + $0x60] sm:$0xff]
      %v303 = vld [vmem:[%s295 + $0x70] sm:$0xff]
      %v304 = vpack.c.bf16 %v297, %v296
      %v305 = vpack.c.bf16 %v299, %v298
      %v306 = vpack.c.bf16 %v301, %v300
      %v307 = vpack.c.bf16 %v303, %v302
      %v308 = vld [vmem:[%s1 + $0x10] sm:$0xf]
      %v309 = vld [vmem:[%s1 + $0x14] sm:$0xf]
      %v312 = vunpack.c.l.b16 %v308
      %v313 = vunpack.c.l.b16 %v309
      %v314 = vpack.c.b16 %v313, %v312
      %v317 = vsel %vm206, %v304, 0
      %v320 = vsel %vm206, %v305, 0
      %v323 = vsel %vm206, %v306, 0
      %v326 = vsel %vm206, %v307, 0
      %328 = vmatpush.bf16.msra.mxu0 0
      %329 = vmatpush.bf16.msra.mxu0 0
      %330 = vmatpush.bf16.msra.mxu0 0
      %331 = vmatpush.bf16.msra.mxu0 0
      %332 = vmatpush.bf16.msra.mxu0 0
      %333 = vmatpush.bf16.msra.mxu0 0
      %334 = vmatpush.bf16.msra.mxu0 0
      %335 = vmatpush.bf16.msra.mxu0 %v314
      %336 = vmatmul.bf16.gmra.mxu0 %v317
      %v337 = vpop.f32.mrf.mxu0
      %v338 = vadd.f32 0.0, %v337
      %v339 = vpop.f32.mrf.mxu0
      %v340 = vadd.f32 0.0, %v339
      %341 = vmatmul.bf16.gmra.mxu0 %v320
      %v342 = vpop.f32.mrf.mxu0
      %v343 = vadd.f32 0.0, %v342
      %v344 = vpop.f32.mrf.mxu0
      %v345 = vadd.f32 0.0, %v344
      %346 = vmatmul.bf16.gmra.mxu0 %v323
      %v347 = vpop.f32.mrf.mxu0
      %v348 = vadd.f32 0.0, %v347
      %v349 = vpop.f32.mrf.mxu0
      %v350 = vadd.f32 0.0, %v349
      %351 = vmatmul.bf16.gmra.mxu0 %v326
      %v352 = vpop.f32.mrf.mxu0
      %v353 = vadd.f32 0.0, %v352
      %v354 = vpop.f32.mrf.mxu0
      %v355 = vadd.f32 0.0, %v354
      %356 = vdwg.mxu0
      %v357 = vadd.f32 %v276, %v338
      %v358 = vadd.f32 %v278, %v340
      %v359 = vadd.f32 %v281, %v343
      %v360 = vadd.f32 %v283, %v345
      %v361 = vadd.f32 %v286, %v348
      %v362 = vadd.f32 %v288, %v350
      %v363 = vadd.f32 %v291, %v353
      %v364 = vadd.f32 %v293, %v355
      %v365 = vld [vmem:[%s295 + $0x1] sm:$0xff]
      %v366 = vld [vmem:[%s295 + $0x11] sm:$0xff]
      %v367 = vld [vmem:[%s295 + $0x21] sm:$0xff]
      %v368 = vld [vmem:[%s295 + $0x31] sm:$0xff]
      %v369 = vld [vmem:[%s295 + $0x41] sm:$0xff]
      %v370 = vld [vmem:[%s295 + $0x51] sm:$0xff]
      %v371 = vld [vmem:[%s295 + $0x61] sm:$0xff]
      %v372 = vld [vmem:[%s295 + $0x71] sm:$0xff]
      %v373 = vpack.c.bf16 %v366, %v365
      %v374 = vpack.c.bf16 %v368, %v367
      %v375 = vpack.c.bf16 %v370, %v369
      %v376 = vpack.c.bf16 %v372, %v371
      %v377 = vld [vmem:[%s1 + $0x18] sm:$0xf]
      %v378 = vld [vmem:[%s1 + $0x1c] sm:$0xf]
      %v381 = vunpack.c.l.b16 %v377
      %v382 = vunpack.c.l.b16 %v378
      %v383 = vpack.c.b16 %v382, %v381
      %v386 = vsel %vm206, %v373, 0
      %v389 = vsel %vm206, %v374, 0
      %v392 = vsel %vm206, %v375, 0
      %v395 = vsel %vm206, %v376, 0
      %397 = vmatpush.bf16.msra.mxu0 0
      %398 = vmatpush.bf16.msra.mxu0 0
      %399 = vmatpush.bf16.msra.mxu0 0
      %400 = vmatpush.bf16.msra.mxu0 0
      %401 = vmatpush.bf16.msra.mxu0 0
      %402 = vmatpush.bf16.msra.mxu0 0
      %403 = vmatpush.bf16.msra.mxu0 0
      %404 = vmatpush.bf16.msra.mxu0 %v383
      %405 = vmatmul.bf16.gmra.mxu0 %v386
      %v406 = vpop.f32.mrf.mxu0
      %v407 = vadd.f32 0.0, %v406
      %v408 = vpop.f32.mrf.mxu0
      %v409 = vadd.f32 0.0, %v408
      %410 = vmatmul.bf16.gmra.mxu0 %v389
      %v411 = vpop.f32.mrf.mxu0
      %v412 = vadd.f32 0.0, %v411
      %v413 = vpop.f32.mrf.mxu0
      %v414 = vadd.f32 0.0, %v413
      %415 = vmatmul.bf16.gmra.mxu0 %v392
      %v416 = vpop.f32.mrf.mxu0
      %v417 = vadd.f32 0.0, %v416
      %v418 = vpop.f32.mrf.mxu0
      %v419 = vadd.f32 0.0, %v418
      %420 = vmatmul.bf16.gmra.mxu0 %v395
      %v421 = vpop.f32.mrf.mxu0
      %v422 = vadd.f32 0.0, %v421
      %v423 = vpop.f32.mrf.mxu0
      %v424 = vadd.f32 0.0, %v423
      %425 = vdwg.mxu0
      %v426 = vadd.f32 %v357, %v407
      %v427 = vadd.f32 %v358, %v409
      %v428 = vadd.f32 %v359, %v412
      %v429 = vadd.f32 %v360, %v414
      %v430 = vadd.f32 %v361, %v417
      %v431 = vadd.f32 %v362, %v419
      %v432 = vadd.f32 %v363, %v422
      %v433 = vadd.f32 %v364, %v424
      %v434 = vld [vmem:[%s2] sm:$0x1]
      %v436 = vperm.slane %v434, 0
      %v438 = vadd.f32 %v426, %v436
      %v439 = vadd.f32 %v427, %v436
      %v440 = vadd.f32 %v428, %v436
      %v441 = vadd.f32 %v429, %v436
      %v442 = vadd.f32 %v430, %v436
      %v443 = vadd.f32 %v431, %v436
      %v444 = vadd.f32 %v432, %v436
      %v445 = vadd.f32 %v433, %v436
      %v446 = vmax.f32 %v438, 0.0
      %v447 = vmax.f32 %v439, 0.0
      %v448 = vmax.f32 %v440, 0.0
      %v449 = vmax.f32 %v441, 0.0
      %v450 = vmax.f32 %v442, 0.0
      %v451 = vmax.f32 %v443, 0.0
      %v452 = vmax.f32 %v444, 0.0
      %v453 = vmax.f32 %v445, 0.0
      %vm454 = vcmask 64512
      %455 = vst.msk [vmem:[%s170] sm:$0xff] %vm454, %v446
      %456 = vst.msk [vmem:[%s170 + $0x8] sm:$0xff] %vm454, %v447
      %457 = vst.msk [vmem:[%s170 + $0x10] sm:$0xff] %vm454, %v448
      %458 = vst.msk [vmem:[%s170 + $0x18] sm:$0xff] %vm454, %v449
      %459 = vst.msk [vmem:[%s170 + $0x20] sm:$0xff] %vm454, %v450
      %460 = vst.msk [vmem:[%s170 + $0x28] sm:$0xff] %vm454, %v451
      %461 = vst.msk [vmem:[%s170 + $0x30] sm:$0xff] %vm454, %v452
      %462 = vst.msk [vmem:[%s170 + $0x38] sm:$0xff] %vm454, %v453
      %p463 = scmp.lt.s32.totalorder %s14, 1
      %s464 = scalar_select %p463, %s14, 1
      %s465 = smul.addr %s464, 8
      %s466 = smul.addr %s465, 8
      %s467 = scalar_lea.vmem %s3, %s466
      // Predicated region
      $region33: #{backbone_with_fpn_forward.9} parent=31 // pred_check
        %p468 = pneg %p100
      $region34: #{backbone_with_fpn_forward.9} parent=31 // pred_check_branch
        %470 = sbr.rel (%p468) target = $region36
      $region35: #{backbone_with_fpn_forward.9} parent=31 // pred_region
        _
      $region36: #{backbone_with_fpn_forward.9} parent=31 // pred_fallthru
        _
    $region32: #{backbone_with_fpn_forward.9} parent=5 // pred_fallthru
      _
    %p471 = scmp.le.s32.totalorder 2, %s9
    // Predicated region
    $region37: #{backbone_with_fpn_forward.9} parent=5 // pred_check
      %p472 = pneg %p471
    $region38: #{backbone_with_fpn_forward.9} parent=5 // pred_check_branch
      %474 = sbr.rel (%p472) target = $region40
    $region39: #{backbone_with_fpn_forward.9} parent=5 // pred_region
      %s475 = ssub.s32 %s9, 2
      // Predicated region
      $region41: #{backbone_with_fpn_forward.9} parent=39 // pred_check
        %p476 = pneg %p106
      $region42: #{backbone_with_fpn_forward.9} parent=39 // pred_check_branch
        %478 = sbr.rel (%p476) target = $region44
      $region43: #{backbone_with_fpn_forward.9} parent=39 // pred_region
        %p479 = scmp.lt.s32.totalorder %s15, 1
        %s480 = scalar_select %p479, %s15, 1
        %s481 = smul.addr %s480, 8
        %s482 = smul.addr %s481, 8
        %s483 = scalar_lea.vmem %s3, %s482
      $region44: #{backbone_with_fpn_forward.9} parent=39 // pred_fallthru
        _
    $region40: #{backbone_with_fpn_forward.9} parent=5 // pred_fallthru
      _
  $region6: #{backbone_with_fpn_forward.9} parent=0 // loop_footer
    %s13 = sadd.s32 1, %s9
  $region7: #{backbone_with_fpn_forward.9} parent=0 // loop_footer_branch
    %8 = sbr.rel target = $region3
  $region8: #{backbone_with_fpn_forward.9} parent=0 // loop_exit
    _

// kernel: backbone_with_fpn_forward.10
$region0: #{backbone_with_fpn_forward.10}
  #allocation0 [shape = 'u32[]', space=smem, size = 0x4, offset = 0x4, fixed_abs, tag = 'smem constant byte address 0x4 - core index']
  #allocation1 [shape = 'u32[72,128]{1,0:T(1,128)}', space=vmem, size = 0x9000, scoped, tag = 'internal scratch']
  %s0 = inlined_call_operand.vmem [shape: f32[2,5,5,32], index: 0, kind: input, shape index: {}]
  %s1 = inlined_call_operand.vmem [shape: bf16[128,16], index: 1, kind: input, shape index: {}]
  %s2 = inlined_call_operand.vmem [shape: f32[1,16], index: 2, kind: input, shape index: {}]
  %s3 = inlined_call_operand.vmem [shape: f32[2,4,4,16], index: 3, kind: output, shape index: {}]
  %s4 = sld [smem:[#allocation0]]
  $region45: #{backbone_with_fpn_forward.10} parent=0
    _
  %s6 = ssub.s32 1, %s4
  %s7 = scalar_select 0, %s6, %s4
  loop: start=0, step=1, limit=4
  $region2: #{backbone_with_fpn_forward.10} parent=0 // loop_pre_header
    _
  $region3: #{backbone_with_fpn_forward.10} parent=0 // loop_header
    %s9 = sphi 0, %s13
    %p10 = scmp.ge.s32.totalorder %s9, 4
    %s19 = sphi 0, %s21
    %s22 = sphi 0, %s19
    %s23 = sphi 0, %s22
    %s39 = sphi 0, %s23
    %s43 = sphi 0, %s43
    %s45 = sphi 0, %s43
    %s46 = sphi 0, %s45
    %s60 = sphi 0, %s46
    %s64 = sphi 0, %s64
    %s66 = sphi 0, %s64
    %s67 = sphi 0, %s66
    %s81 = sphi 0, %s67
    %s87 = sphi 0, %s89
    %s90 = sphi 0, %s87
    %s91 = sphi 0, %s90
    %s107 = sphi 0, %s91
  $region4: #{backbone_with_fpn_forward.10} parent=0 // loop_header_branch
    %12 = sbr.rel (%p10) target = $region8
  $region5: #{backbone_with_fpn_forward.10} parent=0 // loop_body
    %s14 = ssub.s32 %s9, 1
    %s15 = ssub.s32 %s9, 2
    %s16 = sadd.s32 %s9, 1
    %s17 = ssub.s32 %s9, %s16
    %p18 = scmp.eq.s32.totalorder %s17, 0
    %s20 = sadd.s32 %s19, 1
    %s21 = scalar_select %p18, %s19, %s20
    %p24 = pneg %p18
    %p25 = scmp.eq.s32.totalorder %s9, 1
    %p26 = por %p24, %p25
    %p27 = scmp.ne.s32.totalorder %s19, %s22
    %p28 = scmp.eq.s32.totalorder %s9, 0
    %p29 = por %p27, %p28
    %p30 = scmp.ne.s32.totalorder %s19, %s22
    %p31 = scmp.eq.s32.totalorder %s14, 1
    %p32 = por %p30, %p31
    %p33 = scmp.ne.s32.totalorder %s22, %s23
    %p34 = scmp.eq.s32.totalorder %s14, 0
    %p35 = por %p33, %p34
    %p36 = scmp.ne.s32.totalorder %s22, %s23
    %p37 = scmp.eq.s32.totalorder %s15, 1
    %p38 = por %p36, %p37
    %p40 = scmp.ne.s32.totalorder %s23, %s39
    %p41 = scmp.eq.s32.totalorder %s15, 0
    %p42 = por %p40, %p41
    %s44 = sadd.s32 %s43, 1
    %p47 = scmp.eq.s32.totalorder %s9, 1
    %p48 = scmp.ne.s32.totalorder %s43, %s45
    %p49 = scmp.eq.s32.totalorder %s9, 0
    %p50 = por %p48, %p49
    %p51 = scmp.ne.s32.totalorder %s43, %s45
    %p52 = scmp.eq.s32.totalorder %s14, 1
    %p53 = por %p51, %p52
    %p54 = scmp.ne.s32.totalorder %s45, %s46
    %p55 = scmp.eq.s32.totalorder %s14, 0
    %p56 = por %p54, %p55
    %p57 = scmp.ne.s32.totalorder %s45, %s46
    %p58 = scmp.eq.s32.totalorder %s15, 1
    %p59 = por %p57, %p58
    %p61 = scmp.ne.s32.totalorder %s46, %s60
    %p62 = scmp.eq.s32.totalorder %s15, 0
    %p63 = por %p61, %p62
    %s65 = sadd.s32 %s64, 1
    %p68 = scmp.eq.s32.totalorder %s9, 1
    %p69 = scmp.ne.s32.totalorder %s64, %s66
    %p70 = scmp.eq.s32.totalorder %s9, 0
    %p71 = por %p69, %p70
    %p72 = scmp.ne.s32.totalorder %s64, %s66
    %p73 = scmp.eq.s32.totalorder %s14, 1
    %p74 = por %p72, %p73
    %p75 = scmp.ne.s32.totalorder %s66, %s67
    %p76 = scmp.eq.s32.totalorder %s14, 0
    %p77 = por %p75, %p76
    %p78 = scmp.ne.s32.totalorder %s66, %s67
    %p79 = scmp.eq.s32.totalorder %s15, 1
    %p80 = por %p78, %p79
    %p82 = scmp.ne.s32.totalorder %s67, %s81
    %p83 = scmp.eq.s32.totalorder %s15, 0
    %p84 = por %p82, %p83
    %s85 = ssub.s32 %s9, %s16
    %p86 = scmp.eq.s32.totalorder %s85, 0
    %s88 = sadd.s32 %s87, 1
    %s89 = scalar_select %p86, %s87, %s88
    %p92 = pneg %p86
    %p93 = scmp.eq.s32.totalorder %s9, 1
    %p94 = por %p92, %p93
    %p95 = scmp.ne.s32.totalorder %s87, %s90
    %p96 = scmp.eq.s32.totalorder %s9, 0
    %p97 = por %p95, %p96
    %p98 = scmp.ne.s32.totalorder %s87, %s90
    %p99 = scmp.eq.s32.totalorder %s14, 1
    %p100 = por %p98, %p99
    %p101 = scmp.ne.s32.totalorder %s90, %s91
    %p102 = scmp.eq.s32.totalorder %s14, 0
    %p103 = por %p101, %p102
    %p104 = scmp.ne.s32.totalorder %s90, %s91
    %p105 = scmp.eq.s32.totalorder %s15, 1
    %p106 = por %p104, %p105
    %p108 = scmp.ne.s32.totalorder %s91, %s107
    %p109 = scmp.eq.s32.totalorder %s15, 0
    %p110 = por %p108, %p109
    %p111 = scmp.le.s32.totalorder 1, %s9
    %p112 = scmp.lt.s32.totalorder %s9, 3
    %p113 = pnand %p111, %p112
    %p114 = pneg %p113
    // Predicated region
    $region9: #{backbone_with_fpn_forward.10} parent=5 // pred_check
      _
    $region10: #{backbone_with_fpn_forward.10} parent=5 // pred_check_branch
      %116 = sbr.rel (%p113) target = $region12
    $region11: #{backbone_with_fpn_forward.10} parent=5 // pred_region
      %s117 = ssub.s32 %s9, 1
      // Predicated region
      $region13: #{backbone_with_fpn_forward.10} parent=11 // pred_check
        %p118 = pneg %p56
      $region14: #{backbone_with_fpn_forward.10} parent=11 // pred_check_branch
        %120 = sbr.rel (%p118) target = $region16
      $region15: #{backbone_with_fpn_forward.10} parent=11 // pred_region
        _
      $region16: #{backbone_with_fpn_forward.10} parent=11 // pred_fallthru
        _
      // Predicated region
      $region17: #{backbone_with_fpn_forward.10} parent=11 // pred_check
        %p121 = pneg %p77
      $region18: #{backbone_with_fpn_forward.10} parent=11 // pred_check_branch
        %123 = sbr.rel (%p121) target = $region20
      $region19: #{backbone_with_fpn_forward.10} parent=11 // pred_region
        _
      $region20: #{backbone_with_fpn_forward.10} parent=11 // pred_fallthru
        _
    $region12: #{backbone_with_fpn_forward.10} parent=5 // pred_fallthru
      _
    %p124 = scmp.lt.s32.totalorder %s9, 2
    // Predicated region
    $region21: #{backbone_with_fpn_forward.10} parent=5 // pred_check
      %p125 = pneg %p124
    $region22: #{backbone_with_fpn_forward.10} parent=5 // pred_check_branch
      %127 = sbr.rel (%p125) target = $region24
    $region23: #{backbone_with_fpn_forward.10} parent=5 // pred_region
      // Predicated region
      $region25: #{backbone_with_fpn_forward.10} parent=23 // pred_check
        %p128 = pneg %p29
      $region26: #{backbone_with_fpn_forward.10} parent=23 // pred_check_branch
        %130 = sbr.rel (%p128) target = $region28
      $region27: #{backbone_with_fpn_forward.10} parent=23 // pred_region
        %p131 = scmp.lt.s32.totalorder %s9, 1
        %s132 = scalar_select %p131, %s9, 1
        %s133 = smul.addr %s132, 5
        %s134 = smul.addr %s133, 8
        %s135 = scalar_lea.vmem %s0, %s134
      $region28: #{backbone_with_fpn_forward.10} parent=23 // pred_fallthru
        _
    $region24: #{backbone_with_fpn_forward.10} parent=5 // pred_fallthru
      _
    %p136 = scmp.le.s32.totalorder 1, %s9
    %p137 = scmp.lt.s32.totalorder %s9, 3
    %p138 = pnand %p136, %p137
    %p139 = pneg %p138
    // Predicated region
    $region29: #{backbone_with_fpn_forward.10} parent=5 // pred_check
      _
    $region30: #{backbone_with_fpn_forward.10} parent=5 // pred_check_branch
      %141 = sbr.rel (%p138) target = $region32
    $region31: #{backbone_with_fpn_forward.10} parent=5 // pred_region
      %s142 = ssub.s32 %s9, 1
      %p143 = scmp.lt.s32.totalorder %s14, 1
      %s144 = scalar_select %p143, %s14, 1
      %s145 = smul.addr %s144, 5
      %s146 = smul.addr %s145, 8
      %s147 = scalar_lea.vmem %s0, %s146
      %p148 = pneg %p35
      %p149 = pneg %p32
      %p150 = pneg %p56
      %p151 = pneg %p53
      %p152 = pneg %p77
      %p153 = pneg %p74
      %p154 = pneg %p103
      %p155 = pneg %p100
      %p156 = scmp.lt.s32.totalorder %s14, 1
      %s157 = scalar_select %p156, %s14, 1
      %s158 = smul.addr %s157, 4
      %s159 = smul.addr %s158, 4
      %s160 = scalar_lea.vmem %s3, %s159
      %p161 = scmp.lt.s32.totalorder %s14, 1
      %s162 = scalar_select %p161, %s14, 1
      %s163 = smul.addr %s162, 5
      %s164 = smul.addr %s163, 8
      %s165 = scalar_lea.vmem %s0, %s164
      %p166 = scmp.lt.s32.totalorder %s14, 1
      %s167 = scalar_select %p166, %s14, 1
      %s168 = smul.addr %s167, 4
      %s169 = smul.addr %s168, 4
      %s170 = scalar_lea.vmem %s3, %s169
      %v172 = vld [vmem:[%s165] sm:$0xf]
      %v173 = vld [vmem:[%s165 + $0x8] sm:$0xf]
      %v174 = vld [vmem:[%s165 + $0x10] sm:$0xf]
      %v175 = vld [vmem:[%s165 + $0x18] sm:$0xf]
      %180 = vst [vmem:[#allocation1] ss:$2 sm:$0xff] %v172
      %s181 = scalar_lea.vmem [#allocation1], 1
      %182 = vst [vmem:[%s181] ss:$2 sm:$0xff] %v173
      %s183 = scalar_lea.vmem [#allocation1], 16
      %184 = vst [vmem:[%s183] ss:$2 sm:$0xff] %v174
      %s185 = scalar_lea.vmem [#allocation1], 17
      %186 = vst [vmem:[%s185] ss:$2 sm:$0xff] %v175
      %v187 = vld.sshfl [vmem:[#allocation1] sm:$0xff pattern:$0x75316420]
      %v188 = vld.sshfl [vmem:[#allocation1 + $0x10] sm:$0xff pattern:$0x75316420]
      %v191 = vpack.c.bf16 %v188, %v187
      %v192 = vld [vmem:[%s1] sm:$0xf]
      %v193 = vld [vmem:[%s1 + $0x4] sm:$0xf]
      %v194 = vld [vmem:[%s1 + $0x8] sm:$0xf]
      %v195 = vld [vmem:[%s1 + $0xc] sm:$0xf]
      %v196 = vld [vmem:[%s165 + $0x1] sm:$0xf]
      %v197 = vld [vmem:[%s165 + $0x9] sm:$0xf]
      %v198 = vld [vmem:[%s165 + $0x11] sm:$0xf]
      %v199 = vld [vmem:[%s165 + $0x19] sm:$0xf]
      %204 = vst [vmem:[#allocation1] ss:$2 sm:$0xff] %v196
      %s205 = scalar_lea.vmem [#allocation1], 1
      %206 = vst [vmem:[%s205] ss:$2 sm:$0xff] %v197
      %s207 = scalar_lea.vmem [#allocation1], 16
      %208 = vst [vmem:[%s207] ss:$2 sm:$0xff] %v198
      %s209 = scalar_lea.vmem [#allocation1], 17
      %210 = vst [vmem:[%s209] ss:$2 sm:$0xff] %v199
      %v211 = vld.sshfl [vmem:[#allocation1] sm:$0xff pattern:$0x75316420]
      %v212 = vld.sshfl [vmem:[#allocation1 + $0x10] sm:$0xff pattern:$0x75316420]
      %v215 = vpack.c.bf16 %v212, %v211
      %v216 = vld [vmem:[%s1 + $0x10] sm:$0xf]
      %v217 = vld [vmem:[%s1 + $0x14] sm:$0xf]
      %v218 = vld [vmem:[%s1 + $0x18] sm:$0xf]
      %v219 = vld [vmem:[%s1 + $0x1c] sm:$0xf]
      %v224 = vunpack.c.l.b16 %v216
      %v225 = vunpack.c.l.b16 %v217
      %v226 = vunpack.c.l.b16 %v218
      %v227 = vunpack.c.l.b16 %v219
      %v228 = vpack.c.b16 %v225, %v224
      %v229 = vpack.c.b16 %v227, %v226
      %vm232 = vcmask 261120
      %v234 = vsel %vm232, %v215, 0
      %236 = vmatpush.bf16.msra.mxu0 0
      %237 = vmatpush.bf16.msra.mxu0 0
      %238 = vmatpush.bf16.msra.mxu0 0
      %239 = vmatpush.bf16.msra.mxu0 0
      %240 = vmatpush.bf16.msra.mxu0 0
      %241 = vmatpush.bf16.msra.mxu0 0
      %242 = vmatpush.bf16.msra.mxu0 %v229
      %243 = vmatpush.bf16.msra.mxu0 %v228
      %244 = vmatmul.bf16.gmra.mxu0 %v234
      %v245 = vpop.f32.mrf.mxu0
      %v246 = vadd.f32 0.0, %v245
      %v247 = vpop.f32.mrf.mxu0
      %v248 = vadd.f32 0.0, %v247
      %249 = vdwg.mxu0
      %v254 = vunpack.c.l.b16 %v192
      %v255 = vunpack.c.l.b16 %v193
      %v256 = vunpack.c.l.b16 %v194
      %v257 = vunpack.c.l.b16 %v195
      %v258 = vpack.c.b16 %v255, %v254
      %v259 = vpack.c.b16 %v257, %v256
      %v263 = vsel %vm232, %v191, 0
      %265 = vmatpush.bf16.msra.mxu0 0
      %266 = vmatpush.bf16.msra.mxu0 0
      %267 = vmatpush.bf16.msra.mxu0 0
      %268 = vmatpush.bf16.msra.mxu0 0
      %269 = vmatpush.bf16.msra.mxu0 0
      %270 = vmatpush.bf16.msra.mxu0 0
      %271 = vmatpush.bf16.msra.mxu0 %v259
      %272 = vmatpush.bf16.msra.mxu0 %v258
      %273 = vmatmul.bf16.gmra.mxu0 %v263
      %v274 = vpop.f32.mrf.mxu0
      %v275 = vadd.f32 %v246, %v274
      %v276 = vpop.f32.mrf.mxu0
      %v277 = vadd.f32 %v248, %v276
      %278 = vdwg.mxu0
      %s279 = scalar_lea.vmem %s165, 8
      %v280 = vld [vmem:[%s279] sm:$0xf]
      %v281 = vld [vmem:[%s279 + $0x8] sm:$0xf]
      %v282 = vld [vmem:[%s279 + $0x10] sm:$0xf]
      %v283 = vld [vmem:[%s279 + $0x18] sm:$0xf]
      %288 = vst [vmem:[#allocation1] ss:$2 sm:$0xff] %v280
      %s289 = scalar_lea.vmem [#allocation1], 1
      %290 = vst [vmem:[%s289] ss:$2 sm:$0xff] %v281
      %s291 = scalar_lea.vmem [#allocation1], 16
      %292 = vst [vmem:[%s291] ss:$2 sm:$0xff] %v282
      %s293 = scalar_lea.vmem [#allocation1], 17
      %294 = vst [vmem:[%s293] ss:$2 sm:$0xff] %v283
      %v295 = vld.sshfl [vmem:[#allocation1] sm:$0xff pattern:$0x75316420]
      %v296 = vld.sshfl [vmem:[#allocation1 + $0x10] sm:$0xff pattern:$0x75316420]
      %v299 = vpack.c.bf16 %v296, %v295
      %v300 = vld [vmem:[%s1 + $0x20] sm:$0xf]
      %v301 = vld [vmem:[%s1 + $0x24] sm:$0xf]
      %v302 = vld [vmem:[%s1 + $0x28] sm:$0xf]
      %v303 = vld [vmem:[%s1 + $0x2c] sm:$0xf]
      %v308 = vunpack.c.l.b16 %v300
      %v309 = vunpack.c.l.b16 %v301
      %v310 = vunpack.c.l.b16 %v302
      %v311 = vunpack.c.l.b16 %v303
      %v312 = vpack.c.b16 %v309, %v308
      %v313 = vpack.c.b16 %v311, %v310
      %v317 = vsel %vm232, %v299, 0
      %319 = vmatpush.bf16.msra.mxu0 0
      %320 = vmatpush.bf16.msra.mxu0 0
      %321 = vmatpush.bf16.msra.mxu0 0
      %322 = vmatpush.bf16.msra.mxu0 0
      %323 = vmatpush.bf16.msra.mxu0 0
      %324 = vmatpush.bf16.msra.mxu0 0
      %325 = vmatpush.bf16.msra.mxu0 %v313
      %326 = vmatpush.bf16.msra.mxu0 %v312
      %327 = vmatmul.bf16.gmra.mxu0 %v317
      %v328 = vpop.f32.mrf.mxu0
      %v329 = vadd.f32 0.0, %v328
      %v330 = vpop.f32.mrf.mxu0
      %v331 = vadd.f32 0.0, %v330
      %332 = vdwg.mxu0
      %v333 = vadd.f32 %v275, %v329
      %v334 = vadd.f32 %v277, %v331
      %v335 = vld [vmem:[%s279 + $0x1] sm:$0xf]
      %v336 = vld [vmem:[%s279 + $0x9] sm:$0xf]
      %v337 = vld [vmem:[%s279 + $0x11] sm:$0xf]
      %v338 = vld [vmem:[%s279 + $0x19] sm:$0xf]
      %343 = vst [vmem:[#allocation1] ss:$2 sm:$0xff] %v335
      %s344 = scalar_lea.vmem [#allocation1], 1
      %345 = vst [vmem:[%s344] ss:$2 sm:$0xff] %v336
      %s346 = scalar_lea.vmem [#allocation1], 16
      %347 = vst [vmem:[%s346] ss:$2 sm:$0xff] %v337
      %s348 = scalar_lea.vmem [#allocation1], 17
      %349 = vst [vmem:[%s348] ss:$2 sm:$0xff] %v338
      %v350 = vld.sshfl [vmem:[#allocation1] sm:$0xff pattern:$0x75316420]
      %v351 = vld.sshfl [vmem:[#allocation1 + $0x10] sm:$0xff pattern:$0x75316420]
      %v354 = vpack.c.bf16 %v351, %v350
      %v355 = vld [vmem:[%s1 + $0x30] sm:$0xf]
      %v356 = vld [vmem:[%s1 + $0x34] sm:$0xf]
      %v357 = vld [vmem:[%s1 + $0x38] sm:$0xf]
      %v358 = vld [vmem:[%s1 + $0x3c] sm:$0xf]
      %v363 = vunpack.c.l.b16 %v355
      %v364 = vunpack.c.l.b16 %v356
      %v365 = vunpack.c.l.b16 %v357
      %v366 = vunpack.c.l.b16 %v358
      %v367 = vpack.c.b16 %v364, %v363
      %v368 = vpack.c.b16 %v366, %v365
      %v372 = vsel %vm232, %v354, 0
      %374 = vmatpush.bf16.msra.mxu0 0
      %375 = vmatpush.bf16.msra.mxu0 0
      %376 = vmatpush.bf16.msra.mxu0 0
      %377 = vmatpush.bf16.msra.mxu0 0
      %378 = vmatpush.bf16.msra.mxu0 0
      %379 = vmatpush.bf16.msra.mxu0 0
      %380 = vmatpush.bf16.msra.mxu0 %v368
      %381 = vmatpush.bf16.msra.mxu0 %v367
      %382 = vmatmul.bf16.gmra.mxu0 %v372
      %v383 = vpop.f32.mrf.mxu0
      %v384 = vadd.f32 0.0, %v383
      %v385 = vpop.f32.mrf.mxu0
      %v386 = vadd.f32 0.0, %v385
      %387 = vdwg.mxu0
      %v388 = vadd.f32 %v333, %v384
      %v389 = vadd.f32 %v334, %v386
      %v390 = vld [vmem:[%s2] sm:$0x1]
      %v392 = vperm.slane %v390, 0
      %v394 = vadd.f32 %v388, %v392
      %v395 = vadd.f32 %v389, %v392
      %v396 = vmax.f32 %v394, 0.0
      %v397 = vmax.f32 %v395, 0.0
      %v400 = vrot.slane %v396, 4
      %v401 = vrot.slane %v397, 4
      %vm404 = vcmask 125952
      %405 = vst.msk [vmem:[%s170] sm:$0xf] %vm404, %v396
      %406 = vst.msk [vmem:[%s170 + $0x4] sm:$0xf] %vm404, %v400
      %407 = vst.msk [vmem:[%s170 + $0x8] sm:$0xf] %vm404, %v397
      %408 = vst.msk [vmem:[%s170 + $0xc] sm:$0xf] %vm404, %v401
      %p409 = scmp.lt.s32.totalorder %s14, 1
      %s410 = scalar_select %p409, %s14, 1
      %s411 = smul.addr %s410, 4
      %s412 = smul.addr %s411, 4
      %s413 = scalar_lea.vmem %s3, %s412
      // Predicated region
      $region33: #{backbone_with_fpn_forward.10} parent=31 // pred_check
        %p414 = pneg %p100
      $region34: #{backbone_with_fpn_forward.10} parent=31 // pred_check_branch
        %416 = sbr.rel (%p414) target = $region36
      $region35: #{backbone_with_fpn_forward.10} parent=31 // pred_region
        _
      $region36: #{backbone_with_fpn_forward.10} parent=31 // pred_fallthru
        _
    $region32: #{backbone_with_fpn_forward.10} parent=5 // pred_fallthru
      _
    %p417 = scmp.le.s32.totalorder 2, %s9
    // Predicated region
    $region37: #{backbone_with_fpn_forward.10} parent=5 // pred_check
      %p418 = pneg %p417
    $region38: #{backbone_with_fpn_forward.10} parent=5 // pred_check_branch
      %420 = sbr.rel (%p418) target = $region40
    $region39: #{backbone_with_fpn_forward.10} parent=5 // pred_region
      %s421 = ssub.s32 %s9, 2
      // Predicated region
      $region41: #{backbone_with_fpn_forward.10} parent=39 // pred_check
        %p422 = pneg %p106
      $region42: #{backbone_with_fpn_forward.10} parent=39 // pred_check_branch
        %424 = sbr.rel (%p422) target = $region44
      $region43: #{backbone_with_fpn_forward.10} parent=39 // pred_region
        %p425 = scmp.lt.s32.totalorder %s15, 1
        %s426 = scalar_select %p425, %s15, 1
        %s427 = smul.addr %s426, 4
        %s428 = smul.addr %s427, 4
        %s429 = scalar_lea.vmem %s3, %s428
      $region44: #{backbone_with_fpn_forward.10} parent=39 // pred_fallthru
        _
    $region40: #{backbone_with_fpn_forward.10} parent=5 // pred_fallthru
      _
  $region6: #{backbone_with_fpn_forward.10} parent=0 // loop_footer
    %s13 = sadd.s32 1, %s9
  $region7: #{backbone_with_fpn_forward.10} parent=0 // loop_footer_branch
    %8 = sbr.rel target = $region3
  $region8: #{backbone_with_fpn_forward.10} parent=0 // loop_exit
    _

// kernel: backbone_with_fpn_forward.11
$region0: #{backbone_with_fpn_forward.11}
  #allocation0 [shape = 'u32[]', space=smem, size = 0x4, offset = 0x4, fixed_abs, tag = 'smem constant byte address 0x4 - core index']
  #allocation1 [shape = 'u32[72,128]{1,0:T(1,128)}', space=vmem, size = 0x9000, scoped, tag = 'internal scratch']
  %s0 = inlined_call_operand.vmem [shape: f32[2,3,3,64], index: 0, kind: input, shape index: {}]
  %s1 = inlined_call_operand.vmem [shape: bf16[256,32], index: 1, kind: input, shape index: {}]
  %s2 = inlined_call_operand.vmem [shape: f32[1,32], index: 2, kind: input, shape index: {}]
  %s3 = inlined_call_operand.vmem [shape: f32[2,2,2,32], index: 3, kind: output, shape index: {}]
  %s4 = sld [smem:[#allocation0]]
  $region45: #{backbone_with_fpn_forward.11} parent=0
    _
  %s6 = ssub.s32 1, %s4
  %s7 = scalar_select 0, %s6, %s4
  loop: start=0, step=1, limit=4
  $region2: #{backbone_with_fpn_forward.11} parent=0 // loop_pre_header
    _
  $region3: #{backbone_with_fpn_forward.11} parent=0 // loop_header
    %s9 = sphi 0, %s13
    %p10 = scmp.ge.s32.totalorder %s9, 4
    %s19 = sphi 0, %s21
    %s22 = sphi 0, %s19
    %s23 = sphi 0, %s22
    %s39 = sphi 0, %s23
    %s43 = sphi 0, %s43
    %s45 = sphi 0, %s43
    %s46 = sphi 0, %s45
    %s60 = sphi 0, %s46
    %s64 = sphi 0, %s64
    %s66 = sphi 0, %s64
    %s67 = sphi 0, %s66
    %s81 = sphi 0, %s67
    %s87 = sphi 0, %s89
    %s90 = sphi 0, %s87
    %s91 = sphi 0, %s90
    %s107 = sphi 0, %s91
  $region4: #{backbone_with_fpn_forward.11} parent=0 // loop_header_branch
    %12 = sbr.rel (%p10) target = $region8
  $region5: #{backbone_with_fpn_forward.11} parent=0 // loop_body
    %s14 = ssub.s32 %s9, 1
    %s15 = ssub.s32 %s9, 2
    %s16 = sadd.s32 %s9, 1
    %s17 = ssub.s32 %s9, %s16
    %p18 = scmp.eq.s32.totalorder %s17, 0
    %s20 = sadd.s32 %s19, 1
    %s21 = scalar_select %p18, %s19, %s20
    %p24 = pneg %p18
    %p25 = scmp.eq.s32.totalorder %s9, 1
    %p26 = por %p24, %p25
    %p27 = scmp.ne.s32.totalorder %s19, %s22
    %p28 = scmp.eq.s32.totalorder %s9, 0
    %p29 = por %p27, %p28
    %p30 = scmp.ne.s32.totalorder %s19, %s22
    %p31 = scmp.eq.s32.totalorder %s14, 1
    %p32 = por %p30, %p31
    %p33 = scmp.ne.s32.totalorder %s22, %s23
    %p34 = scmp.eq.s32.totalorder %s14, 0
    %p35 = por %p33, %p34
    %p36 = scmp.ne.s32.totalorder %s22, %s23
    %p37 = scmp.eq.s32.totalorder %s15, 1
    %p38 = por %p36, %p37
    %p40 = scmp.ne.s32.totalorder %s23, %s39
    %p41 = scmp.eq.s32.totalorder %s15, 0
    %p42 = por %p40, %p41
    %s44 = sadd.s32 %s43, 1
    %p47 = scmp.eq.s32.totalorder %s9, 1
    %p48 = scmp.ne.s32.totalorder %s43, %s45
    %p49 = scmp.eq.s32.totalorder %s9, 0
    %p50 = por %p48, %p49
    %p51 = scmp.ne.s32.totalorder %s43, %s45
    %p52 = scmp.eq.s32.totalorder %s14, 1
    %p53 = por %p51, %p52
    %p54 = scmp.ne.s32.totalorder %s45, %s46
    %p55 = scmp.eq.s32.totalorder %s14, 0
    %p56 = por %p54, %p55
    %p57 = scmp.ne.s32.totalorder %s45, %s46
    %p58 = scmp.eq.s32.totalorder %s15, 1
    %p59 = por %p57, %p58
    %p61 = scmp.ne.s32.totalorder %s46, %s60
    %p62 = scmp.eq.s32.totalorder %s15, 0
    %p63 = por %p61, %p62
    %s65 = sadd.s32 %s64, 1
    %p68 = scmp.eq.s32.totalorder %s9, 1
    %p69 = scmp.ne.s32.totalorder %s64, %s66
    %p70 = scmp.eq.s32.totalorder %s9, 0
    %p71 = por %p69, %p70
    %p72 = scmp.ne.s32.totalorder %s64, %s66
    %p73 = scmp.eq.s32.totalorder %s14, 1
    %p74 = por %p72, %p73
    %p75 = scmp.ne.s32.totalorder %s66, %s67
    %p76 = scmp.eq.s32.totalorder %s14, 0
    %p77 = por %p75, %p76
    %p78 = scmp.ne.s32.totalorder %s66, %s67
    %p79 = scmp.eq.s32.totalorder %s15, 1
    %p80 = por %p78, %p79
    %p82 = scmp.ne.s32.totalorder %s67, %s81
    %p83 = scmp.eq.s32.totalorder %s15, 0
    %p84 = por %p82, %p83
    %s85 = ssub.s32 %s9, %s16
    %p86 = scmp.eq.s32.totalorder %s85, 0
    %s88 = sadd.s32 %s87, 1
    %s89 = scalar_select %p86, %s87, %s88
    %p92 = pneg %p86
    %p93 = scmp.eq.s32.totalorder %s9, 1
    %p94 = por %p92, %p93
    %p95 = scmp.ne.s32.totalorder %s87, %s90
    %p96 = scmp.eq.s32.totalorder %s9, 0
    %p97 = por %p95, %p96
    %p98 = scmp.ne.s32.totalorder %s87, %s90
    %p99 = scmp.eq.s32.totalorder %s14, 1
    %p100 = por %p98, %p99
    %p101 = scmp.ne.s32.totalorder %s90, %s91
    %p102 = scmp.eq.s32.totalorder %s14, 0
    %p103 = por %p101, %p102
    %p104 = scmp.ne.s32.totalorder %s90, %s91
    %p105 = scmp.eq.s32.totalorder %s15, 1
    %p106 = por %p104, %p105
    %p108 = scmp.ne.s32.totalorder %s91, %s107
    %p109 = scmp.eq.s32.totalorder %s15, 0
    %p110 = por %p108, %p109
    %p111 = scmp.le.s32.totalorder 1, %s9
    %p112 = scmp.lt.s32.totalorder %s9, 3
    %p113 = pnand %p111, %p112
    %p114 = pneg %p113
    // Predicated region
    $region9: #{backbone_with_fpn_forward.11} parent=5 // pred_check
      _
    $region10: #{backbone_with_fpn_forward.11} parent=5 // pred_check_branch
      %116 = sbr.rel (%p113) target = $region12
    $region11: #{backbone_with_fpn_forward.11} parent=5 // pred_region
      %s117 = ssub.s32 %s9, 1
      // Predicated region
      $region13: #{backbone_with_fpn_forward.11} parent=11 // pred_check
        %p118 = pneg %p56
      $region14: #{backbone_with_fpn_forward.11} parent=11 // pred_check_branch
        %120 = sbr.rel (%p118) target = $region16
      $region15: #{backbone_with_fpn_forward.11} parent=11 // pred_region
        _
      $region16: #{backbone_with_fpn_forward.11} parent=11 // pred_fallthru
        _
      // Predicated region
      $region17: #{backbone_with_fpn_forward.11} parent=11 // pred_check
        %p121 = pneg %p77
      $region18: #{backbone_with_fpn_forward.11} parent=11 // pred_check_branch
        %123 = sbr.rel (%p121) target = $region20
      $region19: #{backbone_with_fpn_forward.11} parent=11 // pred_region
        _
      $region20: #{backbone_with_fpn_forward.11} parent=11 // pred_fallthru
        _
    $region12: #{backbone_with_fpn_forward.11} parent=5 // pred_fallthru
      _
    %p124 = scmp.lt.s32.totalorder %s9, 2
    // Predicated region
    $region21: #{backbone_with_fpn_forward.11} parent=5 // pred_check
      %p125 = pneg %p124
    $region22: #{backbone_with_fpn_forward.11} parent=5 // pred_check_branch
      %127 = sbr.rel (%p125) target = $region24
    $region23: #{backbone_with_fpn_forward.11} parent=5 // pred_region
      // Predicated region
      $region25: #{backbone_with_fpn_forward.11} parent=23 // pred_check
        %p128 = pneg %p29
      $region26: #{backbone_with_fpn_forward.11} parent=23 // pred_check_branch
        %130 = sbr.rel (%p128) target = $region28
      $region27: #{backbone_with_fpn_forward.11} parent=23 // pred_region
        %p131 = scmp.lt.s32.totalorder %s9, 1
        %s132 = scalar_select %p131, %s9, 1
        %s133 = smul.addr %s132, 3
        %s134 = smul.addr %s133, 4
        %s135 = scalar_lea.vmem %s0, %s134
      $region28: #{backbone_with_fpn_forward.11} parent=23 // pred_fallthru
        _
    $region24: #{backbone_with_fpn_forward.11} parent=5 // pred_fallthru
      _
    %p136 = scmp.le.s32.totalorder 1, %s9
    %p137 = scmp.lt.s32.totalorder %s9, 3
    %p138 = pnand %p136, %p137
    %p139 = pneg %p138
    // Predicated region
    $region29: #{backbone_with_fpn_forward.11} parent=5 // pred_check
      _
    $region30: #{backbone_with_fpn_forward.11} parent=5 // pred_check_branch
      %141 = sbr.rel (%p138) target = $region32
    $region31: #{backbone_with_fpn_forward.11} parent=5 // pred_region
      %s142 = ssub.s32 %s9, 1
      %p143 = scmp.lt.s32.totalorder %s14, 1
      %s144 = scalar_select %p143, %s14, 1
      %s145 = smul.addr %s144, 3
      %s146 = smul.addr %s145, 4
      %s147 = scalar_lea.vmem %s0, %s146
      %p148 = pneg %p35
      %p149 = pneg %p32
      %p150 = pneg %p56
      %p151 = pneg %p53
      %p152 = pneg %p77
      %p153 = pneg %p74
      %p154 = pneg %p103
      %p155 = pneg %p100
      %p156 = scmp.lt.s32.totalorder %s14, 1
      %s157 = scalar_select %p156, %s14, 1
      %s158 = smul.addr %s157, 2
      %s159 = smul.addr %s158, 2
      %s160 = scalar_lea.vmem %s3, %s159
      %p161 = scmp.lt.s32.totalorder %s14, 1
      %s162 = scalar_select %p161, %s14, 1
      %s163 = smul.addr %s162, 3
      %s164 = smul.addr %s163, 4
      %s165 = scalar_lea.vmem %s0, %s164
      %p166 = scmp.lt.s32.totalorder %s14, 1
      %s167 = scalar_select %p166, %s14, 1
      %s168 = smul.addr %s167, 2
      %s169 = smul.addr %s168, 2
      %s170 = scalar_lea.vmem %s3, %s169
      %v172 = vld [vmem:[%s165] sm:$0x3]
      %v173 = vld [vmem:[%s165 + $0x4] sm:$0x3]
      %176 = vst [vmem:[#allocation1] ss:$4 sm:$0xff] %v172
      %s177 = scalar_lea.vmem [#allocation1], 1
      %178 = vst [vmem:[%s177] ss:$4 sm:$0xff] %v173
      %v179 = vld.sshfl [vmem:[#allocation1] sm:$0xff pattern:$0x73625140]
      %v181 = vpack.c.bf16 %v179, %v179
      %v182 = vld [vmem:[%s1] sm:$0xf]
      %v183 = vld [vmem:[%s1 + $0x4] sm:$0xf]
      %v184 = vld [vmem:[%s1 + $0x8] sm:$0xf]
      %v185 = vld [vmem:[%s1 + $0xc] sm:$0xf]
      %v186 = vld [vmem:[%s1 + $0x10] sm:$0xf]
      %v187 = vld [vmem:[%s1 + $0x14] sm:$0xf]
      %v188 = vld [vmem:[%s1 + $0x18] sm:$0xf]
      %v189 = vld [vmem:[%s1 + $0x1c] sm:$0xf]
      %v190 = vld [vmem:[%s165 + $0x1] sm:$0x3]
      %v191 = vld [vmem:[%s165 + $0x5] sm:$0x3]
      %194 = vst [vmem:[#allocation1] ss:$4 sm:$0xff] %v190
      %s195 = scalar_lea.vmem [#allocation1], 1
      %196 = vst [vmem:[%s195] ss:$4 sm:$0xff] %v191
      %v197 = vld.sshfl [vmem:[#allocation1] sm:$0xff pattern:$0x73625140]
      %v199 = vpack.c.bf16 %v197, %v197
      %v200 = vld [vmem:[%s1 + $0x20] sm:$0xf]
      %v201 = vld [vmem:[%s1 + $0x24] sm:$0xf]
      %v202 = vld [vmem:[%s1 + $0x28] sm:$0xf]
      %v203 = vld [vmem:[%s1 + $0x2c] sm:$0xf]
      %v204 = vld [vmem:[%s1 + $0x30] sm:$0xf]
      %v205 = vld [vmem:[%s1 + $0x34] sm:$0xf]
      %v206 = vld [vmem:[%s1 + $0x38] sm:$0xf]
      %v207 = vld [vmem:[%s1 + $0x3c] sm:$0xf]
      %v216 = vunpack.c.l.b16 %v200
      %v217 = vunpack.c.l.b16 %v201
      %v218 = vunpack.c.l.b16 %v202
      %v219 = vunpack.c.l.b16 %v203
      %v220 = vunpack.c.l.b16 %v204
      %v221 = vunpack.c.l.b16 %v205
      %v222 = vunpack.c.l.b16 %v206
      %v223 = vunpack.c.l.b16 %v207
      %v224 = vpack.c.b16 %v217, %v216
      %v225 = vpack.c.b16 %v219, %v218
      %v226 = vpack.c.b16 %v221, %v220
      %v227 = vpack.c.b16 %v223, %v222
      %vm232 = vcmask 523264
      %v234 = vsel %vm232, %v199, 0
      %236 = vmatpush.bf16.msra.mxu0 0
      %237 = vmatpush.bf16.msra.mxu0 0
      %238 = vmatpush.bf16.msra.mxu0 0
      %239 = vmatpush.bf16.msra.mxu0 0
      %240 = vmatpush.bf16.msra.mxu0 %v227
      %241 = vmatpush.bf16.msra.mxu0 %v226
      %242 = vmatpush.bf16.msra.mxu0 %v225
      %243 = vmatpush.bf16.msra.mxu0 %v224
      %244 = vmatmul.bf16.gmra.mxu0 %v234
      %v245 = vpop.f32.mrf.mxu0
      %v246 = vadd.f32 0.0, %v245
      %v247 = vpop.f32.mrf.mxu0
      %248 = vdwg.mxu0
      %v257 = vunpack.c.l.b16 %v182
      %v258 = vunpack.c.l.b16 %v183
      %v259 = vunpack.c.l.b16 %v184
      %v260 = vunpack.c.l.b16 %v185
      %v261 = vunpack.c.l.b16 %v186
      %v262 = vunpack.c.l.b16 %v187
      %v263 = vunpack.c.l.b16 %v188
      %v264 = vunpack.c.l.b16 %v189
      %v265 = vpack.c.b16 %v258, %v257
      %v266 = vpack.c.b16 %v260, %v259
      %v267 = vpack.c.b16 %v262, %v261
      %v268 = vpack.c.b16 %v264, %v263
      %v274 = vsel %vm232, %v181, 0
      %276 = vmatpush.bf16.msra.mxu0 0
      %277 = vmatpush.bf16.msra.mxu0 0
      %278 = vmatpush.bf16.msra.mxu0 0
      %279 = vmatpush.bf16.msra.mxu0 0
      %280 = vmatpush.bf16.msra.mxu0 %v268
      %281 = vmatpush.bf16.msra.mxu0 %v267
      %282 = vmatpush.bf16.msra.mxu0 %v266
      %283 = vmatpush.bf16.msra.mxu0 %v265
      %284 = vmatmul.bf16.gmra.mxu0 %v274
      %v285 = vpop.f32.mrf.mxu0
      %v286 = vadd.f32 %v246, %v285
      %v287 = vpop.f32.mrf.mxu0
      %288 = vdwg.mxu0
      %s289 = scalar_lea.vmem %s165, 4
      %v290 = vld [vmem:[%s289] sm:$0x3]
      %v291 = vld [vmem:[%s289 + $0x4] sm:$0x3]
      %294 = vst [vmem:[#allocation1] ss:$4 sm:$0xff] %v290
      %s295 = scalar_lea.vmem [#allocation1], 1
      %296 = vst [vmem:[%s295] ss:$4 sm:$0xff] %v291
      %v297 = vld.sshfl [vmem:[#allocation1] sm:$0xff pattern:$0x73625140]
      %v299 = vpack.c.bf16 %v297, %v297
      %v300 = vld [vmem:[%s1 + $0x40] sm:$0xf]
      %v301 = vld [vmem:[%s1 + $0x44] sm:$0xf]
      %v302 = vld [vmem:[%s1 + $0x48] sm:$0xf]
      %v303 = vld [vmem:[%s1 + $0x4c] sm:$0xf]
      %v304 = vld [vmem:[%s1 + $0x50] sm:$0xf]
      %v305 = vld [vmem:[%s1 + $0x54] sm:$0xf]
      %v306 = vld [vmem:[%s1 + $0x58] sm:$0xf]
      %v307 = vld [vmem:[%s1 + $0x5c] sm:$0xf]
      %v316 = vunpack.c.l.b16 %v300
      %v317 = vunpack.c.l.b16 %v301
      %v318 = vunpack.c.l.b16 %v302
      %v319 = vunpack.c.l.b16 %v303
      %v320 = vunpack.c.l.b16 %v304
      %v321 = vunpack.c.l.b16 %v305
      %v322 = vunpack.c.l.b16 %v306
      %v323 = vunpack.c.l.b16 %v307
      %v324 = vpack.c.b16 %v317, %v316
      %v325 = vpack.c.b16 %v319, %v318
      %v326 = vpack.c.b16 %v321, %v320
      %v327 = vpack.c.b16 %v323, %v322
      %v333 = vsel %vm232, %v299, 0
      %335 = vmatpush.bf16.msra.mxu0 0
      %336 = vmatpush.bf16.msra.mxu0 0
      %337 = vmatpush.bf16.msra.mxu0 0
      %338 = vmatpush.bf16.msra.mxu0 0
      %339 = vmatpush.bf16.msra.mxu0 %v327
      %340 = vmatpush.bf16.msra.mxu0 %v326
      %341 = vmatpush.bf16.msra.mxu0 %v325
      %342 = vmatpush.bf16.msra.mxu0 %v324
      %343 = vmatmul.bf16.gmra.mxu0 %v333
      %v344 = vpop.f32.mrf.mxu0
      %v345 = vadd.f32 0.0, %v344
      %v346 = vpop.f32.mrf.mxu0
      %347 = vdwg.mxu0
      %v348 = vadd.f32 %v286, %v345
      %v349 = vld [vmem:[%s289 + $0x1] sm:$0x3]
      %v350 = vld [vmem:[%s289 + $0x5] sm:$0x3]
      %353 = vst [vmem:[#allocation1] ss:$4 sm:$0xff] %v349
      %s354 = scalar_lea.vmem [#allocation1], 1
      %355 = vst [vmem:[%s354] ss:$4 sm:$0xff] %v350
      %v356 = vld.sshfl [vmem:[#allocation1] sm:$0xff pattern:$0x73625140]
      %v358 = vpack.c.bf16 %v356, %v356
      %v359 = vld [vmem:[%s1 + $0x60] sm:$0xf]
      %v360 = vld [vmem:[%s1 + $0x64] sm:$0xf]
      %v361 = vld [vmem:[%s1 + $0x68] sm:$0xf]
      %v362 = vld [vmem:[%s1 + $0x6c] sm:$0xf]
      %v363 = vld [vmem:[%s1 + $0x70] sm:$0xf]
      %v364 = vld [vmem:[%s1 + $0x74] sm:$0xf]
      %v365 = vld [vmem:[%s1 + $0x78] sm:$0xf]
      %v366 = vld [vmem:[%s1 + $0x7c] sm:$0xf]
      %v375 = vunpack.c.l.b16 %v359
      %v376 = vunpack.c.l.b16 %v360
      %v377 = vunpack.c.l.b16 %v361
      %v378 = vunpack.c.l.b16 %v362
      %v379 = vunpack.c.l.b16 %v363
      %v380 = vunpack.c.l.b16 %v364
      %v381 = vunpack.c.l.b16 %v365
      %v382 = vunpack.c.l.b16 %v366
      %v383 = vpack.c.b16 %v376, %v375
      %v384 = vpack.c.b16 %v378, %v377
      %v385 = vpack.c.b16 %v380, %v379
      %v386 = vpack.c.b16 %v382, %v381
      %v392 = vsel %vm232, %v358, 0
      %394 = vmatpush.bf16.msra.mxu0 0
      %395 = vmatpush.bf16.msra.mxu0 0
      %396 = vmatpush.bf16.msra.mxu0 0
      %397 = vmatpush.bf16.msra.mxu0 0
      %398 = vmatpush.bf16.msra.mxu0 %v386
      %399 = vmatpush.bf16.msra.mxu0 %v385
      %400 = vmatpush.bf16.msra.mxu0 %v384
      %401 = vmatpush.bf16.msra.mxu0 %v383
      %402 = vmatmul.bf16.gmra.mxu0 %v392
      %v403 = vpop.f32.mrf.mxu0
      %v404 = vadd.f32 0.0, %v403
      %v405 = vpop.f32.mrf.mxu0
      %406 = vdwg.mxu0
      %v407 = vadd.f32 %v348, %v404
      %v408 = vld [vmem:[%s2] sm:$0x1]
      %v410 = vperm.slane %v408, 0
      %v412 = vadd.f32 %v407, %v410
      %v413 = vmax.f32 %v412, 0.0
      %v415 = vrot.slane %v413, 2
      %vm417 = vcmask 254976
      %418 = vst.msk [vmem:[%s170] sm:$0x3] %vm417, %v413
      %419 = vst.msk [vmem:[%s170 + $0x2] sm:$0x3] %vm417, %v415
      %p420 = scmp.lt.s32.totalorder %s14, 1
      %s421 = scalar_select %p420, %s14, 1
      %s422 = smul.addr %s421, 2
      %s423 = smul.addr %s422, 2
      %s424 = scalar_lea.vmem %s3, %s423
      // Predicated region
      $region33: #{backbone_with_fpn_forward.11} parent=31 // pred_check
        %p425 = pneg %p100
      $region34: #{backbone_with_fpn_forward.11} parent=31 // pred_check_branch
        %427 = sbr.rel (%p425) target = $region36
      $region35: #{backbone_with_fpn_forward.11} parent=31 // pred_region
        _
      $region36: #{backbone_with_fpn_forward.11} parent=31 // pred_fallthru
        _
    $region32: #{backbone_with_fpn_forward.11} parent=5 // pred_fallthru
      _
    %p428 = scmp.le.s32.totalorder 2, %s9
    // Predicated region
    $region37: #{backbone_with_fpn_forward.11} parent=5 // pred_check
      %p429 = pneg %p428
    $region38: #{backbone_with_fpn_forward.11} parent=5 // pred_check_branch
      %431 = sbr.rel (%p429) target = $region40
    $region39: #{backbone_with_fpn_forward.11} parent=5 // pred_region
      %s432 = ssub.s32 %s9, 2
      // Predicated region
      $region41: #{backbone_with_fpn_forward.11} parent=39 // pred_check
        %p433 = pneg %p106
      $region42: #{backbone_with_fpn_forward.11} parent=39 // pred_check_branch
        %435 = sbr.rel (%p433) target = $region44
      $region43: #{backbone_with_fpn_forward.11} parent=39 // pred_region
        %p436 = scmp.lt.s32.totalorder %s15, 1
        %s437 = scalar_select %p436, %s15, 1
        %s438 = smul.addr %s437, 2
        %s439 = smul.addr %s438, 2
        %s440 = scalar_lea.vmem %s3, %s439
      $region44: #{backbone_with_fpn_forward.11} parent=39 // pred_fallthru
        _
    $region40: #{backbone_with_fpn_forward.11} parent=5 // pred_fallthru
      _
  $region6: #{backbone_with_fpn_forward.11} parent=0 // loop_footer
    %s13 = sadd.s32 1, %s9
  $region7: #{backbone_with_fpn_forward.11} parent=0 // loop_footer_branch
    %8 = sbr.rel target = $region3
  $region8: #{backbone_with_fpn_forward.11} parent=0 // loop_exit
    _

// kernel: backbone_with_fpn_forward.12
$region0: #{backbone_with_fpn_forward.12}
  #allocation0 [shape = 'u32[]', space=smem, size = 0x4, offset = 0x4, fixed_abs, tag = 'smem constant byte address 0x4 - core index']
  #allocation1 [shape = 'u32[72,128]{1,0:T(1,128)}', space=vmem, size = 0x9000, scoped, tag = 'internal scratch']
  #allocation2 [shape = 'f32[4,4,16]{2,1,0:T(4,128)}', space=vmem, size = 0x2000, scoped, tag = 'scratch operand']
  %s0 = inlined_call_operand.vmem [shape: f32[2,2,2,32], index: 0, kind: input, shape index: {}]
  %s1 = inlined_call_operand.vmem [shape: f32[2,2,2,16], index: 1, kind: input, shape index: {}]
  %s2 = inlined_call_operand.vmem [shape: bf16[32,16], index: 2, kind: input, shape index: {}]
  %s3 = inlined_call_operand.vmem [shape: f32[1,16], index: 3, kind: input, shape index: {}]
  %s4 = inlined_call_operand.vmem [shape: bf16[144,16], index: 4, kind: input, shape index: {}]
  %s5 = inlined_call_operand.vmem [shape: f32[1,16], index: 5, kind: input, shape index: {}]
  %s6 = inlined_call_operand.vmem [shape: f32[2,2,2,16], index: 6, kind: output, shape index: {0}]
  %s7 = inlined_call_operand.vmem [shape: f32[2,2,2,16], index: 7, kind: output, shape index: {1}]
  %8 = xla_tuple %s6, %s7
  %s9 = sld [smem:[#allocation0]]
  $region65: #{backbone_with_fpn_forward.12} parent=0
    _
  %s11 = ssub.s32 1, %s9
  %s12 = scalar_select 0, %s11, %s9
  loop: start=0, step=1, limit=4
  $region2: #{backbone_with_fpn_forward.12} parent=0 // loop_pre_header
    _
  $region3: #{backbone_with_fpn_forward.12} parent=0 // loop_header
    %s14 = sphi 0, %s18
    %p15 = scmp.ge.s32.totalorder %s14, 4
    %s24 = sphi 0, %s26
    %s27 = sphi 0, %s24
    %s28 = sphi 0, %s27
    %s44 = sphi 0, %s28
    %s50 = sphi 0, %s52
    %s53 = sphi 0, %s50
    %s54 = sphi 0, %s53
    %s70 = sphi 0, %s54
    %s74 = sphi 0, %s74
    %s76 = sphi 0, %s74
    %s77 = sphi 0, %s76
    %s91 = sphi 0, %s77
    %s95 = sphi 0, %s95
    %s97 = sphi 0, %s95
    %s98 = sphi 0, %s97
    %s112 = sphi 0, %s98
    %s116 = sphi 0, %s116
    %s118 = sphi 0, %s116
    %s119 = sphi 0, %s118
    %s133 = sphi 0, %s119
    %s137 = sphi 0, %s137
    %s139 = sphi 0, %s137
    %s140 = sphi 0, %s139
    %s154 = sphi 0, %s140
    %s160 = sphi 0, %s162
    %s163 = sphi 0, %s160
    %s164 = sphi 0, %s163
    %s180 = sphi 0, %s164
    %s186 = sphi 0, %s188
    %s189 = sphi 0, %s186
    %s190 = sphi 0, %s189
    %s206 = sphi 0, %s190
  $region4: #{backbone_with_fpn_forward.12} parent=0 // loop_header_branch
    %17 = sbr.rel (%p15) target = $region8
  $region5: #{backbone_with_fpn_forward.12} parent=0 // loop_body
    %s19 = ssub.s32 %s14, 1
    %s20 = ssub.s32 %s14, 2
    %s21 = sadd.s32 %s14, 1
    %s22 = ssub.s32 %s14, %s21
    %p23 = scmp.eq.s32.totalorder %s22, 0
    %s25 = sadd.s32 %s24, 1
    %s26 = scalar_select %p23, %s24, %s25
    %p29 = pneg %p23
    %p30 = scmp.eq.s32.totalorder %s14, 1
    %p31 = por %p29, %p30
    %p32 = scmp.ne.s32.totalorder %s24, %s27
    %p33 = scmp.eq.s32.totalorder %s14, 0
    %p34 = por %p32, %p33
    %p35 = scmp.ne.s32.totalorder %s24, %s27
    %p36 = scmp.eq.s32.totalorder %s19, 1
    %p37 = por %p35, %p36
    %p38 = scmp.ne.s32.totalorder %s27, %s28
    %p39 = scmp.eq.s32.totalorder %s19, 0
    %p40 = por %p38, %p39
    %p41 = scmp.ne.s32.totalorder %s27, %s28
    %p42 = scmp.eq.s32.totalorder %s20, 1
    %p43 = por %p41, %p42
    %p45 = scmp.ne.s32.totalorder %s28, %s44
    %p46 = scmp.eq.s32.totalorder %s20, 0
    %p47 = por %p45, %p46
    %s48 = ssub.s32 %s14, %s21
    %p49 = scmp.eq.s32.totalorder %s48, 0
    %s51 = sadd.s32 %s50, 1
    %s52 = scalar_select %p49, %s50, %s51
    %p55 = pneg %p49
    %p56 = scmp.eq.s32.totalorder %s14, 1
    %p57 = por %p55, %p56
    %p58 = scmp.ne.s32.totalorder %s50, %s53
    %p59 = scmp.eq.s32.totalorder %s14, 0
    %p60 = por %p58, %p59
    %p61 = scmp.ne.s32.totalorder %s50, %s53
    %p62 = scmp.eq.s32.totalorder %s19, 1
    %p63 = por %p61, %p62
    %p64 = scmp.ne.s32.totalorder %s53, %s54
    %p65 = scmp.eq.s32.totalorder %s19, 0
    %p66 = por %p64, %p65
    %p67 = scmp.ne.s32.totalorder %s53, %s54
    %p68 = scmp.eq.s32.totalorder %s20, 1
    %p69 = por %p67, %p68
    %p71 = scmp.ne.s32.totalorder %s54, %s70
    %p72 = scmp.eq.s32.totalorder %s20, 0
    %p73 = por %p71, %p72
    %s75 = sadd.s32 %s74, 1
    %p78 = scmp.eq.s32.totalorder %s14, 1
    %p79 = scmp.ne.s32.totalorder %s74, %s76
    %p80 = scmp.eq.s32.totalorder %s14, 0
    %p81 = por %p79, %p80
    %p82 = scmp.ne.s32.totalorder %s74, %s76
    %p83 = scmp.eq.s32.totalorder %s19, 1
    %p84 = por %p82, %p83
    %p85 = scmp.ne.s32.totalorder %s76, %s77
    %p86 = scmp.eq.s32.totalorder %s19, 0
    %p87 = por %p85, %p86
    %p88 = scmp.ne.s32.totalorder %s76, %s77
    %p89 = scmp.eq.s32.totalorder %s20, 1
    %p90 = por %p88, %p89
    %p92 = scmp.ne.s32.totalorder %s77, %s91
    %p93 = scmp.eq.s32.totalorder %s20, 0
    %p94 = por %p92, %p93
    %s96 = sadd.s32 %s95, 1
    %p99 = scmp.eq.s32.totalorder %s14, 1
    %p100 = scmp.ne.s32.totalorder %s95, %s97
    %p101 = scmp.eq.s32.totalorder %s14, 0
    %p102 = por %p100, %p101
    %p103 = scmp.ne.s32.totalorder %s95, %s97
    %p104 = scmp.eq.s32.totalorder %s19, 1
    %p105 = por %p103, %p104
    %p106 = scmp.ne.s32.totalorder %s97, %s98
    %p107 = scmp.eq.s32.totalorder %s19, 0
    %p108 = por %p106, %p107
    %p109 = scmp.ne.s32.totalorder %s97, %s98
    %p110 = scmp.eq.s32.totalorder %s20, 1
    %p111 = por %p109, %p110
    %p113 = scmp.ne.s32.totalorder %s98, %s112
    %p114 = scmp.eq.s32.totalorder %s20, 0
    %p115 = por %p113, %p114
    %s117 = sadd.s32 %s116, 1
    %p120 = scmp.eq.s32.totalorder %s14, 1
    %p121 = scmp.ne.s32.totalorder %s116, %s118
    %p122 = scmp.eq.s32.totalorder %s14, 0
    %p123 = por %p121, %p122
    %p124 = scmp.ne.s32.totalorder %s116, %s118
    %p125 = scmp.eq.s32.totalorder %s19, 1
    %p126 = por %p124, %p125
    %p127 = scmp.ne.s32.totalorder %s118, %s119
    %p128 = scmp.eq.s32.totalorder %s19, 0
    %p129 = por %p127, %p128
    %p130 = scmp.ne.s32.totalorder %s118, %s119
    %p131 = scmp.eq.s32.totalorder %s20, 1
    %p132 = por %p130, %p131
    %p134 = scmp.ne.s32.totalorder %s119, %s133
    %p135 = scmp.eq.s32.totalorder %s20, 0
    %p136 = por %p134, %p135
    %s138 = sadd.s32 %s137, 1
    %p141 = scmp.eq.s32.totalorder %s14, 1
    %p142 = scmp.ne.s32.totalorder %s137, %s139
    %p143 = scmp.eq.s32.totalorder %s14, 0
    %p144 = por %p142, %p143
    %p145 = scmp.ne.s32.totalorder %s137, %s139
    %p146 = scmp.eq.s32.totalorder %s19, 1
    %p147 = por %p145, %p146
    %p148 = scmp.ne.s32.totalorder %s139, %s140
    %p149 = scmp.eq.s32.totalorder %s19, 0
    %p150 = por %p148, %p149
    %p151 = scmp.ne.s32.totalorder %s139, %s140
    %p152 = scmp.eq.s32.totalorder %s20, 1
    %p153 = por %p151, %p152
    %p155 = scmp.ne.s32.totalorder %s140, %s154
    %p156 = scmp.eq.s32.totalorder %s20, 0
    %p157 = por %p155, %p156
    %s158 = ssub.s32 %s14, %s21
    %p159 = scmp.eq.s32.totalorder %s158, 0
    %s161 = sadd.s32 %s160, 1
    %s162 = scalar_select %p159, %s160, %s161
    %p165 = pneg %p159
    %p166 = scmp.eq.s32.totalorder %s14, 1
    %p167 = por %p165, %p166
    %p168 = scmp.ne.s32.totalorder %s160, %s163
    %p169 = scmp.eq.s32.totalorder %s14, 0
    %p170 = por %p168, %p169
    %p171 = scmp.ne.s32.totalorder %s160, %s163
    %p172 = scmp.eq.s32.totalorder %s19, 1
    %p173 = por %p171, %p172
    %p174 = scmp.ne.s32.totalorder %s163, %s164
    %p175 = scmp.eq.s32.totalorder %s19, 0
    %p176 = por %p174, %p175
    %p177 = scmp.ne.s32.totalorder %s163, %s164
    %p178 = scmp.eq.s32.totalorder %s20, 1
    %p179 = por %p177, %p178
    %p181 = scmp.ne.s32.totalorder %s164, %s180
    %p182 = scmp.eq.s32.totalorder %s20, 0
    %p183 = por %p181, %p182
    %s184 = ssub.s32 %s14, %s21
    %p185 = scmp.eq.s32.totalorder %s184, 0
    %s187 = sadd.s32 %s186, 1
    %s188 = scalar_select %p185, %s186, %s187
    %p191 = pneg %p185
    %p192 = scmp.eq.s32.totalorder %s14, 1
    %p193 = por %p191, %p192
    %p194 = scmp.ne.s32.totalorder %s186, %s189
    %p195 = scmp.eq.s32.totalorder %s14, 0
    %p196 = por %p194, %p195
    %p197 = scmp.ne.s32.totalorder %s186, %s189
    %p198 = scmp.eq.s32.totalorder %s19, 1
    %p199 = por %p197, %p198
    %p200 = scmp.ne.s32.totalorder %s189, %s190
    %p201 = scmp.eq.s32.totalorder %s19, 0
    %p202 = por %p200, %p201
    %p203 = scmp.ne.s32.totalorder %s189, %s190
    %p204 = scmp.eq.s32.totalorder %s20, 1
    %p205 = por %p203, %p204
    %p207 = scmp.ne.s32.totalorder %s190, %s206
    %p208 = scmp.eq.s32.totalorder %s20, 0
    %p209 = por %p207, %p208
    %p210 = scmp.le.s32.totalorder 1, %s14
    %p211 = scmp.lt.s32.totalorder %s14, 3
    %p212 = pnand %p210, %p211
    %p213 = pneg %p212
    // Predicated region
    $region9: #{backbone_with_fpn_forward.12} parent=5 // pred_check
      _
    $region10: #{backbone_with_fpn_forward.12} parent=5 // pred_check_branch
      %215 = sbr.rel (%p212) target = $region12
    $region11: #{backbone_with_fpn_forward.12} parent=5 // pred_region
      %s216 = ssub.s32 %s14, 1
      // Predicated region
      $region13: #{backbone_with_fpn_forward.12} parent=11 // pred_check
        %p217 = pneg %p87
      $region14: #{backbone_with_fpn_forward.12} parent=11 // pred_check_branch
        %219 = sbr.rel (%p217) target = $region16
      $region15: #{backbone_with_fpn_forward.12} parent=11 // pred_region
        _
      $region16: #{backbone_with_fpn_forward.12} parent=11 // pred_fallthru
        _
      // Predicated region
      $region17: #{backbone_with_fpn_forward.12} parent=11 // pred_check
        %p220 = pneg %p108
      $region18: #{backbone_with_fpn_forward.12} parent=11 // pred_check_branch
        %222 = sbr.rel (%p220) target = $region20
      $region19: #{backbone_with_fpn_forward.12} parent=11 // pred_region
        _
      $region20: #{backbone_with_fpn_forward.12} parent=11 // pred_fallthru
        _
      // Predicated region
      $region21: #{backbone_with_fpn_forward.12} parent=11 // pred_check
        %p223 = pneg %p129
      $region22: #{backbone_with_fpn_forward.12} parent=11 // pred_check_branch
        %225 = sbr.rel (%p223) target = $region24
      $region23: #{backbone_with_fpn_forward.12} parent=11 // pred_region
        _
      $region24: #{backbone_with_fpn_forward.12} parent=11 // pred_fallthru
        _
      // Predicated region
      $region25: #{backbone_with_fpn_forward.12} parent=11 // pred_check
        %p226 = pneg %p150
      $region26: #{backbone_with_fpn_forward.12} parent=11 // pred_check_branch
        %228 = sbr.rel (%p226) target = $region28
      $region27: #{backbone_with_fpn_forward.12} parent=11 // pred_region
        _
      $region28: #{backbone_with_fpn_forward.12} parent=11 // pred_fallthru
        _
    $region12: #{backbone_with_fpn_forward.12} parent=5 // pred_fallthru
      _
    %p229 = scmp.lt.s32.totalorder %s14, 2
    // Predicated region
    $region29: #{backbone_with_fpn_forward.12} parent=5 // pred_check
      %p230 = pneg %p229
    $region30: #{backbone_with_fpn_forward.12} parent=5 // pred_check_branch
      %232 = sbr.rel (%p230) target = $region32
    $region31: #{backbone_with_fpn_forward.12} parent=5 // pred_region
      // Predicated region
      $region33: #{backbone_with_fpn_forward.12} parent=31 // pred_check
        %p233 = pneg %p34
      $region34: #{backbone_with_fpn_forward.12} parent=31 // pred_check_branch
        %235 = sbr.rel (%p233) target = $region36
      $region35: #{backbone_with_fpn_forward.12} parent=31 // pred_region
        %p236 = scmp.lt.s32.totalorder %s14, 1
        %s237 = scalar_select %p236, %s14, 1
        %s238 = smul.addr %s237, 2
        %s239 = smul.addr %s238, 2
        %s240 = scalar_lea.vmem %s0, %s239
      $region36: #{backbone_with_fpn_forward.12} parent=31 // pred_fallthru
        _
      // Predicated region
      $region37: #{backbone_with_fpn_forward.12} parent=31 // pred_check
        %p241 = pneg %p60
      $region38: #{backbone_with_fpn_forward.12} parent=31 // pred_check_branch
        %243 = sbr.rel (%p241) target = $region40
      $region39: #{backbone_with_fpn_forward.12} parent=31 // pred_region
        %p244 = scmp.lt.s32.totalorder %s14, 1
        %s245 = scalar_select %p244, %s14, 1
        %s246 = smul.addr %s245, 2
        %s247 = smul.addr %s246, 2
        %s248 = scalar_lea.vmem %s1, %s247
      $region40: #{backbone_with_fpn_forward.12} parent=31 // pred_fallthru
        _
    $region32: #{backbone_with_fpn_forward.12} parent=5 // pred_fallthru
      _
    %p249 = scmp.le.s32.totalorder 1, %s14
    %p250 = scmp.lt.s32.totalorder %s14, 3
    %p251 = pnand %p249, %p250
    %p252 = pneg %p251
    // Predicated region
    $region41: #{backbone_with_fpn_forward.12} parent=5 // pred_check
      _
    $region42: #{backbone_with_fpn_forward.12} parent=5 // pred_check_branch
      %254 = sbr.rel (%p251) target = $region44
    $region43: #{backbone_with_fpn_forward.12} parent=5 // pred_region
      %s255 = ssub.s32 %s14, 1
      %p256 = scmp.lt.s32.totalorder %s19, 1
      %s257 = scalar_select %p256, %s19, 1
      %s258 = smul.addr %s257, 2
      %s259 = smul.addr %s258, 2
      %s260 = scalar_lea.vmem %s0, %s259
      %p261 = pneg %p40
      %p262 = pneg %p37
      %p263 = scmp.lt.s32.totalorder %s19, 1
      %s264 = scalar_select %p263, %s19, 1
      %s265 = smul.addr %s264, 2
      %s266 = smul.addr %s265, 2
      %s267 = scalar_lea.vmem %s1, %s266
      %p268 = pneg %p66
      %p269 = pneg %p63
      %p270 = pneg %p87
      %p271 = pneg %p84
      %p272 = pneg %p108
      %p273 = pneg %p105
      %p274 = pneg %p129
      %p275 = pneg %p126
      %p276 = pneg %p150
      %p277 = pneg %p147
      %p278 = pneg %p176
      %p279 = pneg %p173
      %p280 = scmp.lt.s32.totalorder %s19, 1
      %s281 = scalar_select %p280, %s19, 1
      %s282 = smul.addr %s281, 2
      %s283 = smul.addr %s282, 2
      %s284 = scalar_lea.vmem %s6, %s283
      %p285 = pneg %p202
      %p286 = pneg %p199
      %p287 = scmp.lt.s32.totalorder %s19, 1
      %s288 = scalar_select %p287, %s19, 1
      %s289 = smul.addr %s288, 2
      %s290 = smul.addr %s289, 2
      %s291 = scalar_lea.vmem %s7, %s290
      %p292 = scmp.lt.s32.totalorder %s19, 1
      %s293 = scalar_select %p292, %s19, 1
      %s294 = smul.addr %s293, 2
      %s295 = smul.addr %s294, 2
      %s296 = scalar_lea.vmem %s0, %s295
      %p297 = scmp.lt.s32.totalorder %s19, 1
      %s298 = scalar_select %p297, %s19, 1
      %s299 = smul.addr %s298, 2
      %s300 = smul.addr %s299, 2
      %s301 = scalar_lea.vmem %s1, %s300
      %p302 = scmp.lt.s32.totalorder %s19, 1
      %s303 = scalar_select %p302, %s19, 1
      %s304 = smul.addr %s303, 2
      %s305 = smul.addr %s304, 2
      %s306 = scalar_lea.vmem %s6, %s305
      %p307 = scmp.lt.s32.totalorder %s19, 1
      %s308 = scalar_select %p307, %s19, 1
      %s309 = smul.addr %s308, 2
      %s310 = smul.addr %s309, 2
      %s311 = scalar_lea.vmem %s7, %s310
      %v313 = vld [vmem:[%s296] sm:$0x3]
      %v314 = vld [vmem:[%s296 + $0x2] sm:$0x3]
      %317 = vst [vmem:[#allocation1] ss:$4 sm:$0xff] %v313
      %s318 = scalar_lea.vmem [#allocation1], 1
      %319 = vst [vmem:[%s318] ss:$4 sm:$0xff] %v314
      %v320 = vld.sshfl [vmem:[#allocation1] sm:$0xff pattern:$0x73625140]
      %v322 = vpack.c.bf16 %v320, %v320
      %v323 = vld [vmem:[%s2] sm:$0xf]
      %v324 = vld [vmem:[%s2 + $0x4] sm:$0xf]
      %v325 = vld [vmem:[%s2 + $0x8] sm:$0xf]
      %v326 = vld [vmem:[%s2 + $0xc] sm:$0xf]
      %v327 = vld [vmem:[%s3] sm:$0x1]
      %v329 = vperm.slane %v327, 0
      %v335 = vunpack.c.l.b16 %v323
      %v336 = vunpack.c.l.b16 %v324
      %v337 = vunpack.c.l.b16 %v325
      %v338 = vunpack.c.l.b16 %v326
      %v339 = vpack.c.b16 %v336, %v335
      %v340 = vpack.c.b16 %v338, %v337
      %vm343 = vcmask 261120
      %v345 = vsel %vm343, %v322, 0
      %347 = vmatpush.bf16.msra.mxu0 0
      %348 = vmatpush.bf16.msra.mxu0 0
      %349 = vmatpush.bf16.msra.mxu0 0
      %350 = vmatpush.bf16.msra.mxu0 0
      %351 = vmatpush.bf16.msra.mxu0 0
      %352 = vmatpush.bf16.msra.mxu0 0
      %353 = vmatpush.bf16.msra.mxu0 %v340
      %354 = vmatpush.bf16.msra.mxu0 %v339
      %355 = vmatmul.bf16.gmra.mxu0 %v345
      %v356 = vpop.f32.mrf.mxu0
      %v357 = vadd.f32 %v329, %v356
      %v358 = vpop.f32.mrf.mxu0
      %359 = vdwg.mxu0
      %v360 = vld [vmem:[%s301] sm:$0x3]
      %v361 = vld [vmem:[%s301 + $0x2] sm:$0x3]
      %364 = vst [vmem:[#allocation1] ss:$4 sm:$0xff] %v360
      %s365 = scalar_lea.vmem [#allocation1], 1
      %366 = vst [vmem:[%s365] ss:$4 sm:$0xff] %v361
      %v367 = vld.sshfl [vmem:[#allocation1] sm:$0xff pattern:$0x73625140]
      %v369 = vadd.f32 %v357, %v367
      %v371 = vrot.slane %v369, 2
      %vm373 = vcmask 123904
      %374 = vst.msk [vmem:[%s306] sm:$0x3] %vm373, %v369
      %375 = vst.msk [vmem:[%s306 + $0x2] sm:$0x3] %vm373, %v371
      %vm376 = vcmask 125952
      %377 = vst.msk [vmem:[#allocation2] sm:$0xf] %vm376, 0.0
      %378 = vst.msk [vmem:[#allocation2 + $0x4] sm:$0xf] %vm376, 0.0
      %379 = vst.msk [vmem:[#allocation2 + $0x8] sm:$0xf] %vm376, 0.0
      %380 = vst.msk [vmem:[#allocation2 + $0xc] sm:$0xf] %vm376, 0.0
      %s381 = scalar_lea.vmem [#allocation2], 4
      %382 = vst.msk [vmem:[%s381 + $0x1] sm:$0x3] %vm373, %v369
      %383 = vst.msk [vmem:[%s381 + $0x5] sm:$0x3] %vm373, %v371
      %v384 = vld [vmem:[#allocation2] sm:$0x3]
      %v385 = vld [vmem:[#allocation2 + $0x4] sm:$0x3]
      %388 = vst [vmem:[#allocation1] ss:$4 sm:$0xff] %v384
      %s389 = scalar_lea.vmem [#allocation1], 1
      %390 = vst [vmem:[%s389] ss:$4 sm:$0xff] %v385
      %v391 = vld.sshfl [vmem:[#allocation1] sm:$0xff pattern:$0x73625140]
      %v393 = vpack.c.bf16 %v391, %v391
      %v394 = vld [vmem:[%s4] sm:$0xf]
      %v395 = vld [vmem:[%s4 + $0x4] sm:$0xf]
      %v396 = vld [vmem:[#allocation2 + $0x1] sm:$0x3]
      %v397 = vld [vmem:[#allocation2 + $0x5] sm:$0x3]
      %400 = vst [vmem:[#allocation1] ss:$4 sm:$0xff] %v396
      %s401 = scalar_lea.vmem [#allocation1], 1
      %402 = vst [vmem:[%s401] ss:$4 sm:$0xff] %v397
      %v403 = vld.sshfl [vmem:[#allocation1] sm:$0xff pattern:$0x73625140]
      %v405 = vpack.c.bf16 %v403, %v403
      %v406 = vld [vmem:[%s4 + $0x8] sm:$0xf]
      %v407 = vld [vmem:[%s4 + $0xc] sm:$0xf]
      %v410 = vunpack.c.l.b16 %v406
      %v411 = vunpack.c.l.b16 %v407
      %v412 = vpack.c.b16 %v411, %v410
      %vm414 = vcmask 130048
      %v416 = vsel %vm414, %v405, 0
      %418 = vmatpush.bf16.msra.mxu0 0
      %419 = vmatpush.bf16.msra.mxu0 0
      %420 = vmatpush.bf16.msra.mxu0 0
      %421 = vmatpush.bf16.msra.mxu0 0
      %422 = vmatpush.bf16.msra.mxu0 0
      %423 = vmatpush.bf16.msra.mxu0 0
      %424 = vmatpush.bf16.msra.mxu0 0
      %425 = vmatpush.bf16.msra.mxu0 %v412
      %426 = vmatmul.bf16.gmra.mxu0 %v416
      %v427 = vpop.f32.mrf.mxu0
      %v428 = vadd.f32 0.0, %v427
      %v429 = vpop.f32.mrf.mxu0
      %430 = vdwg.mxu0
      %v433 = vunpack.c.l.b16 %v394
      %v434 = vunpack.c.l.b16 %v395
      %v435 = vpack.c.b16 %v434, %v433
      %v438 = vsel %vm414, %v393, 0
      %440 = vmatpush.bf16.msra.mxu0 0
      %441 = vmatpush.bf16.msra.mxu0 0
      %442 = vmatpush.bf16.msra.mxu0 0
      %443 = vmatpush.bf16.msra.mxu0 0
      %444 = vmatpush.bf16.msra.mxu0 0
      %445 = vmatpush.bf16.msra.mxu0 0
      %446 = vmatpush.bf16.msra.mxu0 0
      %447 = vmatpush.bf16.msra.mxu0 %v435
      %448 = vmatmul.bf16.gmra.mxu0 %v438
      %v449 = vpop.f32.mrf.mxu0
      %v450 = vadd.f32 %v428, %v449
      %v451 = vpop.f32.mrf.mxu0
      %452 = vdwg.mxu0
      %v453 = vld [vmem:[#allocation2 + $0x2] sm:$0x3]
      %v454 = vld [vmem:[#allocation2 + $0x6] sm:$0x3]
      %457 = vst [vmem:[#allocation1] ss:$4 sm:$0xff] %v453
      %s458 = scalar_lea.vmem [#allocation1], 1
      %459 = vst [vmem:[%s458] ss:$4 sm:$0xff] %v454
      %v460 = vld.sshfl [vmem:[#allocation1] sm:$0xff pattern:$0x73625140]
      %v462 = vpack.c.bf16 %v460, %v460
      %v463 = vld [vmem:[%s4 + $0x10] sm:$0xf]
      %v464 = vld [vmem:[%s4 + $0x14] sm:$0xf]
      %v467 = vunpack.c.l.b16 %v463
      %v468 = vunpack.c.l.b16 %v464
      %v469 = vpack.c.b16 %v468, %v467
      %v472 = vsel %vm414, %v462, 0
      %474 = vmatpush.bf16.msra.mxu0 0
      %475 = vmatpush.bf16.msra.mxu0 0
      %476 = vmatpush.bf16.msra.mxu0 0
      %477 = vmatpush.bf16.msra.mxu0 0
      %478 = vmatpush.bf16.msra.mxu0 0
      %479 = vmatpush.bf16.msra.mxu0 0
      %480 = vmatpush.bf16.msra.mxu0 0
      %481 = vmatpush.bf16.msra.mxu0 %v469
      %482 = vmatmul.bf16.gmra.mxu0 %v472
      %v483 = vpop.f32.mrf.mxu0
      %v484 = vadd.f32 0.0, %v483
      %v485 = vpop.f32.mrf.mxu0
      %486 = vdwg.mxu0
      %v487 = vadd.f32 %v450, %v484
      %v488 = vld [vmem:[%s381] sm:$0x3]
      %v489 = vld [vmem:[%s381 + $0x4] sm:$0x3]
      %492 = vst [vmem:[#allocation1] ss:$4 sm:$0xff] %v488
      %s493 = scalar_lea.vmem [#allocation1], 1
      %494 = vst [vmem:[%s493] ss:$4 sm:$0xff] %v489
      %v495 = vld.sshfl [vmem:[#allocation1] sm:$0xff pattern:$0x73625140]
      %v497 = vpack.c.bf16 %v495, %v495
      %v498 = vld [vmem:[%s4 + $0x18] sm:$0xf]
      %v499 = vld [vmem:[%s4 + $0x1c] sm:$0xf]
      %v502 = vunpack.c.l.b16 %v498
      %v503 = vunpack.c.l.b16 %v499
      %v504 = vpack.c.b16 %v503, %v502
      %v507 = vsel %vm414, %v497, 0
      %509 = vmatpush.bf16.msra.mxu0 0
      %510 = vmatpush.bf16.msra.mxu0 0
      %511 = vmatpush.bf16.msra.mxu0 0
      %512 = vmatpush.bf16.msra.mxu0 0
      %513 = vmatpush.bf16.msra.mxu0 0
      %514 = vmatpush.bf16.msra.mxu0 0
      %515 = vmatpush.bf16.msra.mxu0 0
      %516 = vmatpush.bf16.msra.mxu0 %v504
      %517 = vmatmul.bf16.gmra.mxu0 %v507
      %v518 = vpop.f32.mrf.mxu0
      %v519 = vadd.f32 0.0, %v518
      %v520 = vpop.f32.mrf.mxu0
      %521 = vdwg.mxu0
      %v522 = vadd.f32 %v487, %v519
      %v523 = vld [vmem:[%s381 + $0x1] sm:$0x3]
      %v524 = vld [vmem:[%s381 + $0x5] sm:$0x3]
      %527 = vst [vmem:[#allocation1] ss:$4 sm:$0xff] %v523
      %s528 = scalar_lea.vmem [#allocation1], 1
      %529 = vst [vmem:[%s528] ss:$4 sm:$0xff] %v524
      %v530 = vld.sshfl [vmem:[#allocation1] sm:$0xff pattern:$0x73625140]
      %v532 = vpack.c.bf16 %v530, %v530
      %v533 = vld [vmem:[%s4 + $0x20] sm:$0xf]
      %v534 = vld [vmem:[%s4 + $0x24] sm:$0xf]
      %v537 = vunpack.c.l.b16 %v533
      %v538 = vunpack.c.l.b16 %v534
      %v539 = vpack.c.b16 %v538, %v537
      %v542 = vsel %vm414, %v532, 0
      %544 = vmatpush.bf16.msra.mxu0 0
      %545 = vmatpush.bf16.msra.mxu0 0
      %546 = vmatpush.bf16.msra.mxu0 0
      %547 = vmatpush.bf16.msra.mxu0 0
      %548 = vmatpush.bf16.msra.mxu0 0
      %549 = vmatpush.bf16.msra.mxu0 0
      %550 = vmatpush.bf16.msra.mxu0 0
      %551 = vmatpush.bf16.msra.mxu0 %v539
      %552 = vmatmul.bf16.gmra.mxu0 %v542
      %v553 = vpop.f32.mrf.mxu0
      %v554 = vadd.f32 0.0, %v553
      %v555 = vpop.f32.mrf.mxu0
      %556 = vdwg.mxu0
      %v557 = vadd.f32 %v522, %v554
      %v558 = vld [vmem:[%s381 + $0x2] sm:$0x3]
      %v559 = vld [vmem:[%s381 + $0x6] sm:$0x3]
      %562 = vst [vmem:[#allocation1] ss:$4 sm:$0xff] %v558
      %s563 = scalar_lea.vmem [#allocation1], 1
      %564 = vst [vmem:[%s563] ss:$4 sm:$0xff] %v559
      %v565 = vld.sshfl [vmem:[#allocation1] sm:$0xff pattern:$0x73625140]
      %v567 = vpack.c.bf16 %v565, %v565
      %v568 = vld [vmem:[%s4 + $0x28] sm:$0xf]
      %v569 = vld [vmem:[%s4 + $0x2c] sm:$0xf]
      %v572 = vunpack.c.l.b16 %v568
      %v573 = vunpack.c.l.b16 %v569
      %v574 = vpack.c.b16 %v573, %v572
      %v577 = vsel %vm414, %v567, 0
      %579 = vmatpush.bf16.msra.mxu0 0
      %580 = vmatpush.bf16.msra.mxu0 0
      %581 = vmatpush.bf16.msra.mxu0 0
      %582 = vmatpush.bf16.msra.mxu0 0
      %583 = vmatpush.bf16.msra.mxu0 0
      %584 = vmatpush.bf16.msra.mxu0 0
      %585 = vmatpush.bf16.msra.mxu0 0
      %586 = vmatpush.bf16.msra.mxu0 %v574
      %587 = vmatmul.bf16.gmra.mxu0 %v577
      %v588 = vpop.f32.mrf.mxu0
      %v589 = vadd.f32 0.0, %v588
      %v590 = vpop.f32.mrf.mxu0
      %591 = vdwg.mxu0
      %v592 = vadd.f32 %v557, %v589
      %s593 = scalar_lea.vmem [#allocation2], 8
      %v594 = vld [vmem:[%s593] sm:$0x3]
      %v595 = vld [vmem:[%s593 + $0x4] sm:$0x3]
      %598 = vst [vmem:[#allocation1] ss:$4 sm:$0xff] %v594
      %s599 = scalar_lea.vmem [#allocation1], 1
      %600 = vst [vmem:[%s599] ss:$4 sm:$0xff] %v595
      %v601 = vld.sshfl [vmem:[#allocation1] sm:$0xff pattern:$0x73625140]
      %v603 = vpack.c.bf16 %v601, %v601
      %v604 = vld [vmem:[%s4 + $0x30] sm:$0xf]
      %v605 = vld [vmem:[%s4 + $0x34] sm:$0xf]
      %v608 = vunpack.c.l.b16 %v604
      %v609 = vunpack.c.l.b16 %v605
      %v610 = vpack.c.b16 %v609, %v608
      %v613 = vsel %vm414, %v603, 0
      %615 = vmatpush.bf16.msra.mxu0 0
      %616 = vmatpush.bf16.msra.mxu0 0
      %617 = vmatpush.bf16.msra.mxu0 0
      %618 = vmatpush.bf16.msra.mxu0 0
      %619 = vmatpush.bf16.msra.mxu0 0
      %620 = vmatpush.bf16.msra.mxu0 0
      %621 = vmatpush.bf16.msra.mxu0 0
      %622 = vmatpush.bf16.msra.mxu0 %v610
      %623 = vmatmul.bf16.gmra.mxu0 %v613
      %v624 = vpop.f32.mrf.mxu0
      %v625 = vadd.f32 0.0, %v624
      %v626 = vpop.f32.mrf.mxu0
      %627 = vdwg.mxu0
      %v628 = vadd.f32 %v592, %v625
      %v629 = vld [vmem:[%s593 + $0x1] sm:$0x3]
      %v630 = vld [vmem:[%s593 + $0x5] sm:$0x3]
      %633 = vst [vmem:[#allocation1] ss:$4 sm:$0xff] %v629
      %s634 = scalar_lea.vmem [#allocation1], 1
      %635 = vst [vmem:[%s634] ss:$4 sm:$0xff] %v630
      %v636 = vld.sshfl [vmem:[#allocation1] sm:$0xff pattern:$0x73625140]
      %v638 = vpack.c.bf16 %v636, %v636
      %v639 = vld [vmem:[%s4 + $0x38] sm:$0xf]
      %v640 = vld [vmem:[%s4 + $0x3c] sm:$0xf]
      %v643 = vunpack.c.l.b16 %v639
      %v644 = vunpack.c.l.b16 %v640
      %v645 = vpack.c.b16 %v644, %v643
      %v648 = vsel %vm414, %v638, 0
      %650 = vmatpush.bf16.msra.mxu0 0
      %651 = vmatpush.bf16.msra.mxu0 0
      %652 = vmatpush.bf16.msra.mxu0 0
      %653 = vmatpush.bf16.msra.mxu0 0
      %654 = vmatpush.bf16.msra.mxu0 0
      %655 = vmatpush.bf16.msra.mxu0 0
      %656 = vmatpush.bf16.msra.mxu0 0
      %657 = vmatpush.bf16.msra.mxu0 %v645
      %658 = vmatmul.bf16.gmra.mxu0 %v648
      %v659 = vpop.f32.mrf.mxu0
      %v660 = vadd.f32 0.0, %v659
      %v661 = vpop.f32.mrf.mxu0
      %662 = vdwg.mxu0
      %v663 = vadd.f32 %v628, %v660
      %v664 = vld [vmem:[%s593 + $0x2] sm:$0x3]
      %v665 = vld [vmem:[%s593 + $0x6] sm:$0x3]
      %668 = vst [vmem:[#allocation1] ss:$4 sm:$0xff] %v664
      %s669 = scalar_lea.vmem [#allocation1], 1
      %670 = vst [vmem:[%s669] ss:$4 sm:$0xff] %v665
      %v671 = vld.sshfl [vmem:[#allocation1] sm:$0xff pattern:$0x73625140]
      %v673 = vpack.c.bf16 %v671, %v671
      %v674 = vld [vmem:[%s4 + $0x40] sm:$0xf]
      %v675 = vld [vmem:[%s4 + $0x44] sm:$0xf]
      %v678 = vunpack.c.l.b16 %v674
      %v679 = vunpack.c.l.b16 %v675
      %v680 = vpack.c.b16 %v679, %v678
      %v683 = vsel %vm414, %v673, 0
      %685 = vmatpush.bf16.msra.mxu0 0
      %686 = vmatpush.bf16.msra.mxu0 0
      %687 = vmatpush.bf16.msra.mxu0 0
      %688 = vmatpush.bf16.msra.mxu0 0
      %689 = vmatpush.bf16.msra.mxu0 0
      %690 = vmatpush.bf16.msra.mxu0 0
      %691 = vmatpush.bf16.msra.mxu0 0
      %692 = vmatpush.bf16.msra.mxu0 %v680
      %693 = vmatmul.bf16.gmra.mxu0 %v683
      %v694 = vpop.f32.mrf.mxu0
      %v695 = vadd.f32 0.0, %v694
      %v696 = vpop.f32.mrf.mxu0
      %697 = vdwg.mxu0
      %v698 = vadd.f32 %v663, %v695
      %v699 = vld [vmem:[%s5] sm:$0x1]
      %v701 = vperm.slane %v699, 0
      %v703 = vadd.f32 %v698, %v701
      %v705 = vrot.slane %v703, 2
      %707 = vst.msk [vmem:[%s311] sm:$0x3] %vm373, %v703
      %708 = vst.msk [vmem:[%s311 + $0x2] sm:$0x3] %vm373, %v705
      %p709 = scmp.lt.s32.totalorder %s19, 1
      %s710 = scalar_select %p709, %s19, 1
      %s711 = smul.addr %s710, 2
      %s712 = smul.addr %s711, 2
      %s713 = scalar_lea.vmem %s6, %s712
      %p714 = scmp.lt.s32.totalorder %s19, 1
      %s715 = scalar_select %p714, %s19, 1
      %s716 = smul.addr %s715, 2
      %s717 = smul.addr %s716, 2
      %s718 = scalar_lea.vmem %s7, %s717
      // Predicated region
      $region45: #{backbone_with_fpn_forward.12} parent=43 // pred_check
        %p719 = pneg %p173
      $region46: #{backbone_with_fpn_forward.12} parent=43 // pred_check_branch
        %721 = sbr.rel (%p719) target = $region48
      $region47: #{backbone_with_fpn_forward.12} parent=43 // pred_region
        _
      $region48: #{backbone_with_fpn_forward.12} parent=43 // pred_fallthru
        _
      // Predicated region
      $region49: #{backbone_with_fpn_forward.12} parent=43 // pred_check
        %p722 = pneg %p199
      $region50: #{backbone_with_fpn_forward.12} parent=43 // pred_check_branch
        %724 = sbr.rel (%p722) target = $region52
      $region51: #{backbone_with_fpn_forward.12} parent=43 // pred_region
        _
      $region52: #{backbone_with_fpn_forward.12} parent=43 // pred_fallthru
        _
    $region44: #{backbone_with_fpn_forward.12} parent=5 // pred_fallthru
      _
    %p725 = scmp.le.s32.totalorder 2, %s14
    // Predicated region
    $region53: #{backbone_with_fpn_forward.12} parent=5 // pred_check
      %p726 = pneg %p725
    $region54: #{backbone_with_fpn_forward.12} parent=5 // pred_check_branch
      %728 = sbr.rel (%p726) target = $region56
    $region55: #{backbone_with_fpn_forward.12} parent=5 // pred_region
      %s729 = ssub.s32 %s14, 2
      // Predicated region
      $region57: #{backbone_with_fpn_forward.12} parent=55 // pred_check
        %p730 = pneg %p179
      $region58: #{backbone_with_fpn_forward.12} parent=55 // pred_check_branch
        %732 = sbr.rel (%p730) target = $region60
      $region59: #{backbone_with_fpn_forward.12} parent=55 // pred_region
        %p733 = scmp.lt.s32.totalorder %s20, 1
        %s734 = scalar_select %p733, %s20, 1
        %s735 = smul.addr %s734, 2
        %s736 = smul.addr %s735, 2
        %s737 = scalar_lea.vmem %s6, %s736
      $region60: #{backbone_with_fpn_forward.12} parent=55 // pred_fallthru
        _
      // Predicated region
      $region61: #{backbone_with_fpn_forward.12} parent=55 // pred_check
        %p738 = pneg %p205
      $region62: #{backbone_with_fpn_forward.12} parent=55 // pred_check_branch
        %740 = sbr.rel (%p738) target = $region64
      $region63: #{backbone_with_fpn_forward.12} parent=55 // pred_region
        %p741 = scmp.lt.s32.totalorder %s20, 1
        %s742 = scalar_select %p741, %s20, 1
        %s743 = smul.addr %s742, 2
        %s744 = smul.addr %s743, 2
        %s745 = scalar_lea.vmem %s7, %s744
      $region64: #{backbone_with_fpn_forward.12} parent=55 // pred_fallthru
        _
    $region56: #{backbone_with_fpn_forward.12} parent=5 // pred_fallthru
      _
  $region6: #{backbone_with_fpn_forward.12} parent=0 // loop_footer
    %s18 = sadd.s32 1, %s14
  $region7: #{backbone_with_fpn_forward.12} parent=0 // loop_footer_branch
    %13 = sbr.rel target = $region3
  $region8: #{backbone_with_fpn_forward.12} parent=0 // loop_exit
    _

// kernel: backbone_with_fpn_forward.13
$region0: #{backbone_with_fpn_forward.13}
  #allocation0 [shape = 'u32[]', space=smem, size = 0x4, offset = 0x4, fixed_abs, tag = 'smem constant byte address 0x4 - core index']
  #allocation1 [shape = 'u32[72,128]{1,0:T(1,128)}', space=vmem, size = 0x9000, scoped, tag = 'internal scratch']
  #allocation2 [shape = 'f32[6,6,16]{2,1,0:T(8,128)}', space=vmem, size = 0x6000, scoped, tag = 'scratch operand']
  %s0 = inlined_call_operand.vmem [shape: f32[2,4,4,16], index: 0, kind: input, shape index: {}]
  %s1 = inlined_call_operand.vmem [shape: f32[2,4,4,16], index: 1, kind: input, shape index: {}]
  %s2 = inlined_call_operand.vmem [shape: bf16[16,16], index: 2, kind: input, shape index: {}]
  %s3 = inlined_call_operand.vmem [shape: f32[1,16], index: 3, kind: input, shape index: {}]
  %s4 = inlined_call_operand.vmem [shape: bf16[144,16], index: 4, kind: input, shape index: {}]
  %s5 = inlined_call_operand.vmem [shape: f32[1,16], index: 5, kind: input, shape index: {}]
  %s6 = inlined_call_operand.vmem [shape: f32[2,4,4,16], index: 6, kind: output, shape index: {0}]
  %s7 = inlined_call_operand.hbm [shape: f32[2,4,4,16], index: 7, kind: output, shape index: {1}]
  %8 = xla_tuple %s6, %s7
  %s9 = sld [smem:[#allocation0]]
  $region65: #{backbone_with_fpn_forward.13} parent=0
    _
  %s11 = ssub.s32 1, %s9
  %s12 = scalar_select 0, %s11, %s9
  $region1: #{backbone_with_fpn_forward.13} parent=0
    #allocation3 [shape = 'u8[16384]{0}', space=vmem, size = 0x4000, scoped, tag = 'output window, operand 1']
    #allocation4 [shape = 's32[2]{0}', space=sflag, size = 0x8, scoped, tag = 'scoped memory for backbone_with_fpn_forward.13']
    %13 = vsyncpa [#allocation4], 0
    %s14 = scalar_lea.sflag [#allocation4], 1
    %15 = vsyncpa %s14, 0
    loop: start=0, step=1, limit=4
    $region2: #{backbone_with_fpn_forward.13} parent=1 // loop_pre_header
      _
    $region3: #{backbone_with_fpn_forward.13} parent=1 // loop_header
      %s17 = sphi 0, %s21
      %p18 = scmp.ge.s32.totalorder %s17, 4
      %s27 = sphi 0, %s29
      %s30 = sphi 0, %s27
      %s31 = sphi 0, %s30
      %s47 = sphi 0, %s31
      %s53 = sphi 0, %s55
      %s56 = sphi 0, %s53
      %s57 = sphi 0, %s56
      %s73 = sphi 0, %s57
      %s77 = sphi 0, %s77
      %s79 = sphi 0, %s77
      %s80 = sphi 0, %s79
      %s94 = sphi 0, %s80
      %s98 = sphi 0, %s98
      %s100 = sphi 0, %s98
      %s101 = sphi 0, %s100
      %s115 = sphi 0, %s101
      %s119 = sphi 0, %s119
      %s121 = sphi 0, %s119
      %s122 = sphi 0, %s121
      %s136 = sphi 0, %s122
      %s140 = sphi 0, %s140
      %s142 = sphi 0, %s140
      %s143 = sphi 0, %s142
      %s157 = sphi 0, %s143
      %s163 = sphi 0, %s165
      %s166 = sphi 0, %s163
      %s167 = sphi 0, %s166
      %s183 = sphi 0, %s167
      %s189 = sphi 0, %s191
      %s192 = sphi 0, %s189
      %s193 = sphi 0, %s192
      %s209 = sphi 0, %s193
    $region4: #{backbone_with_fpn_forward.13} parent=1 // loop_header_branch
      %20 = sbr.rel (%p18) target = $region8
    $region5: #{backbone_with_fpn_forward.13} parent=1 // loop_body
      %s22 = ssub.s32 %s17, 1
      %s23 = ssub.s32 %s17, 2
      %s24 = sadd.s32 %s17, 1
      %s25 = ssub.s32 %s17, %s24
      %p26 = scmp.eq.s32.totalorder %s25, 0
      %s28 = sadd.s32 %s27, 1
      %s29 = scalar_select %p26, %s27, %s28
      %p32 = pneg %p26
      %p33 = scmp.eq.s32.totalorder %s17, 1
      %p34 = por %p32, %p33
      %p35 = scmp.ne.s32.totalorder %s27, %s30
      %p36 = scmp.eq.s32.totalorder %s17, 0
      %p37 = por %p35, %p36
      %p38 = scmp.ne.s32.totalorder %s27, %s30
      %p39 = scmp.eq.s32.totalorder %s22, 1
      %p40 = por %p38, %p39
      %p41 = scmp.ne.s32.totalorder %s30, %s31
      %p42 = scmp.eq.s32.totalorder %s22, 0
      %p43 = por %p41, %p42
      %p44 = scmp.ne.s32.totalorder %s30, %s31
      %p45 = scmp.eq.s32.totalorder %s23, 1
      %p46 = por %p44, %p45
      %p48 = scmp.ne.s32.totalorder %s31, %s47
      %p49 = scmp.eq.s32.totalorder %s23, 0
      %p50 = por %p48, %p49
      %s51 = ssub.s32 %s17, %s24
      %p52 = scmp.eq.s32.totalorder %s51, 0
      %s54 = sadd.s32 %s53, 1
      %s55 = scalar_select %p52, %s53, %s54
      %p58 = pneg %p52
      %p59 = scmp.eq.s32.totalorder %s17, 1
      %p60 = por %p58, %p59
      %p61 = scmp.ne.s32.totalorder %s53, %s56
      %p62 = scmp.eq.s32.totalorder %s17, 0
      %p63 = por %p61, %p62
      %p64 = scmp.ne.s32.totalorder %s53, %s56
      %p65 = scmp.eq.s32.totalorder %s22, 1
      %p66 = por %p64, %p65
      %p67 = scmp.ne.s32.totalorder %s56, %s57
      %p68 = scmp.eq.s32.totalorder %s22, 0
      %p69 = por %p67, %p68
      %p70 = scmp.ne.s32.totalorder %s56, %s57
      %p71 = scmp.eq.s32.totalorder %s23, 1
      %p72 = por %p70, %p71
      %p74 = scmp.ne.s32.totalorder %s57, %s73
      %p75 = scmp.eq.s32.totalorder %s23, 0
      %p76 = por %p74, %p75
      %s78 = sadd.s32 %s77, 1
      %p81 = scmp.eq.s32.totalorder %s17, 1
      %p82 = scmp.ne.s32.totalorder %s77, %s79
      %p83 = scmp.eq.s32.totalorder %s17, 0
      %p84 = por %p82, %p83
      %p85 = scmp.ne.s32.totalorder %s77, %s79
      %p86 = scmp.eq.s32.totalorder %s22, 1
      %p87 = por %p85, %p86
      %p88 = scmp.ne.s32.totalorder %s79, %s80
      %p89 = scmp.eq.s32.totalorder %s22, 0
      %p90 = por %p88, %p89
      %p91 = scmp.ne.s32.totalorder %s79, %s80
      %p92 = scmp.eq.s32.totalorder %s23, 1
      %p93 = por %p91, %p92
      %p95 = scmp.ne.s32.totalorder %s80, %s94
      %p96 = scmp.eq.s32.totalorder %s23, 0
      %p97 = por %p95, %p96
      %s99 = sadd.s32 %s98, 1
      %p102 = scmp.eq.s32.totalorder %s17, 1
      %p103 = scmp.ne.s32.totalorder %s98, %s100
      %p104 = scmp.eq.s32.totalorder %s17, 0
      %p105 = por %p103, %p104
      %p106 = scmp.ne.s32.totalorder %s98, %s100
      %p107 = scmp.eq.s32.totalorder %s22, 1
      %p108 = por %p106, %p107
      %p109 = scmp.ne.s32.totalorder %s100, %s101
      %p110 = scmp.eq.s32.totalorder %s22, 0
      %p111 = por %p109, %p110
      %p112 = scmp.ne.s32.totalorder %s100, %s101
      %p113 = scmp.eq.s32.totalorder %s23, 1
      %p114 = por %p112, %p113
      %p116 = scmp.ne.s32.totalorder %s101, %s115
      %p117 = scmp.eq.s32.totalorder %s23, 0
      %p118 = por %p116, %p117
      %s120 = sadd.s32 %s119, 1
      %p123 = scmp.eq.s32.totalorder %s17, 1
      %p124 = scmp.ne.s32.totalorder %s119, %s121
      %p125 = scmp.eq.s32.totalorder %s17, 0
      %p126 = por %p124, %p125
      %p127 = scmp.ne.s32.totalorder %s119, %s121
      %p128 = scmp.eq.s32.totalorder %s22, 1
      %p129 = por %p127, %p128
      %p130 = scmp.ne.s32.totalorder %s121, %s122
      %p131 = scmp.eq.s32.totalorder %s22, 0
      %p132 = por %p130, %p131
      %p133 = scmp.ne.s32.totalorder %s121, %s122
      %p134 = scmp.eq.s32.totalorder %s23, 1
      %p135 = por %p133, %p134
      %p137 = scmp.ne.s32.totalorder %s122, %s136
      %p138 = scmp.eq.s32.totalorder %s23, 0
      %p139 = por %p137, %p138
      %s141 = sadd.s32 %s140, 1
      %p144 = scmp.eq.s32.totalorder %s17, 1
      %p145 = scmp.ne.s32.totalorder %s140, %s142
      %p146 = scmp.eq.s32.totalorder %s17, 0
      %p147 = por %p145, %p146
      %p148 = scmp.ne.s32.totalorder %s140, %s142
      %p149 = scmp.eq.s32.totalorder %s22, 1
      %p150 = por %p148, %p149
      %p151 = scmp.ne.s32.totalorder %s142, %s143
      %p152 = scmp.eq.s32.totalorder %s22, 0
      %p153 = por %p151, %p152
      %p154 = scmp.ne.s32.totalorder %s142, %s143
      %p155 = scmp.eq.s32.totalorder %s23, 1
      %p156 = por %p154, %p155
      %p158 = scmp.ne.s32.totalorder %s143, %s157
      %p159 = scmp.eq.s32.totalorder %s23, 0
      %p160 = por %p158, %p159
      %s161 = ssub.s32 %s17, %s24
      %p162 = scmp.eq.s32.totalorder %s161, 0
      %s164 = sadd.s32 %s163, 1
      %s165 = scalar_select %p162, %s163, %s164
      %p168 = pneg %p162
      %p169 = scmp.eq.s32.totalorder %s17, 1
      %p170 = por %p168, %p169
      %p171 = scmp.ne.s32.totalorder %s163, %s166
      %p172 = scmp.eq.s32.totalorder %s17, 0
      %p173 = por %p171, %p172
      %p174 = scmp.ne.s32.totalorder %s163, %s166
      %p175 = scmp.eq.s32.totalorder %s22, 1
      %p176 = por %p174, %p175
      %p177 = scmp.ne.s32.totalorder %s166, %s167
      %p178 = scmp.eq.s32.totalorder %s22, 0
      %p179 = por %p177, %p178
      %p180 = scmp.ne.s32.totalorder %s166, %s167
      %p181 = scmp.eq.s32.totalorder %s23, 1
      %p182 = por %p180, %p181
      %p184 = scmp.ne.s32.totalorder %s167, %s183
      %p185 = scmp.eq.s32.totalorder %s23, 0
      %p186 = por %p184, %p185
      %s187 = ssub.s32 %s17, %s24
      %p188 = scmp.eq.s32.totalorder %s187, 0
      %s190 = sadd.s32 %s189, 1
      %s191 = scalar_select %p188, %s189, %s190
      %p194 = pneg %p188
      %p195 = scmp.eq.s32.totalorder %s17, 1
      %p196 = por %p194, %p195
      %p197 = scmp.ne.s32.totalorder %s189, %s192
      %p198 = scmp.eq.s32.totalorder %s17, 0
      %p199 = por %p197, %p198
      %p200 = scmp.ne.s32.totalorder %s189, %s192
      %p201 = scmp.eq.s32.totalorder %s22, 1
      %p202 = por %p200, %p201
      %p203 = scmp.ne.s32.totalorder %s192, %s193
      %p204 = scmp.eq.s32.totalorder %s22, 0
      %p205 = por %p203, %p204
      %p206 = scmp.ne.s32.totalorder %s192, %s193
      %p207 = scmp.eq.s32.totalorder %s23, 1
      %p208 = por %p206, %p207
      %p210 = scmp.ne.s32.totalorder %s193, %s209
      %p211 = scmp.eq.s32.totalorder %s23, 0
      %p212 = por %p210, %p211
      %p213 = scmp.le.s32.totalorder 1, %s17
      %p214 = scmp.lt.s32.totalorder %s17, 3
      %p215 = pnand %p213, %p214
      %p216 = pneg %p215
      // Predicated region
      $region9: #{backbone_with_fpn_forward.13} parent=5 // pred_check
        _
      $region10: #{backbone_with_fpn_forward.13} parent=5 // pred_check_branch
        %218 = sbr.rel (%p215) target = $region12
      $region11: #{backbone_with_fpn_forward.13} parent=5 // pred_region
        %s219 = ssub.s32 %s17, 1
        // Predicated region
        $region13: #{backbone_with_fpn_forward.13} parent=11 // pred_check
          %p220 = pneg %p90
        $region14: #{backbone_with_fpn_forward.13} parent=11 // pred_check_branch
          %222 = sbr.rel (%p220) target = $region16
        $region15: #{backbone_with_fpn_forward.13} parent=11 // pred_region
          _
        $region16: #{backbone_with_fpn_forward.13} parent=11 // pred_fallthru
          _
        // Predicated region
        $region17: #{backbone_with_fpn_forward.13} parent=11 // pred_check
          %p223 = pneg %p111
        $region18: #{backbone_with_fpn_forward.13} parent=11 // pred_check_branch
          %225 = sbr.rel (%p223) target = $region20
        $region19: #{backbone_with_fpn_forward.13} parent=11 // pred_region
          _
        $region20: #{backbone_with_fpn_forward.13} parent=11 // pred_fallthru
          _
        // Predicated region
        $region21: #{backbone_with_fpn_forward.13} parent=11 // pred_check
          %p226 = pneg %p132
        $region22: #{backbone_with_fpn_forward.13} parent=11 // pred_check_branch
          %228 = sbr.rel (%p226) target = $region24
        $region23: #{backbone_with_fpn_forward.13} parent=11 // pred_region
          _
        $region24: #{backbone_with_fpn_forward.13} parent=11 // pred_fallthru
          _
        // Predicated region
        $region25: #{backbone_with_fpn_forward.13} parent=11 // pred_check
          %p229 = pneg %p153
        $region26: #{backbone_with_fpn_forward.13} parent=11 // pred_check_branch
          %231 = sbr.rel (%p229) target = $region28
        $region27: #{backbone_with_fpn_forward.13} parent=11 // pred_region
          _
        $region28: #{backbone_with_fpn_forward.13} parent=11 // pred_fallthru
          _
      $region12: #{backbone_with_fpn_forward.13} parent=5 // pred_fallthru
        _
      %p232 = scmp.lt.s32.totalorder %s17, 2
      // Predicated region
      $region29: #{backbone_with_fpn_forward.13} parent=5 // pred_check
        %p233 = pneg %p232
      $region30: #{backbone_with_fpn_forward.13} parent=5 // pred_check_branch
        %235 = sbr.rel (%p233) target = $region32
      $region31: #{backbone_with_fpn_forward.13} parent=5 // pred_region
        // Predicated region
        $region33: #{backbone_with_fpn_forward.13} parent=31 // pred_check
          %p236 = pneg %p37
        $region34: #{backbone_with_fpn_forward.13} parent=31 // pred_check_branch
          %238 = sbr.rel (%p236) target = $region36
        $region35: #{backbone_with_fpn_forward.13} parent=31 // pred_region
          %p239 = scmp.lt.s32.totalorder %s17, 1
          %s240 = scalar_select %p239, %s17, 1
          %s241 = smul.addr %s240, 4
          %s242 = smul.addr %s241, 4
          %s243 = scalar_lea.vmem %s0, %s242
        $region36: #{backbone_with_fpn_forward.13} parent=31 // pred_fallthru
          _
        // Predicated region
        $region37: #{backbone_with_fpn_forward.13} parent=31 // pred_check
          %p244 = pneg %p63
        $region38: #{backbone_with_fpn_forward.13} parent=31 // pred_check_branch
          %246 = sbr.rel (%p244) target = $region40
        $region39: #{backbone_with_fpn_forward.13} parent=31 // pred_region
          %p247 = scmp.lt.s32.totalorder %s17, 1
          %s248 = scalar_select %p247, %s17, 1
          %s249 = smul.addr %s248, 4
          %s250 = smul.addr %s249, 4
          %s251 = scalar_lea.vmem %s1, %s250
        $region40: #{backbone_with_fpn_forward.13} parent=31 // pred_fallthru
          _
      $region32: #{backbone_with_fpn_forward.13} parent=5 // pred_fallthru
        _
      %p252 = scmp.le.s32.totalorder 1, %s17
      %p253 = scmp.lt.s32.totalorder %s17, 3
      %p254 = pnand %p252, %p253
      %p255 = pneg %p254
      // Predicated region
      $region41: #{backbone_with_fpn_forward.13} parent=5 // pred_check
        _
      $region42: #{backbone_with_fpn_forward.13} parent=5 // pred_check_branch
        %257 = sbr.rel (%p254) target = $region44
      $region43: #{backbone_with_fpn_forward.13} parent=5 // pred_region
        %s258 = ssub.s32 %s17, 1
        %p259 = scmp.lt.s32.totalorder %s22, 1
        %s260 = scalar_select %p259, %s22, 1
        %s261 = smul.addr %s260, 4
        %s262 = smul.addr %s261, 4
        %s263 = scalar_lea.vmem %s0, %s262
        %p264 = pneg %p43
        %p265 = pneg %p40
        %p266 = scmp.lt.s32.totalorder %s22, 1
        %s267 = scalar_select %p266, %s22, 1
        %s268 = smul.addr %s267, 4
        %s269 = smul.addr %s268, 4
        %s270 = scalar_lea.vmem %s1, %s269
        %p271 = pneg %p69
        %p272 = pneg %p66
        %p273 = pneg %p90
        %p274 = pneg %p87
        %p275 = pneg %p111
        %p276 = pneg %p108
        %p277 = pneg %p132
        %p278 = pneg %p129
        %p279 = pneg %p153
        %p280 = pneg %p150
        %p281 = pneg %p179
        %p282 = pneg %p176
        %p283 = scmp.lt.s32.totalorder %s22, 1
        %s284 = scalar_select %p283, %s22, 1
        %s285 = smul.addr %s284, 4
        %s286 = smul.addr %s285, 4
        %s287 = scalar_lea.vmem %s6, %s286
        %p288 = pneg %p205
        %p289 = pneg %p202
        %s290 = sand.u32 %s192, 1
        %s291 = scalar_lea.sflag [#allocation4], %s290
        %s292 = sand.u32 %s192, 1
        %s293 = smul.addr %s292, 16
        %s294 = scalar_lea.vmem [#allocation3], %s293
        %p295 = scmp.lt.s32.totalorder %s22, 1
        %s296 = scalar_select %p295, %s22, 1
        %s297 = smul.addr %s296, 4
        %s298 = smul.addr %s297, 4
        %s299 = scalar_lea.vmem %s0, %s298
        %p300 = scmp.lt.s32.totalorder %s22, 1
        %s301 = scalar_select %p300, %s22, 1
        %s302 = smul.addr %s301, 4
        %s303 = smul.addr %s302, 4
        %s304 = scalar_lea.vmem %s1, %s303
        %p305 = scmp.lt.s32.totalorder %s22, 1
        %s306 = scalar_select %p305, %s22, 1
        %s307 = smul.addr %s306, 4
        %s308 = smul.addr %s307, 4
        %s309 = scalar_lea.vmem %s6, %s308
        %v311 = vld [vmem:[%s299] sm:$0xf]
        %v312 = vld [vmem:[%s299 + $0x4] sm:$0xf]
        %v313 = vld [vmem:[%s299 + $0x8] sm:$0xf]
        %v314 = vld [vmem:[%s299 + $0xc] sm:$0xf]
        %319 = vst [vmem:[#allocation1] ss:$2 sm:$0xff] %v311
        %s320 = scalar_lea.vmem [#allocation1], 1
        %321 = vst [vmem:[%s320] ss:$2 sm:$0xff] %v312
        %s322 = scalar_lea.vmem [#allocation1], 16
        %323 = vst [vmem:[%s322] ss:$2 sm:$0xff] %v313
        %s324 = scalar_lea.vmem [#allocation1], 17
        %325 = vst [vmem:[%s324] ss:$2 sm:$0xff] %v314
        %v326 = vld.sshfl [vmem:[#allocation1] sm:$0xff pattern:$0x75316420]
        %v327 = vld.sshfl [vmem:[#allocation1 + $0x10] sm:$0xff pattern:$0x75316420]
        %v330 = vpack.c.bf16 %v327, %v326
        %v331 = vld [vmem:[%s2] sm:$0xf]
        %v332 = vld [vmem:[%s2 + $0x4] sm:$0xf]
        %v333 = vld [vmem:[%s3] sm:$0x1]
        %v335 = vperm.slane %v333, 0
        %v339 = vunpack.c.l.b16 %v331
        %v340 = vunpack.c.l.b16 %v332
        %v341 = vpack.c.b16 %v340, %v339
        %vm343 = vcmask 130048
        %v345 = vsel %vm343, %v330, 0
        %347 = vmatpush.bf16.msra.mxu0 0
        %348 = vmatpush.bf16.msra.mxu0 0
        %349 = vmatpush.bf16.msra.mxu0 0
        %350 = vmatpush.bf16.msra.mxu0 0
        %351 = vmatpush.bf16.msra.mxu0 0
        %352 = vmatpush.bf16.msra.mxu0 0
        %353 = vmatpush.bf16.msra.mxu0 0
        %354 = vmatpush.bf16.msra.mxu0 %v341
        %355 = vmatmul.bf16.gmra.mxu0 %v345
        %v356 = vpop.f32.mrf.mxu0
        %v357 = vadd.f32 %v335, %v356
        %v358 = vpop.f32.mrf.mxu0
        %v359 = vadd.f32 %v335, %v358
        %360 = vdwg.mxu0
        %v361 = vld [vmem:[%s304] sm:$0xf]
        %v362 = vld [vmem:[%s304 + $0x4] sm:$0xf]
        %v363 = vld [vmem:[%s304 + $0x8] sm:$0xf]
        %v364 = vld [vmem:[%s304 + $0xc] sm:$0xf]
        %369 = vst [vmem:[#allocation1] ss:$2 sm:$0xff] %v361
        %s370 = scalar_lea.vmem [#allocation1], 1
        %371 = vst [vmem:[%s370] ss:$2 sm:$0xff] %v362
        %s372 = scalar_lea.vmem [#allocation1], 16
        %373 = vst [vmem:[%s372] ss:$2 sm:$0xff] %v363
        %s374 = scalar_lea.vmem [#allocation1], 17
        %375 = vst [vmem:[%s374] ss:$2 sm:$0xff] %v364
        %v376 = vld.sshfl [vmem:[#allocation1] sm:$0xff pattern:$0x75316420]
        %v377 = vld.sshfl [vmem:[#allocation1 + $0x10] sm:$0xff pattern:$0x75316420]
        %v380 = vadd.f32 %v357, %v376
        %v381 = vadd.f32 %v359, %v377
        %v384 = vrot.slane %v380, 4
        %v385 = vrot.slane %v381, 4
        %vm388 = vcmask 125952
        %389 = vst.msk [vmem:[%s309] sm:$0xf] %vm388, %v380
        %390 = vst.msk [vmem:[%s309 + $0x4] sm:$0xf] %vm388, %v384
        %391 = vst.msk [vmem:[%s309 + $0x8] sm:$0xf] %vm388, %v381
        %392 = vst.msk [vmem:[%s309 + $0xc] sm:$0xf] %vm388, %v385
        %vm393 = vcmask 128000
        %394 = vst.msk [vmem:[#allocation2] sm:$0x3f] %vm393, 0.0
        %395 = vst.msk [vmem:[#allocation2 + $0x8] sm:$0x3f] %vm393, 0.0
        %396 = vst.msk [vmem:[#allocation2 + $0x10] sm:$0x3f] %vm393, 0.0
        %397 = vst.msk [vmem:[#allocation2 + $0x18] sm:$0x3f] %vm393, 0.0
        %398 = vst.msk [vmem:[#allocation2 + $0x20] sm:$0x3f] %vm393, 0.0
        %399 = vst.msk [vmem:[#allocation2 + $0x28] sm:$0x3f] %vm393, 0.0
        %s400 = scalar_lea.vmem [#allocation2], 8
        %401 = vst.msk [vmem:[%s400 + $0x1] sm:$0xf] %vm388, %v380
        %402 = vst.msk [vmem:[%s400 + $0x9] sm:$0xf] %vm388, %v384
        %403 = vst.msk [vmem:[%s400 + $0x11] sm:$0xf] %vm388, %v381
        %404 = vst.msk [vmem:[%s400 + $0x19] sm:$0xf] %vm388, %v385
        %v405 = vld [vmem:[#allocation2] sm:$0xf]
        %v406 = vld [vmem:[#allocation2 + $0x8] sm:$0xf]
        %v407 = vld [vmem:[#allocation2 + $0x10] sm:$0xf]
        %v408 = vld [vmem:[#allocation2 + $0x18] sm:$0xf]
        %413 = vst [vmem:[#allocation1] ss:$2 sm:$0xff] %v405
        %s414 = scalar_lea.vmem [#allocation1], 1
        %415 = vst [vmem:[%s414] ss:$2 sm:$0xff] %v406
        %s416 = scalar_lea.vmem [#allocation1], 16
        %417 = vst [vmem:[%s416] ss:$2 sm:$0xff] %v407
        %s418 = scalar_lea.vmem [#allocation1], 17
        %419 = vst [vmem:[%s418] ss:$2 sm:$0xff] %v408
        %v420 = vld.sshfl [vmem:[#allocation1] sm:$0xff pattern:$0x75316420]
        %v421 = vld.sshfl [vmem:[#allocation1 + $0x10] sm:$0xff pattern:$0x75316420]
        %v424 = vpack.c.bf16 %v421, %v420
        %v425 = vld [vmem:[%s4] sm:$0xf]
        %v426 = vld [vmem:[%s4 + $0x4] sm:$0xf]
        %v427 = vld [vmem:[#allocation2 + $0x1] sm:$0xf]
        %v428 = vld [vmem:[#allocation2 + $0x9] sm:$0xf]
        %v429 = vld [vmem:[#allocation2 + $0x11] sm:$0xf]
        %v430 = vld [vmem:[#allocation2 + $0x19] sm:$0xf]
        %435 = vst [vmem:[#allocation1] ss:$2 sm:$0xff] %v427
        %s436 = scalar_lea.vmem [#allocation1], 1
        %437 = vst [vmem:[%s436] ss:$2 sm:$0xff] %v428
        %s438 = scalar_lea.vmem [#allocation1], 16
        %439 = vst [vmem:[%s438] ss:$2 sm:$0xff] %v429
        %s440 = scalar_lea.vmem [#allocation1], 17
        %441 = vst [vmem:[%s440] ss:$2 sm:$0xff] %v430
        %v442 = vld.sshfl [vmem:[#allocation1] sm:$0xff pattern:$0x75316420]
        %v443 = vld.sshfl [vmem:[#allocation1 + $0x10] sm:$0xff pattern:$0x75316420]
        %v446 = vpack.c.bf16 %v443, %v442
        %v447 = vld [vmem:[%s4 + $0x8] sm:$0xf]
        %v448 = vld [vmem:[%s4 + $0xc] sm:$0xf]
        %v451 = vunpack.c.l.b16 %v447
        %v452 = vunpack.c.l.b16 %v448
        %v453 = vpack.c.b16 %v452, %v451
        %v456 = vsel %vm343, %v446, 0
        %458 = vmatpush.bf16.msra.mxu0 0
        %459 = vmatpush.bf16.msra.mxu0 0
        %460 = vmatpush.bf16.msra.mxu0 0
        %461 = vmatpush.bf16.msra.mxu0 0
        %462 = vmatpush.bf16.msra.mxu0 0
        %463 = vmatpush.bf16.msra.mxu0 0
        %464 = vmatpush.bf16.msra.mxu0 0
        %465 = vmatpush.bf16.msra.mxu0 %v453
        %466 = vmatmul.bf16.gmra.mxu0 %v456
        %v467 = vpop.f32.mrf.mxu0
        %v468 = vadd.f32 0.0, %v467
        %v469 = vpop.f32.mrf.mxu0
        %v470 = vadd.f32 0.0, %v469
        %471 = vdwg.mxu0
        %v474 = vunpack.c.l.b16 %v425
        %v475 = vunpack.c.l.b16 %v426
        %v476 = vpack.c.b16 %v475, %v474
        %v479 = vsel %vm343, %v424, 0
        %481 = vmatpush.bf16.msra.mxu0 0
        %482 = vmatpush.bf16.msra.mxu0 0
        %483 = vmatpush.bf16.msra.mxu0 0
        %484 = vmatpush.bf16.msra.mxu0 0
        %485 = vmatpush.bf16.msra.mxu0 0
        %486 = vmatpush.bf16.msra.mxu0 0
        %487 = vmatpush.bf16.msra.mxu0 0
        %488 = vmatpush.bf16.msra.mxu0 %v476
        %489 = vmatmul.bf16.gmra.mxu0 %v479
        %v490 = vpop.f32.mrf.mxu0
        %v491 = vadd.f32 %v468, %v490
        %v492 = vpop.f32.mrf.mxu0
        %v493 = vadd.f32 %v470, %v492
        %494 = vdwg.mxu0
        %v495 = vld [vmem:[#allocation2 + $0x2] sm:$0xf]
        %v496 = vld [vmem:[#allocation2 + $0xa] sm:$0xf]
        %v497 = vld [vmem:[#allocation2 + $0x12] sm:$0xf]
        %v498 = vld [vmem:[#allocation2 + $0x1a] sm:$0xf]
        %503 = vst [vmem:[#allocation1] ss:$2 sm:$0xff] %v495
        %s504 = scalar_lea.vmem [#allocation1], 1
        %505 = vst [vmem:[%s504] ss:$2 sm:$0xff] %v496
        %s506 = scalar_lea.vmem [#allocation1], 16
        %507 = vst [vmem:[%s506] ss:$2 sm:$0xff] %v497
        %s508 = scalar_lea.vmem [#allocation1], 17
        %509 = vst [vmem:[%s508] ss:$2 sm:$0xff] %v498
        %v510 = vld.sshfl [vmem:[#allocation1] sm:$0xff pattern:$0x75316420]
        %v511 = vld.sshfl [vmem:[#allocation1 + $0x10] sm:$0xff pattern:$0x75316420]
        %v514 = vpack.c.bf16 %v511, %v510
        %v515 = vld [vmem:[%s4 + $0x10] sm:$0xf]
        %v516 = vld [vmem:[%s4 + $0x14] sm:$0xf]
        %v519 = vunpack.c.l.b16 %v515
        %v520 = vunpack.c.l.b16 %v516
        %v521 = vpack.c.b16 %v520, %v519
        %v524 = vsel %vm343, %v514, 0
        %526 = vmatpush.bf16.msra.mxu0 0
        %527 = vmatpush.bf16.msra.mxu0 0
        %528 = vmatpush.bf16.msra.mxu0 0
        %529 = vmatpush.bf16.msra.mxu0 0
        %530 = vmatpush.bf16.msra.mxu0 0
        %531 = vmatpush.bf16.msra.mxu0 0
        %532 = vmatpush.bf16.msra.mxu0 0
        %533 = vmatpush.bf16.msra.mxu0 %v521
        %534 = vmatmul.bf16.gmra.mxu0 %v524
        %v535 = vpop.f32.mrf.mxu0
        %v536 = vadd.f32 0.0, %v535
        %v537 = vpop.f32.mrf.mxu0
        %v538 = vadd.f32 0.0, %v537
        %539 = vdwg.mxu0
        %v540 = vadd.f32 %v491, %v536
        %v541 = vadd.f32 %v493, %v538
        %v542 = vld [vmem:[%s400] sm:$0xf]
        %v543 = vld [vmem:[%s400 + $0x8] sm:$0xf]
        %v544 = vld [vmem:[%s400 + $0x10] sm:$0xf]
        %v545 = vld [vmem:[%s400 + $0x18] sm:$0xf]
        %550 = vst [vmem:[#allocation1] ss:$2 sm:$0xff] %v542
        %s551 = scalar_lea.vmem [#allocation1], 1
        %552 = vst [vmem:[%s551] ss:$2 sm:$0xff] %v543
        %s553 = scalar_lea.vmem [#allocation1], 16
        %554 = vst [vmem:[%s553] ss:$2 sm:$0xff] %v544
        %s555 = scalar_lea.vmem [#allocation1], 17
        %556 = vst [vmem:[%s555] ss:$2 sm:$0xff] %v545
        %v557 = vld.sshfl [vmem:[#allocation1] sm:$0xff pattern:$0x75316420]
        %v558 = vld.sshfl [vmem:[#allocation1 + $0x10] sm:$0xff pattern:$0x75316420]
        %v561 = vpack.c.bf16 %v558, %v557
        %v562 = vld [vmem:[%s4 + $0x18] sm:$0xf]
        %v563 = vld [vmem:[%s4 + $0x1c] sm:$0xf]
        %v566 = vunpack.c.l.b16 %v562
        %v567 = vunpack.c.l.b16 %v563
        %v568 = vpack.c.b16 %v567, %v566
        %v571 = vsel %vm343, %v561, 0
        %573 = vmatpush.bf16.msra.mxu0 0
        %574 = vmatpush.bf16.msra.mxu0 0
        %575 = vmatpush.bf16.msra.mxu0 0
        %576 = vmatpush.bf16.msra.mxu0 0
        %577 = vmatpush.bf16.msra.mxu0 0
        %578 = vmatpush.bf16.msra.mxu0 0
        %579 = vmatpush.bf16.msra.mxu0 0
        %580 = vmatpush.bf16.msra.mxu0 %v568
        %581 = vmatmul.bf16.gmra.mxu0 %v571
        %v582 = vpop.f32.mrf.mxu0
        %v583 = vadd.f32 0.0, %v582
        %v584 = vpop.f32.mrf.mxu0
        %v585 = vadd.f32 0.0, %v584
        %586 = vdwg.mxu0
        %v587 = vadd.f32 %v540, %v583
        %v588 = vadd.f32 %v541, %v585
        %v589 = vld [vmem:[%s400 + $0x1] sm:$0xf]
        %v590 = vld [vmem:[%s400 + $0x9] sm:$0xf]
        %v591 = vld [vmem:[%s400 + $0x11] sm:$0xf]
        %v592 = vld [vmem:[%s400 + $0x19] sm:$0xf]
        %597 = vst [vmem:[#allocation1] ss:$2 sm:$0xff] %v589
        %s598 = scalar_lea.vmem [#allocation1], 1
        %599 = vst [vmem:[%s598] ss:$2 sm:$0xff] %v590
        %s600 = scalar_lea.vmem [#allocation1], 16
        %601 = vst [vmem:[%s600] ss:$2 sm:$0xff] %v591
        %s602 = scalar_lea.vmem [#allocation1], 17
        %603 = vst [vmem:[%s602] ss:$2 sm:$0xff] %v592
        %v604 = vld.sshfl [vmem:[#allocation1] sm:$0xff pattern:$0x75316420]
        %v605 = vld.sshfl [vmem:[#allocation1 + $0x10] sm:$0xff pattern:$0x75316420]
        %v608 = vpack.c.bf16 %v605, %v604
        %v609 = vld [vmem:[%s4 + $0x20] sm:$0xf]
        %v610 = vld [vmem:[%s4 + $0x24] sm:$0xf]
        %v613 = vunpack.c.l.b16 %v609
        %v614 = vunpack.c.l.b16 %v610
        %v615 = vpack.c.b16 %v614, %v613
        %v618 = vsel %vm343, %v608, 0
        %620 = vmatpush.bf16.msra.mxu0 0
        %621 = vmatpush.bf16.msra.mxu0 0
        %622 = vmatpush.bf16.msra.mxu0 0
        %623 = vmatpush.bf16.msra.mxu0 0
        %624 = vmatpush.bf16.msra.mxu0 0
        %625 = vmatpush.bf16.msra.mxu0 0
        %626 = vmatpush.bf16.msra.mxu0 0
        %627 = vmatpush.bf16.msra.mxu0 %v615
        %628 = vmatmul.bf16.gmra.mxu0 %v618
        %v629 = vpop.f32.mrf.mxu0
        %v630 = vadd.f32 0.0, %v629
        %v631 = vpop.f32.mrf.mxu0
        %v632 = vadd.f32 0.0, %v631
        %633 = vdwg.mxu0
        %v634 = vadd.f32 %v587, %v630
        %v635 = vadd.f32 %v588, %v632
        %v636 = vld [vmem:[%s400 + $0x2] sm:$0xf]
        %v637 = vld [vmem:[%s400 + $0xa] sm:$0xf]
        %v638 = vld [vmem:[%s400 + $0x12] sm:$0xf]
        %v639 = vld [vmem:[%s400 + $0x1a] sm:$0xf]
        %644 = vst [vmem:[#allocation1] ss:$2 sm:$0xff] %v636
        %s645 = scalar_lea.vmem [#allocation1], 1
        %646 = vst [vmem:[%s645] ss:$2 sm:$0xff] %v637
        %s647 = scalar_lea.vmem [#allocation1], 16
        %648 = vst [vmem:[%s647] ss:$2 sm:$0xff] %v638
        %s649 = scalar_lea.vmem [#allocation1], 17
        %650 = vst [vmem:[%s649] ss:$2 sm:$0xff] %v639
        %v651 = vld.sshfl [vmem:[#allocation1] sm:$0xff pattern:$0x75316420]
        %v652 = vld.sshfl [vmem:[#allocation1 + $0x10] sm:$0xff pattern:$0x75316420]
        %v655 = vpack.c.bf16 %v652, %v651
        %v656 = vld [vmem:[%s4 + $0x28] sm:$0xf]
        %v657 = vld [vmem:[%s4 + $0x2c] sm:$0xf]
        %v660 = vunpack.c.l.b16 %v656
        %v661 = vunpack.c.l.b16 %v657
        %v662 = vpack.c.b16 %v661, %v660
        %v665 = vsel %vm343, %v655, 0
        %667 = vmatpush.bf16.msra.mxu0 0
        %668 = vmatpush.bf16.msra.mxu0 0
        %669 = vmatpush.bf16.msra.mxu0 0
        %670 = vmatpush.bf16.msra.mxu0 0
        %671 = vmatpush.bf16.msra.mxu0 0
        %672 = vmatpush.bf16.msra.mxu0 0
        %673 = vmatpush.bf16.msra.mxu0 0
        %674 = vmatpush.bf16.msra.mxu0 %v662
        %675 = vmatmul.bf16.gmra.mxu0 %v665
        %v676 = vpop.f32.mrf.mxu0
        %v677 = vadd.f32 0.0, %v676
        %v678 = vpop.f32.mrf.mxu0
        %v679 = vadd.f32 0.0, %v678
        %680 = vdwg.mxu0
        %v681 = vadd.f32 %v634, %v677
        %v682 = vadd.f32 %v635, %v679
        %s683 = scalar_lea.vmem [#allocation2], 16
        %v684 = vld [vmem:[%s683] sm:$0xf]
        %v685 = vld [vmem:[%s683 + $0x8] sm:$0xf]
        %v686 = vld [vmem:[%s683 + $0x10] sm:$0xf]
        %v687 = vld [vmem:[%s683 + $0x18] sm:$0xf]
        %692 = vst [vmem:[#allocation1] ss:$2 sm:$0xff] %v684
        %s693 = scalar_lea.vmem [#allocation1], 1
        %694 = vst [vmem:[%s693] ss:$2 sm:$0xff] %v685
        %s695 = scalar_lea.vmem [#allocation1], 16
        %696 = vst [vmem:[%s695] ss:$2 sm:$0xff] %v686
        %s697 = scalar_lea.vmem [#allocation1], 17
        %698 = vst [vmem:[%s697] ss:$2 sm:$0xff] %v687
        %v699 = vld.sshfl [vmem:[#allocation1] sm:$0xff pattern:$0x75316420]
        %v700 = vld.sshfl [vmem:[#allocation1 + $0x10] sm:$0xff pattern:$0x75316420]
        %v703 = vpack.c.bf16 %v700, %v699
        %v704 = vld [vmem:[%s4 + $0x30] sm:$0xf]
        %v705 = vld [vmem:[%s4 + $0x34] sm:$0xf]
        %v708 = vunpack.c.l.b16 %v704
        %v709 = vunpack.c.l.b16 %v705
        %v710 = vpack.c.b16 %v709, %v708
        %v713 = vsel %vm343, %v703, 0
        %715 = vmatpush.bf16.msra.mxu0 0
        %716 = vmatpush.bf16.msra.mxu0 0
        %717 = vmatpush.bf16.msra.mxu0 0
        %718 = vmatpush.bf16.msra.mxu0 0
        %719 = vmatpush.bf16.msra.mxu0 0
        %720 = vmatpush.bf16.msra.mxu0 0
        %721 = vmatpush.bf16.msra.mxu0 0
        %722 = vmatpush.bf16.msra.mxu0 %v710
        %723 = vmatmul.bf16.gmra.mxu0 %v713
        %v724 = vpop.f32.mrf.mxu0
        %v725 = vadd.f32 0.0, %v724
        %v726 = vpop.f32.mrf.mxu0
        %v727 = vadd.f32 0.0, %v726
        %728 = vdwg.mxu0
        %v729 = vadd.f32 %v681, %v725
        %v730 = vadd.f32 %v682, %v727
        %v731 = vld [vmem:[%s683 + $0x1] sm:$0xf]
        %v732 = vld [vmem:[%s683 + $0x9] sm:$0xf]
        %v733 = vld [vmem:[%s683 + $0x11] sm:$0xf]
        %v734 = vld [vmem:[%s683 + $0x19] sm:$0xf]
        %739 = vst [vmem:[#allocation1] ss:$2 sm:$0xff] %v731
        %s740 = scalar_lea.vmem [#allocation1], 1
        %741 = vst [vmem:[%s740] ss:$2 sm:$0xff] %v732
        %s742 = scalar_lea.vmem [#allocation1], 16
        %743 = vst [vmem:[%s742] ss:$2 sm:$0xff] %v733
        %s744 = scalar_lea.vmem [#allocation1], 17
        %745 = vst [vmem:[%s744] ss:$2 sm:$0xff] %v734
        %v746 = vld.sshfl [vmem:[#allocation1] sm:$0xff pattern:$0x75316420]
        %v747 = vld.sshfl [vmem:[#allocation1 + $0x10] sm:$0xff pattern:$0x75316420]
        %v750 = vpack.c.bf16 %v747, %v746
        %v751 = vld [vmem:[%s4 + $0x38] sm:$0xf]
        %v752 = vld [vmem:[%s4 + $0x3c] sm:$0xf]
        %v755 = vunpack.c.l.b16 %v751
        %v756 = vunpack.c.l.b16 %v752
        %v757 = vpack.c.b16 %v756, %v755
        %v760 = vsel %vm343, %v750, 0
        %762 = vmatpush.bf16.msra.mxu0 0
        %763 = vmatpush.bf16.msra.mxu0 0
        %764 = vmatpush.bf16.msra.mxu0 0
        %765 = vmatpush.bf16.msra.mxu0 0
        %766 = vmatpush.bf16.msra.mxu0 0
        %767 = vmatpush.bf16.msra.mxu0 0
        %768 = vmatpush.bf16.msra.mxu0 0
        %769 = vmatpush.bf16.msra.mxu0 %v757
        %770 = vmatmul.bf16.gmra.mxu0 %v760
        %v771 = vpop.f32.mrf.mxu0
        %v772 = vadd.f32 0.0, %v771
        %v773 = vpop.f32.mrf.mxu0
        %v774 = vadd.f32 0.0, %v773
        %775 = vdwg.mxu0
        %v776 = vadd.f32 %v729, %v772
        %v777 = vadd.f32 %v730, %v774
        %v778 = vld [vmem:[%s683 + $0x2] sm:$0xf]
        %v779 = vld [vmem:[%s683 + $0xa] sm:$0xf]
        %v780 = vld [vmem:[%s683 + $0x12] sm:$0xf]
        %v781 = vld [vmem:[%s683 + $0x1a] sm:$0xf]
        %786 = vst [vmem:[#allocation1] ss:$2 sm:$0xff] %v778
        %s787 = scalar_lea.vmem [#allocation1], 1
        %788 = vst [vmem:[%s787] ss:$2 sm:$0xff] %v779
        %s789 = scalar_lea.vmem [#allocation1], 16
        %790 = vst [vmem:[%s789] ss:$2 sm:$0xff] %v780
        %s791 = scalar_lea.vmem [#allocation1], 17
        %792 = vst [vmem:[%s791] ss:$2 sm:$0xff] %v781
        %v793 = vld.sshfl [vmem:[#allocation1] sm:$0xff pattern:$0x75316420]
        %v794 = vld.sshfl [vmem:[#allocation1 + $0x10] sm:$0xff pattern:$0x75316420]
        %v797 = vpack.c.bf16 %v794, %v793
        %v798 = vld [vmem:[%s4 + $0x40] sm:$0xf]
        %v799 = vld [vmem:[%s4 + $0x44] sm:$0xf]
        %v802 = vunpack.c.l.b16 %v798
        %v803 = vunpack.c.l.b16 %v799
        %v804 = vpack.c.b16 %v803, %v802
        %v807 = vsel %vm343, %v797, 0
        %809 = vmatpush.bf16.msra.mxu0 0
        %810 = vmatpush.bf16.msra.mxu0 0
        %811 = vmatpush.bf16.msra.mxu0 0
        %812 = vmatpush.bf16.msra.mxu0 0
        %813 = vmatpush.bf16.msra.mxu0 0
        %814 = vmatpush.bf16.msra.mxu0 0
        %815 = vmatpush.bf16.msra.mxu0 0
        %816 = vmatpush.bf16.msra.mxu0 %v804
        %817 = vmatmul.bf16.gmra.mxu0 %v807
        %v818 = vpop.f32.mrf.mxu0
        %v819 = vadd.f32 0.0, %v818
        %v820 = vpop.f32.mrf.mxu0
        %v821 = vadd.f32 0.0, %v820
        %822 = vdwg.mxu0
        %v823 = vadd.f32 %v776, %v819
        %v824 = vadd.f32 %v777, %v821
        %v825 = vld [vmem:[%s5] sm:$0x1]
        %v827 = vperm.slane %v825, 0
        %v829 = vadd.f32 %v823, %v827
        %v830 = vadd.f32 %v824, %v827
        %v833 = vrot.slane %v829, 4
        %v834 = vrot.slane %v830, 4
        %837 = vst.msk [vmem:[%s294] sm:$0xf] %vm388, %v829
        %838 = vst.msk [vmem:[%s294 + $0x4] sm:$0xf] %vm388, %v833
        %839 = vst.msk [vmem:[%s294 + $0x8] sm:$0xf] %vm388, %v830
        %840 = vst.msk [vmem:[%s294 + $0xc] sm:$0xf] %vm388, %v834
        %p841 = scmp.lt.s32.totalorder %s22, 1
        %s842 = scalar_select %p841, %s22, 1
        %s843 = smul.addr %s842, 4
        %s844 = smul.addr %s843, 4
        %s845 = scalar_lea.vmem %s6, %s844
        %s846 = sand.u32 %s192, 1
        %s847 = scalar_lea.sflag [#allocation4], %s846
        %s848 = sand.u32 %s192, 1
        %s849 = smul.addr %s848, 16
        %s850 = scalar_lea.vmem [#allocation3], %s849
        // Predicated region
        $region45: #{backbone_with_fpn_forward.13} parent=43 // pred_check
          %p851 = pneg %p176
        $region46: #{backbone_with_fpn_forward.13} parent=43 // pred_check_branch
          %853 = sbr.rel (%p851) target = $region48
        $region47: #{backbone_with_fpn_forward.13} parent=43 // pred_region
          _
        $region48: #{backbone_with_fpn_forward.13} parent=43 // pred_fallthru
          _
        // Predicated region
        $region49: #{backbone_with_fpn_forward.13} parent=43 // pred_check
          %p854 = pneg %p202
        $region50: #{backbone_with_fpn_forward.13} parent=43 // pred_check_branch
          %856 = sbr.rel (%p854) target = $region52
        $region51: #{backbone_with_fpn_forward.13} parent=43 // pred_region
          %858 = vsyncadd %s847, 0
          %s859 = smul.addr %s22, 4
          %s860 = smul.addr %s859, 4
          %s861 = scalar_lea.hbm %s7, %s860
          %s862 = sshll.u32 %s850, 4
          %s863 = int_to_ptr.vmem [resolvable:$true] %s862
          %s864 = sshll.u32 %s861, 4
          %s865 = int_to_ptr.hbm [resolvable:$true] %s864
          %870 = dma.vmem_to_hbm [thread:$0]  %s863, 256, %s865, %s847, 64, 64, 4
        $region52: #{backbone_with_fpn_forward.13} parent=43 // pred_fallthru
          _
      $region44: #{backbone_with_fpn_forward.13} parent=5 // pred_fallthru
        _
      %p871 = scmp.le.s32.totalorder 2, %s17
      // Predicated region
      $region53: #{backbone_with_fpn_forward.13} parent=5 // pred_check
        %p872 = pneg %p871
      $region54: #{backbone_with_fpn_forward.13} parent=5 // pred_check_branch
        %874 = sbr.rel (%p872) target = $region56
      $region55: #{backbone_with_fpn_forward.13} parent=5 // pred_region
        %s875 = ssub.s32 %s17, 2
        // Predicated region
        $region57: #{backbone_with_fpn_forward.13} parent=55 // pred_check
          %p876 = pneg %p182
        $region58: #{backbone_with_fpn_forward.13} parent=55 // pred_check_branch
          %878 = sbr.rel (%p876) target = $region60
        $region59: #{backbone_with_fpn_forward.13} parent=55 // pred_region
          %p879 = scmp.lt.s32.totalorder %s23, 1
          %s880 = scalar_select %p879, %s23, 1
          %s881 = smul.addr %s880, 4
          %s882 = smul.addr %s881, 4
          %s883 = scalar_lea.vmem %s6, %s882
        $region60: #{backbone_with_fpn_forward.13} parent=55 // pred_fallthru
          _
        // Predicated region
        $region61: #{backbone_with_fpn_forward.13} parent=55 // pred_check
          %p884 = pneg %p208
        $region62: #{backbone_with_fpn_forward.13} parent=55 // pred_check_branch
          %886 = sbr.rel (%p884) target = $region64
        $region63: #{backbone_with_fpn_forward.13} parent=55 // pred_region
          %s887 = sand.u32 %s193, 1
          %s888 = scalar_lea.sflag [#allocation4], %s887
          %s889 = sand.u32 %s193, 1
          %s890 = smul.addr %s889, 16
          %s891 = scalar_lea.vmem [#allocation3], %s890
          %893 = dma.done %s888, 256
        $region64: #{backbone_with_fpn_forward.13} parent=55 // pred_fallthru
          _
      $region56: #{backbone_with_fpn_forward.13} parent=5 // pred_fallthru
        _
    $region6: #{backbone_with_fpn_forward.13} parent=1 // loop_footer
      %s21 = sadd.s32 1, %s17
    $region7: #{backbone_with_fpn_forward.13} parent=1 // loop_footer_branch
      %16 = sbr.rel target = $region3
    $region8: #{backbone_with_fpn_forward.13} parent=1 // loop_exit
      _
    %894 = vsyncpa [#allocation4], 1
    %s895 = scalar_lea.sflag [#allocation4], 1
    %896 = vsyncpa %s895, 1

// kernel: backbone_with_fpn_forward.14
$region0: #{backbone_with_fpn_forward.14}
  #allocation0 [shape = 'u32[]', space=smem, size = 0x4, offset = 0x4, fixed_abs, tag = 'smem constant byte address 0x4 - core index']
  #allocation1 [shape = 'u32[72,128]{1,0:T(1,128)}', space=vmem, size = 0x9000, scoped, tag = 'internal scratch']
  #allocation2 [shape = 'f32[10,10,16]{2,1,0:T(8,128)}', space=vmem, size = 0x14000, scoped, tag = 'scratch operand']
  %s0 = inlined_call_operand.vmem [shape: f32[2,8,8,8], index: 0, kind: input, shape index: {}]
  %s1 = inlined_call_operand.vmem [shape: f32[2,8,8,16], index: 1, kind: input, shape index: {}]
  %s2 = inlined_call_operand.vmem [shape: bf16[8,16], index: 2, kind: input, shape index: {}]
  %s3 = inlined_call_operand.vmem [shape: f32[1,16], index: 3, kind: input, shape index: {}]
  %s4 = inlined_call_operand.vmem [shape: bf16[144,16], index: 4, kind: input, shape index: {}]
  %s5 = inlined_call_operand.vmem [shape: f32[1,16], index: 5, kind: input, shape index: {}]
  %s6 = inlined_call_operand.vmem [shape: f32[2,8,8,16], index: 6, kind: output, shape index: {0}]
  %s7 = inlined_call_operand.vmem [shape: f32[2,16,64], index: 7, kind: output, shape index: {1}]
  %8 = xla_tuple %s6, %s7
  %s9 = sld [smem:[#allocation0]]
  $region65: #{backbone_with_fpn_forward.14} parent=0
    _
  %s11 = ssub.s32 1, %s9
  %s12 = scalar_select 0, %s11, %s9
  loop: start=0, step=1, limit=4
  $region2: #{backbone_with_fpn_forward.14} parent=0 // loop_pre_header
    _
  $region3: #{backbone_with_fpn_forward.14} parent=0 // loop_header
    %s14 = sphi 0, %s18
    %p15 = scmp.ge.s32.totalorder %s14, 4
    %s24 = sphi 0, %s26
    %s27 = sphi 0, %s24
    %s28 = sphi 0, %s27
    %s44 = sphi 0, %s28
    %s50 = sphi 0, %s52
    %s53 = sphi 0, %s50
    %s54 = sphi 0, %s53
    %s70 = sphi 0, %s54
    %s74 = sphi 0, %s74
    %s76 = sphi 0, %s74
    %s77 = sphi 0, %s76
    %s91 = sphi 0, %s77
    %s95 = sphi 0, %s95
    %s97 = sphi 0, %s95
    %s98 = sphi 0, %s97
    %s112 = sphi 0, %s98
    %s116 = sphi 0, %s116
    %s118 = sphi 0, %s116
    %s119 = sphi 0, %s118
    %s133 = sphi 0, %s119
    %s137 = sphi 0, %s137
    %s139 = sphi 0, %s137
    %s140 = sphi 0, %s139
    %s154 = sphi 0, %s140
    %s160 = sphi 0, %s162
    %s163 = sphi 0, %s160
    %s164 = sphi 0, %s163
    %s180 = sphi 0, %s164
    %s186 = sphi 0, %s188
    %s189 = sphi 0, %s186
    %s190 = sphi 0, %s189
    %s206 = sphi 0, %s190
  $region4: #{backbone_with_fpn_forward.14} parent=0 // loop_header_branch
    %17 = sbr.rel (%p15) target = $region8
  $region5: #{backbone_with_fpn_forward.14} parent=0 // loop_body
    %s19 = ssub.s32 %s14, 1
    %s20 = ssub.s32 %s14, 2
    %s21 = sadd.s32 %s14, 1
    %s22 = ssub.s32 %s14, %s21
    %p23 = scmp.eq.s32.totalorder %s22, 0
    %s25 = sadd.s32 %s24, 1
    %s26 = scalar_select %p23, %s24, %s25
    %p29 = pneg %p23
    %p30 = scmp.eq.s32.totalorder %s14, 1
    %p31 = por %p29, %p30
    %p32 = scmp.ne.s32.totalorder %s24, %s27
    %p33 = scmp.eq.s32.totalorder %s14, 0
    %p34 = por %p32, %p33
    %p35 = scmp.ne.s32.totalorder %s24, %s27
    %p36 = scmp.eq.s32.totalorder %s19, 1
    %p37 = por %p35, %p36
    %p38 = scmp.ne.s32.totalorder %s27, %s28
    %p39 = scmp.eq.s32.totalorder %s19, 0
    %p40 = por %p38, %p39
    %p41 = scmp.ne.s32.totalorder %s27, %s28
    %p42 = scmp.eq.s32.totalorder %s20, 1
    %p43 = por %p41, %p42
    %p45 = scmp.ne.s32.totalorder %s28, %s44
    %p46 = scmp.eq.s32.totalorder %s20, 0
    %p47 = por %p45, %p46
    %s48 = ssub.s32 %s14, %s21
    %p49 = scmp.eq.s32.totalorder %s48, 0
    %s51 = sadd.s32 %s50, 1
    %s52 = scalar_select %p49, %s50, %s51
    %p55 = pneg %p49
    %p56 = scmp.eq.s32.totalorder %s14, 1
    %p57 = por %p55, %p56
    %p58 = scmp.ne.s32.totalorder %s50, %s53
    %p59 = scmp.eq.s32.totalorder %s14, 0
    %p60 = por %p58, %p59
    %p61 = scmp.ne.s32.totalorder %s50, %s53
    %p62 = scmp.eq.s32.totalorder %s19, 1
    %p63 = por %p61, %p62
    %p64 = scmp.ne.s32.totalorder %s53, %s54
    %p65 = scmp.eq.s32.totalorder %s19, 0
    %p66 = por %p64, %p65
    %p67 = scmp.ne.s32.totalorder %s53, %s54
    %p68 = scmp.eq.s32.totalorder %s20, 1
    %p69 = por %p67, %p68
    %p71 = scmp.ne.s32.totalorder %s54, %s70
    %p72 = scmp.eq.s32.totalorder %s20, 0
    %p73 = por %p71, %p72
    %s75 = sadd.s32 %s74, 1
    %p78 = scmp.eq.s32.totalorder %s14, 1
    %p79 = scmp.ne.s32.totalorder %s74, %s76
    %p80 = scmp.eq.s32.totalorder %s14, 0
    %p81 = por %p79, %p80
    %p82 = scmp.ne.s32.totalorder %s74, %s76
    %p83 = scmp.eq.s32.totalorder %s19, 1
    %p84 = por %p82, %p83
    %p85 = scmp.ne.s32.totalorder %s76, %s77
    %p86 = scmp.eq.s32.totalorder %s19, 0
    %p87 = por %p85, %p86
    %p88 = scmp.ne.s32.totalorder %s76, %s77
    %p89 = scmp.eq.s32.totalorder %s20, 1
    %p90 = por %p88, %p89
    %p92 = scmp.ne.s32.totalorder %s77, %s91
    %p93 = scmp.eq.s32.totalorder %s20, 0
    %p94 = por %p92, %p93
    %s96 = sadd.s32 %s95, 1
    %p99 = scmp.eq.s32.totalorder %s14, 1
    %p100 = scmp.ne.s32.totalorder %s95, %s97
    %p101 = scmp.eq.s32.totalorder %s14, 0
    %p102 = por %p100, %p101
    %p103 = scmp.ne.s32.totalorder %s95, %s97
    %p104 = scmp.eq.s32.totalorder %s19, 1
    %p105 = por %p103, %p104
    %p106 = scmp.ne.s32.totalorder %s97, %s98
    %p107 = scmp.eq.s32.totalorder %s19, 0
    %p108 = por %p106, %p107
    %p109 = scmp.ne.s32.totalorder %s97, %s98
    %p110 = scmp.eq.s32.totalorder %s20, 1
    %p111 = por %p109, %p110
    %p113 = scmp.ne.s32.totalorder %s98, %s112
    %p114 = scmp.eq.s32.totalorder %s20, 0
    %p115 = por %p113, %p114
    %s117 = sadd.s32 %s116, 1
    %p120 = scmp.eq.s32.totalorder %s14, 1
    %p121 = scmp.ne.s32.totalorder %s116, %s118
    %p122 = scmp.eq.s32.totalorder %s14, 0
    %p123 = por %p121, %p122
    %p124 = scmp.ne.s32.totalorder %s116, %s118
    %p125 = scmp.eq.s32.totalorder %s19, 1
    %p126 = por %p124, %p125
    %p127 = scmp.ne.s32.totalorder %s118, %s119
    %p128 = scmp.eq.s32.totalorder %s19, 0
    %p129 = por %p127, %p128
    %p130 = scmp.ne.s32.totalorder %s118, %s119
    %p131 = scmp.eq.s32.totalorder %s20, 1
    %p132 = por %p130, %p131
    %p134 = scmp.ne.s32.totalorder %s119, %s133
    %p135 = scmp.eq.s32.totalorder %s20, 0
    %p136 = por %p134, %p135
    %s138 = sadd.s32 %s137, 1
    %p141 = scmp.eq.s32.totalorder %s14, 1
    %p142 = scmp.ne.s32.totalorder %s137, %s139
    %p143 = scmp.eq.s32.totalorder %s14, 0
    %p144 = por %p142, %p143
    %p145 = scmp.ne.s32.totalorder %s137, %s139
    %p146 = scmp.eq.s32.totalorder %s19, 1
    %p147 = por %p145, %p146
    %p148 = scmp.ne.s32.totalorder %s139, %s140
    %p149 = scmp.eq.s32.totalorder %s19, 0
    %p150 = por %p148, %p149
    %p151 = scmp.ne.s32.totalorder %s139, %s140
    %p152 = scmp.eq.s32.totalorder %s20, 1
    %p153 = por %p151, %p152
    %p155 = scmp.ne.s32.totalorder %s140, %s154
    %p156 = scmp.eq.s32.totalorder %s20, 0
    %p157 = por %p155, %p156
    %s158 = ssub.s32 %s14, %s21
    %p159 = scmp.eq.s32.totalorder %s158, 0
    %s161 = sadd.s32 %s160, 1
    %s162 = scalar_select %p159, %s160, %s161
    %p165 = pneg %p159
    %p166 = scmp.eq.s32.totalorder %s14, 1
    %p167 = por %p165, %p166
    %p168 = scmp.ne.s32.totalorder %s160, %s163
    %p169 = scmp.eq.s32.totalorder %s14, 0
    %p170 = por %p168, %p169
    %p171 = scmp.ne.s32.totalorder %s160, %s163
    %p172 = scmp.eq.s32.totalorder %s19, 1
    %p173 = por %p171, %p172
    %p174 = scmp.ne.s32.totalorder %s163, %s164
    %p175 = scmp.eq.s32.totalorder %s19, 0
    %p176 = por %p174, %p175
    %p177 = scmp.ne.s32.totalorder %s163, %s164
    %p178 = scmp.eq.s32.totalorder %s20, 1
    %p179 = por %p177, %p178
    %p181 = scmp.ne.s32.totalorder %s164, %s180
    %p182 = scmp.eq.s32.totalorder %s20, 0
    %p183 = por %p181, %p182
    %s184 = ssub.s32 %s14, %s21
    %p185 = scmp.eq.s32.totalorder %s184, 0
    %s187 = sadd.s32 %s186, 1
    %s188 = scalar_select %p185, %s186, %s187
    %p191 = pneg %p185
    %p192 = scmp.eq.s32.totalorder %s14, 1
    %p193 = por %p191, %p192
    %p194 = scmp.ne.s32.totalorder %s186, %s189
    %p195 = scmp.eq.s32.totalorder %s14, 0
    %p196 = por %p194, %p195
    %p197 = scmp.ne.s32.totalorder %s186, %s189
    %p198 = scmp.eq.s32.totalorder %s19, 1
    %p199 = por %p197, %p198
    %p200 = scmp.ne.s32.totalorder %s189, %s190
    %p201 = scmp.eq.s32.totalorder %s19, 0
    %p202 = por %p200, %p201
    %p203 = scmp.ne.s32.totalorder %s189, %s190
    %p204 = scmp.eq.s32.totalorder %s20, 1
    %p205 = por %p203, %p204
    %p207 = scmp.ne.s32.totalorder %s190, %s206
    %p208 = scmp.eq.s32.totalorder %s20, 0
    %p209 = por %p207, %p208
    %p210 = scmp.le.s32.totalorder 1, %s14
    %p211 = scmp.lt.s32.totalorder %s14, 3
    %p212 = pnand %p210, %p211
    %p213 = pneg %p212
    // Predicated region
    $region9: #{backbone_with_fpn_forward.14} parent=5 // pred_check
      _
    $region10: #{backbone_with_fpn_forward.14} parent=5 // pred_check_branch
      %215 = sbr.rel (%p212) target = $region12
    $region11: #{backbone_with_fpn_forward.14} parent=5 // pred_region
      %s216 = ssub.s32 %s14, 1
      // Predicated region
      $region13: #{backbone_with_fpn_forward.14} parent=11 // pred_check
        %p217 = pneg %p87
      $region14: #{backbone_with_fpn_forward.14} parent=11 // pred_check_branch
        %219 = sbr.rel (%p217) target = $region16
      $region15: #{backbone_with_fpn_forward.14} parent=11 // pred_region
        _
      $region16: #{backbone_with_fpn_forward.14} parent=11 // pred_fallthru
        _
      // Predicated region
      $region17: #{backbone_with_fpn_forward.14} parent=11 // pred_check
        %p220 = pneg %p108
      $region18: #{backbone_with_fpn_forward.14} parent=11 // pred_check_branch
        %222 = sbr.rel (%p220) target = $region20
      $region19: #{backbone_with_fpn_forward.14} parent=11 // pred_region
        _
      $region20: #{backbone_with_fpn_forward.14} parent=11 // pred_fallthru
        _
      // Predicated region
      $region21: #{backbone_with_fpn_forward.14} parent=11 // pred_check
        %p223 = pneg %p129
      $region22: #{backbone_with_fpn_forward.14} parent=11 // pred_check_branch
        %225 = sbr.rel (%p223) target = $region24
      $region23: #{backbone_with_fpn_forward.14} parent=11 // pred_region
        _
      $region24: #{backbone_with_fpn_forward.14} parent=11 // pred_fallthru
        _
      // Predicated region
      $region25: #{backbone_with_fpn_forward.14} parent=11 // pred_check
        %p226 = pneg %p150
      $region26: #{backbone_with_fpn_forward.14} parent=11 // pred_check_branch
        %228 = sbr.rel (%p226) target = $region28
      $region27: #{backbone_with_fpn_forward.14} parent=11 // pred_region
        _
      $region28: #{backbone_with_fpn_forward.14} parent=11 // pred_fallthru
        _
    $region12: #{backbone_with_fpn_forward.14} parent=5 // pred_fallthru
      _
    %p229 = scmp.lt.s32.totalorder %s14, 2
    // Predicated region
    $region29: #{backbone_with_fpn_forward.14} parent=5 // pred_check
      %p230 = pneg %p229
    $region30: #{backbone_with_fpn_forward.14} parent=5 // pred_check_branch
      %232 = sbr.rel (%p230) target = $region32
    $region31: #{backbone_with_fpn_forward.14} parent=5 // pred_region
      // Predicated region
      $region33: #{backbone_with_fpn_forward.14} parent=31 // pred_check
        %p233 = pneg %p34
      $region34: #{backbone_with_fpn_forward.14} parent=31 // pred_check_branch
        %235 = sbr.rel (%p233) target = $region36
      $region35: #{backbone_with_fpn_forward.14} parent=31 // pred_region
        %p236 = scmp.lt.s32.totalorder %s14, 1
        %s237 = scalar_select %p236, %s14, 1
        %s238 = smul.addr %s237, 8
        %s239 = smul.addr %s238, 8
        %s240 = scalar_lea.vmem %s0, %s239
      $region36: #{backbone_with_fpn_forward.14} parent=31 // pred_fallthru
        _
      // Predicated region
      $region37: #{backbone_with_fpn_forward.14} parent=31 // pred_check
        %p241 = pneg %p60
      $region38: #{backbone_with_fpn_forward.14} parent=31 // pred_check_branch
        %243 = sbr.rel (%p241) target = $region40
      $region39: #{backbone_with_fpn_forward.14} parent=31 // pred_region
        %p244 = scmp.lt.s32.totalorder %s14, 1
        %s245 = scalar_select %p244, %s14, 1
        %s246 = smul.addr %s245, 8
        %s247 = smul.addr %s246, 8
        %s248 = scalar_lea.vmem %s1, %s247
      $region40: #{backbone_with_fpn_forward.14} parent=31 // pred_fallthru
        _
    $region32: #{backbone_with_fpn_forward.14} parent=5 // pred_fallthru
      _
    %p249 = scmp.le.s32.totalorder 1, %s14
    %p250 = scmp.lt.s32.totalorder %s14, 3
    %p251 = pnand %p249, %p250
    %p252 = pneg %p251
    // Predicated region
    $region41: #{backbone_with_fpn_forward.14} parent=5 // pred_check
      _
    $region42: #{backbone_with_fpn_forward.14} parent=5 // pred_check_branch
      %254 = sbr.rel (%p251) target = $region44
    $region43: #{backbone_with_fpn_forward.14} parent=5 // pred_region
      %s255 = ssub.s32 %s14, 1
      %p256 = scmp.lt.s32.totalorder %s19, 1
      %s257 = scalar_select %p256, %s19, 1
      %s258 = smul.addr %s257, 8
      %s259 = smul.addr %s258, 8
      %s260 = scalar_lea.vmem %s0, %s259
      %p261 = pneg %p40
      %p262 = pneg %p37
      %p263 = scmp.lt.s32.totalorder %s19, 1
      %s264 = scalar_select %p263, %s19, 1
      %s265 = smul.addr %s264, 8
      %s266 = smul.addr %s265, 8
      %s267 = scalar_lea.vmem %s1, %s266
      %p268 = pneg %p66
      %p269 = pneg %p63
      %p270 = pneg %p87
      %p271 = pneg %p84
      %p272 = pneg %p108
      %p273 = pneg %p105
      %p274 = pneg %p129
      %p275 = pneg %p126
      %p276 = pneg %p150
      %p277 = pneg %p147
      %p278 = pneg %p176
      %p279 = pneg %p173
      %p280 = scmp.lt.s32.totalorder %s19, 1
      %s281 = scalar_select %p280, %s19, 1
      %s282 = smul.addr %s281, 8
      %s283 = smul.addr %s282, 8
      %s284 = scalar_lea.vmem %s6, %s283
      %p285 = pneg %p202
      %p286 = pneg %p199
      %p287 = scmp.lt.s32.totalorder %s19, 1
      %s288 = scalar_select %p287, %s19, 1
      %s289 = smul.addr %s288, 2
      %s290 = smul.addr %s289, 8
      %s291 = scalar_lea.vmem %s7, %s290
      %p292 = scmp.lt.s32.totalorder %s19, 1
      %s293 = scalar_select %p292, %s19, 1
      %s294 = smul.addr %s293, 8
      %s295 = smul.addr %s294, 8
      %s296 = scalar_lea.vmem %s0, %s295
      %p297 = scmp.lt.s32.totalorder %s19, 1
      %s298 = scalar_select %p297, %s19, 1
      %s299 = smul.addr %s298, 8
      %s300 = smul.addr %s299, 8
      %s301 = scalar_lea.vmem %s1, %s300
      %p302 = scmp.lt.s32.totalorder %s19, 1
      %s303 = scalar_select %p302, %s19, 1
      %s304 = smul.addr %s303, 8
      %s305 = smul.addr %s304, 8
      %s306 = scalar_lea.vmem %s6, %s305
      %p307 = scmp.lt.s32.totalorder %s19, 1
      %s308 = scalar_select %p307, %s19, 1
      %s309 = smul.addr %s308, 2
      %s310 = smul.addr %s309, 8
      %s311 = scalar_lea.vmem %s7, %s310
      %v313 = vld [vmem:[%s296] sm:$0xff]
      %v314 = vld [vmem:[%s296 + $0x8] sm:$0xff]
      %v315 = vld [vmem:[%s296 + $0x10] sm:$0xff]
      %v316 = vld [vmem:[%s296 + $0x18] sm:$0xff]
      %v317 = vld [vmem:[%s296 + $0x20] sm:$0xff]
      %v318 = vld [vmem:[%s296 + $0x28] sm:$0xff]
      %v319 = vld [vmem:[%s296 + $0x30] sm:$0xff]
      %v320 = vld [vmem:[%s296 + $0x38] sm:$0xff]
      %v321 = vpack.c.bf16 %v314, %v313
      %v322 = vpack.c.bf16 %v316, %v315
      %v323 = vpack.c.bf16 %v318, %v317
      %v324 = vpack.c.bf16 %v320, %v319
      %v325 = vld [vmem:[%s2] sm:$0xf]
      %v326 = vld [vmem:[%s3] sm:$0x1]
      %v328 = vperm.slane %v326, 0
      %vm330 = vcmask 64512
      %v332 = vsel %vm330, %v321, 0
      %v335 = vsel %vm330, %v322, 0
      %v338 = vsel %vm330, %v323, 0
      %v341 = vsel %vm330, %v324, 0
      %vm343 = vcmask 1043456
      %v345 = vsel %vm343, %v325, 0
      %347 = vmatpush.bf16.msra.mxu0 0
      %348 = vmatpush.bf16.msra.mxu0 0
      %349 = vmatpush.bf16.msra.mxu0 0
      %350 = vmatpush.bf16.msra.mxu0 0
      %351 = vmatpush.bf16.msra.mxu0 0
      %352 = vmatpush.bf16.msra.mxu0 0
      %353 = vmatpush.bf16.msra.mxu0 0
      %354 = vmatpush.bf16.msra.mxu0 %v345
      %355 = vmatmul.bf16.gmra.mxu0 %v332
      %v356 = vpop.f32.mrf.mxu0
      %v357 = vadd.f32 %v328, %v356
      %v358 = vpop.f32.mrf.mxu0
      %v359 = vadd.f32 %v328, %v358
      %360 = vmatmul.bf16.gmra.mxu0 %v335
      %v361 = vpop.f32.mrf.mxu0
      %v362 = vadd.f32 %v328, %v361
      %v363 = vpop.f32.mrf.mxu0
      %v364 = vadd.f32 %v328, %v363
      %365 = vmatmul.bf16.gmra.mxu0 %v338
      %v366 = vpop.f32.mrf.mxu0
      %v367 = vadd.f32 %v328, %v366
      %v368 = vpop.f32.mrf.mxu0
      %v369 = vadd.f32 %v328, %v368
      %370 = vmatmul.bf16.gmra.mxu0 %v341
      %v371 = vpop.f32.mrf.mxu0
      %v372 = vadd.f32 %v328, %v371
      %v373 = vpop.f32.mrf.mxu0
      %v374 = vadd.f32 %v328, %v373
      %375 = vdwg.mxu0
      %v376 = vld [vmem:[%s301] sm:$0xff]
      %v377 = vld [vmem:[%s301 + $0x8] sm:$0xff]
      %v378 = vld [vmem:[%s301 + $0x10] sm:$0xff]
      %v379 = vld [vmem:[%s301 + $0x18] sm:$0xff]
      %v380 = vld [vmem:[%s301 + $0x20] sm:$0xff]
      %v381 = vld [vmem:[%s301 + $0x28] sm:$0xff]
      %v382 = vld [vmem:[%s301 + $0x30] sm:$0xff]
      %v383 = vld [vmem:[%s301 + $0x38] sm:$0xff]
      %v384 = vadd.f32 %v357, %v376
      %v385 = vadd.f32 %v359, %v377
      %v386 = vadd.f32 %v362, %v378
      %v387 = vadd.f32 %v364, %v379
      %v388 = vadd.f32 %v367, %v380
      %v389 = vadd.f32 %v369, %v381
      %v390 = vadd.f32 %v372, %v382
      %v391 = vadd.f32 %v374, %v383
      %vm392 = vcmask 130048
      %393 = vst.msk [vmem:[%s306] sm:$0xff] %vm392, %v384
      %394 = vst.msk [vmem:[%s306 + $0x8] sm:$0xff] %vm392, %v385
      %395 = vst.msk [vmem:[%s306 + $0x10] sm:$0xff] %vm392, %v386
      %396 = vst.msk [vmem:[%s306 + $0x18] sm:$0xff] %vm392, %v387
      %397 = vst.msk [vmem:[%s306 + $0x20] sm:$0xff] %vm392, %v388
      %398 = vst.msk [vmem:[%s306 + $0x28] sm:$0xff] %vm392, %v389
      %399 = vst.msk [vmem:[%s306 + $0x30] sm:$0xff] %vm392, %v390
      %400 = vst.msk [vmem:[%s306 + $0x38] sm:$0xff] %vm392, %v391
      %401 = vst.msk [vmem:[#allocation2] sm:$0xff] %vm392, 0.0
      %vm402 = vcmask 123904
      %403 = vst.msk [vmem:[#allocation2 + $0x8] sm:$0x3] %vm402, 0.0
      %404 = vst.msk [vmem:[#allocation2 + $0x10] sm:$0xff] %vm392, 0.0
      %405 = vst.msk [vmem:[#allocation2 + $0x18] sm:$0x3] %vm402, 0.0
      %406 = vst.msk [vmem:[#allocation2 + $0x20] sm:$0xff] %vm392, 0.0
      %407 = vst.msk [vmem:[#allocation2 + $0x28] sm:$0x3] %vm402, 0.0
      %408 = vst.msk [vmem:[#allocation2 + $0x30] sm:$0xff] %vm392, 0.0
      %409 = vst.msk [vmem:[#allocation2 + $0x38] sm:$0x3] %vm402, 0.0
      %410 = vst.msk [vmem:[#allocation2 + $0x40] sm:$0xff] %vm392, 0.0
      %411 = vst.msk [vmem:[#allocation2 + $0x48] sm:$0x3] %vm402, 0.0
      %412 = vst.msk [vmem:[#allocation2 + $0x50] sm:$0xff] %vm392, 0.0
      %413 = vst.msk [vmem:[#allocation2 + $0x58] sm:$0x3] %vm402, 0.0
      %414 = vst.msk [vmem:[#allocation2 + $0x60] sm:$0xff] %vm392, 0.0
      %415 = vst.msk [vmem:[#allocation2 + $0x68] sm:$0x3] %vm402, 0.0
      %416 = vst.msk [vmem:[#allocation2 + $0x70] sm:$0xff] %vm392, 0.0
      %417 = vst.msk [vmem:[#allocation2 + $0x78] sm:$0x3] %vm402, 0.0
      %418 = vst.msk [vmem:[#allocation2 + $0x80] sm:$0xff] %vm392, 0.0
      %419 = vst.msk [vmem:[#allocation2 + $0x88] sm:$0x3] %vm402, 0.0
      %420 = vst.msk [vmem:[#allocation2 + $0x90] sm:$0xff] %vm392, 0.0
      %421 = vst.msk [vmem:[#allocation2 + $0x98] sm:$0x3] %vm402, 0.0
      %s422 = scalar_lea.vmem [#allocation2], 16
      %423 = vst.msk [vmem:[%s422 + $0x1] sm:$0xff] %vm392, %v384
      %424 = vst.msk [vmem:[%s422 + $0x11] sm:$0xff] %vm392, %v385
      %425 = vst.msk [vmem:[%s422 + $0x21] sm:$0xff] %vm392, %v386
      %426 = vst.msk [vmem:[%s422 + $0x31] sm:$0xff] %vm392, %v387
      %427 = vst.msk [vmem:[%s422 + $0x41] sm:$0xff] %vm392, %v388
      %428 = vst.msk [vmem:[%s422 + $0x51] sm:$0xff] %vm392, %v389
      %429 = vst.msk [vmem:[%s422 + $0x61] sm:$0xff] %vm392, %v390
      %430 = vst.msk [vmem:[%s422 + $0x71] sm:$0xff] %vm392, %v391
      %v431 = vld [vmem:[#allocation2] sm:$0xff]
      %v432 = vld [vmem:[#allocation2 + $0x10] sm:$0xff]
      %v433 = vld [vmem:[#allocation2 + $0x20] sm:$0xff]
      %v434 = vld [vmem:[#allocation2 + $0x30] sm:$0xff]
      %v435 = vld [vmem:[#allocation2 + $0x40] sm:$0xff]
      %v436 = vld [vmem:[#allocation2 + $0x50] sm:$0xff]
      %v437 = vld [vmem:[#allocation2 + $0x60] sm:$0xff]
      %v438 = vld [vmem:[#allocation2 + $0x70] sm:$0xff]
      %v439 = vpack.c.bf16 %v432, %v431
      %v440 = vpack.c.bf16 %v434, %v433
      %v441 = vpack.c.bf16 %v436, %v435
      %v442 = vpack.c.bf16 %v438, %v437
      %v443 = vld [vmem:[%s4] sm:$0xf]
      %v444 = vld [vmem:[%s4 + $0x4] sm:$0xf]
      %v445 = vld [vmem:[#allocation2 + $0x1] sm:$0xff]
      %v446 = vld [vmem:[#allocation2 + $0x11] sm:$0xff]
      %v447 = vld [vmem:[#allocation2 + $0x21] sm:$0xff]
      %v448 = vld [vmem:[#allocation2 + $0x31] sm:$0xff]
      %v449 = vld [vmem:[#allocation2 + $0x41] sm:$0xff]
      %v450 = vld [vmem:[#allocation2 + $0x51] sm:$0xff]
      %v451 = vld [vmem:[#allocation2 + $0x61] sm:$0xff]
      %v452 = vld [vmem:[#allocation2 + $0x71] sm:$0xff]
      %v453 = vpack.c.bf16 %v446, %v445
      %v454 = vpack.c.bf16 %v448, %v447
      %v455 = vpack.c.bf16 %v450, %v449
      %v456 = vpack.c.bf16 %v452, %v451
      %v457 = vld [vmem:[%s4 + $0x8] sm:$0xf]
      %v458 = vld [vmem:[%s4 + $0xc] sm:$0xf]
      %v461 = vunpack.c.l.b16 %v457
      %v462 = vunpack.c.l.b16 %v458
      %v463 = vpack.c.b16 %v462, %v461
      %v466 = vsel %vm392, %v453, 0
      %v469 = vsel %vm392, %v454, 0
      %v472 = vsel %vm392, %v455, 0
      %v475 = vsel %vm392, %v456, 0
      %477 = vmatpush.bf16.msra.mxu0 0
      %478 = vmatpush.bf16.msra.mxu0 0
      %479 = vmatpush.bf16.msra.mxu0 0
      %480 = vmatpush.bf16.msra.mxu0 0
      %481 = vmatpush.bf16.msra.mxu0 0
      %482 = vmatpush.bf16.msra.mxu0 0
      %483 = vmatpush.bf16.msra.mxu0 0
      %484 = vmatpush.bf16.msra.mxu0 %v463
      %485 = vmatmul.bf16.gmra.mxu0 %v466
      %v486 = vpop.f32.mrf.mxu0
      %v487 = vadd.f32 0.0, %v486
      %v488 = vpop.f32.mrf.mxu0
      %v489 = vadd.f32 0.0, %v488
      %490 = vmatmul.bf16.gmra.mxu0 %v469
      %v491 = vpop.f32.mrf.mxu0
      %v492 = vadd.f32 0.0, %v491
      %v493 = vpop.f32.mrf.mxu0
      %v494 = vadd.f32 0.0, %v493
      %495 = vmatmul.bf16.gmra.mxu0 %v472
      %v496 = vpop.f32.mrf.mxu0
      %v497 = vadd.f32 0.0, %v496
      %v498 = vpop.f32.mrf.mxu0
      %v499 = vadd.f32 0.0, %v498
      %500 = vmatmul.bf16.gmra.mxu0 %v475
      %v501 = vpop.f32.mrf.mxu0
      %v502 = vadd.f32 0.0, %v501
      %v503 = vpop.f32.mrf.mxu0
      %v504 = vadd.f32 0.0, %v503
      %505 = vdwg.mxu0
      %v508 = vunpack.c.l.b16 %v443
      %v509 = vunpack.c.l.b16 %v444
      %v510 = vpack.c.b16 %v509, %v508
      %v513 = vsel %vm392, %v439, 0
      %v516 = vsel %vm392, %v440, 0
      %v519 = vsel %vm392, %v441, 0
      %v522 = vsel %vm392, %v442, 0
      %524 = vmatpush.bf16.msra.mxu0 0
      %525 = vmatpush.bf16.msra.mxu0 0
      %526 = vmatpush.bf16.msra.mxu0 0
      %527 = vmatpush.bf16.msra.mxu0 0
      %528 = vmatpush.bf16.msra.mxu0 0
      %529 = vmatpush.bf16.msra.mxu0 0
      %530 = vmatpush.bf16.msra.mxu0 0
      %531 = vmatpush.bf16.msra.mxu0 %v510
      %532 = vmatmul.bf16.gmra.mxu0 %v513
      %v533 = vpop.f32.mrf.mxu0
      %v534 = vadd.f32 %v487, %v533
      %v535 = vpop.f32.mrf.mxu0
      %v536 = vadd.f32 %v489, %v535
      %537 = vmatmul.bf16.gmra.mxu0 %v516
      %v538 = vpop.f32.mrf.mxu0
      %v539 = vadd.f32 %v492, %v538
      %v540 = vpop.f32.mrf.mxu0
      %v541 = vadd.f32 %v494, %v540
      %542 = vmatmul.bf16.gmra.mxu0 %v519
      %v543 = vpop.f32.mrf.mxu0
      %v544 = vadd.f32 %v497, %v543
      %v545 = vpop.f32.mrf.mxu0
      %v546 = vadd.f32 %v499, %v545
      %547 = vmatmul.bf16.gmra.mxu0 %v522
      %v548 = vpop.f32.mrf.mxu0
      %v549 = vadd.f32 %v502, %v548
      %v550 = vpop.f32.mrf.mxu0
      %v551 = vadd.f32 %v504, %v550
      %552 = vdwg.mxu0
      %v553 = vld [vmem:[#allocation2 + $0x2] sm:$0xff]
      %v554 = vld [vmem:[#allocation2 + $0x12] sm:$0xff]
      %v555 = vld [vmem:[#allocation2 + $0x22] sm:$0xff]
      %v556 = vld [vmem:[#allocation2 + $0x32] sm:$0xff]
      %v557 = vld [vmem:[#allocation2 + $0x42] sm:$0xff]
      %v558 = vld [vmem:[#allocation2 + $0x52] sm:$0xff]
      %v559 = vld [vmem:[#allocation2 + $0x62] sm:$0xff]
      %v560 = vld [vmem:[#allocation2 + $0x72] sm:$0xff]
      %v561 = vpack.c.bf16 %v554, %v553
      %v562 = vpack.c.bf16 %v556, %v555
      %v563 = vpack.c.bf16 %v558, %v557
      %v564 = vpack.c.bf16 %v560, %v559
      %v565 = vld [vmem:[%s4 + $0x10] sm:$0xf]
      %v566 = vld [vmem:[%s4 + $0x14] sm:$0xf]
      %v569 = vunpack.c.l.b16 %v565
      %v570 = vunpack.c.l.b16 %v566
      %v571 = vpack.c.b16 %v570, %v569
      %v574 = vsel %vm392, %v561, 0
      %v577 = vsel %vm392, %v562, 0
      %v580 = vsel %vm392, %v563, 0
      %v583 = vsel %vm392, %v564, 0
      %585 = vmatpush.bf16.msra.mxu0 0
      %586 = vmatpush.bf16.msra.mxu0 0
      %587 = vmatpush.bf16.msra.mxu0 0
      %588 = vmatpush.bf16.msra.mxu0 0
      %589 = vmatpush.bf16.msra.mxu0 0
      %590 = vmatpush.bf16.msra.mxu0 0
      %591 = vmatpush.bf16.msra.mxu0 0
      %592 = vmatpush.bf16.msra.mxu0 %v571
      %593 = vmatmul.bf16.gmra.mxu0 %v574
      %v594 = vpop.f32.mrf.mxu0
      %v595 = vadd.f32 0.0, %v594
      %v596 = vpop.f32.mrf.mxu0
      %v597 = vadd.f32 0.0, %v596
      %598 = vmatmul.bf16.gmra.mxu0 %v577
      %v599 = vpop.f32.mrf.mxu0
      %v600 = vadd.f32 0.0, %v599
      %v601 = vpop.f32.mrf.mxu0
      %v602 = vadd.f32 0.0, %v601
      %603 = vmatmul.bf16.gmra.mxu0 %v580
      %v604 = vpop.f32.mrf.mxu0
      %v605 = vadd.f32 0.0, %v604
      %v606 = vpop.f32.mrf.mxu0
      %v607 = vadd.f32 0.0, %v606
      %608 = vmatmul.bf16.gmra.mxu0 %v583
      %v609 = vpop.f32.mrf.mxu0
      %v610 = vadd.f32 0.0, %v609
      %v611 = vpop.f32.mrf.mxu0
      %v612 = vadd.f32 0.0, %v611
      %613 = vdwg.mxu0
      %v614 = vadd.f32 %v534, %v595
      %v615 = vadd.f32 %v536, %v597
      %v616 = vadd.f32 %v539, %v600
      %v617 = vadd.f32 %v541, %v602
      %v618 = vadd.f32 %v544, %v605
      %v619 = vadd.f32 %v546, %v607
      %v620 = vadd.f32 %v549, %v610
      %v621 = vadd.f32 %v551, %v612
      %v622 = vld [vmem:[%s422] sm:$0xff]
      %v623 = vld [vmem:[%s422 + $0x10] sm:$0xff]
      %v624 = vld [vmem:[%s422 + $0x20] sm:$0xff]
      %v625 = vld [vmem:[%s422 + $0x30] sm:$0xff]
      %v626 = vld [vmem:[%s422 + $0x40] sm:$0xff]
      %v627 = vld [vmem:[%s422 + $0x50] sm:$0xff]
      %v628 = vld [vmem:[%s422 + $0x60] sm:$0xff]
      %v629 = vld [vmem:[%s422 + $0x70] sm:$0xff]
      %v630 = vpack.c.bf16 %v623, %v622
      %v631 = vpack.c.bf16 %v625, %v624
      %v632 = vpack.c.bf16 %v627, %v626
      %v633 = vpack.c.bf16 %v629, %v628
      %v634 = vld [vmem:[%s4 + $0x18] sm:$0xf]
      %v635 = vld [vmem:[%s4 + $0x1c] sm:$0xf]
      %v638 = vunpack.c.l.b16 %v634
      %v639 = vunpack.c.l.b16 %v635
      %v640 = vpack.c.b16 %v639, %v638
      %v643 = vsel %vm392, %v630, 0
      %v646 = vsel %vm392, %v631, 0
      %v649 = vsel %vm392, %v632, 0
      %v652 = vsel %vm392, %v633, 0
      %654 = vmatpush.bf16.msra.mxu0 0
      %655 = vmatpush.bf16.msra.mxu0 0
      %656 = vmatpush.bf16.msra.mxu0 0
      %657 = vmatpush.bf16.msra.mxu0 0
      %658 = vmatpush.bf16.msra.mxu0 0
      %659 = vmatpush.bf16.msra.mxu0 0
      %660 = vmatpush.bf16.msra.mxu0 0
      %661 = vmatpush.bf16.msra.mxu0 %v640
      %662 = vmatmul.bf16.gmra.mxu0 %v643
      %v663 = vpop.f32.mrf.mxu0
      %v664 = vadd.f32 0.0, %v663
      %v665 = vpop.f32.mrf.mxu0
      %v666 = vadd.f32 0.0, %v665
      %667 = vmatmul.bf16.gmra.mxu0 %v646
      %v668 = vpop.f32.mrf.mxu0
      %v669 = vadd.f32 0.0, %v668
      %v670 = vpop.f32.mrf.mxu0
      %v671 = vadd.f32 0.0, %v670
      %672 = vmatmul.bf16.gmra.mxu0 %v649
      %v673 = vpop.f32.mrf.mxu0
      %v674 = vadd.f32 0.0, %v673
      %v675 = vpop.f32.mrf.mxu0
      %v676 = vadd.f32 0.0, %v675
      %677 = vmatmul.bf16.gmra.mxu0 %v652
      %v678 = vpop.f32.mrf.mxu0
      %v679 = vadd.f32 0.0, %v678
      %v680 = vpop.f32.mrf.mxu0
      %v681 = vadd.f32 0.0, %v680
      %682 = vdwg.mxu0
      %v683 = vadd.f32 %v614, %v664
      %v684 = vadd.f32 %v615, %v666
      %v685 = vadd.f32 %v616, %v669
      %v686 = vadd.f32 %v617, %v671
      %v687 = vadd.f32 %v618, %v674
      %v688 = vadd.f32 %v619, %v676
      %v689 = vadd.f32 %v620, %v679
      %v690 = vadd.f32 %v621, %v681
      %v691 = vld [vmem:[%s422 + $0x1] sm:$0xff]
      %v692 = vld [vmem:[%s422 + $0x11] sm:$0xff]
      %v693 = vld [vmem:[%s422 + $0x21] sm:$0xff]
      %v694 = vld [vmem:[%s422 + $0x31] sm:$0xff]
      %v695 = vld [vmem:[%s422 + $0x41] sm:$0xff]
      %v696 = vld [vmem:[%s422 + $0x51] sm:$0xff]
      %v697 = vld [vmem:[%s422 + $0x61] sm:$0xff]
      %v698 = vld [vmem:[%s422 + $0x71] sm:$0xff]
      %v699 = vpack.c.bf16 %v692, %v691
      %v700 = vpack.c.bf16 %v694, %v693
      %v701 = vpack.c.bf16 %v696, %v695
      %v702 = vpack.c.bf16 %v698, %v697
      %v703 = vld [vmem:[%s4 + $0x20] sm:$0xf]
      %v704 = vld [vmem:[%s4 + $0x24] sm:$0xf]
      %v707 = vunpack.c.l.b16 %v703
      %v708 = vunpack.c.l.b16 %v704
      %v709 = vpack.c.b16 %v708, %v707
      %v712 = vsel %vm392, %v699, 0
      %v715 = vsel %vm392, %v700, 0
      %v718 = vsel %vm392, %v701, 0
      %v721 = vsel %vm392, %v702, 0
      %723 = vmatpush.bf16.msra.mxu0 0
      %724 = vmatpush.bf16.msra.mxu0 0
      %725 = vmatpush.bf16.msra.mxu0 0
      %726 = vmatpush.bf16.msra.mxu0 0
      %727 = vmatpush.bf16.msra.mxu0 0
      %728 = vmatpush.bf16.msra.mxu0 0
      %729 = vmatpush.bf16.msra.mxu0 0
      %730 = vmatpush.bf16.msra.mxu0 %v709
      %731 = vmatmul.bf16.gmra.mxu0 %v712
      %v732 = vpop.f32.mrf.mxu0
      %v733 = vadd.f32 0.0, %v732
      %v734 = vpop.f32.mrf.mxu0
      %v735 = vadd.f32 0.0, %v734
      %736 = vmatmul.bf16.gmra.mxu0 %v715
      %v737 = vpop.f32.mrf.mxu0
      %v738 = vadd.f32 0.0, %v737
      %v739 = vpop.f32.mrf.mxu0
      %v740 = vadd.f32 0.0, %v739
      %741 = vmatmul.bf16.gmra.mxu0 %v718
      %v742 = vpop.f32.mrf.mxu0
      %v743 = vadd.f32 0.0, %v742
      %v744 = vpop.f32.mrf.mxu0
      %v745 = vadd.f32 0.0, %v744
      %746 = vmatmul.bf16.gmra.mxu0 %v721
      %v747 = vpop.f32.mrf.mxu0
      %v748 = vadd.f32 0.0, %v747
      %v749 = vpop.f32.mrf.mxu0
      %v750 = vadd.f32 0.0, %v749
      %751 = vdwg.mxu0
      %v752 = vadd.f32 %v683, %v733
      %v753 = vadd.f32 %v684, %v735
      %v754 = vadd.f32 %v685, %v738
      %v755 = vadd.f32 %v686, %v740
      %v756 = vadd.f32 %v687, %v743
      %v757 = vadd.f32 %v688, %v745
      %v758 = vadd.f32 %v689, %v748
      %v759 = vadd.f32 %v690, %v750
      %v760 = vld [vmem:[%s422 + $0x2] sm:$0xff]
      %v761 = vld [vmem:[%s422 + $0x12] sm:$0xff]
      %v762 = vld [vmem:[%s422 + $0x22] sm:$0xff]
      %v763 = vld [vmem:[%s422 + $0x32] sm:$0xff]
      %v764 = vld [vmem:[%s422 + $0x42] sm:$0xff]
      %v765 = vld [vmem:[%s422 + $0x52] sm:$0xff]
      %v766 = vld [vmem:[%s422 + $0x62] sm:$0xff]
      %v767 = vld [vmem:[%s422 + $0x72] sm:$0xff]
      %v768 = vpack.c.bf16 %v761, %v760
      %v769 = vpack.c.bf16 %v763, %v762
      %v770 = vpack.c.bf16 %v765, %v764
      %v771 = vpack.c.bf16 %v767, %v766
      %v772 = vld [vmem:[%s4 + $0x28] sm:$0xf]
      %v773 = vld [vmem:[%s4 + $0x2c] sm:$0xf]
      %v776 = vunpack.c.l.b16 %v772
      %v777 = vunpack.c.l.b16 %v773
      %v778 = vpack.c.b16 %v777, %v776
      %v781 = vsel %vm392, %v768, 0
      %v784 = vsel %vm392, %v769, 0
      %v787 = vsel %vm392, %v770, 0
      %v790 = vsel %vm392, %v771, 0
      %792 = vmatpush.bf16.msra.mxu0 0
      %793 = vmatpush.bf16.msra.mxu0 0
      %794 = vmatpush.bf16.msra.mxu0 0
      %795 = vmatpush.bf16.msra.mxu0 0
      %796 = vmatpush.bf16.msra.mxu0 0
      %797 = vmatpush.bf16.msra.mxu0 0
      %798 = vmatpush.bf16.msra.mxu0 0
      %799 = vmatpush.bf16.msra.mxu0 %v778
      %800 = vmatmul.bf16.gmra.mxu0 %v781
      %v801 = vpop.f32.mrf.mxu0
      %v802 = vadd.f32 0.0, %v801
      %v803 = vpop.f32.mrf.mxu0
      %v804 = vadd.f32 0.0, %v803
      %805 = vmatmul.bf16.gmra.mxu0 %v784
      %v806 = vpop.f32.mrf.mxu0
      %v807 = vadd.f32 0.0, %v806
      %v808 = vpop.f32.mrf.mxu0
      %v809 = vadd.f32 0.0, %v808
      %810 = vmatmul.bf16.gmra.mxu0 %v787
      %v811 = vpop.f32.mrf.mxu0
      %v812 = vadd.f32 0.0, %v811
      %v813 = vpop.f32.mrf.mxu0
      %v814 = vadd.f32 0.0, %v813
      %815 = vmatmul.bf16.gmra.mxu0 %v790
      %v816 = vpop.f32.mrf.mxu0
      %v817 = vadd.f32 0.0, %v816
      %v818 = vpop.f32.mrf.mxu0
      %v819 = vadd.f32 0.0, %v818
      %820 = vdwg.mxu0
      %v821 = vadd.f32 %v752, %v802
      %v822 = vadd.f32 %v753, %v804
      %v823 = vadd.f32 %v754, %v807
      %v824 = vadd.f32 %v755, %v809
      %v825 = vadd.f32 %v756, %v812
      %v826 = vadd.f32 %v757, %v814
      %v827 = vadd.f32 %v758, %v817
      %v828 = vadd.f32 %v759, %v819
      %s829 = scalar_lea.vmem [#allocation2], 32
      %v830 = vld [vmem:[%s829] sm:$0xff]
      %v831 = vld [vmem:[%s829 + $0x10] sm:$0xff]
      %v832 = vld [vmem:[%s829 + $0x20] sm:$0xff]
      %v833 = vld [vmem:[%s829 + $0x30] sm:$0xff]
      %v834 = vld [vmem:[%s829 + $0x40] sm:$0xff]
      %v835 = vld [vmem:[%s829 + $0x50] sm:$0xff]
      %v836 = vld [vmem:[%s829 + $0x60] sm:$0xff]
      %v837 = vld [vmem:[%s829 + $0x70] sm:$0xff]
      %v838 = vpack.c.bf16 %v831, %v830
      %v839 = vpack.c.bf16 %v833, %v832
      %v840 = vpack.c.bf16 %v835, %v834
      %v841 = vpack.c.bf16 %v837, %v836
      %v842 = vld [vmem:[%s4 + $0x30] sm:$0xf]
      %v843 = vld [vmem:[%s4 + $0x34] sm:$0xf]
      %v846 = vunpack.c.l.b16 %v842
      %v847 = vunpack.c.l.b16 %v843
      %v848 = vpack.c.b16 %v847, %v846
      %v851 = vsel %vm392, %v838, 0
      %v854 = vsel %vm392, %v839, 0
      %v857 = vsel %vm392, %v840, 0
      %v860 = vsel %vm392, %v841, 0
      %862 = vmatpush.bf16.msra.mxu0 0
      %863 = vmatpush.bf16.msra.mxu0 0
      %864 = vmatpush.bf16.msra.mxu0 0
      %865 = vmatpush.bf16.msra.mxu0 0
      %866 = vmatpush.bf16.msra.mxu0 0
      %867 = vmatpush.bf16.msra.mxu0 0
      %868 = vmatpush.bf16.msra.mxu0 0
      %869 = vmatpush.bf16.msra.mxu0 %v848
      %870 = vmatmul.bf16.gmra.mxu0 %v851
      %v871 = vpop.f32.mrf.mxu0
      %v872 = vadd.f32 0.0, %v871
      %v873 = vpop.f32.mrf.mxu0
      %v874 = vadd.f32 0.0, %v873
      %875 = vmatmul.bf16.gmra.mxu0 %v854
      %v876 = vpop.f32.mrf.mxu0
      %v877 = vadd.f32 0.0, %v876
      %v878 = vpop.f32.mrf.mxu0
      %v879 = vadd.f32 0.0, %v878
      %880 = vmatmul.bf16.gmra.mxu0 %v857
      %v881 = vpop.f32.mrf.mxu0
      %v882 = vadd.f32 0.0, %v881
      %v883 = vpop.f32.mrf.mxu0
      %v884 = vadd.f32 0.0, %v883
      %885 = vmatmul.bf16.gmra.mxu0 %v860
      %v886 = vpop.f32.mrf.mxu0
      %v887 = vadd.f32 0.0, %v886
      %v888 = vpop.f32.mrf.mxu0
      %v889 = vadd.f32 0.0, %v888
      %890 = vdwg.mxu0
      %v891 = vadd.f32 %v821, %v872
      %v892 = vadd.f32 %v822, %v874
      %v893 = vadd.f32 %v823, %v877
      %v894 = vadd.f32 %v824, %v879
      %v895 = vadd.f32 %v825, %v882
      %v896 = vadd.f32 %v826, %v884
      %v897 = vadd.f32 %v827, %v887
      %v898 = vadd.f32 %v828, %v889
      %v899 = vld [vmem:[%s829 + $0x1] sm:$0xff]
      %v900 = vld [vmem:[%s829 + $0x11] sm:$0xff]
      %v901 = vld [vmem:[%s829 + $0x21] sm:$0xff]
      %v902 = vld [vmem:[%s829 + $0x31] sm:$0xff]
      %v903 = vld [vmem:[%s829 + $0x41] sm:$0xff]
      %v904 = vld [vmem:[%s829 + $0x51] sm:$0xff]
      %v905 = vld [vmem:[%s829 + $0x61] sm:$0xff]
      %v906 = vld [vmem:[%s829 + $0x71] sm:$0xff]
      %v907 = vpack.c.bf16 %v900, %v899
      %v908 = vpack.c.bf16 %v902, %v901
      %v909 = vpack.c.bf16 %v904, %v903
      %v910 = vpack.c.bf16 %v906, %v905
      %v911 = vld [vmem:[%s4 + $0x38] sm:$0xf]
      %v912 = vld [vmem:[%s4 + $0x3c] sm:$0xf]
      %v915 = vunpack.c.l.b16 %v911
      %v916 = vunpack.c.l.b16 %v912
      %v917 = vpack.c.b16 %v916, %v915
      %v920 = vsel %vm392, %v907, 0
      %v923 = vsel %vm392, %v908, 0
      %v926 = vsel %vm392, %v909, 0
      %v929 = vsel %vm392, %v910, 0
      %931 = vmatpush.bf16.msra.mxu0 0
      %932 = vmatpush.bf16.msra.mxu0 0
      %933 = vmatpush.bf16.msra.mxu0 0
      %934 = vmatpush.bf16.msra.mxu0 0
      %935 = vmatpush.bf16.msra.mxu0 0
      %936 = vmatpush.bf16.msra.mxu0 0
      %937 = vmatpush.bf16.msra.mxu0 0
      %938 = vmatpush.bf16.msra.mxu0 %v917
      %939 = vmatmul.bf16.gmra.mxu0 %v920
      %v940 = vpop.f32.mrf.mxu0
      %v941 = vadd.f32 0.0, %v940
      %v942 = vpop.f32.mrf.mxu0
      %v943 = vadd.f32 0.0, %v942
      %944 = vmatmul.bf16.gmra.mxu0 %v923
      %v945 = vpop.f32.mrf.mxu0
      %v946 = vadd.f32 0.0, %v945
      %v947 = vpop.f32.mrf.mxu0
      %v948 = vadd.f32 0.0, %v947
      %949 = vmatmul.bf16.gmra.mxu0 %v926
      %v950 = vpop.f32.mrf.mxu0
      %v951 = vadd.f32 0.0, %v950
      %v952 = vpop.f32.mrf.mxu0
      %v953 = vadd.f32 0.0, %v952
      %954 = vmatmul.bf16.gmra.mxu0 %v929
      %v955 = vpop.f32.mrf.mxu0
      %v956 = vadd.f32 0.0, %v955
      %v957 = vpop.f32.mrf.mxu0
      %v958 = vadd.f32 0.0, %v957
      %959 = vdwg.mxu0
      %v960 = vadd.f32 %v891, %v941
      %v961 = vadd.f32 %v892, %v943
      %v962 = vadd.f32 %v893, %v946
      %v963 = vadd.f32 %v894, %v948
      %v964 = vadd.f32 %v895, %v951
      %v965 = vadd.f32 %v896, %v953
      %v966 = vadd.f32 %v897, %v956
      %v967 = vadd.f32 %v898, %v958
      %v968 = vld [vmem:[%s829 + $0x2] sm:$0xff]
      %v969 = vld [vmem:[%s829 + $0x12] sm:$0xff]
      %v970 = vld [vmem:[%s829 + $0x22] sm:$0xff]
      %v971 = vld [vmem:[%s829 + $0x32] sm:$0xff]
      %v972 = vld [vmem:[%s829 + $0x42] sm:$0xff]
      %v973 = vld [vmem:[%s829 + $0x52] sm:$0xff]
      %v974 = vld [vmem:[%s829 + $0x62] sm:$0xff]
      %v975 = vld [vmem:[%s829 + $0x72] sm:$0xff]
      %v976 = vpack.c.bf16 %v969, %v968
      %v977 = vpack.c.bf16 %v971, %v970
      %v978 = vpack.c.bf16 %v973, %v972
      %v979 = vpack.c.bf16 %v975, %v974
      %v980 = vld [vmem:[%s4 + $0x40] sm:$0xf]
      %v981 = vld [vmem:[%s4 + $0x44] sm:$0xf]
      %v984 = vunpack.c.l.b16 %v980
      %v985 = vunpack.c.l.b16 %v981
      %v986 = vpack.c.b16 %v985, %v984
      %v989 = vsel %vm392, %v976, 0
      %v992 = vsel %vm392, %v977, 0
      %v995 = vsel %vm392, %v978, 0
      %v998 = vsel %vm392, %v979, 0
      %1000 = vmatpush.bf16.msra.mxu0 0
      %1001 = vmatpush.bf16.msra.mxu0 0
      %1002 = vmatpush.bf16.msra.mxu0 0
      %1003 = vmatpush.bf16.msra.mxu0 0
      %1004 = vmatpush.bf16.msra.mxu0 0
      %1005 = vmatpush.bf16.msra.mxu0 0
      %1006 = vmatpush.bf16.msra.mxu0 0
      %1007 = vmatpush.bf16.msra.mxu0 %v986
      %1008 = vmatmul.bf16.gmra.mxu0 %v989
      %v1009 = vpop.f32.mrf.mxu0
      %v1010 = vadd.f32 0.0, %v1009
      %v1011 = vpop.f32.mrf.mxu0
      %v1012 = vadd.f32 0.0, %v1011
      %1013 = vmatmul.bf16.gmra.mxu0 %v992
      %v1014 = vpop.f32.mrf.mxu0
      %v1015 = vadd.f32 0.0, %v1014
      %v1016 = vpop.f32.mrf.mxu0
      %v1017 = vadd.f32 0.0, %v1016
      %1018 = vmatmul.bf16.gmra.mxu0 %v995
      %v1019 = vpop.f32.mrf.mxu0
      %v1020 = vadd.f32 0.0, %v1019
      %v1021 = vpop.f32.mrf.mxu0
      %v1022 = vadd.f32 0.0, %v1021
      %1023 = vmatmul.bf16.gmra.mxu0 %v998
      %v1024 = vpop.f32.mrf.mxu0
      %v1025 = vadd.f32 0.0, %v1024
      %v1026 = vpop.f32.mrf.mxu0
      %v1027 = vadd.f32 0.0, %v1026
      %1028 = vdwg.mxu0
      %v1029 = vadd.f32 %v960, %v1010
      %v1030 = vadd.f32 %v961, %v1012
      %v1031 = vadd.f32 %v962, %v1015
      %v1032 = vadd.f32 %v963, %v1017
      %v1033 = vadd.f32 %v964, %v1020
      %v1034 = vadd.f32 %v965, %v1022
      %v1035 = vadd.f32 %v966, %v1025
      %v1036 = vadd.f32 %v967, %v1027
      %v1037 = vld [vmem:[%s5] sm:$0x1]
      %v1039 = vperm.slane %v1037, 0
      %v1041 = vadd.f32 %v1029, %v1039
      %v1042 = vadd.f32 %v1030, %v1039
      %v1043 = vadd.f32 %v1031, %v1039
      %v1044 = vadd.f32 %v1032, %v1039
      %v1045 = vadd.f32 %v1033, %v1039
      %v1046 = vadd.f32 %v1034, %v1039
      %v1047 = vadd.f32 %v1035, %v1039
      %v1048 = vadd.f32 %v1036, %v1039
      %1049 = vxpose.xlu0.b32.start [1/16] %v1041, 128
      %1050 = vxpose.xlu0.b32.cont [2/16] %v1042, 128
      %1051 = vxpose.xlu0.b32.cont [3/16] %v1043, 128
      %1052 = vxpose.xlu0.b32.cont [4/16] %v1044, 128
      %1053 = vxpose.xlu0.b32.cont [5/16] %v1045, 128
      %1054 = vxpose.xlu0.b32.cont [6/16] %v1046, 128
      %1055 = vxpose.xlu0.b32.cont [7/16] %v1047, 128
      %1056 = vxpose.xlu0.b32.cont [8/16] %v1048, 128
      %1057 = vxpose.xlu0.b32.cont [9/16] 0.0, 128
      %1058 = vxpose.xlu0.b32.cont [10/16] 0.0, 128
      %1059 = vxpose.xlu0.b32.cont [11/16] 0.0, 128
      %1060 = vxpose.xlu0.b32.cont [12/16] 0.0, 128
      %1061 = vxpose.xlu0.b32.cont [13/16] 0.0, 128
      %1062 = vxpose.xlu0.b32.cont [14/16] 0.0, 128
      %1063 = vxpose.xlu0.b32.cont [15/16] 0.0, 128
      %1064 = vxpose.xlu0.b32.end [16/16] 0.0, 128
      %v1065 = vpop.trf.xlu0
      %v1066 = vpop.trf.xlu0
      %v1067 = vpop.trf.xlu0
      %v1068 = vpop.trf.xlu0
      %v1069 = vpop.trf.xlu0
      %v1070 = vpop.trf.xlu0
      %v1071 = vpop.trf.xlu0
      %v1072 = vpop.trf.xlu0
      %v1073 = vpop.trf.xlu0
      %v1074 = vpop.trf.xlu0
      %v1075 = vpop.trf.xlu0
      %v1076 = vpop.trf.xlu0
      %v1077 = vpop.trf.xlu0
      %v1078 = vpop.trf.xlu0
      %v1079 = vpop.trf.xlu0
      %v1080 = vpop.trf.xlu0
      %vm1081 = vcmask 523264
      %1082 = vst.msk [vmem:[%s311] sm:$0xff] %vm1081, %v1065
      %1083 = vst.msk [vmem:[%s311 + $0x8] sm:$0xff] %vm1081, %v1066
      %p1084 = scmp.lt.s32.totalorder %s19, 1
      %s1085 = scalar_select %p1084, %s19, 1
      %s1086 = smul.addr %s1085, 8
      %s1087 = smul.addr %s1086, 8
      %s1088 = scalar_lea.vmem %s6, %s1087
      %p1089 = scmp.lt.s32.totalorder %s19, 1
      %s1090 = scalar_select %p1089, %s19, 1
      %s1091 = smul.addr %s1090, 2
      %s1092 = smul.addr %s1091, 8
      %s1093 = scalar_lea.vmem %s7, %s1092
      // Predicated region
      $region45: #{backbone_with_fpn_forward.14} parent=43 // pred_check
        %p1094 = pneg %p173
      $region46: #{backbone_with_fpn_forward.14} parent=43 // pred_check_branch
        %1096 = sbr.rel (%p1094) target = $region48
      $region47: #{backbone_with_fpn_forward.14} parent=43 // pred_region
        _
      $region48: #{backbone_with_fpn_forward.14} parent=43 // pred_fallthru
        _
      // Predicated region
      $region49: #{backbone_with_fpn_forward.14} parent=43 // pred_check
        %p1097 = pneg %p199
      $region50: #{backbone_with_fpn_forward.14} parent=43 // pred_check_branch
        %1099 = sbr.rel (%p1097) target = $region52
      $region51: #{backbone_with_fpn_forward.14} parent=43 // pred_region
        _
      $region52: #{backbone_with_fpn_forward.14} parent=43 // pred_fallthru
        _
    $region44: #{backbone_with_fpn_forward.14} parent=5 // pred_fallthru
      _
    %p1100 = scmp.le.s32.totalorder 2, %s14
    // Predicated region
    $region53: #{backbone_with_fpn_forward.14} parent=5 // pred_check
      %p1101 = pneg %p1100
    $region54: #{backbone_with_fpn_forward.14} parent=5 // pred_check_branch
      %1103 = sbr.rel (%p1101) target = $region56
    $region55: #{backbone_with_fpn_forward.14} parent=5 // pred_region
      %s1104 = ssub.s32 %s14, 2
      // Predicated region
      $region57: #{backbone_with_fpn_forward.14} parent=55 // pred_check
        %p1105 = pneg %p179
      $region58: #{backbone_with_fpn_forward.14} parent=55 // pred_check_branch
        %1107 = sbr.rel (%p1105) target = $region60
      $region59: #{backbone_with_fpn_forward.14} parent=55 // pred_region
        %p1108 = scmp.lt.s32.totalorder %s20, 1
        %s1109 = scalar_select %p1108, %s20, 1
        %s1110 = smul.addr %s1109, 8
        %s1111 = smul.addr %s1110, 8
        %s1112 = scalar_lea.vmem %s6, %s1111
      $region60: #{backbone_with_fpn_forward.14} parent=55 // pred_fallthru
        _
      // Predicated region
      $region61: #{backbone_with_fpn_forward.14} parent=55 // pred_check
        %p1113 = pneg %p205
      $region62: #{backbone_with_fpn_forward.14} parent=55 // pred_check_branch
        %1115 = sbr.rel (%p1113) target = $region64
      $region63: #{backbone_with_fpn_forward.14} parent=55 // pred_region
        %p1116 = scmp.lt.s32.totalorder %s20, 1
        %s1117 = scalar_select %p1116, %s20, 1
        %s1118 = smul.addr %s1117, 2
        %s1119 = smul.addr %s1118, 8
        %s1120 = scalar_lea.vmem %s7, %s1119
      $region64: #{backbone_with_fpn_forward.14} parent=55 // pred_fallthru
        _
    $region56: #{backbone_with_fpn_forward.14} parent=5 // pred_fallthru
      _
  $region6: #{backbone_with_fpn_forward.14} parent=0 // loop_footer
    %s18 = sadd.s32 1, %s14
  $region7: #{backbone_with_fpn_forward.14} parent=0 // loop_footer_branch
    %13 = sbr.rel target = $region3
  $region8: #{backbone_with_fpn_forward.14} parent=0 // loop_exit
    _

// kernel: backbone_with_fpn_forward.15
$region0: #{backbone_with_fpn_forward.15}
  #allocation0 [shape = 'u32[]', space=smem, size = 0x4, offset = 0x4, fixed_abs, tag = 'smem constant byte address 0x4 - core index']
  #allocation1 [shape = 'u32[72,128]{1,0:T(1,128)}', space=vmem, size = 0x9000, scoped, tag = 'internal scratch']
  #allocation2 [shape = 'f32[18,18,16]{2,1,0:T(8,128)}', space=vmem, size = 0x36000, scoped, tag = 'scratch operand']
  %s0 = inlined_call_operand.vmem [shape: f32[2,16,16,8], index: 0, kind: input, shape index: {}]
  %s1 = inlined_call_operand.vmem [shape: f32[2,16,16,16], index: 1, kind: input, shape index: {}]
  %s2 = inlined_call_operand.vmem [shape: bf16[8,16], index: 2, kind: input, shape index: {}]
  %s3 = inlined_call_operand.vmem [shape: f32[1,16], index: 3, kind: input, shape index: {}]
  %s4 = inlined_call_operand.vmem [shape: bf16[144,16], index: 4, kind: input, shape index: {}]
  %s5 = inlined_call_operand.vmem [shape: f32[1,16], index: 5, kind: input, shape index: {}]
  %s6 = inlined_call_operand.hbm [shape: f32[2,16,16,16], index: 6, kind: output, shape index: {0}]
  %s7 = inlined_call_operand.vmem [shape: f32[2,16,256], index: 7, kind: output, shape index: {1}]
  %8 = xla_tuple %s6, %s7
  %s9 = sld [smem:[#allocation0]]
  $region65: #{backbone_with_fpn_forward.15} parent=0
    _
  %s11 = ssub.s32 1, %s9
  %s12 = scalar_select 0, %s11, %s9
  $region1: #{backbone_with_fpn_forward.15} parent=0
    #allocation3 [shape = 'u8[262144]{0}', space=vmem, size = 0x40000, scoped, tag = 'output window, operand 0']
    #allocation4 [shape = 's32[2]{0}', space=sflag, size = 0x8, scoped, tag = 'scoped memory for backbone_with_fpn_forward.15']
    %13 = vsyncpa [#allocation4], 0
    %s14 = scalar_lea.sflag [#allocation4], 1
    %15 = vsyncpa %s14, 0
    loop: start=0, step=1, limit=4
    $region2: #{backbone_with_fpn_forward.15} parent=1 // loop_pre_header
      _
    $region3: #{backbone_with_fpn_forward.15} parent=1 // loop_header
      %s17 = sphi 0, %s21
      %p18 = scmp.ge.s32.totalorder %s17, 4
      %s27 = sphi 0, %s29
      %s30 = sphi 0, %s27
      %s31 = sphi 0, %s30
      %s47 = sphi 0, %s31
      %s53 = sphi 0, %s55
      %s56 = sphi 0, %s53
      %s57 = sphi 0, %s56
      %s73 = sphi 0, %s57
      %s77 = sphi 0, %s77
      %s79 = sphi 0, %s77
      %s80 = sphi 0, %s79
      %s94 = sphi 0, %s80
      %s98 = sphi 0, %s98
      %s100 = sphi 0, %s98
      %s101 = sphi 0, %s100
      %s115 = sphi 0, %s101
      %s119 = sphi 0, %s119
      %s121 = sphi 0, %s119
      %s122 = sphi 0, %s121
      %s136 = sphi 0, %s122
      %s140 = sphi 0, %s140
      %s142 = sphi 0, %s140
      %s143 = sphi 0, %s142
      %s157 = sphi 0, %s143
      %s163 = sphi 0, %s165
      %s166 = sphi 0, %s163
      %s167 = sphi 0, %s166
      %s183 = sphi 0, %s167
      %s189 = sphi 0, %s191
      %s192 = sphi 0, %s189
      %s193 = sphi 0, %s192
      %s209 = sphi 0, %s193
    $region4: #{backbone_with_fpn_forward.15} parent=1 // loop_header_branch
      %20 = sbr.rel (%p18) target = $region8
    $region5: #{backbone_with_fpn_forward.15} parent=1 // loop_body
      %s22 = ssub.s32 %s17, 1
      %s23 = ssub.s32 %s17, 2
      %s24 = sadd.s32 %s17, 1
      %s25 = ssub.s32 %s17, %s24
      %p26 = scmp.eq.s32.totalorder %s25, 0
      %s28 = sadd.s32 %s27, 1
      %s29 = scalar_select %p26, %s27, %s28
      %p32 = pneg %p26
      %p33 = scmp.eq.s32.totalorder %s17, 1
      %p34 = por %p32, %p33
      %p35 = scmp.ne.s32.totalorder %s27, %s30
      %p36 = scmp.eq.s32.totalorder %s17, 0
      %p37 = por %p35, %p36
      %p38 = scmp.ne.s32.totalorder %s27, %s30
      %p39 = scmp.eq.s32.totalorder %s22, 1
      %p40 = por %p38, %p39
      %p41 = scmp.ne.s32.totalorder %s30, %s31
      %p42 = scmp.eq.s32.totalorder %s22, 0
      %p43 = por %p41, %p42
      %p44 = scmp.ne.s32.totalorder %s30, %s31
      %p45 = scmp.eq.s32.totalorder %s23, 1
      %p46 = por %p44, %p45
      %p48 = scmp.ne.s32.totalorder %s31, %s47
      %p49 = scmp.eq.s32.totalorder %s23, 0
      %p50 = por %p48, %p49
      %s51 = ssub.s32 %s17, %s24
      %p52 = scmp.eq.s32.totalorder %s51, 0
      %s54 = sadd.s32 %s53, 1
      %s55 = scalar_select %p52, %s53, %s54
      %p58 = pneg %p52
      %p59 = scmp.eq.s32.totalorder %s17, 1
      %p60 = por %p58, %p59
      %p61 = scmp.ne.s32.totalorder %s53, %s56
      %p62 = scmp.eq.s32.totalorder %s17, 0
      %p63 = por %p61, %p62
      %p64 = scmp.ne.s32.totalorder %s53, %s56
      %p65 = scmp.eq.s32.totalorder %s22, 1
      %p66 = por %p64, %p65
      %p67 = scmp.ne.s32.totalorder %s56, %s57
      %p68 = scmp.eq.s32.totalorder %s22, 0
      %p69 = por %p67, %p68
      %p70 = scmp.ne.s32.totalorder %s56, %s57
      %p71 = scmp.eq.s32.totalorder %s23, 1
      %p72 = por %p70, %p71
      %p74 = scmp.ne.s32.totalorder %s57, %s73
      %p75 = scmp.eq.s32.totalorder %s23, 0
      %p76 = por %p74, %p75
      %s78 = sadd.s32 %s77, 1
      %p81 = scmp.eq.s32.totalorder %s17, 1
      %p82 = scmp.ne.s32.totalorder %s77, %s79
      %p83 = scmp.eq.s32.totalorder %s17, 0
      %p84 = por %p82, %p83
      %p85 = scmp.ne.s32.totalorder %s77, %s79
      %p86 = scmp.eq.s32.totalorder %s22, 1
      %p87 = por %p85, %p86
      %p88 = scmp.ne.s32.totalorder %s79, %s80
      %p89 = scmp.eq.s32.totalorder %s22, 0
      %p90 = por %p88, %p89
      %p91 = scmp.ne.s32.totalorder %s79, %s80
      %p92 = scmp.eq.s32.totalorder %s23, 1
      %p93 = por %p91, %p92
      %p95 = scmp.ne.s32.totalorder %s80, %s94
      %p96 = scmp.eq.s32.totalorder %s23, 0
      %p97 = por %p95, %p96
      %s99 = sadd.s32 %s98, 1
      %p102 = scmp.eq.s32.totalorder %s17, 1
      %p103 = scmp.ne.s32.totalorder %s98, %s100
      %p104 = scmp.eq.s32.totalorder %s17, 0
      %p105 = por %p103, %p104
      %p106 = scmp.ne.s32.totalorder %s98, %s100
      %p107 = scmp.eq.s32.totalorder %s22, 1
      %p108 = por %p106, %p107
      %p109 = scmp.ne.s32.totalorder %s100, %s101
      %p110 = scmp.eq.s32.totalorder %s22, 0
      %p111 = por %p109, %p110
      %p112 = scmp.ne.s32.totalorder %s100, %s101
      %p113 = scmp.eq.s32.totalorder %s23, 1
      %p114 = por %p112, %p113
      %p116 = scmp.ne.s32.totalorder %s101, %s115
      %p117 = scmp.eq.s32.totalorder %s23, 0
      %p118 = por %p116, %p117
      %s120 = sadd.s32 %s119, 1
      %p123 = scmp.eq.s32.totalorder %s17, 1
      %p124 = scmp.ne.s32.totalorder %s119, %s121
      %p125 = scmp.eq.s32.totalorder %s17, 0
      %p126 = por %p124, %p125
      %p127 = scmp.ne.s32.totalorder %s119, %s121
      %p128 = scmp.eq.s32.totalorder %s22, 1
      %p129 = por %p127, %p128
      %p130 = scmp.ne.s32.totalorder %s121, %s122
      %p131 = scmp.eq.s32.totalorder %s22, 0
      %p132 = por %p130, %p131
      %p133 = scmp.ne.s32.totalorder %s121, %s122
      %p134 = scmp.eq.s32.totalorder %s23, 1
      %p135 = por %p133, %p134
      %p137 = scmp.ne.s32.totalorder %s122, %s136
      %p138 = scmp.eq.s32.totalorder %s23, 0
      %p139 = por %p137, %p138
      %s141 = sadd.s32 %s140, 1
      %p144 = scmp.eq.s32.totalorder %s17, 1
      %p145 = scmp.ne.s32.totalorder %s140, %s142
      %p146 = scmp.eq.s32.totalorder %s17, 0
      %p147 = por %p145, %p146
      %p148 = scmp.ne.s32.totalorder %s140, %s142
      %p149 = scmp.eq.s32.totalorder %s22, 1
      %p150 = por %p148, %p149
      %p151 = scmp.ne.s32.totalorder %s142, %s143
      %p152 = scmp.eq.s32.totalorder %s22, 0
      %p153 = por %p151, %p152
      %p154 = scmp.ne.s32.totalorder %s142, %s143
      %p155 = scmp.eq.s32.totalorder %s23, 1
      %p156 = por %p154, %p155
      %p158 = scmp.ne.s32.totalorder %s143, %s157
      %p159 = scmp.eq.s32.totalorder %s23, 0
      %p160 = por %p158, %p159
      %s161 = ssub.s32 %s17, %s24
      %p162 = scmp.eq.s32.totalorder %s161, 0
      %s164 = sadd.s32 %s163, 1
      %s165 = scalar_select %p162, %s163, %s164
      %p168 = pneg %p162
      %p169 = scmp.eq.s32.totalorder %s17, 1
      %p170 = por %p168, %p169
      %p171 = scmp.ne.s32.totalorder %s163, %s166
      %p172 = scmp.eq.s32.totalorder %s17, 0
      %p173 = por %p171, %p172
      %p174 = scmp.ne.s32.totalorder %s163, %s166
      %p175 = scmp.eq.s32.totalorder %s22, 1
      %p176 = por %p174, %p175
      %p177 = scmp.ne.s32.totalorder %s166, %s167
      %p178 = scmp.eq.s32.totalorder %s22, 0
      %p179 = por %p177, %p178
      %p180 = scmp.ne.s32.totalorder %s166, %s167
      %p181 = scmp.eq.s32.totalorder %s23, 1
      %p182 = por %p180, %p181
      %p184 = scmp.ne.s32.totalorder %s167, %s183
      %p185 = scmp.eq.s32.totalorder %s23, 0
      %p186 = por %p184, %p185
      %s187 = ssub.s32 %s17, %s24
      %p188 = scmp.eq.s32.totalorder %s187, 0
      %s190 = sadd.s32 %s189, 1
      %s191 = scalar_select %p188, %s189, %s190
      %p194 = pneg %p188
      %p195 = scmp.eq.s32.totalorder %s17, 1
      %p196 = por %p194, %p195
      %p197 = scmp.ne.s32.totalorder %s189, %s192
      %p198 = scmp.eq.s32.totalorder %s17, 0
      %p199 = por %p197, %p198
      %p200 = scmp.ne.s32.totalorder %s189, %s192
      %p201 = scmp.eq.s32.totalorder %s22, 1
      %p202 = por %p200, %p201
      %p203 = scmp.ne.s32.totalorder %s192, %s193
      %p204 = scmp.eq.s32.totalorder %s22, 0
      %p205 = por %p203, %p204
      %p206 = scmp.ne.s32.totalorder %s192, %s193
      %p207 = scmp.eq.s32.totalorder %s23, 1
      %p208 = por %p206, %p207
      %p210 = scmp.ne.s32.totalorder %s193, %s209
      %p211 = scmp.eq.s32.totalorder %s23, 0
      %p212 = por %p210, %p211
      %p213 = scmp.le.s32.totalorder 1, %s17
      %p214 = scmp.lt.s32.totalorder %s17, 3
      %p215 = pnand %p213, %p214
      %p216 = pneg %p215
      // Predicated region
      $region9: #{backbone_with_fpn_forward.15} parent=5 // pred_check
        _
      $region10: #{backbone_with_fpn_forward.15} parent=5 // pred_check_branch
        %218 = sbr.rel (%p215) target = $region12
      $region11: #{backbone_with_fpn_forward.15} parent=5 // pred_region
        %s219 = ssub.s32 %s17, 1
        // Predicated region
        $region13: #{backbone_with_fpn_forward.15} parent=11 // pred_check
          %p220 = pneg %p90
        $region14: #{backbone_with_fpn_forward.15} parent=11 // pred_check_branch
          %222 = sbr.rel (%p220) target = $region16
        $region15: #{backbone_with_fpn_forward.15} parent=11 // pred_region
          _
        $region16: #{backbone_with_fpn_forward.15} parent=11 // pred_fallthru
          _
        // Predicated region
        $region17: #{backbone_with_fpn_forward.15} parent=11 // pred_check
          %p223 = pneg %p111
        $region18: #{backbone_with_fpn_forward.15} parent=11 // pred_check_branch
          %225 = sbr.rel (%p223) target = $region20
        $region19: #{backbone_with_fpn_forward.15} parent=11 // pred_region
          _
        $region20: #{backbone_with_fpn_forward.15} parent=11 // pred_fallthru
          _
        // Predicated region
        $region21: #{backbone_with_fpn_forward.15} parent=11 // pred_check
          %p226 = pneg %p132
        $region22: #{backbone_with_fpn_forward.15} parent=11 // pred_check_branch
          %228 = sbr.rel (%p226) target = $region24
        $region23: #{backbone_with_fpn_forward.15} parent=11 // pred_region
          _
        $region24: #{backbone_with_fpn_forward.15} parent=11 // pred_fallthru
          _
        // Predicated region
        $region25: #{backbone_with_fpn_forward.15} parent=11 // pred_check
          %p229 = pneg %p153
        $region26: #{backbone_with_fpn_forward.15} parent=11 // pred_check_branch
          %231 = sbr.rel (%p229) target = $region28
        $region27: #{backbone_with_fpn_forward.15} parent=11 // pred_region
          _
        $region28: #{backbone_with_fpn_forward.15} parent=11 // pred_fallthru
          _
      $region12: #{backbone_with_fpn_forward.15} parent=5 // pred_fallthru
        _
      %p232 = scmp.lt.s32.totalorder %s17, 2
      // Predicated region
      $region29: #{backbone_with_fpn_forward.15} parent=5 // pred_check
        %p233 = pneg %p232
      $region30: #{backbone_with_fpn_forward.15} parent=5 // pred_check_branch
        %235 = sbr.rel (%p233) target = $region32
      $region31: #{backbone_with_fpn_forward.15} parent=5 // pred_region
        // Predicated region
        $region33: #{backbone_with_fpn_forward.15} parent=31 // pred_check
          %p236 = pneg %p37
        $region34: #{backbone_with_fpn_forward.15} parent=31 // pred_check_branch
          %238 = sbr.rel (%p236) target = $region36
        $region35: #{backbone_with_fpn_forward.15} parent=31 // pred_region
          %p239 = scmp.lt.s32.totalorder %s17, 1
          %s240 = scalar_select %p239, %s17, 1
          %s241 = smul.addr %s240, 32
          %s242 = smul.addr %s241, 8
          %s243 = scalar_lea.vmem %s0, %s242
        $region36: #{backbone_with_fpn_forward.15} parent=31 // pred_fallthru
          _
        // Predicated region
        $region37: #{backbone_with_fpn_forward.15} parent=31 // pred_check
          %p244 = pneg %p63
        $region38: #{backbone_with_fpn_forward.15} parent=31 // pred_check_branch
          %246 = sbr.rel (%p244) target = $region40
        $region39: #{backbone_with_fpn_forward.15} parent=31 // pred_region
          %p247 = scmp.lt.s32.totalorder %s17, 1
          %s248 = scalar_select %p247, %s17, 1
          %s249 = smul.addr %s248, 32
          %s250 = smul.addr %s249, 8
          %s251 = scalar_lea.vmem %s1, %s250
        $region40: #{backbone_with_fpn_forward.15} parent=31 // pred_fallthru
          _
      $region32: #{backbone_with_fpn_forward.15} parent=5 // pred_fallthru
        _
      %p252 = scmp.le.s32.totalorder 1, %s17
      %p253 = scmp.lt.s32.totalorder %s17, 3
      %p254 = pnand %p252, %p253
      %p255 = pneg %p254
      // Predicated region
      $region41: #{backbone_with_fpn_forward.15} parent=5 // pred_check
        _
      $region42: #{backbone_with_fpn_forward.15} parent=5 // pred_check_branch
        %257 = sbr.rel (%p254) target = $region44
      $region43: #{backbone_with_fpn_forward.15} parent=5 // pred_region
        %s258 = ssub.s32 %s17, 1
        %p259 = scmp.lt.s32.totalorder %s22, 1
        %s260 = scalar_select %p259, %s22, 1
        %s261 = smul.addr %s260, 32
        %s262 = smul.addr %s261, 8
        %s263 = scalar_lea.vmem %s0, %s262
        %p264 = pneg %p43
        %p265 = pneg %p40
        %p266 = scmp.lt.s32.totalorder %s22, 1
        %s267 = scalar_select %p266, %s22, 1
        %s268 = smul.addr %s267, 32
        %s269 = smul.addr %s268, 8
        %s270 = scalar_lea.vmem %s1, %s269
        %p271 = pneg %p69
        %p272 = pneg %p66
        %p273 = pneg %p90
        %p274 = pneg %p87
        %p275 = pneg %p111
        %p276 = pneg %p108
        %p277 = pneg %p132
        %p278 = pneg %p129
        %p279 = pneg %p153
        %p280 = pneg %p150
        %p281 = pneg %p179
        %p282 = pneg %p176
        %s283 = sand.u32 %s166, 1
        %s284 = scalar_lea.sflag [#allocation4], %s283
        %s285 = sand.u32 %s166, 1
        %s286 = smul.addr %s285, 256
        %s287 = scalar_lea.vmem [#allocation3], %s286
        %p288 = pneg %p205
        %p289 = pneg %p202
        %p290 = scmp.lt.s32.totalorder %s22, 1
        %s291 = scalar_select %p290, %s22, 1
        %s292 = smul.addr %s291, 4
        %s293 = smul.addr %s292, 8
        %s294 = scalar_lea.vmem %s7, %s293
        %p295 = scmp.lt.s32.totalorder %s22, 1
        %s296 = scalar_select %p295, %s22, 1
        %s297 = smul.addr %s296, 32
        %s298 = smul.addr %s297, 8
        %s299 = scalar_lea.vmem %s0, %s298
        %p300 = scmp.lt.s32.totalorder %s22, 1
        %s301 = scalar_select %p300, %s22, 1
        %s302 = smul.addr %s301, 32
        %s303 = smul.addr %s302, 8
        %s304 = scalar_lea.vmem %s1, %s303
        %p305 = scmp.lt.s32.totalorder %s22, 1
        %s306 = scalar_select %p305, %s22, 1
        %s307 = smul.addr %s306, 4
        %s308 = smul.addr %s307, 8
        %s309 = scalar_lea.vmem %s7, %s308
        %v311 = vld [vmem:[%s299] sm:$0xff]
        %v312 = vld [vmem:[%s299 + $0x8] sm:$0xff]
        %v313 = vld [vmem:[%s299 + $0x10] sm:$0xff]
        %v314 = vld [vmem:[%s299 + $0x18] sm:$0xff]
        %v315 = vld [vmem:[%s299 + $0x20] sm:$0xff]
        %v316 = vld [vmem:[%s299 + $0x28] sm:$0xff]
        %v317 = vld [vmem:[%s299 + $0x30] sm:$0xff]
        %v318 = vld [vmem:[%s299 + $0x38] sm:$0xff]
        %v319 = vld [vmem:[%s299 + $0x40] sm:$0xff]
        %v320 = vld [vmem:[%s299 + $0x48] sm:$0xff]
        %v321 = vld [vmem:[%s299 + $0x50] sm:$0xff]
        %v322 = vld [vmem:[%s299 + $0x58] sm:$0xff]
        %v323 = vld [vmem:[%s299 + $0x60] sm:$0xff]
        %v324 = vld [vmem:[%s299 + $0x68] sm:$0xff]
        %v325 = vld [vmem:[%s299 + $0x70] sm:$0xff]
        %v326 = vld [vmem:[%s299 + $0x78] sm:$0xff]
        %v327 = vld [vmem:[%s299 + $0x80] sm:$0xff]
        %v328 = vld [vmem:[%s299 + $0x88] sm:$0xff]
        %v329 = vld [vmem:[%s299 + $0x90] sm:$0xff]
        %v330 = vld [vmem:[%s299 + $0x98] sm:$0xff]
        %v331 = vld [vmem:[%s299 + $0xa0] sm:$0xff]
        %v332 = vld [vmem:[%s299 + $0xa8] sm:$0xff]
        %v333 = vld [vmem:[%s299 + $0xb0] sm:$0xff]
        %v334 = vld [vmem:[%s299 + $0xb8] sm:$0xff]
        %v335 = vld [vmem:[%s299 + $0xc0] sm:$0xff]
        %v336 = vld [vmem:[%s299 + $0xc8] sm:$0xff]
        %v337 = vld [vmem:[%s299 + $0xd0] sm:$0xff]
        %v338 = vld [vmem:[%s299 + $0xd8] sm:$0xff]
        %v339 = vld [vmem:[%s299 + $0xe0] sm:$0xff]
        %v340 = vld [vmem:[%s299 + $0xe8] sm:$0xff]
        %v341 = vld [vmem:[%s299 + $0xf0] sm:$0xff]
        %v342 = vld [vmem:[%s299 + $0xf8] sm:$0xff]
        %v343 = vpack.c.bf16 %v312, %v311
        %v344 = vpack.c.bf16 %v314, %v313
        %v345 = vpack.c.bf16 %v316, %v315
        %v346 = vpack.c.bf16 %v318, %v317
        %v347 = vpack.c.bf16 %v320, %v319
        %v348 = vpack.c.bf16 %v322, %v321
        %v349 = vpack.c.bf16 %v324, %v323
        %v350 = vpack.c.bf16 %v326, %v325
        %v351 = vpack.c.bf16 %v328, %v327
        %v352 = vpack.c.bf16 %v330, %v329
        %v353 = vpack.c.bf16 %v332, %v331
        %v354 = vpack.c.bf16 %v334, %v333
        %v355 = vpack.c.bf16 %v336, %v335
        %v356 = vpack.c.bf16 %v338, %v337
        %v357 = vpack.c.bf16 %v340, %v339
        %v358 = vpack.c.bf16 %v342, %v341
        %v359 = vld [vmem:[%s2] sm:$0xf]
        %v360 = vld [vmem:[%s3] sm:$0x1]
        %v362 = vperm.slane %v360, 0
        %vm364 = vcmask 64512
        %v366 = vsel %vm364, %v343, 0
        %v369 = vsel %vm364, %v344, 0
        %v372 = vsel %vm364, %v345, 0
        %v375 = vsel %vm364, %v346, 0
        %v378 = vsel %vm364, %v347, 0
        %v381 = vsel %vm364, %v348, 0
        %v384 = vsel %vm364, %v349, 0
        %v387 = vsel %vm364, %v350, 0
        %v390 = vsel %vm364, %v351, 0
        %v393 = vsel %vm364, %v352, 0
        %v396 = vsel %vm364, %v353, 0
        %v399 = vsel %vm364, %v354, 0
        %v402 = vsel %vm364, %v355, 0
        %v405 = vsel %vm364, %v356, 0
        %v408 = vsel %vm364, %v357, 0
        %v411 = vsel %vm364, %v358, 0
        %vm413 = vcmask 1043456
        %v415 = vsel %vm413, %v359, 0
        %417 = vmatpush.bf16.msra.mxu0 0
        %418 = vmatpush.bf16.msra.mxu0 0
        %419 = vmatpush.bf16.msra.mxu0 0
        %420 = vmatpush.bf16.msra.mxu0 0
        %421 = vmatpush.bf16.msra.mxu0 0
        %422 = vmatpush.bf16.msra.mxu0 0
        %423 = vmatpush.bf16.msra.mxu0 0
        %424 = vmatpush.bf16.msra.mxu0 %v415
        %425 = vmatmul.bf16.gmra.mxu0 %v366
        %v426 = vpop.f32.mrf.mxu0
        %v427 = vadd.f32 %v362, %v426
        %v428 = vpop.f32.mrf.mxu0
        %v429 = vadd.f32 %v362, %v428
        %430 = vmatmul.bf16.gmra.mxu0 %v369
        %v431 = vpop.f32.mrf.mxu0
        %v432 = vadd.f32 %v362, %v431
        %v433 = vpop.f32.mrf.mxu0
        %v434 = vadd.f32 %v362, %v433
        %435 = vmatmul.bf16.gmra.mxu0 %v372
        %v436 = vpop.f32.mrf.mxu0
        %v437 = vadd.f32 %v362, %v436
        %v438 = vpop.f32.mrf.mxu0
        %v439 = vadd.f32 %v362, %v438
        %440 = vmatmul.bf16.gmra.mxu0 %v375
        %v441 = vpop.f32.mrf.mxu0
        %v442 = vadd.f32 %v362, %v441
        %v443 = vpop.f32.mrf.mxu0
        %v444 = vadd.f32 %v362, %v443
        %445 = vmatmul.bf16.gmra.mxu0 %v378
        %v446 = vpop.f32.mrf.mxu0
        %v447 = vadd.f32 %v362, %v446
        %v448 = vpop.f32.mrf.mxu0
        %v449 = vadd.f32 %v362, %v448
        %450 = vmatmul.bf16.gmra.mxu0 %v381
        %v451 = vpop.f32.mrf.mxu0
        %v452 = vadd.f32 %v362, %v451
        %v453 = vpop.f32.mrf.mxu0
        %v454 = vadd.f32 %v362, %v453
        %455 = vmatmul.bf16.gmra.mxu0 %v384
        %v456 = vpop.f32.mrf.mxu0
        %v457 = vadd.f32 %v362, %v456
        %v458 = vpop.f32.mrf.mxu0
        %v459 = vadd.f32 %v362, %v458
        %460 = vmatmul.bf16.gmra.mxu0 %v387
        %v461 = vpop.f32.mrf.mxu0
        %v462 = vadd.f32 %v362, %v461
        %v463 = vpop.f32.mrf.mxu0
        %v464 = vadd.f32 %v362, %v463
        %465 = vmatmul.bf16.gmra.mxu0 %v390
        %v466 = vpop.f32.mrf.mxu0
        %v467 = vadd.f32 %v362, %v466
        %v468 = vpop.f32.mrf.mxu0
        %v469 = vadd.f32 %v362, %v468
        %470 = vmatmul.bf16.gmra.mxu0 %v393
        %v471 = vpop.f32.mrf.mxu0
        %v472 = vadd.f32 %v362, %v471
        %v473 = vpop.f32.mrf.mxu0
        %v474 = vadd.f32 %v362, %v473
        %475 = vmatmul.bf16.gmra.mxu0 %v396
        %v476 = vpop.f32.mrf.mxu0
        %v477 = vadd.f32 %v362, %v476
        %v478 = vpop.f32.mrf.mxu0
        %v479 = vadd.f32 %v362, %v478
        %480 = vmatmul.bf16.gmra.mxu0 %v399
        %v481 = vpop.f32.mrf.mxu0
        %v482 = vadd.f32 %v362, %v481
        %v483 = vpop.f32.mrf.mxu0
        %v484 = vadd.f32 %v362, %v483
        %485 = vmatmul.bf16.gmra.mxu0 %v402
        %v486 = vpop.f32.mrf.mxu0
        %v487 = vadd.f32 %v362, %v486
        %v488 = vpop.f32.mrf.mxu0
        %v489 = vadd.f32 %v362, %v488
        %490 = vmatmul.bf16.gmra.mxu0 %v405
        %v491 = vpop.f32.mrf.mxu0
        %v492 = vadd.f32 %v362, %v491
        %v493 = vpop.f32.mrf.mxu0
        %v494 = vadd.f32 %v362, %v493
        %495 = vmatmul.bf16.gmra.mxu0 %v408
        %v496 = vpop.f32.mrf.mxu0
        %v497 = vadd.f32 %v362, %v496
        %v498 = vpop.f32.mrf.mxu0
        %v499 = vadd.f32 %v362, %v498
        %500 = vmatmul.bf16.gmra.mxu0 %v411
        %v501 = vpop.f32.mrf.mxu0
        %v502 = vadd.f32 %v362, %v501
        %v503 = vpop.f32.mrf.mxu0
        %v504 = vadd.f32 %v362, %v503
        %505 = vdwg.mxu0
        %v506 = vld [vmem:[%s304] sm:$0xff]
        %v507 = vld [vmem:[%s304 + $0x8] sm:$0xff]
        %v508 = vld [vmem:[%s304 + $0x10] sm:$0xff]
        %v509 = vld [vmem:[%s304 + $0x18] sm:$0xff]
        %v510 = vld [vmem:[%s304 + $0x20] sm:$0xff]
        %v511 = vld [vmem:[%s304 + $0x28] sm:$0xff]
        %v512 = vld [vmem:[%s304 + $0x30] sm:$0xff]
        %v513 = vld [vmem:[%s304 + $0x38] sm:$0xff]
        %v514 = vld [vmem:[%s304 + $0x40] sm:$0xff]
        %v515 = vld [vmem:[%s304 + $0x48] sm:$0xff]
        %v516 = vld [vmem:[%s304 + $0x50] sm:$0xff]
        %v517 = vld [vmem:[%s304 + $0x58] sm:$0xff]
        %v518 = vld [vmem:[%s304 + $0x60] sm:$0xff]
        %v519 = vld [vmem:[%s304 + $0x68] sm:$0xff]
        %v520 = vld [vmem:[%s304 + $0x70] sm:$0xff]
        %v521 = vld [vmem:[%s304 + $0x78] sm:$0xff]
        %v522 = vld [vmem:[%s304 + $0x80] sm:$0xff]
        %v523 = vld [vmem:[%s304 + $0x88] sm:$0xff]
        %v524 = vld [vmem:[%s304 + $0x90] sm:$0xff]
        %v525 = vld [vmem:[%s304 + $0x98] sm:$0xff]
        %v526 = vld [vmem:[%s304 + $0xa0] sm:$0xff]
        %v527 = vld [vmem:[%s304 + $0xa8] sm:$0xff]
        %v528 = vld [vmem:[%s304 + $0xb0] sm:$0xff]
        %v529 = vld [vmem:[%s304 + $0xb8] sm:$0xff]
        %v530 = vld [vmem:[%s304 + $0xc0] sm:$0xff]
        %v531 = vld [vmem:[%s304 + $0xc8] sm:$0xff]
        %v532 = vld [vmem:[%s304 + $0xd0] sm:$0xff]
        %v533 = vld [vmem:[%s304 + $0xd8] sm:$0xff]
        %v534 = vld [vmem:[%s304 + $0xe0] sm:$0xff]
        %v535 = vld [vmem:[%s304 + $0xe8] sm:$0xff]
        %v536 = vld [vmem:[%s304 + $0xf0] sm:$0xff]
        %v537 = vld [vmem:[%s304 + $0xf8] sm:$0xff]
        %v538 = vadd.f32 %v427, %v506
        %v539 = vadd.f32 %v429, %v507
        %v540 = vadd.f32 %v432, %v508
        %v541 = vadd.f32 %v434, %v509
        %v542 = vadd.f32 %v437, %v510
        %v543 = vadd.f32 %v439, %v511
        %v544 = vadd.f32 %v442, %v512
        %v545 = vadd.f32 %v444, %v513
        %v546 = vadd.f32 %v447, %v514
        %v547 = vadd.f32 %v449, %v515
        %v548 = vadd.f32 %v452, %v516
        %v549 = vadd.f32 %v454, %v517
        %v550 = vadd.f32 %v457, %v518
        %v551 = vadd.f32 %v459, %v519
        %v552 = vadd.f32 %v462, %v520
        %v553 = vadd.f32 %v464, %v521
        %v554 = vadd.f32 %v467, %v522
        %v555 = vadd.f32 %v469, %v523
        %v556 = vadd.f32 %v472, %v524
        %v557 = vadd.f32 %v474, %v525
        %v558 = vadd.f32 %v477, %v526
        %v559 = vadd.f32 %v479, %v527
        %v560 = vadd.f32 %v482, %v528
        %v561 = vadd.f32 %v484, %v529
        %v562 = vadd.f32 %v487, %v530
        %v563 = vadd.f32 %v489, %v531
        %v564 = vadd.f32 %v492, %v532
        %v565 = vadd.f32 %v494, %v533
        %v566 = vadd.f32 %v497, %v534
        %v567 = vadd.f32 %v499, %v535
        %v568 = vadd.f32 %v502, %v536
        %v569 = vadd.f32 %v504, %v537
        %vm570 = vcmask 130048
        %571 = vst.msk [vmem:[%s287] sm:$0xff] %vm570, %v538
        %572 = vst.msk [vmem:[%s287 + $0x8] sm:$0xff] %vm570, %v539
        %573 = vst.msk [vmem:[%s287 + $0x10] sm:$0xff] %vm570, %v540
        %574 = vst.msk [vmem:[%s287 + $0x18] sm:$0xff] %vm570, %v541
        %575 = vst.msk [vmem:[%s287 + $0x20] sm:$0xff] %vm570, %v542
        %576 = vst.msk [vmem:[%s287 + $0x28] sm:$0xff] %vm570, %v543
        %577 = vst.msk [vmem:[%s287 + $0x30] sm:$0xff] %vm570, %v544
        %578 = vst.msk [vmem:[%s287 + $0x38] sm:$0xff] %vm570, %v545
        %579 = vst.msk [vmem:[%s287 + $0x40] sm:$0xff] %vm570, %v546
        %580 = vst.msk [vmem:[%s287 + $0x48] sm:$0xff] %vm570, %v547
        %581 = vst.msk [vmem:[%s287 + $0x50] sm:$0xff] %vm570, %v548
        %582 = vst.msk [vmem:[%s287 + $0x58] sm:$0xff] %vm570, %v549
        %583 = vst.msk [vmem:[%s287 + $0x60] sm:$0xff] %vm570, %v550
        %584 = vst.msk [vmem:[%s287 + $0x68] sm:$0xff] %vm570, %v551
        %585 = vst.msk [vmem:[%s287 + $0x70] sm:$0xff] %vm570, %v552
        %586 = vst.msk [vmem:[%s287 + $0x78] sm:$0xff] %vm570, %v553
        %587 = vst.msk [vmem:[%s287 + $0x80] sm:$0xff] %vm570, %v554
        %588 = vst.msk [vmem:[%s287 + $0x88] sm:$0xff] %vm570, %v555
        %589 = vst.msk [vmem:[%s287 + $0x90] sm:$0xff] %vm570, %v556
        %590 = vst.msk [vmem:[%s287 + $0x98] sm:$0xff] %vm570, %v557
        %591 = vst.msk [vmem:[%s287 + $0xa0] sm:$0xff] %vm570, %v558
        %592 = vst.msk [vmem:[%s287 + $0xa8] sm:$0xff] %vm570, %v559
        %593 = vst.msk [vmem:[%s287 + $0xb0] sm:$0xff] %vm570, %v560
        %594 = vst.msk [vmem:[%s287 + $0xb8] sm:$0xff] %vm570, %v561
        %595 = vst.msk [vmem:[%s287 + $0xc0] sm:$0xff] %vm570, %v562
        %596 = vst.msk [vmem:[%s287 + $0xc8] sm:$0xff] %vm570, %v563
        %597 = vst.msk [vmem:[%s287 + $0xd0] sm:$0xff] %vm570, %v564
        %598 = vst.msk [vmem:[%s287 + $0xd8] sm:$0xff] %vm570, %v565
        %599 = vst.msk [vmem:[%s287 + $0xe0] sm:$0xff] %vm570, %v566
        %600 = vst.msk [vmem:[%s287 + $0xe8] sm:$0xff] %vm570, %v567
        %601 = vst.msk [vmem:[%s287 + $0xf0] sm:$0xff] %vm570, %v568
        %602 = vst.msk [vmem:[%s287 + $0xf8] sm:$0xff] %vm570, %v569
        %603 = vst.msk [vmem:[#allocation2] sm:$0xff] %vm570, 0.0
        %604 = vst.msk [vmem:[#allocation2 + $0x8] sm:$0xff] %vm570, 0.0
        %vm605 = vcmask 123904
        %606 = vst.msk [vmem:[#allocation2 + $0x10] sm:$0x3] %vm605, 0.0
        %607 = vst.msk [vmem:[#allocation2 + $0x18] sm:$0xff] %vm570, 0.0
        %608 = vst.msk [vmem:[#allocation2 + $0x20] sm:$0xff] %vm570, 0.0
        %609 = vst.msk [vmem:[#allocation2 + $0x28] sm:$0x3] %vm605, 0.0
        %610 = vst.msk [vmem:[#allocation2 + $0x30] sm:$0xff] %vm570, 0.0
        %611 = vst.msk [vmem:[#allocation2 + $0x38] sm:$0xff] %vm570, 0.0
        %612 = vst.msk [vmem:[#allocation2 + $0x40] sm:$0x3] %vm605, 0.0
        %613 = vst.msk [vmem:[#allocation2 + $0x48] sm:$0xff] %vm570, 0.0
        %614 = vst.msk [vmem:[#allocation2 + $0x50] sm:$0xff] %vm570, 0.0
        %615 = vst.msk [vmem:[#allocation2 + $0x58] sm:$0x3] %vm605, 0.0
        %616 = vst.msk [vmem:[#allocation2 + $0x60] sm:$0xff] %vm570, 0.0
        %617 = vst.msk [vmem:[#allocation2 + $0x68] sm:$0xff] %vm570, 0.0
        %618 = vst.msk [vmem:[#allocation2 + $0x70] sm:$0x3] %vm605, 0.0
        %619 = vst.msk [vmem:[#allocation2 + $0x78] sm:$0xff] %vm570, 0.0
        %620 = vst.msk [vmem:[#allocation2 + $0x80] sm:$0xff] %vm570, 0.0
        %621 = vst.msk [vmem:[#allocation2 + $0x88] sm:$0x3] %vm605, 0.0
        %622 = vst.msk [vmem:[#allocation2 + $0x90] sm:$0xff] %vm570, 0.0
        %623 = vst.msk [vmem:[#allocation2 + $0x98] sm:$0xff] %vm570, 0.0
        %624 = vst.msk [vmem:[#allocation2 + $0xa0] sm:$0x3] %vm605, 0.0
        %625 = vst.msk [vmem:[#allocation2 + $0xa8] sm:$0xff] %vm570, 0.0
        %626 = vst.msk [vmem:[#allocation2 + $0xb0] sm:$0xff] %vm570, 0.0
        %627 = vst.msk [vmem:[#allocation2 + $0xb8] sm:$0x3] %vm605, 0.0
        %628 = vst.msk [vmem:[#allocation2 + $0xc0] sm:$0xff] %vm570, 0.0
        %629 = vst.msk [vmem:[#allocation2 + $0xc8] sm:$0xff] %vm570, 0.0
        %630 = vst.msk [vmem:[#allocation2 + $0xd0] sm:$0x3] %vm605, 0.0
        %631 = vst.msk [vmem:[#allocation2 + $0xd8] sm:$0xff] %vm570, 0.0
        %632 = vst.msk [vmem:[#allocation2 + $0xe0] sm:$0xff] %vm570, 0.0
        %633 = vst.msk [vmem:[#allocation2 + $0xe8] sm:$0x3] %vm605, 0.0
        %634 = vst.msk [vmem:[#allocation2 + $0xf0] sm:$0xff] %vm570, 0.0
        %635 = vst.msk [vmem:[#allocation2 + $0xf8] sm:$0xff] %vm570, 0.0
        %636 = vst.msk [vmem:[#allocation2 + $0x100] sm:$0x3] %vm605, 0.0
        %637 = vst.msk [vmem:[#allocation2 + $0x108] sm:$0xff] %vm570, 0.0
        %638 = vst.msk [vmem:[#allocation2 + $0x110] sm:$0xff] %vm570, 0.0
        %639 = vst.msk [vmem:[#allocation2 + $0x118] sm:$0x3] %vm605, 0.0
        %640 = vst.msk [vmem:[#allocation2 + $0x120] sm:$0xff] %vm570, 0.0
        %641 = vst.msk [vmem:[#allocation2 + $0x128] sm:$0xff] %vm570, 0.0
        %642 = vst.msk [vmem:[#allocation2 + $0x130] sm:$0x3] %vm605, 0.0
        %643 = vst.msk [vmem:[#allocation2 + $0x138] sm:$0xff] %vm570, 0.0
        %644 = vst.msk [vmem:[#allocation2 + $0x140] sm:$0xff] %vm570, 0.0
        %645 = vst.msk [vmem:[#allocation2 + $0x148] sm:$0x3] %vm605, 0.0
        %646 = vst.msk [vmem:[#allocation2 + $0x150] sm:$0xff] %vm570, 0.0
        %647 = vst.msk [vmem:[#allocation2 + $0x158] sm:$0xff] %vm570, 0.0
        %648 = vst.msk [vmem:[#allocation2 + $0x160] sm:$0x3] %vm605, 0.0
        %649 = vst.msk [vmem:[#allocation2 + $0x168] sm:$0xff] %vm570, 0.0
        %650 = vst.msk [vmem:[#allocation2 + $0x170] sm:$0xff] %vm570, 0.0
        %651 = vst.msk [vmem:[#allocation2 + $0x178] sm:$0x3] %vm605, 0.0
        %652 = vst.msk [vmem:[#allocation2 + $0x180] sm:$0xff] %vm570, 0.0
        %653 = vst.msk [vmem:[#allocation2 + $0x188] sm:$0xff] %vm570, 0.0
        %654 = vst.msk [vmem:[#allocation2 + $0x190] sm:$0x3] %vm605, 0.0
        %655 = vst.msk [vmem:[#allocation2 + $0x198] sm:$0xff] %vm570, 0.0
        %656 = vst.msk [vmem:[#allocation2 + $0x1a0] sm:$0xff] %vm570, 0.0
        %657 = vst.msk [vmem:[#allocation2 + $0x1a8] sm:$0x3] %vm605, 0.0
        %s658 = scalar_lea.vmem [#allocation2], 24
        %659 = vst.msk [vmem:[%s658 + $0x1] sm:$0xff] %vm570, %v538
        %660 = vst.msk [vmem:[%s658 + $0x9] sm:$0xff] %vm570, %v539
        %661 = vst.msk [vmem:[%s658 + $0x19] sm:$0xff] %vm570, %v540
        %662 = vst.msk [vmem:[%s658 + $0x21] sm:$0xff] %vm570, %v541
        %663 = vst.msk [vmem:[%s658 + $0x31] sm:$0xff] %vm570, %v542
        %664 = vst.msk [vmem:[%s658 + $0x39] sm:$0xff] %vm570, %v543
        %665 = vst.msk [vmem:[%s658 + $0x49] sm:$0xff] %vm570, %v544
        %666 = vst.msk [vmem:[%s658 + $0x51] sm:$0xff] %vm570, %v545
        %667 = vst.msk [vmem:[%s658 + $0x61] sm:$0xff] %vm570, %v546
        %668 = vst.msk [vmem:[%s658 + $0x69] sm:$0xff] %vm570, %v547
        %669 = vst.msk [vmem:[%s658 + $0x79] sm:$0xff] %vm570, %v548
        %670 = vst.msk [vmem:[%s658 + $0x81] sm:$0xff] %vm570, %v549
        %671 = vst.msk [vmem:[%s658 + $0x91] sm:$0xff] %vm570, %v550
        %672 = vst.msk [vmem:[%s658 + $0x99] sm:$0xff] %vm570, %v551
        %673 = vst.msk [vmem:[%s658 + $0xa9] sm:$0xff] %vm570, %v552
        %674 = vst.msk [vmem:[%s658 + $0xb1] sm:$0xff] %vm570, %v553
        %675 = vst.msk [vmem:[%s658 + $0xc1] sm:$0xff] %vm570, %v554
        %676 = vst.msk [vmem:[%s658 + $0xc9] sm:$0xff] %vm570, %v555
        %677 = vst.msk [vmem:[%s658 + $0xd9] sm:$0xff] %vm570, %v556
        %678 = vst.msk [vmem:[%s658 + $0xe1] sm:$0xff] %vm570, %v557
        %679 = vst.msk [vmem:[%s658 + $0xf1] sm:$0xff] %vm570, %v558
        %680 = vst.msk [vmem:[%s658 + $0xf9] sm:$0xff] %vm570, %v559
        %681 = vst.msk [vmem:[%s658 + $0x109] sm:$0xff] %vm570, %v560
        %682 = vst.msk [vmem:[%s658 + $0x111] sm:$0xff] %vm570, %v561
        %683 = vst.msk [vmem:[%s658 + $0x121] sm:$0xff] %vm570, %v562
        %684 = vst.msk [vmem:[%s658 + $0x129] sm:$0xff] %vm570, %v563
        %685 = vst.msk [vmem:[%s658 + $0x139] sm:$0xff] %vm570, %v564
        %686 = vst.msk [vmem:[%s658 + $0x141] sm:$0xff] %vm570, %v565
        %687 = vst.msk [vmem:[%s658 + $0x151] sm:$0xff] %vm570, %v566
        %688 = vst.msk [vmem:[%s658 + $0x159] sm:$0xff] %vm570, %v567
        %689 = vst.msk [vmem:[%s658 + $0x169] sm:$0xff] %vm570, %v568
        %690 = vst.msk [vmem:[%s658 + $0x171] sm:$0xff] %vm570, %v569
        %v691 = vld [vmem:[#allocation2] sm:$0xff]
        %v692 = vld [vmem:[#allocation2 + $0x8] sm:$0xff]
        %v693 = vld [vmem:[#allocation2 + $0x18] sm:$0xff]
        %v694 = vld [vmem:[#allocation2 + $0x20] sm:$0xff]
        %v695 = vld [vmem:[#allocation2 + $0x30] sm:$0xff]
        %v696 = vld [vmem:[#allocation2 + $0x38] sm:$0xff]
        %v697 = vld [vmem:[#allocation2 + $0x48] sm:$0xff]
        %v698 = vld [vmem:[#allocation2 + $0x50] sm:$0xff]
        %v699 = vld [vmem:[#allocation2 + $0x60] sm:$0xff]
        %v700 = vld [vmem:[#allocation2 + $0x68] sm:$0xff]
        %v701 = vld [vmem:[#allocation2 + $0x78] sm:$0xff]
        %v702 = vld [vmem:[#allocation2 + $0x80] sm:$0xff]
        %v703 = vld [vmem:[#allocation2 + $0x90] sm:$0xff]
        %v704 = vld [vmem:[#allocation2 + $0x98] sm:$0xff]
        %v705 = vld [vmem:[#allocation2 + $0xa8] sm:$0xff]
        %v706 = vld [vmem:[#allocation2 + $0xb0] sm:$0xff]
        %v707 = vld [vmem:[#allocation2 + $0xc0] sm:$0xff]
        %v708 = vld [vmem:[#allocation2 + $0xc8] sm:$0xff]
        %v709 = vld [vmem:[#allocation2 + $0xd8] sm:$0xff]
        %v710 = vld [vmem:[#allocation2 + $0xe0] sm:$0xff]
        %v711 = vld [vmem:[#allocation2 + $0xf0] sm:$0xff]
        %v712 = vld [vmem:[#allocation2 + $0xf8] sm:$0xff]
        %v713 = vld [vmem:[#allocation2 + $0x108] sm:$0xff]
        %v714 = vld [vmem:[#allocation2 + $0x110] sm:$0xff]
        %v715 = vld [vmem:[#allocation2 + $0x120] sm:$0xff]
        %v716 = vld [vmem:[#allocation2 + $0x128] sm:$0xff]
        %v717 = vld [vmem:[#allocation2 + $0x138] sm:$0xff]
        %v718 = vld [vmem:[#allocation2 + $0x140] sm:$0xff]
        %v719 = vld [vmem:[#allocation2 + $0x150] sm:$0xff]
        %v720 = vld [vmem:[#allocation2 + $0x158] sm:$0xff]
        %v721 = vld [vmem:[#allocation2 + $0x168] sm:$0xff]
        %v722 = vld [vmem:[#allocation2 + $0x170] sm:$0xff]
        %v723 = vpack.c.bf16 %v692, %v691
        %v724 = vpack.c.bf16 %v694, %v693
        %v725 = vpack.c.bf16 %v696, %v695
        %v726 = vpack.c.bf16 %v698, %v697
        %v727 = vpack.c.bf16 %v700, %v699
        %v728 = vpack.c.bf16 %v702, %v701
        %v729 = vpack.c.bf16 %v704, %v703
        %v730 = vpack.c.bf16 %v706, %v705
        %v731 = vpack.c.bf16 %v708, %v707
        %v732 = vpack.c.bf16 %v710, %v709
        %v733 = vpack.c.bf16 %v712, %v711
        %v734 = vpack.c.bf16 %v714, %v713
        %v735 = vpack.c.bf16 %v716, %v715
        %v736 = vpack.c.bf16 %v718, %v717
        %v737 = vpack.c.bf16 %v720, %v719
        %v738 = vpack.c.bf16 %v722, %v721
        %v739 = vld [vmem:[%s4] sm:$0xf]
        %v740 = vld [vmem:[%s4 + $0x4] sm:$0xf]
        %v741 = vld [vmem:[#allocation2 + $0x1] sm:$0xff]
        %v742 = vld [vmem:[#allocation2 + $0x9] sm:$0xff]
        %v743 = vld [vmem:[#allocation2 + $0x19] sm:$0xff]
        %v744 = vld [vmem:[#allocation2 + $0x21] sm:$0xff]
        %v745 = vld [vmem:[#allocation2 + $0x31] sm:$0xff]
        %v746 = vld [vmem:[#allocation2 + $0x39] sm:$0xff]
        %v747 = vld [vmem:[#allocation2 + $0x49] sm:$0xff]
        %v748 = vld [vmem:[#allocation2 + $0x51] sm:$0xff]
        %v749 = vld [vmem:[#allocation2 + $0x61] sm:$0xff]
        %v750 = vld [vmem:[#allocation2 + $0x69] sm:$0xff]
        %v751 = vld [vmem:[#allocation2 + $0x79] sm:$0xff]
        %v752 = vld [vmem:[#allocation2 + $0x81] sm:$0xff]
        %v753 = vld [vmem:[#allocation2 + $0x91] sm:$0xff]
        %v754 = vld [vmem:[#allocation2 + $0x99] sm:$0xff]
        %v755 = vld [vmem:[#allocation2 + $0xa9] sm:$0xff]
        %v756 = vld [vmem:[#allocation2 + $0xb1] sm:$0xff]
        %v757 = vld [vmem:[#allocation2 + $0xc1] sm:$0xff]
        %v758 = vld [vmem:[#allocation2 + $0xc9] sm:$0xff]
        %v759 = vld [vmem:[#allocation2 + $0xd9] sm:$0xff]
        %v760 = vld [vmem:[#allocation2 + $0xe1] sm:$0xff]
        %v761 = vld [vmem:[#allocation2 + $0xf1] sm:$0xff]
        %v762 = vld [vmem:[#allocation2 + $0xf9] sm:$0xff]
        %v763 = vld [vmem:[#allocation2 + $0x109] sm:$0xff]
        %v764 = vld [vmem:[#allocation2 + $0x111] sm:$0xff]
        %v765 = vld [vmem:[#allocation2 + $0x121] sm:$0xff]
        %v766 = vld [vmem:[#allocation2 + $0x129] sm:$0xff]
        %v767 = vld [vmem:[#allocation2 + $0x139] sm:$0xff]
        %v768 = vld [vmem:[#allocation2 + $0x141] sm:$0xff]
        %v769 = vld [vmem:[#allocation2 + $0x151] sm:$0xff]
        %v770 = vld [vmem:[#allocation2 + $0x159] sm:$0xff]
        %v771 = vld [vmem:[#allocation2 + $0x169] sm:$0xff]
        %v772 = vld [vmem:[#allocation2 + $0x171] sm:$0xff]
        %v773 = vpack.c.bf16 %v742, %v741
        %v774 = vpack.c.bf16 %v744, %v743
        %v775 = vpack.c.bf16 %v746, %v745
        %v776 = vpack.c.bf16 %v748, %v747
        %v777 = vpack.c.bf16 %v750, %v749
        %v778 = vpack.c.bf16 %v752, %v751
        %v779 = vpack.c.bf16 %v754, %v753
        %v780 = vpack.c.bf16 %v756, %v755
        %v781 = vpack.c.bf16 %v758, %v757
        %v782 = vpack.c.bf16 %v760, %v759
        %v783 = vpack.c.bf16 %v762, %v761
        %v784 = vpack.c.bf16 %v764, %v763
        %v785 = vpack.c.bf16 %v766, %v765
        %v786 = vpack.c.bf16 %v768, %v767
        %v787 = vpack.c.bf16 %v770, %v769
        %v788 = vpack.c.bf16 %v772, %v771
        %v789 = vld [vmem:[%s4 + $0x8] sm:$0xf]
        %v790 = vld [vmem:[%s4 + $0xc] sm:$0xf]
        %v793 = vunpack.c.l.b16 %v789
        %v794 = vunpack.c.l.b16 %v790
        %v795 = vpack.c.b16 %v794, %v793
        %v798 = vsel %vm570, %v773, 0
        %v801 = vsel %vm570, %v774, 0
        %v804 = vsel %vm570, %v775, 0
        %v807 = vsel %vm570, %v776, 0
        %v810 = vsel %vm570, %v777, 0
        %v813 = vsel %vm570, %v778, 0
        %v816 = vsel %vm570, %v779, 0
        %v819 = vsel %vm570, %v780, 0
        %v822 = vsel %vm570, %v781, 0
        %v825 = vsel %vm570, %v782, 0
        %v828 = vsel %vm570, %v783, 0
        %v831 = vsel %vm570, %v784, 0
        %v834 = vsel %vm570, %v785, 0
        %v837 = vsel %vm570, %v786, 0
        %v840 = vsel %vm570, %v787, 0
        %v843 = vsel %vm570, %v788, 0
        %845 = vmatpush.bf16.msra.mxu0 0
        %846 = vmatpush.bf16.msra.mxu0 0
        %847 = vmatpush.bf16.msra.mxu0 0
        %848 = vmatpush.bf16.msra.mxu0 0
        %849 = vmatpush.bf16.msra.mxu0 0
        %850 = vmatpush.bf16.msra.mxu0 0
        %851 = vmatpush.bf16.msra.mxu0 0
        %852 = vmatpush.bf16.msra.mxu0 %v795
        %853 = vmatmul.bf16.gmra.mxu0 %v798
        %v854 = vpop.f32.mrf.mxu0
        %v855 = vadd.f32 0.0, %v854
        %v856 = vpop.f32.mrf.mxu0
        %v857 = vadd.f32 0.0, %v856
        %858 = vmatmul.bf16.gmra.mxu0 %v801
        %v859 = vpop.f32.mrf.mxu0
        %v860 = vadd.f32 0.0, %v859
        %v861 = vpop.f32.mrf.mxu0
        %v862 = vadd.f32 0.0, %v861
        %863 = vmatmul.bf16.gmra.mxu0 %v804
        %v864 = vpop.f32.mrf.mxu0
        %v865 = vadd.f32 0.0, %v864
        %v866 = vpop.f32.mrf.mxu0
        %v867 = vadd.f32 0.0, %v866
        %868 = vmatmul.bf16.gmra.mxu0 %v807
        %v869 = vpop.f32.mrf.mxu0
        %v870 = vadd.f32 0.0, %v869
        %v871 = vpop.f32.mrf.mxu0
        %v872 = vadd.f32 0.0, %v871
        %873 = vmatmul.bf16.gmra.mxu0 %v810
        %v874 = vpop.f32.mrf.mxu0
        %v875 = vadd.f32 0.0, %v874
        %v876 = vpop.f32.mrf.mxu0
        %v877 = vadd.f32 0.0, %v876
        %878 = vmatmul.bf16.gmra.mxu0 %v813
        %v879 = vpop.f32.mrf.mxu0
        %v880 = vadd.f32 0.0, %v879
        %v881 = vpop.f32.mrf.mxu0
        %v882 = vadd.f32 0.0, %v881
        %883 = vmatmul.bf16.gmra.mxu0 %v816
        %v884 = vpop.f32.mrf.mxu0
        %v885 = vadd.f32 0.0, %v884
        %v886 = vpop.f32.mrf.mxu0
        %v887 = vadd.f32 0.0, %v886
        %888 = vmatmul.bf16.gmra.mxu0 %v819
        %v889 = vpop.f32.mrf.mxu0
        %v890 = vadd.f32 0.0, %v889
        %v891 = vpop.f32.mrf.mxu0
        %v892 = vadd.f32 0.0, %v891
        %893 = vmatmul.bf16.gmra.mxu0 %v822
        %v894 = vpop.f32.mrf.mxu0
        %v895 = vadd.f32 0.0, %v894
        %v896 = vpop.f32.mrf.mxu0
        %v897 = vadd.f32 0.0, %v896
        %898 = vmatmul.bf16.gmra.mxu0 %v825
        %v899 = vpop.f32.mrf.mxu0
        %v900 = vadd.f32 0.0, %v899
        %v901 = vpop.f32.mrf.mxu0
        %v902 = vadd.f32 0.0, %v901
        %903 = vmatmul.bf16.gmra.mxu0 %v828
        %v904 = vpop.f32.mrf.mxu0
        %v905 = vadd.f32 0.0, %v904
        %v906 = vpop.f32.mrf.mxu0
        %v907 = vadd.f32 0.0, %v906
        %908 = vmatmul.bf16.gmra.mxu0 %v831
        %v909 = vpop.f32.mrf.mxu0
        %v910 = vadd.f32 0.0, %v909
        %v911 = vpop.f32.mrf.mxu0
        %v912 = vadd.f32 0.0, %v911
        %913 = vmatmul.bf16.gmra.mxu0 %v834
        %v914 = vpop.f32.mrf.mxu0
        %v915 = vadd.f32 0.0, %v914
        %v916 = vpop.f32.mrf.mxu0
        %v917 = vadd.f32 0.0, %v916
        %918 = vmatmul.bf16.gmra.mxu0 %v837
        %v919 = vpop.f32.mrf.mxu0
        %v920 = vadd.f32 0.0, %v919
        %v921 = vpop.f32.mrf.mxu0
        %v922 = vadd.f32 0.0, %v921
        %923 = vmatmul.bf16.gmra.mxu0 %v840
        %v924 = vpop.f32.mrf.mxu0
        %v925 = vadd.f32 0.0, %v924
        %v926 = vpop.f32.mrf.mxu0
        %v927 = vadd.f32 0.0, %v926
        %928 = vmatmul.bf16.gmra.mxu0 %v843
        %v929 = vpop.f32.mrf.mxu0
        %v930 = vadd.f32 0.0, %v929
        %v931 = vpop.f32.mrf.mxu0
        %v932 = vadd.f32 0.0, %v931
        %933 = vdwg.mxu0
        %v936 = vunpack.c.l.b16 %v739
        %v937 = vunpack.c.l.b16 %v740
        %v938 = vpack.c.b16 %v937, %v936
        %v941 = vsel %vm570, %v723, 0
        %v944 = vsel %vm570, %v724, 0
        %v947 = vsel %vm570, %v725, 0
        %v950 = vsel %vm570, %v726, 0
        %v953 = vsel %vm570, %v727, 0
        %v956 = vsel %vm570, %v728, 0
        %v959 = vsel %vm570, %v729, 0
        %v962 = vsel %vm570, %v730, 0
        %v965 = vsel %vm570, %v731, 0
        %v968 = vsel %vm570, %v732, 0
        %v971 = vsel %vm570, %v733, 0
        %v974 = vsel %vm570, %v734, 0
        %v977 = vsel %vm570, %v735, 0
        %v980 = vsel %vm570, %v736, 0
        %v983 = vsel %vm570, %v737, 0
        %v986 = vsel %vm570, %v738, 0
        %988 = vmatpush.bf16.msra.mxu0 0
        %989 = vmatpush.bf16.msra.mxu0 0
        %990 = vmatpush.bf16.msra.mxu0 0
        %991 = vmatpush.bf16.msra.mxu0 0
        %992 = vmatpush.bf16.msra.mxu0 0
        %993 = vmatpush.bf16.msra.mxu0 0
        %994 = vmatpush.bf16.msra.mxu0 0
        %995 = vmatpush.bf16.msra.mxu0 %v938
        %996 = vmatmul.bf16.gmra.mxu0 %v941
        %v997 = vpop.f32.mrf.mxu0
        %v998 = vadd.f32 %v855, %v997
        %v999 = vpop.f32.mrf.mxu0
        %v1000 = vadd.f32 %v857, %v999
        %1001 = vmatmul.bf16.gmra.mxu0 %v944
        %v1002 = vpop.f32.mrf.mxu0
        %v1003 = vadd.f32 %v860, %v1002
        %v1004 = vpop.f32.mrf.mxu0
        %v1005 = vadd.f32 %v862, %v1004
        %1006 = vmatmul.bf16.gmra.mxu0 %v947
        %v1007 = vpop.f32.mrf.mxu0
        %v1008 = vadd.f32 %v865, %v1007
        %v1009 = vpop.f32.mrf.mxu0
        %v1010 = vadd.f32 %v867, %v1009
        %1011 = vmatmul.bf16.gmra.mxu0 %v950
        %v1012 = vpop.f32.mrf.mxu0
        %v1013 = vadd.f32 %v870, %v1012
        %v1014 = vpop.f32.mrf.mxu0
        %v1015 = vadd.f32 %v872, %v1014
        %1016 = vmatmul.bf16.gmra.mxu0 %v953
        %v1017 = vpop.f32.mrf.mxu0
        %v1018 = vadd.f32 %v875, %v1017
        %v1019 = vpop.f32.mrf.mxu0
        %v1020 = vadd.f32 %v877, %v1019
        %1021 = vmatmul.bf16.gmra.mxu0 %v956
        %v1022 = vpop.f32.mrf.mxu0
        %v1023 = vadd.f32 %v880, %v1022
        %v1024 = vpop.f32.mrf.mxu0
        %v1025 = vadd.f32 %v882, %v1024
        %1026 = vmatmul.bf16.gmra.mxu0 %v959
        %v1027 = vpop.f32.mrf.mxu0
        %v1028 = vadd.f32 %v885, %v1027
        %v1029 = vpop.f32.mrf.mxu0
        %v1030 = vadd.f32 %v887, %v1029
        %1031 = vmatmul.bf16.gmra.mxu0 %v962
        %v1032 = vpop.f32.mrf.mxu0
        %v1033 = vadd.f32 %v890, %v1032
        %v1034 = vpop.f32.mrf.mxu0
        %v1035 = vadd.f32 %v892, %v1034
        %1036 = vmatmul.bf16.gmra.mxu0 %v965
        %v1037 = vpop.f32.mrf.mxu0
        %v1038 = vadd.f32 %v895, %v1037
        %v1039 = vpop.f32.mrf.mxu0
        %v1040 = vadd.f32 %v897, %v1039
        %1041 = vmatmul.bf16.gmra.mxu0 %v968
        %v1042 = vpop.f32.mrf.mxu0
        %v1043 = vadd.f32 %v900, %v1042
        %v1044 = vpop.f32.mrf.mxu0
        %v1045 = vadd.f32 %v902, %v1044
        %1046 = vmatmul.bf16.gmra.mxu0 %v971
        %v1047 = vpop.f32.mrf.mxu0
        %v1048 = vadd.f32 %v905, %v1047
        %v1049 = vpop.f32.mrf.mxu0
        %v1050 = vadd.f32 %v907, %v1049
        %1051 = vmatmul.bf16.gmra.mxu0 %v974
        %v1052 = vpop.f32.mrf.mxu0
        %v1053 = vadd.f32 %v910, %v1052
        %v1054 = vpop.f32.mrf.mxu0
        %v1055 = vadd.f32 %v912, %v1054
        %1056 = vmatmul.bf16.gmra.mxu0 %v977
        %v1057 = vpop.f32.mrf.mxu0
        %v1058 = vadd.f32 %v915, %v1057
        %v1059 = vpop.f32.mrf.mxu0
        %v1060 = vadd.f32 %v917, %v1059
        %1061 = vmatmul.bf16.gmra.mxu0 %v980
        %v1062 = vpop.f32.mrf.mxu0
        %v1063 = vadd.f32 %v920, %v1062
        %v1064 = vpop.f32.mrf.mxu0
        %v1065 = vadd.f32 %v922, %v1064
        %1066 = vmatmul.bf16.gmra.mxu0 %v983
        %v1067 = vpop.f32.mrf.mxu0
        %v1068 = vadd.f32 %v925, %v1067
        %v1069 = vpop.f32.mrf.mxu0
        %v1070 = vadd.f32 %v927, %v1069
        %1071 = vmatmul.bf16.gmra.mxu0 %v986
        %v1072 = vpop.f32.mrf.mxu0
        %v1073 = vadd.f32 %v930, %v1072
        %v1074 = vpop.f32.mrf.mxu0
        %v1075 = vadd.f32 %v932, %v1074
        %1076 = vdwg.mxu0
        %v1077 = vld [vmem:[#allocation2 + $0x2] sm:$0xff]
        %v1078 = vld [vmem:[#allocation2 + $0xa] sm:$0xff]
        %v1079 = vld [vmem:[#allocation2 + $0x1a] sm:$0xff]
        %v1080 = vld [vmem:[#allocation2 + $0x22] sm:$0xff]
        %v1081 = vld [vmem:[#allocation2 + $0x32] sm:$0xff]
        %v1082 = vld [vmem:[#allocation2 + $0x3a] sm:$0xff]
        %v1083 = vld [vmem:[#allocation2 + $0x4a] sm:$0xff]
        %v1084 = vld [vmem:[#allocation2 + $0x52] sm:$0xff]
        %v1085 = vld [vmem:[#allocation2 + $0x62] sm:$0xff]
        %v1086 = vld [vmem:[#allocation2 + $0x6a] sm:$0xff]
        %v1087 = vld [vmem:[#allocation2 + $0x7a] sm:$0xff]
        %v1088 = vld [vmem:[#allocation2 + $0x82] sm:$0xff]
        %v1089 = vld [vmem:[#allocation2 + $0x92] sm:$0xff]
        %v1090 = vld [vmem:[#allocation2 + $0x9a] sm:$0xff]
        %v1091 = vld [vmem:[#allocation2 + $0xaa] sm:$0xff]
        %v1092 = vld [vmem:[#allocation2 + $0xb2] sm:$0xff]
        %v1093 = vld [vmem:[#allocation2 + $0xc2] sm:$0xff]
        %v1094 = vld [vmem:[#allocation2 + $0xca] sm:$0xff]
        %v1095 = vld [vmem:[#allocation2 + $0xda] sm:$0xff]
        %v1096 = vld [vmem:[#allocation2 + $0xe2] sm:$0xff]
        %v1097 = vld [vmem:[#allocation2 + $0xf2] sm:$0xff]
        %v1098 = vld [vmem:[#allocation2 + $0xfa] sm:$0xff]
        %v1099 = vld [vmem:[#allocation2 + $0x10a] sm:$0xff]
        %v1100 = vld [vmem:[#allocation2 + $0x112] sm:$0xff]
        %v1101 = vld [vmem:[#allocation2 + $0x122] sm:$0xff]
        %v1102 = vld [vmem:[#allocation2 + $0x12a] sm:$0xff]
        %v1103 = vld [vmem:[#allocation2 + $0x13a] sm:$0xff]
        %v1104 = vld [vmem:[#allocation2 + $0x142] sm:$0xff]
        %v1105 = vld [vmem:[#allocation2 + $0x152] sm:$0xff]
        %v1106 = vld [vmem:[#allocation2 + $0x15a] sm:$0xff]
        %v1107 = vld [vmem:[#allocation2 + $0x16a] sm:$0xff]
        %v1108 = vld [vmem:[#allocation2 + $0x172] sm:$0xff]
        %v1109 = vpack.c.bf16 %v1078, %v1077
        %v1110 = vpack.c.bf16 %v1080, %v1079
        %v1111 = vpack.c.bf16 %v1082, %v1081
        %v1112 = vpack.c.bf16 %v1084, %v1083
        %v1113 = vpack.c.bf16 %v1086, %v1085
        %v1114 = vpack.c.bf16 %v1088, %v1087
        %v1115 = vpack.c.bf16 %v1090, %v1089
        %v1116 = vpack.c.bf16 %v1092, %v1091
        %v1117 = vpack.c.bf16 %v1094, %v1093
        %v1118 = vpack.c.bf16 %v1096, %v1095
        %v1119 = vpack.c.bf16 %v1098, %v1097
        %v1120 = vpack.c.bf16 %v1100, %v1099
        %v1121 = vpack.c.bf16 %v1102, %v1101
        %v1122 = vpack.c.bf16 %v1104, %v1103
        %v1123 = vpack.c.bf16 %v1106, %v1105
        %v1124 = vpack.c.bf16 %v1108, %v1107
        %v1125 = vld [vmem:[%s4 + $0x10] sm:$0xf]
        %v1126 = vld [vmem:[%s4 + $0x14] sm:$0xf]
        %v1129 = vunpack.c.l.b16 %v1125
        %v1130 = vunpack.c.l.b16 %v1126
        %v1131 = vpack.c.b16 %v1130, %v1129
        %v1134 = vsel %vm570, %v1109, 0
        %v1137 = vsel %vm570, %v1110, 0
        %v1140 = vsel %vm570, %v1111, 0
        %v1143 = vsel %vm570, %v1112, 0
        %v1146 = vsel %vm570, %v1113, 0
        %v1149 = vsel %vm570, %v1114, 0
        %v1152 = vsel %vm570, %v1115, 0
        %v1155 = vsel %vm570, %v1116, 0
        %v1158 = vsel %vm570, %v1117, 0
        %v1161 = vsel %vm570, %v1118, 0
        %v1164 = vsel %vm570, %v1119, 0
        %v1167 = vsel %vm570, %v1120, 0
        %v1170 = vsel %vm570, %v1121, 0
        %v1173 = vsel %vm570, %v1122, 0
        %v1176 = vsel %vm570, %v1123, 0
        %v1179 = vsel %vm570, %v1124, 0
        %1181 = vmatpush.bf16.msra.mxu0 0
        %1182 = vmatpush.bf16.msra.mxu0 0
        %1183 = vmatpush.bf16.msra.mxu0 0
        %1184 = vmatpush.bf16.msra.mxu0 0
        %1185 = vmatpush.bf16.msra.mxu0 0
        %1186 = vmatpush.bf16.msra.mxu0 0
        %1187 = vmatpush.bf16.msra.mxu0 0
        %1188 = vmatpush.bf16.msra.mxu0 %v1131
        %1189 = vmatmul.bf16.gmra.mxu0 %v1134
        %v1190 = vpop.f32.mrf.mxu0
        %v1191 = vadd.f32 0.0, %v1190
        %v1192 = vpop.f32.mrf.mxu0
        %v1193 = vadd.f32 0.0, %v1192
        %1194 = vmatmul.bf16.gmra.mxu0 %v1137
        %v1195 = vpop.f32.mrf.mxu0
        %v1196 = vadd.f32 0.0, %v1195
        %v1197 = vpop.f32.mrf.mxu0
        %v1198 = vadd.f32 0.0, %v1197
        %1199 = vmatmul.bf16.gmra.mxu0 %v1140
        %v1200 = vpop.f32.mrf.mxu0
        %v1201 = vadd.f32 0.0, %v1200
        %v1202 = vpop.f32.mrf.mxu0
        %v1203 = vadd.f32 0.0, %v1202
        %1204 = vmatmul.bf16.gmra.mxu0 %v1143
        %v1205 = vpop.f32.mrf.mxu0
        %v1206 = vadd.f32 0.0, %v1205
        %v1207 = vpop.f32.mrf.mxu0
        %v1208 = vadd.f32 0.0, %v1207
        %1209 = vmatmul.bf16.gmra.mxu0 %v1146
        %v1210 = vpop.f32.mrf.mxu0
        %v1211 = vadd.f32 0.0, %v1210
        %v1212 = vpop.f32.mrf.mxu0
        %v1213 = vadd.f32 0.0, %v1212
        %1214 = vmatmul.bf16.gmra.mxu0 %v1149
        %v1215 = vpop.f32.mrf.mxu0
        %v1216 = vadd.f32 0.0, %v1215
        %v1217 = vpop.f32.mrf.mxu0
        %v1218 = vadd.f32 0.0, %v1217
        %1219 = vmatmul.bf16.gmra.mxu0 %v1152
        %v1220 = vpop.f32.mrf.mxu0
        %v1221 = vadd.f32 0.0, %v1220
        %v1222 = vpop.f32.mrf.mxu0
        %v1223 = vadd.f32 0.0, %v1222
        %1224 = vmatmul.bf16.gmra.mxu0 %v1155
        %v1225 = vpop.f32.mrf.mxu0
        %v1226 = vadd.f32 0.0, %v1225
        %v1227 = vpop.f32.mrf.mxu0
        %v1228 = vadd.f32 0.0, %v1227
        %1229 = vmatmul.bf16.gmra.mxu0 %v1158
        %v1230 = vpop.f32.mrf.mxu0
        %v1231 = vadd.f32 0.0, %v1230
        %v1232 = vpop.f32.mrf.mxu0
        %v1233 = vadd.f32 0.0, %v1232
        %1234 = vmatmul.bf16.gmra.mxu0 %v1161
        %v1235 = vpop.f32.mrf.mxu0
        %v1236 = vadd.f32 0.0, %v1235
        %v1237 = vpop.f32.mrf.mxu0
        %v1238 = vadd.f32 0.0, %v1237
        %1239 = vmatmul.bf16.gmra.mxu0 %v1164
        %v1240 = vpop.f32.mrf.mxu0
        %v1241 = vadd.f32 0.0, %v1240
        %v1242 = vpop.f32.mrf.mxu0
        %v1243 = vadd.f32 0.0, %v1242
        %1244 = vmatmul.bf16.gmra.mxu0 %v1167
        %v1245 = vpop.f32.mrf.mxu0
        %v1246 = vadd.f32 0.0, %v1245
        %v1247 = vpop.f32.mrf.mxu0
        %v1248 = vadd.f32 0.0, %v1247
        %1249 = vmatmul.bf16.gmra.mxu0 %v1170
        %v1250 = vpop.f32.mrf.mxu0
        %v1251 = vadd.f32 0.0, %v1250
        %v1252 = vpop.f32.mrf.mxu0
        %v1253 = vadd.f32 0.0, %v1252
        %1254 = vmatmul.bf16.gmra.mxu0 %v1173
        %v1255 = vpop.f32.mrf.mxu0
        %v1256 = vadd.f32 0.0, %v1255
        %v1257 = vpop.f32.mrf.mxu0
        %v1258 = vadd.f32 0.0, %v1257
        %1259 = vmatmul.bf16.gmra.mxu0 %v1176
        %v1260 = vpop.f32.mrf.mxu0
        %v1261 = vadd.f32 0.0, %v1260
        %v1262 = vpop.f32.mrf.mxu0
        %v1263 = vadd.f32 0.0, %v1262
        %1264 = vmatmul.bf16.gmra.mxu0 %v1179
        %v1265 = vpop.f32.mrf.mxu0
        %v1266 = vadd.f32 0.0, %v1265
        %v1267 = vpop.f32.mrf.mxu0
        %v1268 = vadd.f32 0.0, %v1267
        %1269 = vdwg.mxu0
        %v1270 = vadd.f32 %v998, %v1191
        %v1271 = vadd.f32 %v1000, %v1193
        %v1272 = vadd.f32 %v1003, %v1196
        %v1273 = vadd.f32 %v1005, %v1198
        %v1274 = vadd.f32 %v1008, %v1201
        %v1275 = vadd.f32 %v1010, %v1203
        %v1276 = vadd.f32 %v1013, %v1206
        %v1277 = vadd.f32 %v1015, %v1208
        %v1278 = vadd.f32 %v1018, %v1211
        %v1279 = vadd.f32 %v1020, %v1213
        %v1280 = vadd.f32 %v1023, %v1216
        %v1281 = vadd.f32 %v1025, %v1218
        %v1282 = vadd.f32 %v1028, %v1221
        %v1283 = vadd.f32 %v1030, %v1223
        %v1284 = vadd.f32 %v1033, %v1226
        %v1285 = vadd.f32 %v1035, %v1228
        %v1286 = vadd.f32 %v1038, %v1231
        %v1287 = vadd.f32 %v1040, %v1233
        %v1288 = vadd.f32 %v1043, %v1236
        %v1289 = vadd.f32 %v1045, %v1238
        %v1290 = vadd.f32 %v1048, %v1241
        %v1291 = vadd.f32 %v1050, %v1243
        %v1292 = vadd.f32 %v1053, %v1246
        %v1293 = vadd.f32 %v1055, %v1248
        %v1294 = vadd.f32 %v1058, %v1251
        %v1295 = vadd.f32 %v1060, %v1253
        %v1296 = vadd.f32 %v1063, %v1256
        %v1297 = vadd.f32 %v1065, %v1258
        %v1298 = vadd.f32 %v1068, %v1261
        %v1299 = vadd.f32 %v1070, %v1263
        %v1300 = vadd.f32 %v1073, %v1266
        %v1301 = vadd.f32 %v1075, %v1268
        %v1302 = vld [vmem:[%s658] sm:$0xff]
        %v1303 = vld [vmem:[%s658 + $0x8] sm:$0xff]
        %v1304 = vld [vmem:[%s658 + $0x18] sm:$0xff]
        %v1305 = vld [vmem:[%s658 + $0x20] sm:$0xff]
        %v1306 = vld [vmem:[%s658 + $0x30] sm:$0xff]
        %v1307 = vld [vmem:[%s658 + $0x38] sm:$0xff]
        %v1308 = vld [vmem:[%s658 + $0x48] sm:$0xff]
        %v1309 = vld [vmem:[%s658 + $0x50] sm:$0xff]
        %v1310 = vld [vmem:[%s658 + $0x60] sm:$0xff]
        %v1311 = vld [vmem:[%s658 + $0x68] sm:$0xff]
        %v1312 = vld [vmem:[%s658 + $0x78] sm:$0xff]
        %v1313 = vld [vmem:[%s658 + $0x80] sm:$0xff]
        %v1314 = vld [vmem:[%s658 + $0x90] sm:$0xff]
        %v1315 = vld [vmem:[%s658 + $0x98] sm:$0xff]
        %v1316 = vld [vmem:[%s658 + $0xa8] sm:$0xff]
        %v1317 = vld [vmem:[%s658 + $0xb0] sm:$0xff]
        %v1318 = vld [vmem:[%s658 + $0xc0] sm:$0xff]
        %v1319 = vld [vmem:[%s658 + $0xc8] sm:$0xff]
        %v1320 = vld [vmem:[%s658 + $0xd8] sm:$0xff]
        %v1321 = vld [vmem:[%s658 + $0xe0] sm:$0xff]
        %v1322 = vld [vmem:[%s658 + $0xf0] sm:$0xff]
        %v1323 = vld [vmem:[%s658 + $0xf8] sm:$0xff]
        %v1324 = vld [vmem:[%s658 + $0x108] sm:$0xff]
        %v1325 = vld [vmem:[%s658 + $0x110] sm:$0xff]
        %v1326 = vld [vmem:[%s658 + $0x120] sm:$0xff]
        %v1327 = vld [vmem:[%s658 + $0x128] sm:$0xff]
        %v1328 = vld [vmem:[%s658 + $0x138] sm:$0xff]
        %v1329 = vld [vmem:[%s658 + $0x140] sm:$0xff]
        %v1330 = vld [vmem:[%s658 + $0x150] sm:$0xff]
        %v1331 = vld [vmem:[%s658 + $0x158] sm:$0xff]
        %v1332 = vld [vmem:[%s658 + $0x168] sm:$0xff]
        %v1333 = vld [vmem:[%s658 + $0x170] sm:$0xff]
        %v1334 = vpack.c.bf16 %v1303, %v1302
        %v1335 = vpack.c.bf16 %v1305, %v1304
        %v1336 = vpack.c.bf16 %v1307, %v1306
        %v1337 = vpack.c.bf16 %v1309, %v1308
        %v1338 = vpack.c.bf16 %v1311, %v1310
        %v1339 = vpack.c.bf16 %v1313, %v1312
        %v1340 = vpack.c.bf16 %v1315, %v1314
        %v1341 = vpack.c.bf16 %v1317, %v1316
        %v1342 = vpack.c.bf16 %v1319, %v1318
        %v1343 = vpack.c.bf16 %v1321, %v1320
        %v1344 = vpack.c.bf16 %v1323, %v1322
        %v1345 = vpack.c.bf16 %v1325, %v1324
        %v1346 = vpack.c.bf16 %v1327, %v1326
        %v1347 = vpack.c.bf16 %v1329, %v1328
        %v1348 = vpack.c.bf16 %v1331, %v1330
        %v1349 = vpack.c.bf16 %v1333, %v1332
        %v1350 = vld [vmem:[%s4 + $0x18] sm:$0xf]
        %v1351 = vld [vmem:[%s4 + $0x1c] sm:$0xf]
        %v1354 = vunpack.c.l.b16 %v1350
        %v1355 = vunpack.c.l.b16 %v1351
        %v1356 = vpack.c.b16 %v1355, %v1354
        %v1359 = vsel %vm570, %v1334, 0
        %v1362 = vsel %vm570, %v1335, 0
        %v1365 = vsel %vm570, %v1336, 0
        %v1368 = vsel %vm570, %v1337, 0
        %v1371 = vsel %vm570, %v1338, 0
        %v1374 = vsel %vm570, %v1339, 0
        %v1377 = vsel %vm570, %v1340, 0
        %v1380 = vsel %vm570, %v1341, 0
        %v1383 = vsel %vm570, %v1342, 0
        %v1386 = vsel %vm570, %v1343, 0
        %v1389 = vsel %vm570, %v1344, 0
        %v1392 = vsel %vm570, %v1345, 0
        %v1395 = vsel %vm570, %v1346, 0
        %v1398 = vsel %vm570, %v1347, 0
        %v1401 = vsel %vm570, %v1348, 0
        %v1404 = vsel %vm570, %v1349, 0
        %1406 = vmatpush.bf16.msra.mxu0 0
        %1407 = vmatpush.bf16.msra.mxu0 0
        %1408 = vmatpush.bf16.msra.mxu0 0
        %1409 = vmatpush.bf16.msra.mxu0 0
        %1410 = vmatpush.bf16.msra.mxu0 0
        %1411 = vmatpush.bf16.msra.mxu0 0
        %1412 = vmatpush.bf16.msra.mxu0 0
        %1413 = vmatpush.bf16.msra.mxu0 %v1356
        %1414 = vmatmul.bf16.gmra.mxu0 %v1359
        %v1415 = vpop.f32.mrf.mxu0
        %v1416 = vadd.f32 0.0, %v1415
        %v1417 = vpop.f32.mrf.mxu0
        %v1418 = vadd.f32 0.0, %v1417
        %1419 = vmatmul.bf16.gmra.mxu0 %v1362
        %v1420 = vpop.f32.mrf.mxu0
        %v1421 = vadd.f32 0.0, %v1420
        %v1422 = vpop.f32.mrf.mxu0
        %v1423 = vadd.f32 0.0, %v1422
        %1424 = vmatmul.bf16.gmra.mxu0 %v1365
        %v1425 = vpop.f32.mrf.mxu0
        %v1426 = vadd.f32 0.0, %v1425
        %v1427 = vpop.f32.mrf.mxu0
        %v1428 = vadd.f32 0.0, %v1427
        %1429 = vmatmul.bf16.gmra.mxu0 %v1368
        %v1430 = vpop.f32.mrf.mxu0
        %v1431 = vadd.f32 0.0, %v1430
        %v1432 = vpop.f32.mrf.mxu0
        %v1433 = vadd.f32 0.0, %v1432
        %1434 = vmatmul.bf16.gmra.mxu0 %v1371
        %v1435 = vpop.f32.mrf.mxu0
        %v1436 = vadd.f32 0.0, %v1435
        %v1437 = vpop.f32.mrf.mxu0
        %v1438 = vadd.f32 0.0, %v1437
        %1439 = vmatmul.bf16.gmra.mxu0 %v1374
        %v1440 = vpop.f32.mrf.mxu0
        %v1441 = vadd.f32 0.0, %v1440
        %v1442 = vpop.f32.mrf.mxu0
        %v1443 = vadd.f32 0.0, %v1442
        %1444 = vmatmul.bf16.gmra.mxu0 %v1377
        %v1445 = vpop.f32.mrf.mxu0
        %v1446 = vadd.f32 0.0, %v1445
        %v1447 = vpop.f32.mrf.mxu0
        %v1448 = vadd.f32 0.0, %v1447
        %1449 = vmatmul.bf16.gmra.mxu0 %v1380
        %v1450 = vpop.f32.mrf.mxu0
        %v1451 = vadd.f32 0.0, %v1450
        %v1452 = vpop.f32.mrf.mxu0
        %v1453 = vadd.f32 0.0, %v1452
        %1454 = vmatmul.bf16.gmra.mxu0 %v1383
        %v1455 = vpop.f32.mrf.mxu0
        %v1456 = vadd.f32 0.0, %v1455
        %v1457 = vpop.f32.mrf.mxu0
        %v1458 = vadd.f32 0.0, %v1457
        %1459 = vmatmul.bf16.gmra.mxu0 %v1386
        %v1460 = vpop.f32.mrf.mxu0
        %v1461 = vadd.f32 0.0, %v1460
        %v1462 = vpop.f32.mrf.mxu0
        %v1463 = vadd.f32 0.0, %v1462
        %1464 = vmatmul.bf16.gmra.mxu0 %v1389
        %v1465 = vpop.f32.mrf.mxu0
        %v1466 = vadd.f32 0.0, %v1465
        %v1467 = vpop.f32.mrf.mxu0
        %v1468 = vadd.f32 0.0, %v1467
        %1469 = vmatmul.bf16.gmra.mxu0 %v1392
        %v1470 = vpop.f32.mrf.mxu0
        %v1471 = vadd.f32 0.0, %v1470
        %v1472 = vpop.f32.mrf.mxu0
        %v1473 = vadd.f32 0.0, %v1472
        %1474 = vmatmul.bf16.gmra.mxu0 %v1395
        %v1475 = vpop.f32.mrf.mxu0
        %v1476 = vadd.f32 0.0, %v1475
        %v1477 = vpop.f32.mrf.mxu0
        %v1478 = vadd.f32 0.0, %v1477
        %1479 = vmatmul.bf16.gmra.mxu0 %v1398
        %v1480 = vpop.f32.mrf.mxu0
        %v1481 = vadd.f32 0.0, %v1480
        %v1482 = vpop.f32.mrf.mxu0
        %v1483 = vadd.f32 0.0, %v1482
        %1484 = vmatmul.bf16.gmra.mxu0 %v1401
        %v1485 = vpop.f32.mrf.mxu0
        %v1486 = vadd.f32 0.0, %v1485
        %v1487 = vpop.f32.mrf.mxu0
        %v1488 = vadd.f32 0.0, %v1487
        %1489 = vmatmul.bf16.gmra.mxu0 %v1404
        %v1490 = vpop.f32.mrf.mxu0
        %v1491 = vadd.f32 0.0, %v1490
        %v1492 = vpop.f32.mrf.mxu0
        %v1493 = vadd.f32 0.0, %v1492
        %1494 = vdwg.mxu0
        %v1495 = vadd.f32 %v1270, %v1416
        %v1496 = vadd.f32 %v1271, %v1418
        %v1497 = vadd.f32 %v1272, %v1421
        %v1498 = vadd.f32 %v1273, %v1423
        %v1499 = vadd.f32 %v1274, %v1426
        %v1500 = vadd.f32 %v1275, %v1428
        %v1501 = vadd.f32 %v1276, %v1431
        %v1502 = vadd.f32 %v1277, %v1433
        %v1503 = vadd.f32 %v1278, %v1436
        %v1504 = vadd.f32 %v1279, %v1438
        %v1505 = vadd.f32 %v1280, %v1441
        %v1506 = vadd.f32 %v1281, %v1443
        %v1507 = vadd.f32 %v1282, %v1446
        %v1508 = vadd.f32 %v1283, %v1448
        %v1509 = vadd.f32 %v1284, %v1451
        %v1510 = vadd.f32 %v1285, %v1453
        %v1511 = vadd.f32 %v1286, %v1456
        %v1512 = vadd.f32 %v1287, %v1458
        %v1513 = vadd.f32 %v1288, %v1461
        %v1514 = vadd.f32 %v1289, %v1463
        %v1515 = vadd.f32 %v1290, %v1466
        %v1516 = vadd.f32 %v1291, %v1468
        %v1517 = vadd.f32 %v1292, %v1471
        %v1518 = vadd.f32 %v1293, %v1473
        %v1519 = vadd.f32 %v1294, %v1476
        %v1520 = vadd.f32 %v1295, %v1478
        %v1521 = vadd.f32 %v1296, %v1481
        %v1522 = vadd.f32 %v1297, %v1483
        %v1523 = vadd.f32 %v1298, %v1486
        %v1524 = vadd.f32 %v1299, %v1488
        %v1525 = vadd.f32 %v1300, %v1491
        %v1526 = vadd.f32 %v1301, %v1493
        %v1527 = vld [vmem:[%s658 + $0x1] sm:$0xff]
        %v1528 = vld [vmem:[%s658 + $0x9] sm:$0xff]
        %v1529 = vld [vmem:[%s658 + $0x19] sm:$0xff]
        %v1530 = vld [vmem:[%s658 + $0x21] sm:$0xff]
        %v1531 = vld [vmem:[%s658 + $0x31] sm:$0xff]
        %v1532 = vld [vmem:[%s658 + $0x39] sm:$0xff]
        %v1533 = vld [vmem:[%s658 + $0x49] sm:$0xff]
        %v1534 = vld [vmem:[%s658 + $0x51] sm:$0xff]
        %v1535 = vld [vmem:[%s658 + $0x61] sm:$0xff]
        %v1536 = vld [vmem:[%s658 + $0x69] sm:$0xff]
        %v1537 = vld [vmem:[%s658 + $0x79] sm:$0xff]
        %v1538 = vld [vmem:[%s658 + $0x81] sm:$0xff]
        %v1539 = vld [vmem:[%s658 + $0x91] sm:$0xff]
        %v1540 = vld [vmem:[%s658 + $0x99] sm:$0xff]
        %v1541 = vld [vmem:[%s658 + $0xa9] sm:$0xff]
        %v1542 = vld [vmem:[%s658 + $0xb1] sm:$0xff]
        %v1543 = vld [vmem:[%s658 + $0xc1] sm:$0xff]
        %v1544 = vld [vmem:[%s658 + $0xc9] sm:$0xff]
        %v1545 = vld [vmem:[%s658 + $0xd9] sm:$0xff]
        %v1546 = vld [vmem:[%s658 + $0xe1] sm:$0xff]
        %v1547 = vld [vmem:[%s658 + $0xf1] sm:$0xff]
        %v1548 = vld [vmem:[%s658 + $0xf9] sm:$0xff]
        %v1549 = vld [vmem:[%s658 + $0x109] sm:$0xff]
        %v1550 = vld [vmem:[%s658 + $0x111] sm:$0xff]
        %v1551 = vld [vmem:[%s658 + $0x121] sm:$0xff]
        %v1552 = vld [vmem:[%s658 + $0x129] sm:$0xff]
        %v1553 = vld [vmem:[%s658 + $0x139] sm:$0xff]
        %v1554 = vld [vmem:[%s658 + $0x141] sm:$0xff]
        %v1555 = vld [vmem:[%s658 + $0x151] sm:$0xff]
        %v1556 = vld [vmem:[%s658 + $0x159] sm:$0xff]
        %v1557 = vld [vmem:[%s658 + $0x169] sm:$0xff]
        %v1558 = vld [vmem:[%s658 + $0x171] sm:$0xff]
        %v1559 = vpack.c.bf16 %v1528, %v1527
        %v1560 = vpack.c.bf16 %v1530, %v1529
        %v1561 = vpack.c.bf16 %v1532, %v1531
        %v1562 = vpack.c.bf16 %v1534, %v1533
        %v1563 = vpack.c.bf16 %v1536, %v1535
        %v1564 = vpack.c.bf16 %v1538, %v1537
        %v1565 = vpack.c.bf16 %v1540, %v1539
        %v1566 = vpack.c.bf16 %v1542, %v1541
        %v1567 = vpack.c.bf16 %v1544, %v1543
        %v1568 = vpack.c.bf16 %v1546, %v1545
        %v1569 = vpack.c.bf16 %v1548, %v1547
        %v1570 = vpack.c.bf16 %v1550, %v1549
        %v1571 = vpack.c.bf16 %v1552, %v1551
        %v1572 = vpack.c.bf16 %v1554, %v1553
        %v1573 = vpack.c.bf16 %v1556, %v1555
        %v1574 = vpack.c.bf16 %v1558, %v1557
        %v1575 = vld [vmem:[%s4 + $0x20] sm:$0xf]
        %v1576 = vld [vmem:[%s4 + $0x24] sm:$0xf]
        %v1579 = vunpack.c.l.b16 %v1575
        %v1580 = vunpack.c.l.b16 %v1576
        %v1581 = vpack.c.b16 %v1580, %v1579
        %v1584 = vsel %vm570, %v1559, 0
        %v1587 = vsel %vm570, %v1560, 0
        %v1590 = vsel %vm570, %v1561, 0
        %v1593 = vsel %vm570, %v1562, 0
        %v1596 = vsel %vm570, %v1563, 0
        %v1599 = vsel %vm570, %v1564, 0
        %v1602 = vsel %vm570, %v1565, 0
        %v1605 = vsel %vm570, %v1566, 0
        %v1608 = vsel %vm570, %v1567, 0
        %v1611 = vsel %vm570, %v1568, 0
        %v1614 = vsel %vm570, %v1569, 0
        %v1617 = vsel %vm570, %v1570, 0
        %v1620 = vsel %vm570, %v1571, 0
        %v1623 = vsel %vm570, %v1572, 0
        %v1626 = vsel %vm570, %v1573, 0
        %v1629 = vsel %vm570, %v1574, 0
        %1631 = vmatpush.bf16.msra.mxu0 0
        %1632 = vmatpush.bf16.msra.mxu0 0
        %1633 = vmatpush.bf16.msra.mxu0 0
        %1634 = vmatpush.bf16.msra.mxu0 0
        %1635 = vmatpush.bf16.msra.mxu0 0
        %1636 = vmatpush.bf16.msra.mxu0 0
        %1637 = vmatpush.bf16.msra.mxu0 0
        %1638 = vmatpush.bf16.msra.mxu0 %v1581
        %1639 = vmatmul.bf16.gmra.mxu0 %v1584
        %v1640 = vpop.f32.mrf.mxu0
        %v1641 = vadd.f32 0.0, %v1640
        %v1642 = vpop.f32.mrf.mxu0
        %v1643 = vadd.f32 0.0, %v1642
        %1644 = vmatmul.bf16.gmra.mxu0 %v1587
        %v1645 = vpop.f32.mrf.mxu0
        %v1646 = vadd.f32 0.0, %v1645
        %v1647 = vpop.f32.mrf.mxu0
        %v1648 = vadd.f32 0.0, %v1647
        %1649 = vmatmul.bf16.gmra.mxu0 %v1590
        %v1650 = vpop.f32.mrf.mxu0
        %v1651 = vadd.f32 0.0, %v1650
        %v1652 = vpop.f32.mrf.mxu0
        %v1653 = vadd.f32 0.0, %v1652
        %1654 = vmatmul.bf16.gmra.mxu0 %v1593
        %v1655 = vpop.f32.mrf.mxu0
        %v1656 = vadd.f32 0.0, %v1655
        %v1657 = vpop.f32.mrf.mxu0
        %v1658 = vadd.f32 0.0, %v1657
        %1659 = vmatmul.bf16.gmra.mxu0 %v1596
        %v1660 = vpop.f32.mrf.mxu0
        %v1661 = vadd.f32 0.0, %v1660
        %v1662 = vpop.f32.mrf.mxu0
        %v1663 = vadd.f32 0.0, %v1662
        %1664 = vmatmul.bf16.gmra.mxu0 %v1599
        %v1665 = vpop.f32.mrf.mxu0
        %v1666 = vadd.f32 0.0, %v1665
        %v1667 = vpop.f32.mrf.mxu0
        %v1668 = vadd.f32 0.0, %v1667
        %1669 = vmatmul.bf16.gmra.mxu0 %v1602
        %v1670 = vpop.f32.mrf.mxu0
        %v1671 = vadd.f32 0.0, %v1670
        %v1672 = vpop.f32.mrf.mxu0
        %v1673 = vadd.f32 0.0, %v1672
        %1674 = vmatmul.bf16.gmra.mxu0 %v1605
        %v1675 = vpop.f32.mrf.mxu0
        %v1676 = vadd.f32 0.0, %v1675
        %v1677 = vpop.f32.mrf.mxu0
        %v1678 = vadd.f32 0.0, %v1677
        %1679 = vmatmul.bf16.gmra.mxu0 %v1608
        %v1680 = vpop.f32.mrf.mxu0
        %v1681 = vadd.f32 0.0, %v1680
        %v1682 = vpop.f32.mrf.mxu0
        %v1683 = vadd.f32 0.0, %v1682
        %1684 = vmatmul.bf16.gmra.mxu0 %v1611
        %v1685 = vpop.f32.mrf.mxu0
        %v1686 = vadd.f32 0.0, %v1685
        %v1687 = vpop.f32.mrf.mxu0
        %v1688 = vadd.f32 0.0, %v1687
        %1689 = vmatmul.bf16.gmra.mxu0 %v1614
        %v1690 = vpop.f32.mrf.mxu0
        %v1691 = vadd.f32 0.0, %v1690
        %v1692 = vpop.f32.mrf.mxu0
        %v1693 = vadd.f32 0.0, %v1692
        %1694 = vmatmul.bf16.gmra.mxu0 %v1617
        %v1695 = vpop.f32.mrf.mxu0
        %v1696 = vadd.f32 0.0, %v1695
        %v1697 = vpop.f32.mrf.mxu0
        %v1698 = vadd.f32 0.0, %v1697
        %1699 = vmatmul.bf16.gmra.mxu0 %v1620
        %v1700 = vpop.f32.mrf.mxu0
        %v1701 = vadd.f32 0.0, %v1700
        %v1702 = vpop.f32.mrf.mxu0
        %v1703 = vadd.f32 0.0, %v1702
        %1704 = vmatmul.bf16.gmra.mxu0 %v1623
        %v1705 = vpop.f32.mrf.mxu0
        %v1706 = vadd.f32 0.0, %v1705
        %v1707 = vpop.f32.mrf.mxu0
        %v1708 = vadd.f32 0.0, %v1707
        %1709 = vmatmul.bf16.gmra.mxu0 %v1626
        %v1710 = vpop.f32.mrf.mxu0
        %v1711 = vadd.f32 0.0, %v1710
        %v1712 = vpop.f32.mrf.mxu0
        %v1713 = vadd.f32 0.0, %v1712
        %1714 = vmatmul.bf16.gmra.mxu0 %v1629
        %v1715 = vpop.f32.mrf.mxu0
        %v1716 = vadd.f32 0.0, %v1715
        %v1717 = vpop.f32.mrf.mxu0
        %v1718 = vadd.f32 0.0, %v1717
        %1719 = vdwg.mxu0
        %v1720 = vadd.f32 %v1495, %v1641
        %v1721 = vadd.f32 %v1496, %v1643
        %v1722 = vadd.f32 %v1497, %v1646
        %v1723 = vadd.f32 %v1498, %v1648
        %v1724 = vadd.f32 %v1499, %v1651
        %v1725 = vadd.f32 %v1500, %v1653
        %v1726 = vadd.f32 %v1501, %v1656
        %v1727 = vadd.f32 %v1502, %v1658
        %v1728 = vadd.f32 %v1503, %v1661
        %v1729 = vadd.f32 %v1504, %v1663
        %v1730 = vadd.f32 %v1505, %v1666
        %v1731 = vadd.f32 %v1506, %v1668
        %v1732 = vadd.f32 %v1507, %v1671
        %v1733 = vadd.f32 %v1508, %v1673
        %v1734 = vadd.f32 %v1509, %v1676
        %v1735 = vadd.f32 %v1510, %v1678
        %v1736 = vadd.f32 %v1511, %v1681
        %v1737 = vadd.f32 %v1512, %v1683
        %v1738 = vadd.f32 %v1513, %v1686
        %v1739 = vadd.f32 %v1514, %v1688
        %v1740 = vadd.f32 %v1515, %v1691
        %v1741 = vadd.f32 %v1516, %v1693
        %v1742 = vadd.f32 %v1517, %v1696
        %v1743 = vadd.f32 %v1518, %v1698
        %v1744 = vadd.f32 %v1519, %v1701
        %v1745 = vadd.f32 %v1520, %v1703
        %v1746 = vadd.f32 %v1521, %v1706
        %v1747 = vadd.f32 %v1522, %v1708
        %v1748 = vadd.f32 %v1523, %v1711
        %v1749 = vadd.f32 %v1524, %v1713
        %v1750 = vadd.f32 %v1525, %v1716
        %v1751 = vadd.f32 %v1526, %v1718
        %v1752 = vld [vmem:[%s658 + $0x2] sm:$0xff]
        %v1753 = vld [vmem:[%s658 + $0xa] sm:$0xff]
        %v1754 = vld [vmem:[%s658 + $0x1a] sm:$0xff]
        %v1755 = vld [vmem:[%s658 + $0x22] sm:$0xff]
        %v1756 = vld [vmem:[%s658 + $0x32] sm:$0xff]
        %v1757 = vld [vmem:[%s658 + $0x3a] sm:$0xff]
        %v1758 = vld [vmem:[%s658 + $0x4a] sm:$0xff]
        %v1759 = vld [vmem:[%s658 + $0x52] sm:$0xff]
        %v1760 = vld [vmem:[%s658 + $0x62] sm:$0xff]
        %v1761 = vld [vmem:[%s658 + $0x6a] sm:$0xff]
        %v1762 = vld [vmem:[%s658 + $0x7a] sm:$0xff]
        %v1763 = vld [vmem:[%s658 + $0x82] sm:$0xff]
        %v1764 = vld [vmem:[%s658 + $0x92] sm:$0xff]
        %v1765 = vld [vmem:[%s658 + $0x9a] sm:$0xff]
        %v1766 = vld [vmem:[%s658 + $0xaa] sm:$0xff]
        %v1767 = vld [vmem:[%s658 + $0xb2] sm:$0xff]
        %v1768 = vld [vmem:[%s658 + $0xc2] sm:$0xff]
        %v1769 = vld [vmem:[%s658 + $0xca] sm:$0xff]
        %v1770 = vld [vmem:[%s658 + $0xda] sm:$0xff]
        %v1771 = vld [vmem:[%s658 + $0xe2] sm:$0xff]
        %v1772 = vld [vmem:[%s658 + $0xf2] sm:$0xff]
        %v1773 = vld [vmem:[%s658 + $0xfa] sm:$0xff]
        %v1774 = vld [vmem:[%s658 + $0x10a] sm:$0xff]
        %v1775 = vld [vmem:[%s658 + $0x112] sm:$0xff]
        %v1776 = vld [vmem:[%s658 + $0x122] sm:$0xff]
        %v1777 = vld [vmem:[%s658 + $0x12a] sm:$0xff]
        %v1778 = vld [vmem:[%s658 + $0x13a] sm:$0xff]
        %v1779 = vld [vmem:[%s658 + $0x142] sm:$0xff]
        %v1780 = vld [vmem:[%s658 + $0x152] sm:$0xff]
        %v1781 = vld [vmem:[%s658 + $0x15a] sm:$0xff]
        %v1782 = vld [vmem:[%s658 + $0x16a] sm:$0xff]
        %v1783 = vld [vmem:[%s658 + $0x172] sm:$0xff]
        %v1784 = vpack.c.bf16 %v1753, %v1752
        %v1785 = vpack.c.bf16 %v1755, %v1754
        %v1786 = vpack.c.bf16 %v1757, %v1756
        %v1787 = vpack.c.bf16 %v1759, %v1758
        %v1788 = vpack.c.bf16 %v1761, %v1760
        %v1789 = vpack.c.bf16 %v1763, %v1762
        %v1790 = vpack.c.bf16 %v1765, %v1764
        %v1791 = vpack.c.bf16 %v1767, %v1766
        %v1792 = vpack.c.bf16 %v1769, %v1768
        %v1793 = vpack.c.bf16 %v1771, %v1770
        %v1794 = vpack.c.bf16 %v1773, %v1772
        %v1795 = vpack.c.bf16 %v1775, %v1774
        %v1796 = vpack.c.bf16 %v1777, %v1776
        %v1797 = vpack.c.bf16 %v1779, %v1778
        %v1798 = vpack.c.bf16 %v1781, %v1780
        %v1799 = vpack.c.bf16 %v1783, %v1782
        %v1800 = vld [vmem:[%s4 + $0x28] sm:$0xf]
        %v1801 = vld [vmem:[%s4 + $0x2c] sm:$0xf]
        %v1804 = vunpack.c.l.b16 %v1800
        %v1805 = vunpack.c.l.b16 %v1801
        %v1806 = vpack.c.b16 %v1805, %v1804
        %v1809 = vsel %vm570, %v1784, 0
        %v1812 = vsel %vm570, %v1785, 0
        %v1815 = vsel %vm570, %v1786, 0
        %v1818 = vsel %vm570, %v1787, 0
        %v1821 = vsel %vm570, %v1788, 0
        %v1824 = vsel %vm570, %v1789, 0
        %v1827 = vsel %vm570, %v1790, 0
        %v1830 = vsel %vm570, %v1791, 0
        %v1833 = vsel %vm570, %v1792, 0
        %v1836 = vsel %vm570, %v1793, 0
        %v1839 = vsel %vm570, %v1794, 0
        %v1842 = vsel %vm570, %v1795, 0
        %v1845 = vsel %vm570, %v1796, 0
        %v1848 = vsel %vm570, %v1797, 0
        %v1851 = vsel %vm570, %v1798, 0
        %v1854 = vsel %vm570, %v1799, 0
        %1856 = vmatpush.bf16.msra.mxu0 0
        %1857 = vmatpush.bf16.msra.mxu0 0
        %1858 = vmatpush.bf16.msra.mxu0 0
        %1859 = vmatpush.bf16.msra.mxu0 0
        %1860 = vmatpush.bf16.msra.mxu0 0
        %1861 = vmatpush.bf16.msra.mxu0 0
        %1862 = vmatpush.bf16.msra.mxu0 0
        %1863 = vmatpush.bf16.msra.mxu0 %v1806
        %1864 = vmatmul.bf16.gmra.mxu0 %v1809
        %v1865 = vpop.f32.mrf.mxu0
        %v1866 = vadd.f32 0.0, %v1865
        %v1867 = vpop.f32.mrf.mxu0
        %v1868 = vadd.f32 0.0, %v1867
        %1869 = vmatmul.bf16.gmra.mxu0 %v1812
        %v1870 = vpop.f32.mrf.mxu0
        %v1871 = vadd.f32 0.0, %v1870
        %v1872 = vpop.f32.mrf.mxu0
        %v1873 = vadd.f32 0.0, %v1872
        %1874 = vmatmul.bf16.gmra.mxu0 %v1815
        %v1875 = vpop.f32.mrf.mxu0
        %v1876 = vadd.f32 0.0, %v1875
        %v1877 = vpop.f32.mrf.mxu0
        %v1878 = vadd.f32 0.0, %v1877
        %1879 = vmatmul.bf16.gmra.mxu0 %v1818
        %v1880 = vpop.f32.mrf.mxu0
        %v1881 = vadd.f32 0.0, %v1880
        %v1882 = vpop.f32.mrf.mxu0
        %v1883 = vadd.f32 0.0, %v1882
        %1884 = vmatmul.bf16.gmra.mxu0 %v1821
        %v1885 = vpop.f32.mrf.mxu0
        %v1886 = vadd.f32 0.0, %v1885
        %v1887 = vpop.f32.mrf.mxu0
        %v1888 = vadd.f32 0.0, %v1887
        %1889 = vmatmul.bf16.gmra.mxu0 %v1824
        %v1890 = vpop.f32.mrf.mxu0
        %v1891 = vadd.f32 0.0, %v1890
        %v1892 = vpop.f32.mrf.mxu0
        %v1893 = vadd.f32 0.0, %v1892
        %1894 = vmatmul.bf16.gmra.mxu0 %v1827
        %v1895 = vpop.f32.mrf.mxu0
        %v1896 = vadd.f32 0.0, %v1895
        %v1897 = vpop.f32.mrf.mxu0
        %v1898 = vadd.f32 0.0, %v1897
        %1899 = vmatmul.bf16.gmra.mxu0 %v1830
        %v1900 = vpop.f32.mrf.mxu0
        %v1901 = vadd.f32 0.0, %v1900
        %v1902 = vpop.f32.mrf.mxu0
        %v1903 = vadd.f32 0.0, %v1902
        %1904 = vmatmul.bf16.gmra.mxu0 %v1833
        %v1905 = vpop.f32.mrf.mxu0
        %v1906 = vadd.f32 0.0, %v1905
        %v1907 = vpop.f32.mrf.mxu0
        %v1908 = vadd.f32 0.0, %v1907
        %1909 = vmatmul.bf16.gmra.mxu0 %v1836
        %v1910 = vpop.f32.mrf.mxu0
        %v1911 = vadd.f32 0.0, %v1910
        %v1912 = vpop.f32.mrf.mxu0
        %v1913 = vadd.f32 0.0, %v1912
        %1914 = vmatmul.bf16.gmra.mxu0 %v1839
        %v1915 = vpop.f32.mrf.mxu0
        %v1916 = vadd.f32 0.0, %v1915
        %v1917 = vpop.f32.mrf.mxu0
        %v1918 = vadd.f32 0.0, %v1917
        %1919 = vmatmul.bf16.gmra.mxu0 %v1842
        %v1920 = vpop.f32.mrf.mxu0
        %v1921 = vadd.f32 0.0, %v1920
        %v1922 = vpop.f32.mrf.mxu0
        %v1923 = vadd.f32 0.0, %v1922
        %1924 = vmatmul.bf16.gmra.mxu0 %v1845
        %v1925 = vpop.f32.mrf.mxu0
        %v1926 = vadd.f32 0.0, %v1925
        %v1927 = vpop.f32.mrf.mxu0
        %v1928 = vadd.f32 0.0, %v1927
        %1929 = vmatmul.bf16.gmra.mxu0 %v1848
        %v1930 = vpop.f32.mrf.mxu0
        %v1931 = vadd.f32 0.0, %v1930
        %v1932 = vpop.f32.mrf.mxu0
        %v1933 = vadd.f32 0.0, %v1932
        %1934 = vmatmul.bf16.gmra.mxu0 %v1851
        %v1935 = vpop.f32.mrf.mxu0
        %v1936 = vadd.f32 0.0, %v1935
        %v1937 = vpop.f32.mrf.mxu0
        %v1938 = vadd.f32 0.0, %v1937
        %1939 = vmatmul.bf16.gmra.mxu0 %v1854
        %v1940 = vpop.f32.mrf.mxu0
        %v1941 = vadd.f32 0.0, %v1940
        %v1942 = vpop.f32.mrf.mxu0
        %v1943 = vadd.f32 0.0, %v1942
        %1944 = vdwg.mxu0
        %v1945 = vadd.f32 %v1720, %v1866
        %v1946 = vadd.f32 %v1721, %v1868
        %v1947 = vadd.f32 %v1722, %v1871
        %v1948 = vadd.f32 %v1723, %v1873
        %v1949 = vadd.f32 %v1724, %v1876
        %v1950 = vadd.f32 %v1725, %v1878
        %v1951 = vadd.f32 %v1726, %v1881
        %v1952 = vadd.f32 %v1727, %v1883
        %v1953 = vadd.f32 %v1728, %v1886
        %v1954 = vadd.f32 %v1729, %v1888
        %v1955 = vadd.f32 %v1730, %v1891
        %v1956 = vadd.f32 %v1731, %v1893
        %v1957 = vadd.f32 %v1732, %v1896
        %v1958 = vadd.f32 %v1733, %v1898
        %v1959 = vadd.f32 %v1734, %v1901
        %v1960 = vadd.f32 %v1735, %v1903
        %v1961 = vadd.f32 %v1736, %v1906
        %v1962 = vadd.f32 %v1737, %v1908
        %v1963 = vadd.f32 %v1738, %v1911
        %v1964 = vadd.f32 %v1739, %v1913
        %v1965 = vadd.f32 %v1740, %v1916
        %v1966 = vadd.f32 %v1741, %v1918
        %v1967 = vadd.f32 %v1742, %v1921
        %v1968 = vadd.f32 %v1743, %v1923
        %v1969 = vadd.f32 %v1744, %v1926
        %v1970 = vadd.f32 %v1745, %v1928
        %v1971 = vadd.f32 %v1746, %v1931
        %v1972 = vadd.f32 %v1747, %v1933
        %v1973 = vadd.f32 %v1748, %v1936
        %v1974 = vadd.f32 %v1749, %v1938
        %v1975 = vadd.f32 %v1750, %v1941
        %v1976 = vadd.f32 %v1751, %v1943
        %s1977 = scalar_lea.vmem [#allocation2], 48
        %v1978 = vld [vmem:[%s1977] sm:$0xff]
        %v1979 = vld [vmem:[%s1977 + $0x8] sm:$0xff]
        %v1980 = vld [vmem:[%s1977 + $0x18] sm:$0xff]
        %v1981 = vld [vmem:[%s1977 + $0x20] sm:$0xff]
        %v1982 = vld [vmem:[%s1977 + $0x30] sm:$0xff]
        %v1983 = vld [vmem:[%s1977 + $0x38] sm:$0xff]
        %v1984 = vld [vmem:[%s1977 + $0x48] sm:$0xff]
        %v1985 = vld [vmem:[%s1977 + $0x50] sm:$0xff]
        %v1986 = vld [vmem:[%s1977 + $0x60] sm:$0xff]
        %v1987 = vld [vmem:[%s1977 + $0x68] sm:$0xff]
        %v1988 = vld [vmem:[%s1977 + $0x78] sm:$0xff]
        %v1989 = vld [vmem:[%s1977 + $0x80] sm:$0xff]
        %v1990 = vld [vmem:[%s1977 + $0x90] sm:$0xff]
        %v1991 = vld [vmem:[%s1977 + $0x98] sm:$0xff]
        %v1992 = vld [vmem:[%s1977 + $0xa8] sm:$0xff]
        %v1993 = vld [vmem:[%s1977 + $0xb0] sm:$0xff]
        %v1994 = vld [vmem:[%s1977 + $0xc0] sm:$0xff]
        %v1995 = vld [vmem:[%s1977 + $0xc8] sm:$0xff]
        %v1996 = vld [vmem:[%s1977 + $0xd8] sm:$0xff]
        %v1997 = vld [vmem:[%s1977 + $0xe0] sm:$0xff]
        %v1998 = vld [vmem:[%s1977 + $0xf0] sm:$0xff]
        %v1999 = vld [vmem:[%s1977 + $0xf8] sm:$0xff]
        %v2000 = vld [vmem:[%s1977 + $0x108] sm:$0xff]
        %v2001 = vld [vmem:[%s1977 + $0x110] sm:$0xff]
        %v2002 = vld [vmem:[%s1977 + $0x120] sm:$0xff]
        %v2003 = vld [vmem:[%s1977 + $0x128] sm:$0xff]
        %v2004 = vld [vmem:[%s1977 + $0x138] sm:$0xff]
        %v2005 = vld [vmem:[%s1977 + $0x140] sm:$0xff]
        %v2006 = vld [vmem:[%s1977 + $0x150] sm:$0xff]
        %v2007 = vld [vmem:[%s1977 + $0x158] sm:$0xff]
        %v2008 = vld [vmem:[%s1977 + $0x168] sm:$0xff]
        %v2009 = vld [vmem:[%s1977 + $0x170] sm:$0xff]
        %v2010 = vpack.c.bf16 %v1979, %v1978
        %v2011 = vpack.c.bf16 %v1981, %v1980
        %v2012 = vpack.c.bf16 %v1983, %v1982
        %v2013 = vpack.c.bf16 %v1985, %v1984
        %v2014 = vpack.c.bf16 %v1987, %v1986
        %v2015 = vpack.c.bf16 %v1989, %v1988
        %v2016 = vpack.c.bf16 %v1991, %v1990
        %v2017 = vpack.c.bf16 %v1993, %v1992
        %v2018 = vpack.c.bf16 %v1995, %v1994
        %v2019 = vpack.c.bf16 %v1997, %v1996
        %v2020 = vpack.c.bf16 %v1999, %v1998
        %v2021 = vpack.c.bf16 %v2001, %v2000
        %v2022 = vpack.c.bf16 %v2003, %v2002
        %v2023 = vpack.c.bf16 %v2005, %v2004
        %v2024 = vpack.c.bf16 %v2007, %v2006
        %v2025 = vpack.c.bf16 %v2009, %v2008
        %v2026 = vld [vmem:[%s4 + $0x30] sm:$0xf]
        %v2027 = vld [vmem:[%s4 + $0x34] sm:$0xf]
        %v2030 = vunpack.c.l.b16 %v2026
        %v2031 = vunpack.c.l.b16 %v2027
        %v2032 = vpack.c.b16 %v2031, %v2030
        %v2035 = vsel %vm570, %v2010, 0
        %v2038 = vsel %vm570, %v2011, 0
        %v2041 = vsel %vm570, %v2012, 0
        %v2044 = vsel %vm570, %v2013, 0
        %v2047 = vsel %vm570, %v2014, 0
        %v2050 = vsel %vm570, %v2015, 0
        %v2053 = vsel %vm570, %v2016, 0
        %v2056 = vsel %vm570, %v2017, 0
        %v2059 = vsel %vm570, %v2018, 0
        %v2062 = vsel %vm570, %v2019, 0
        %v2065 = vsel %vm570, %v2020, 0
        %v2068 = vsel %vm570, %v2021, 0
        %v2071 = vsel %vm570, %v2022, 0
        %v2074 = vsel %vm570, %v2023, 0
        %v2077 = vsel %vm570, %v2024, 0
        %v2080 = vsel %vm570, %v2025, 0
        %2082 = vmatpush.bf16.msra.mxu0 0
        %2083 = vmatpush.bf16.msra.mxu0 0
        %2084 = vmatpush.bf16.msra.mxu0 0
        %2085 = vmatpush.bf16.msra.mxu0 0
        %2086 = vmatpush.bf16.msra.mxu0 0
        %2087 = vmatpush.bf16.msra.mxu0 0
        %2088 = vmatpush.bf16.msra.mxu0 0
        %2089 = vmatpush.bf16.msra.mxu0 %v2032
        %2090 = vmatmul.bf16.gmra.mxu0 %v2035
        %v2091 = vpop.f32.mrf.mxu0
        %v2092 = vadd.f32 0.0, %v2091
        %v2093 = vpop.f32.mrf.mxu0
        %v2094 = vadd.f32 0.0, %v2093
        %2095 = vmatmul.bf16.gmra.mxu0 %v2038
        %v2096 = vpop.f32.mrf.mxu0
        %v2097 = vadd.f32 0.0, %v2096
        %v2098 = vpop.f32.mrf.mxu0
        %v2099 = vadd.f32 0.0, %v2098
        %2100 = vmatmul.bf16.gmra.mxu0 %v2041
        %v2101 = vpop.f32.mrf.mxu0
        %v2102 = vadd.f32 0.0, %v2101
        %v2103 = vpop.f32.mrf.mxu0
        %v2104 = vadd.f32 0.0, %v2103
        %2105 = vmatmul.bf16.gmra.mxu0 %v2044
        %v2106 = vpop.f32.mrf.mxu0
        %v2107 = vadd.f32 0.0, %v2106
        %v2108 = vpop.f32.mrf.mxu0
        %v2109 = vadd.f32 0.0, %v2108
        %2110 = vmatmul.bf16.gmra.mxu0 %v2047
        %v2111 = vpop.f32.mrf.mxu0
        %v2112 = vadd.f32 0.0, %v2111
        %v2113 = vpop.f32.mrf.mxu0
        %v2114 = vadd.f32 0.0, %v2113
        %2115 = vmatmul.bf16.gmra.mxu0 %v2050
        %v2116 = vpop.f32.mrf.mxu0
        %v2117 = vadd.f32 0.0, %v2116
        %v2118 = vpop.f32.mrf.mxu0
        %v2119 = vadd.f32 0.0, %v2118
        %2120 = vmatmul.bf16.gmra.mxu0 %v2053
        %v2121 = vpop.f32.mrf.mxu0
        %v2122 = vadd.f32 0.0, %v2121
        %v2123 = vpop.f32.mrf.mxu0
        %v2124 = vadd.f32 0.0, %v2123
        %2125 = vmatmul.bf16.gmra.mxu0 %v2056
        %v2126 = vpop.f32.mrf.mxu0
        %v2127 = vadd.f32 0.0, %v2126
        %v2128 = vpop.f32.mrf.mxu0
        %v2129 = vadd.f32 0.0, %v2128
        %2130 = vmatmul.bf16.gmra.mxu0 %v2059
        %v2131 = vpop.f32.mrf.mxu0
        %v2132 = vadd.f32 0.0, %v2131
        %v2133 = vpop.f32.mrf.mxu0
        %v2134 = vadd.f32 0.0, %v2133
        %2135 = vmatmul.bf16.gmra.mxu0 %v2062
        %v2136 = vpop.f32.mrf.mxu0
        %v2137 = vadd.f32 0.0, %v2136
        %v2138 = vpop.f32.mrf.mxu0
        %v2139 = vadd.f32 0.0, %v2138
        %2140 = vmatmul.bf16.gmra.mxu0 %v2065
        %v2141 = vpop.f32.mrf.mxu0
        %v2142 = vadd.f32 0.0, %v2141
        %v2143 = vpop.f32.mrf.mxu0
        %v2144 = vadd.f32 0.0, %v2143
        %2145 = vmatmul.bf16.gmra.mxu0 %v2068
        %v2146 = vpop.f32.mrf.mxu0
        %v2147 = vadd.f32 0.0, %v2146
        %v2148 = vpop.f32.mrf.mxu0
        %v2149 = vadd.f32 0.0, %v2148
        %2150 = vmatmul.bf16.gmra.mxu0 %v2071
        %v2151 = vpop.f32.mrf.mxu0
        %v2152 = vadd.f32 0.0, %v2151
        %v2153 = vpop.f32.mrf.mxu0
        %v2154 = vadd.f32 0.0, %v2153
        %2155 = vmatmul.bf16.gmra.mxu0 %v2074
        %v2156 = vpop.f32.mrf.mxu0
        %v2157 = vadd.f32 0.0, %v2156
        %v2158 = vpop.f32.mrf.mxu0
        %v2159 = vadd.f32 0.0, %v2158
        %2160 = vmatmul.bf16.gmra.mxu0 %v2077
        %v2161 = vpop.f32.mrf.mxu0
        %v2162 = vadd.f32 0.0, %v2161
        %v2163 = vpop.f32.mrf.mxu0
        %v2164 = vadd.f32 0.0, %v2163
        %2165 = vmatmul.bf16.gmra.mxu0 %v2080
        %v2166 = vpop.f32.mrf.mxu0
        %v2167 = vadd.f32 0.0, %v2166
        %v2168 = vpop.f32.mrf.mxu0
        %v2169 = vadd.f32 0.0, %v2168
        %2170 = vdwg.mxu0
        %v2171 = vadd.f32 %v1945, %v2092
        %v2172 = vadd.f32 %v1946, %v2094
        %v2173 = vadd.f32 %v1947, %v2097
        %v2174 = vadd.f32 %v1948, %v2099
        %v2175 = vadd.f32 %v1949, %v2102
        %v2176 = vadd.f32 %v1950, %v2104
        %v2177 = vadd.f32 %v1951, %v2107
        %v2178 = vadd.f32 %v1952, %v2109
        %v2179 = vadd.f32 %v1953, %v2112
        %v2180 = vadd.f32 %v1954, %v2114
        %v2181 = vadd.f32 %v1955, %v2117
        %v2182 = vadd.f32 %v1956, %v2119
        %v2183 = vadd.f32 %v1957, %v2122
        %v2184 = vadd.f32 %v1958, %v2124
        %v2185 = vadd.f32 %v1959, %v2127
        %v2186 = vadd.f32 %v1960, %v2129
        %v2187 = vadd.f32 %v1961, %v2132
        %v2188 = vadd.f32 %v1962, %v2134
        %v2189 = vadd.f32 %v1963, %v2137
        %v2190 = vadd.f32 %v1964, %v2139
        %v2191 = vadd.f32 %v1965, %v2142
        %v2192 = vadd.f32 %v1966, %v2144
        %v2193 = vadd.f32 %v1967, %v2147
        %v2194 = vadd.f32 %v1968, %v2149
        %v2195 = vadd.f32 %v1969, %v2152
        %v2196 = vadd.f32 %v1970, %v2154
        %v2197 = vadd.f32 %v1971, %v2157
        %v2198 = vadd.f32 %v1972, %v2159
        %v2199 = vadd.f32 %v1973, %v2162
        %v2200 = vadd.f32 %v1974, %v2164
        %v2201 = vadd.f32 %v1975, %v2167
        %v2202 = vadd.f32 %v1976, %v2169
        %v2203 = vld [vmem:[%s1977 + $0x1] sm:$0xff]
        %v2204 = vld [vmem:[%s1977 + $0x9] sm:$0xff]
        %v2205 = vld [vmem:[%s1977 + $0x19] sm:$0xff]
        %v2206 = vld [vmem:[%s1977 + $0x21] sm:$0xff]
        %v2207 = vld [vmem:[%s1977 + $0x31] sm:$0xff]
        %v2208 = vld [vmem:[%s1977 + $0x39] sm:$0xff]
        %v2209 = vld [vmem:[%s1977 + $0x49] sm:$0xff]
        %v2210 = vld [vmem:[%s1977 + $0x51] sm:$0xff]
        %v2211 = vld [vmem:[%s1977 + $0x61] sm:$0xff]
        %v2212 = vld [vmem:[%s1977 + $0x69] sm:$0xff]
        %v2213 = vld [vmem:[%s1977 + $0x79] sm:$0xff]
        %v2214 = vld [vmem:[%s1977 + $0x81] sm:$0xff]
        %v2215 = vld [vmem:[%s1977 + $0x91] sm:$0xff]
        %v2216 = vld [vmem:[%s1977 + $0x99] sm:$0xff]
        %v2217 = vld [vmem:[%s1977 + $0xa9] sm:$0xff]
        %v2218 = vld [vmem:[%s1977 + $0xb1] sm:$0xff]
        %v2219 = vld [vmem:[%s1977 + $0xc1] sm:$0xff]
        %v2220 = vld [vmem:[%s1977 + $0xc9] sm:$0xff]
        %v2221 = vld [vmem:[%s1977 + $0xd9] sm:$0xff]
        %v2222 = vld [vmem:[%s1977 + $0xe1] sm:$0xff]
        %v2223 = vld [vmem:[%s1977 + $0xf1] sm:$0xff]
        %v2224 = vld [vmem:[%s1977 + $0xf9] sm:$0xff]
        %v2225 = vld [vmem:[%s1977 + $0x109] sm:$0xff]
        %v2226 = vld [vmem:[%s1977 + $0x111] sm:$0xff]
        %v2227 = vld [vmem:[%s1977 + $0x121] sm:$0xff]
        %v2228 = vld [vmem:[%s1977 + $0x129] sm:$0xff]
        %v2229 = vld [vmem:[%s1977 + $0x139] sm:$0xff]
        %v2230 = vld [vmem:[%s1977 + $0x141] sm:$0xff]
        %v2231 = vld [vmem:[%s1977 + $0x151] sm:$0xff]
        %v2232 = vld [vmem:[%s1977 + $0x159] sm:$0xff]
        %v2233 = vld [vmem:[%s1977 + $0x169] sm:$0xff]
        %v2234 = vld [vmem:[%s1977 + $0x171] sm:$0xff]
        %v2235 = vpack.c.bf16 %v2204, %v2203
        %v2236 = vpack.c.bf16 %v2206, %v2205
        %v2237 = vpack.c.bf16 %v2208, %v2207
        %v2238 = vpack.c.bf16 %v2210, %v2209
        %v2239 = vpack.c.bf16 %v2212, %v2211
        %v2240 = vpack.c.bf16 %v2214, %v2213
        %v2241 = vpack.c.bf16 %v2216, %v2215
        %v2242 = vpack.c.bf16 %v2218, %v2217
        %v2243 = vpack.c.bf16 %v2220, %v2219
        %v2244 = vpack.c.bf16 %v2222, %v2221
        %v2245 = vpack.c.bf16 %v2224, %v2223
        %v2246 = vpack.c.bf16 %v2226, %v2225
        %v2247 = vpack.c.bf16 %v2228, %v2227
        %v2248 = vpack.c.bf16 %v2230, %v2229
        %v2249 = vpack.c.bf16 %v2232, %v2231
        %v2250 = vpack.c.bf16 %v2234, %v2233
        %v2251 = vld [vmem:[%s4 + $0x38] sm:$0xf]
        %v2252 = vld [vmem:[%s4 + $0x3c] sm:$0xf]
        %v2255 = vunpack.c.l.b16 %v2251
        %v2256 = vunpack.c.l.b16 %v2252
        %v2257 = vpack.c.b16 %v2256, %v2255
        %v2260 = vsel %vm570, %v2235, 0
        %v2263 = vsel %vm570, %v2236, 0
        %v2266 = vsel %vm570, %v2237, 0
        %v2269 = vsel %vm570, %v2238, 0
        %v2272 = vsel %vm570, %v2239, 0
        %v2275 = vsel %vm570, %v2240, 0
        %v2278 = vsel %vm570, %v2241, 0
        %v2281 = vsel %vm570, %v2242, 0
        %v2284 = vsel %vm570, %v2243, 0
        %v2287 = vsel %vm570, %v2244, 0
        %v2290 = vsel %vm570, %v2245, 0
        %v2293 = vsel %vm570, %v2246, 0
        %v2296 = vsel %vm570, %v2247, 0
        %v2299 = vsel %vm570, %v2248, 0
        %v2302 = vsel %vm570, %v2249, 0
        %v2305 = vsel %vm570, %v2250, 0
        %2307 = vmatpush.bf16.msra.mxu0 0
        %2308 = vmatpush.bf16.msra.mxu0 0
        %2309 = vmatpush.bf16.msra.mxu0 0
        %2310 = vmatpush.bf16.msra.mxu0 0
        %2311 = vmatpush.bf16.msra.mxu0 0
        %2312 = vmatpush.bf16.msra.mxu0 0
        %2313 = vmatpush.bf16.msra.mxu0 0
        %2314 = vmatpush.bf16.msra.mxu0 %v2257
        %2315 = vmatmul.bf16.gmra.mxu0 %v2260
        %v2316 = vpop.f32.mrf.mxu0
        %v2317 = vadd.f32 0.0, %v2316
        %v2318 = vpop.f32.mrf.mxu0
        %v2319 = vadd.f32 0.0, %v2318
        %2320 = vmatmul.bf16.gmra.mxu0 %v2263
        %v2321 = vpop.f32.mrf.mxu0
        %v2322 = vadd.f32 0.0, %v2321
        %v2323 = vpop.f32.mrf.mxu0
        %v2324 = vadd.f32 0.0, %v2323
        %2325 = vmatmul.bf16.gmra.mxu0 %v2266
        %v2326 = vpop.f32.mrf.mxu0
        %v2327 = vadd.f32 0.0, %v2326
        %v2328 = vpop.f32.mrf.mxu0
        %v2329 = vadd.f32 0.0, %v2328
        %2330 = vmatmul.bf16.gmra.mxu0 %v2269
        %v2331 = vpop.f32.mrf.mxu0
        %v2332 = vadd.f32 0.0, %v2331
        %v2333 = vpop.f32.mrf.mxu0
        %v2334 = vadd.f32 0.0, %v2333
        %2335 = vmatmul.bf16.gmra.mxu0 %v2272
        %v2336 = vpop.f32.mrf.mxu0
        %v2337 = vadd.f32 0.0, %v2336
        %v2338 = vpop.f32.mrf.mxu0
        %v2339 = vadd.f32 0.0, %v2338
        %2340 = vmatmul.bf16.gmra.mxu0 %v2275
        %v2341 = vpop.f32.mrf.mxu0
        %v2342 = vadd.f32 0.0, %v2341
        %v2343 = vpop.f32.mrf.mxu0
        %v2344 = vadd.f32 0.0, %v2343
        %2345 = vmatmul.bf16.gmra.mxu0 %v2278
        %v2346 = vpop.f32.mrf.mxu0
        %v2347 = vadd.f32 0.0, %v2346
        %v2348 = vpop.f32.mrf.mxu0
        %v2349 = vadd.f32 0.0, %v2348
        %2350 = vmatmul.bf16.gmra.mxu0 %v2281
        %v2351 = vpop.f32.mrf.mxu0
        %v2352 = vadd.f32 0.0, %v2351
        %v2353 = vpop.f32.mrf.mxu0
        %v2354 = vadd.f32 0.0, %v2353
        %2355 = vmatmul.bf16.gmra.mxu0 %v2284
        %v2356 = vpop.f32.mrf.mxu0
        %v2357 = vadd.f32 0.0, %v2356
        %v2358 = vpop.f32.mrf.mxu0
        %v2359 = vadd.f32 0.0, %v2358
        %2360 = vmatmul.bf16.gmra.mxu0 %v2287
        %v2361 = vpop.f32.mrf.mxu0
        %v2362 = vadd.f32 0.0, %v2361
        %v2363 = vpop.f32.mrf.mxu0
        %v2364 = vadd.f32 0.0, %v2363
        %2365 = vmatmul.bf16.gmra.mxu0 %v2290
        %v2366 = vpop.f32.mrf.mxu0
        %v2367 = vadd.f32 0.0, %v2366
        %v2368 = vpop.f32.mrf.mxu0
        %v2369 = vadd.f32 0.0, %v2368
        %2370 = vmatmul.bf16.gmra.mxu0 %v2293
        %v2371 = vpop.f32.mrf.mxu0
        %v2372 = vadd.f32 0.0, %v2371
        %v2373 = vpop.f32.mrf.mxu0
        %v2374 = vadd.f32 0.0, %v2373
        %2375 = vmatmul.bf16.gmra.mxu0 %v2296
        %v2376 = vpop.f32.mrf.mxu0
        %v2377 = vadd.f32 0.0, %v2376
        %v2378 = vpop.f32.mrf.mxu0
        %v2379 = vadd.f32 0.0, %v2378
        %2380 = vmatmul.bf16.gmra.mxu0 %v2299
        %v2381 = vpop.f32.mrf.mxu0
        %v2382 = vadd.f32 0.0, %v2381
        %v2383 = vpop.f32.mrf.mxu0
        %v2384 = vadd.f32 0.0, %v2383
        %2385 = vmatmul.bf16.gmra.mxu0 %v2302
        %v2386 = vpop.f32.mrf.mxu0
        %v2387 = vadd.f32 0.0, %v2386
        %v2388 = vpop.f32.mrf.mxu0
        %v2389 = vadd.f32 0.0, %v2388
        %2390 = vmatmul.bf16.gmra.mxu0 %v2305
        %v2391 = vpop.f32.mrf.mxu0
        %v2392 = vadd.f32 0.0, %v2391
        %v2393 = vpop.f32.mrf.mxu0
        %v2394 = vadd.f32 0.0, %v2393
        %2395 = vdwg.mxu0
        %v2396 = vadd.f32 %v2171, %v2317
        %v2397 = vadd.f32 %v2172, %v2319
        %v2398 = vadd.f32 %v2173, %v2322
        %v2399 = vadd.f32 %v2174, %v2324
        %v2400 = vadd.f32 %v2175, %v2327
        %v2401 = vadd.f32 %v2176, %v2329
        %v2402 = vadd.f32 %v2177, %v2332
        %v2403 = vadd.f32 %v2178, %v2334
        %v2404 = vadd.f32 %v2179, %v2337
        %v2405 = vadd.f32 %v2180, %v2339
        %v2406 = vadd.f32 %v2181, %v2342
        %v2407 = vadd.f32 %v2182, %v2344
        %v2408 = vadd.f32 %v2183, %v2347
        %v2409 = vadd.f32 %v2184, %v2349
        %v2410 = vadd.f32 %v2185, %v2352
        %v2411 = vadd.f32 %v2186, %v2354
        %v2412 = vadd.f32 %v2187, %v2357
        %v2413 = vadd.f32 %v2188, %v2359
        %v2414 = vadd.f32 %v2189, %v2362
        %v2415 = vadd.f32 %v2190, %v2364
        %v2416 = vadd.f32 %v2191, %v2367
        %v2417 = vadd.f32 %v2192, %v2369
        %v2418 = vadd.f32 %v2193, %v2372
        %v2419 = vadd.f32 %v2194, %v2374
        %v2420 = vadd.f32 %v2195, %v2377
        %v2421 = vadd.f32 %v2196, %v2379
        %v2422 = vadd.f32 %v2197, %v2382
        %v2423 = vadd.f32 %v2198, %v2384
        %v2424 = vadd.f32 %v2199, %v2387
        %v2425 = vadd.f32 %v2200, %v2389
        %v2426 = vadd.f32 %v2201, %v2392
        %v2427 = vadd.f32 %v2202, %v2394
        %v2428 = vld [vmem:[%s1977 + $0x2] sm:$0xff]
        %v2429 = vld [vmem:[%s1977 + $0xa] sm:$0xff]
        %v2430 = vld [vmem:[%s1977 + $0x1a] sm:$0xff]
        %v2431 = vld [vmem:[%s1977 + $0x22] sm:$0xff]
        %v2432 = vld [vmem:[%s1977 + $0x32] sm:$0xff]
        %v2433 = vld [vmem:[%s1977 + $0x3a] sm:$0xff]
        %v2434 = vld [vmem:[%s1977 + $0x4a] sm:$0xff]
        %v2435 = vld [vmem:[%s1977 + $0x52] sm:$0xff]
        %v2436 = vld [vmem:[%s1977 + $0x62] sm:$0xff]
        %v2437 = vld [vmem:[%s1977 + $0x6a] sm:$0xff]
        %v2438 = vld [vmem:[%s1977 + $0x7a] sm:$0xff]
        %v2439 = vld [vmem:[%s1977 + $0x82] sm:$0xff]
        %v2440 = vld [vmem:[%s1977 + $0x92] sm:$0xff]
        %v2441 = vld [vmem:[%s1977 + $0x9a] sm:$0xff]
        %v2442 = vld [vmem:[%s1977 + $0xaa] sm:$0xff]
        %v2443 = vld [vmem:[%s1977 + $0xb2] sm:$0xff]
        %v2444 = vld [vmem:[%s1977 + $0xc2] sm:$0xff]
        %v2445 = vld [vmem:[%s1977 + $0xca] sm:$0xff]
        %v2446 = vld [vmem:[%s1977 + $0xda] sm:$0xff]
        %v2447 = vld [vmem:[%s1977 + $0xe2] sm:$0xff]
        %v2448 = vld [vmem:[%s1977 + $0xf2] sm:$0xff]
        %v2449 = vld [vmem:[%s1977 + $0xfa] sm:$0xff]
        %v2450 = vld [vmem:[%s1977 + $0x10a] sm:$0xff]
        %v2451 = vld [vmem:[%s1977 + $0x112] sm:$0xff]
        %v2452 = vld [vmem:[%s1977 + $0x122] sm:$0xff]
        %v2453 = vld [vmem:[%s1977 + $0x12a] sm:$0xff]
        %v2454 = vld [vmem:[%s1977 + $0x13a] sm:$0xff]
        %v2455 = vld [vmem:[%s1977 + $0x142] sm:$0xff]
        %v2456 = vld [vmem:[%s1977 + $0x152] sm:$0xff]
        %v2457 = vld [vmem:[%s1977 + $0x15a] sm:$0xff]
        %v2458 = vld [vmem:[%s1977 + $0x16a] sm:$0xff]
        %v2459 = vld [vmem:[%s1977 + $0x172] sm:$0xff]
        %v2460 = vpack.c.bf16 %v2429, %v2428
        %v2461 = vpack.c.bf16 %v2431, %v2430
        %v2462 = vpack.c.bf16 %v2433, %v2432
        %v2463 = vpack.c.bf16 %v2435, %v2434
        %v2464 = vpack.c.bf16 %v2437, %v2436
        %v2465 = vpack.c.bf16 %v2439, %v2438
        %v2466 = vpack.c.bf16 %v2441, %v2440
        %v2467 = vpack.c.bf16 %v2443, %v2442
        %v2468 = vpack.c.bf16 %v2445, %v2444
        %v2469 = vpack.c.bf16 %v2447, %v2446
        %v2470 = vpack.c.bf16 %v2449, %v2448
        %v2471 = vpack.c.bf16 %v2451, %v2450
        %v2472 = vpack.c.bf16 %v2453, %v2452
        %v2473 = vpack.c.bf16 %v2455, %v2454
        %v2474 = vpack.c.bf16 %v2457, %v2456
        %v2475 = vpack.c.bf16 %v2459, %v2458
        %v2476 = vld [vmem:[%s4 + $0x40] sm:$0xf]
        %v2477 = vld [vmem:[%s4 + $0x44] sm:$0xf]
        %v2480 = vunpack.c.l.b16 %v2476
        %v2481 = vunpack.c.l.b16 %v2477
        %v2482 = vpack.c.b16 %v2481, %v2480
        %v2485 = vsel %vm570, %v2460, 0
        %v2488 = vsel %vm570, %v2461, 0
        %v2491 = vsel %vm570, %v2462, 0
        %v2494 = vsel %vm570, %v2463, 0
        %v2497 = vsel %vm570, %v2464, 0
        %v2500 = vsel %vm570, %v2465, 0
        %v2503 = vsel %vm570, %v2466, 0
        %v2506 = vsel %vm570, %v2467, 0
        %v2509 = vsel %vm570, %v2468, 0
        %v2512 = vsel %vm570, %v2469, 0
        %v2515 = vsel %vm570, %v2470, 0
        %v2518 = vsel %vm570, %v2471, 0
        %v2521 = vsel %vm570, %v2472, 0
        %v2524 = vsel %vm570, %v2473, 0
        %v2527 = vsel %vm570, %v2474, 0
        %v2530 = vsel %vm570, %v2475, 0
        %2532 = vmatpush.bf16.msra.mxu0 0
        %2533 = vmatpush.bf16.msra.mxu0 0
        %2534 = vmatpush.bf16.msra.mxu0 0
        %2535 = vmatpush.bf16.msra.mxu0 0
        %2536 = vmatpush.bf16.msra.mxu0 0
        %2537 = vmatpush.bf16.msra.mxu0 0
        %2538 = vmatpush.bf16.msra.mxu0 0
        %2539 = vmatpush.bf16.msra.mxu0 %v2482
        %2540 = vmatmul.bf16.gmra.mxu0 %v2485
        %v2541 = vpop.f32.mrf.mxu0
        %v2542 = vadd.f32 0.0, %v2541
        %v2543 = vpop.f32.mrf.mxu0
        %v2544 = vadd.f32 0.0, %v2543
        %2545 = vmatmul.bf16.gmra.mxu0 %v2488
        %v2546 = vpop.f32.mrf.mxu0
        %v2547 = vadd.f32 0.0, %v2546
        %v2548 = vpop.f32.mrf.mxu0
        %v2549 = vadd.f32 0.0, %v2548
        %2550 = vmatmul.bf16.gmra.mxu0 %v2491
        %v2551 = vpop.f32.mrf.mxu0
        %v2552 = vadd.f32 0.0, %v2551
        %v2553 = vpop.f32.mrf.mxu0
        %v2554 = vadd.f32 0.0, %v2553
        %2555 = vmatmul.bf16.gmra.mxu0 %v2494
        %v2556 = vpop.f32.mrf.mxu0
        %v2557 = vadd.f32 0.0, %v2556
        %v2558 = vpop.f32.mrf.mxu0
        %v2559 = vadd.f32 0.0, %v2558
        %2560 = vmatmul.bf16.gmra.mxu0 %v2497
        %v2561 = vpop.f32.mrf.mxu0
        %v2562 = vadd.f32 0.0, %v2561
        %v2563 = vpop.f32.mrf.mxu0
        %v2564 = vadd.f32 0.0, %v2563
        %2565 = vmatmul.bf16.gmra.mxu0 %v2500
        %v2566 = vpop.f32.mrf.mxu0
        %v2567 = vadd.f32 0.0, %v2566
        %v2568 = vpop.f32.mrf.mxu0
        %v2569 = vadd.f32 0.0, %v2568
        %2570 = vmatmul.bf16.gmra.mxu0 %v2503
        %v2571 = vpop.f32.mrf.mxu0
        %v2572 = vadd.f32 0.0, %v2571
        %v2573 = vpop.f32.mrf.mxu0
        %v2574 = vadd.f32 0.0, %v2573
        %2575 = vmatmul.bf16.gmra.mxu0 %v2506
        %v2576 = vpop.f32.mrf.mxu0
        %v2577 = vadd.f32 0.0, %v2576
        %v2578 = vpop.f32.mrf.mxu0
        %v2579 = vadd.f32 0.0, %v2578
        %2580 = vmatmul.bf16.gmra.mxu0 %v2509
        %v2581 = vpop.f32.mrf.mxu0
        %v2582 = vadd.f32 0.0, %v2581
        %v2583 = vpop.f32.mrf.mxu0
        %v2584 = vadd.f32 0.0, %v2583
        %2585 = vmatmul.bf16.gmra.mxu0 %v2512
        %v2586 = vpop.f32.mrf.mxu0
        %v2587 = vadd.f32 0.0, %v2586
        %v2588 = vpop.f32.mrf.mxu0
        %v2589 = vadd.f32 0.0, %v2588
        %2590 = vmatmul.bf16.gmra.mxu0 %v2515
        %v2591 = vpop.f32.mrf.mxu0
        %v2592 = vadd.f32 0.0, %v2591
        %v2593 = vpop.f32.mrf.mxu0
        %v2594 = vadd.f32 0.0, %v2593
        %2595 = vmatmul.bf16.gmra.mxu0 %v2518
        %v2596 = vpop.f32.mrf.mxu0
        %v2597 = vadd.f32 0.0, %v2596
        %v2598 = vpop.f32.mrf.mxu0
        %v2599 = vadd.f32 0.0, %v2598
        %2600 = vmatmul.bf16.gmra.mxu0 %v2521
        %v2601 = vpop.f32.mrf.mxu0
        %v2602 = vadd.f32 0.0, %v2601
        %v2603 = vpop.f32.mrf.mxu0
        %v2604 = vadd.f32 0.0, %v2603
        %2605 = vmatmul.bf16.gmra.mxu0 %v2524
        %v2606 = vpop.f32.mrf.mxu0
        %v2607 = vadd.f32 0.0, %v2606
        %v2608 = vpop.f32.mrf.mxu0
        %v2609 = vadd.f32 0.0, %v2608
        %2610 = vmatmul.bf16.gmra.mxu0 %v2527
        %v2611 = vpop.f32.mrf.mxu0
        %v2612 = vadd.f32 0.0, %v2611
        %v2613 = vpop.f32.mrf.mxu0
        %v2614 = vadd.f32 0.0, %v2613
        %2615 = vmatmul.bf16.gmra.mxu0 %v2530
        %v2616 = vpop.f32.mrf.mxu0
        %v2617 = vadd.f32 0.0, %v2616
        %v2618 = vpop.f32.mrf.mxu0
        %v2619 = vadd.f32 0.0, %v2618
        %2620 = vdwg.mxu0
        %v2621 = vadd.f32 %v2396, %v2542
        %v2622 = vadd.f32 %v2397, %v2544
        %v2623 = vadd.f32 %v2398, %v2547
        %v2624 = vadd.f32 %v2399, %v2549
        %v2625 = vadd.f32 %v2400, %v2552
        %v2626 = vadd.f32 %v2401, %v2554
        %v2627 = vadd.f32 %v2402, %v2557
        %v2628 = vadd.f32 %v2403, %v2559
        %v2629 = vadd.f32 %v2404, %v2562
        %v2630 = vadd.f32 %v2405, %v2564
        %v2631 = vadd.f32 %v2406, %v2567
        %v2632 = vadd.f32 %v2407, %v2569
        %v2633 = vadd.f32 %v2408, %v2572
        %v2634 = vadd.f32 %v2409, %v2574
        %v2635 = vadd.f32 %v2410, %v2577
        %v2636 = vadd.f32 %v2411, %v2579
        %v2637 = vadd.f32 %v2412, %v2582
        %v2638 = vadd.f32 %v2413, %v2584
        %v2639 = vadd.f32 %v2414, %v2587
        %v2640 = vadd.f32 %v2415, %v2589
        %v2641 = vadd.f32 %v2416, %v2592
        %v2642 = vadd.f32 %v2417, %v2594
        %v2643 = vadd.f32 %v2418, %v2597
        %v2644 = vadd.f32 %v2419, %v2599
        %v2645 = vadd.f32 %v2420, %v2602
        %v2646 = vadd.f32 %v2421, %v2604
        %v2647 = vadd.f32 %v2422, %v2607
        %v2648 = vadd.f32 %v2423, %v2609
        %v2649 = vadd.f32 %v2424, %v2612
        %v2650 = vadd.f32 %v2425, %v2614
        %v2651 = vadd.f32 %v2426, %v2617
        %v2652 = vadd.f32 %v2427, %v2619
        %v2653 = vld [vmem:[%s5] sm:$0x1]
        %v2655 = vperm.slane %v2653, 0
        %v2657 = vadd.f32 %v2621, %v2655
        %v2658 = vadd.f32 %v2622, %v2655
        %v2659 = vadd.f32 %v2623, %v2655
        %v2660 = vadd.f32 %v2624, %v2655
        %v2661 = vadd.f32 %v2625, %v2655
        %v2662 = vadd.f32 %v2626, %v2655
        %v2663 = vadd.f32 %v2627, %v2655
        %v2664 = vadd.f32 %v2628, %v2655
        %v2665 = vadd.f32 %v2629, %v2655
        %v2666 = vadd.f32 %v2630, %v2655
        %v2667 = vadd.f32 %v2631, %v2655
        %v2668 = vadd.f32 %v2632, %v2655
        %v2669 = vadd.f32 %v2633, %v2655
        %v2670 = vadd.f32 %v2634, %v2655
        %v2671 = vadd.f32 %v2635, %v2655
        %v2672 = vadd.f32 %v2636, %v2655
        %v2673 = vadd.f32 %v2637, %v2655
        %v2674 = vadd.f32 %v2638, %v2655
        %v2675 = vadd.f32 %v2639, %v2655
        %v2676 = vadd.f32 %v2640, %v2655
        %v2677 = vadd.f32 %v2641, %v2655
        %v2678 = vadd.f32 %v2642, %v2655
        %v2679 = vadd.f32 %v2643, %v2655
        %v2680 = vadd.f32 %v2644, %v2655
        %v2681 = vadd.f32 %v2645, %v2655
        %v2682 = vadd.f32 %v2646, %v2655
        %v2683 = vadd.f32 %v2647, %v2655
        %v2684 = vadd.f32 %v2648, %v2655
        %v2685 = vadd.f32 %v2649, %v2655
        %v2686 = vadd.f32 %v2650, %v2655
        %v2687 = vadd.f32 %v2651, %v2655
        %v2688 = vadd.f32 %v2652, %v2655
        %2689 = vxpose.xlu0.b32.start [1/16] %v2657, 128
        %2690 = vxpose.xlu0.b32.cont [2/16] %v2658, 128
        %2691 = vxpose.xlu0.b32.cont [3/16] %v2659, 128
        %2692 = vxpose.xlu0.b32.cont [4/16] %v2660, 128
        %2693 = vxpose.xlu0.b32.cont [5/16] %v2661, 128
        %2694 = vxpose.xlu0.b32.cont [6/16] %v2662, 128
        %2695 = vxpose.xlu0.b32.cont [7/16] %v2663, 128
        %2696 = vxpose.xlu0.b32.cont [8/16] %v2664, 128
        %2697 = vxpose.xlu0.b32.cont [9/16] %v2665, 128
        %2698 = vxpose.xlu0.b32.cont [10/16] %v2666, 128
        %2699 = vxpose.xlu0.b32.cont [11/16] %v2667, 128
        %2700 = vxpose.xlu0.b32.cont [12/16] %v2668, 128
        %2701 = vxpose.xlu0.b32.cont [13/16] %v2669, 128
        %2702 = vxpose.xlu0.b32.cont [14/16] %v2670, 128
        %2703 = vxpose.xlu0.b32.cont [15/16] %v2671, 128
        %2704 = vxpose.xlu0.b32.end [16/16] %v2672, 128
        %v2705 = vpop.trf.xlu0
        %v2706 = vpop.trf.xlu0
        %v2707 = vpop.trf.xlu0
        %v2708 = vpop.trf.xlu0
        %v2709 = vpop.trf.xlu0
        %v2710 = vpop.trf.xlu0
        %v2711 = vpop.trf.xlu0
        %v2712 = vpop.trf.xlu0
        %v2713 = vpop.trf.xlu0
        %v2714 = vpop.trf.xlu0
        %v2715 = vpop.trf.xlu0
        %v2716 = vpop.trf.xlu0
        %v2717 = vpop.trf.xlu0
        %v2718 = vpop.trf.xlu0
        %v2719 = vpop.trf.xlu0
        %v2720 = vpop.trf.xlu0
        %2721 = vxpose.xlu0.b32.start [1/16] %v2673, 128
        %2722 = vxpose.xlu0.b32.cont [2/16] %v2674, 128
        %2723 = vxpose.xlu0.b32.cont [3/16] %v2675, 128
        %2724 = vxpose.xlu0.b32.cont [4/16] %v2676, 128
        %2725 = vxpose.xlu0.b32.cont [5/16] %v2677, 128
        %2726 = vxpose.xlu0.b32.cont [6/16] %v2678, 128
        %2727 = vxpose.xlu0.b32.cont [7/16] %v2679, 128
        %2728 = vxpose.xlu0.b32.cont [8/16] %v2680, 128
        %2729 = vxpose.xlu0.b32.cont [9/16] %v2681, 128
        %2730 = vxpose.xlu0.b32.cont [10/16] %v2682, 128
        %2731 = vxpose.xlu0.b32.cont [11/16] %v2683, 128
        %2732 = vxpose.xlu0.b32.cont [12/16] %v2684, 128
        %2733 = vxpose.xlu0.b32.cont [13/16] %v2685, 128
        %2734 = vxpose.xlu0.b32.cont [14/16] %v2686, 128
        %2735 = vxpose.xlu0.b32.cont [15/16] %v2687, 128
        %2736 = vxpose.xlu0.b32.end [16/16] %v2688, 128
        %v2737 = vpop.trf.xlu0
        %v2738 = vpop.trf.xlu0
        %v2739 = vpop.trf.xlu0
        %v2740 = vpop.trf.xlu0
        %v2741 = vpop.trf.xlu0
        %v2742 = vpop.trf.xlu0
        %v2743 = vpop.trf.xlu0
        %v2744 = vpop.trf.xlu0
        %v2745 = vpop.trf.xlu0
        %v2746 = vpop.trf.xlu0
        %v2747 = vpop.trf.xlu0
        %v2748 = vpop.trf.xlu0
        %v2749 = vpop.trf.xlu0
        %v2750 = vpop.trf.xlu0
        %v2751 = vpop.trf.xlu0
        %v2752 = vpop.trf.xlu0
        %2753 = vst [vmem:[%s309] sm:$0xff] %v2705
        %2754 = vst [vmem:[%s309 + $0x8] sm:$0xff] %v2737
        %2755 = vst [vmem:[%s309 + $0x10] sm:$0xff] %v2706
        %2756 = vst [vmem:[%s309 + $0x18] sm:$0xff] %v2738
        %s2757 = sand.u32 %s166, 1
        %s2758 = scalar_lea.sflag [#allocation4], %s2757
        %s2759 = sand.u32 %s166, 1
        %s2760 = smul.addr %s2759, 256
        %s2761 = scalar_lea.vmem [#allocation3], %s2760
        %p2762 = scmp.lt.s32.totalorder %s22, 1
        %s2763 = scalar_select %p2762, %s22, 1
        %s2764 = smul.addr %s2763, 4
        %s2765 = smul.addr %s2764, 8
        %s2766 = scalar_lea.vmem %s7, %s2765
        // Predicated region
        $region45: #{backbone_with_fpn_forward.15} parent=43 // pred_check
          %p2767 = pneg %p176
        $region46: #{backbone_with_fpn_forward.15} parent=43 // pred_check_branch
          %2769 = sbr.rel (%p2767) target = $region48
        $region47: #{backbone_with_fpn_forward.15} parent=43 // pred_region
          %2771 = vsyncadd %s2758, 0
          %s2772 = smul.addr %s22, 32
          %s2773 = smul.addr %s2772, 8
          %s2774 = scalar_lea.hbm %s6, %s2773
          %s2775 = sshll.u32 %s2761, 4
          %s2776 = int_to_ptr.vmem [resolvable:$true] %s2775
          %s2777 = sshll.u32 %s2774, 4
          %s2778 = int_to_ptr.hbm [resolvable:$true] %s2777
          %2783 = dma.vmem_to_hbm [thread:$0]  %s2776, 4096, %s2778, %s2758, 128, 128, 8
        $region48: #{backbone_with_fpn_forward.15} parent=43 // pred_fallthru
          _
        // Predicated region
        $region49: #{backbone_with_fpn_forward.15} parent=43 // pred_check
          %p2784 = pneg %p202
        $region50: #{backbone_with_fpn_forward.15} parent=43 // pred_check_branch
          %2786 = sbr.rel (%p2784) target = $region52
        $region51: #{backbone_with_fpn_forward.15} parent=43 // pred_region
          _
        $region52: #{backbone_with_fpn_forward.15} parent=43 // pred_fallthru
          _
      $region44: #{backbone_with_fpn_forward.15} parent=5 // pred_fallthru
        _
      %p2787 = scmp.le.s32.totalorder 2, %s17
      // Predicated region
      $region53: #{backbone_with_fpn_forward.15} parent=5 // pred_check
        %p2788 = pneg %p2787
      $region54: #{backbone_with_fpn_forward.15} parent=5 // pred_check_branch
        %2790 = sbr.rel (%p2788) target = $region56
      $region55: #{backbone_with_fpn_forward.15} parent=5 // pred_region
        %s2791 = ssub.s32 %s17, 2
        // Predicated region
        $region57: #{backbone_with_fpn_forward.15} parent=55 // pred_check
          %p2792 = pneg %p182
        $region58: #{backbone_with_fpn_forward.15} parent=55 // pred_check_branch
          %2794 = sbr.rel (%p2792) target = $region60
        $region59: #{backbone_with_fpn_forward.15} parent=55 // pred_region
          %s2795 = sand.u32 %s167, 1
          %s2796 = scalar_lea.sflag [#allocation4], %s2795
          %s2797 = sand.u32 %s167, 1
          %s2798 = smul.addr %s2797, 256
          %s2799 = scalar_lea.vmem [#allocation3], %s2798
          %2801 = dma.done %s2796, 4096
        $region60: #{backbone_with_fpn_forward.15} parent=55 // pred_fallthru
          _
        // Predicated region
        $region61: #{backbone_with_fpn_forward.15} parent=55 // pred_check
          %p2802 = pneg %p208
        $region62: #{backbone_with_fpn_forward.15} parent=55 // pred_check_branch
          %2804 = sbr.rel (%p2802) target = $region64
        $region63: #{backbone_with_fpn_forward.15} parent=55 // pred_region
          %p2805 = scmp.lt.s32.totalorder %s23, 1
          %s2806 = scalar_select %p2805, %s23, 1
          %s2807 = smul.addr %s2806, 4
          %s2808 = smul.addr %s2807, 8
          %s2809 = scalar_lea.vmem %s7, %s2808
        $region64: #{backbone_with_fpn_forward.15} parent=55 // pred_fallthru
          _
      $region56: #{backbone_with_fpn_forward.15} parent=5 // pred_fallthru
        _
    $region6: #{backbone_with_fpn_forward.15} parent=1 // loop_footer
      %s21 = sadd.s32 1, %s17
    $region7: #{backbone_with_fpn_forward.15} parent=1 // loop_footer_branch
      %16 = sbr.rel target = $region3
    $region8: #{backbone_with_fpn_forward.15} parent=1 // loop_exit
      _
    %2810 = vsyncpa [#allocation4], 1
    %s2811 = scalar_lea.sflag [#allocation4], 1
    %2812 = vsyncpa %s2811, 1

</llo_original>
